<compile_context>
chip_gen: v7x
topology: tpu7x:2x2x1
jax: 0.10.0
libtpu: 0.0.40
codegen_flags: <defaults>
</compile_context>

<pallas_src>
import math

import jax
import jax.numpy as jnp
from jax.experimental import pallas as pl
from jax.experimental.pallas import tpu as pltpu


# ----------------------------- Fused Pallas kernel --------------------------

def _fused_ae_kernel(x_ref, t1_ref, b1_ref, t2_ref, b2_ref,
                     t3_ref, b3_ref, t4_ref, b4_ref,
                     latent_ref, rec_ref):
    """One batch tile: 4 MXU GEMMs (bf16 x bf16 -> f32 acc) + bias + activations."""
    x = x_ref[...].astype(jnp.bfloat16)                       # (TILE_N, 3*16*16)

    # encoder layer 1: conv(3->16, s2, p1) + ReLU
    h = jnp.dot(x, t1_ref[...], preferred_element_type=jnp.float32)
    h = jnp.maximum(h + b1_ref[...], 0.0)                      # (TILE_N, 16*8*8)

    # encoder layer 2: conv(16->32, s2, p1) + ReLU  -> latent
    z = jnp.dot(h.astype(jnp.bfloat16), t2_ref[...],
                preferred_element_type=jnp.float32)
    z = jnp.maximum(z + b2_ref[...], 0.0)                      # (TILE_N, 32*4*4)
    latent_ref[...] = z.astype(latent_ref.dtype)

    # decoder layer 1: conv_transpose(32->16, s2, p1, op1) + ReLU
    d = jnp.dot(z.astype(jnp.bfloat16), t3_ref[...],
                preferred_element_type=jnp.float32)
    d = jnp.maximum(d + b3_ref[...], 0.0)                      # (TILE_N, 16*8*8)

    # decoder layer 2: conv_transpose(16->3, s2, p1, op1) + Sigmoid
    r = jnp.dot(d.astype(jnp.bfloat16), t4_ref[...],
                preferred_element_type=jnp.float32)
    r = r + b4_ref[...]                                        # (TILE_N, 3*16*16)
    e = jnp.exp(-r)                                            # EUP transcendental
    rec_ref[...] = pl.reciprocal(1.0 + e, approx=False).astype(rec_ref.dtype)


def _fused_forward(x_flat, gp, tile_n):
    """x_flat: (N_pad, Cin*H*W) f32 with N_pad % tile_n == 0."""
    n_pad, k0 = x_flat.shape
    t1, b1 = gp["t1"], gp["b1"]
    t2, b2 = gp["t2"], gp["b2"]
    t3, b3 = gp["t3"], gp["b3"]
    t4, b4 = gp["t4"], gp["b4"]
    f2, f4 = t2.shape[1], t4.shape[1]

    def tile_spec(cols):
        # Batch-tiled activation: block index advances with the grid step.
        return pl.BlockSpec((tile_n, cols), lambda i: (i, 0))

    def resident(arr):
        # Constant block index: fetched once, stays VMEM-resident over the grid.
        return pl.BlockSpec(arr.shape, lambda i: (0, 0))

    return pl.pallas_call(
        _fused_ae_kernel,
        out_shape=(
            jax.ShapeDtypeStruct((n_pad, f2), jnp.float32),    # latent (flat)
            jax.ShapeDtypeStruct((n_pad, f4), jnp.float32),    # reconstruction (flat)
        ),
        grid=(n_pad // tile_n,),
        in_specs=[
            tile_spec(k0),
            resident(t1), resident(b1),
            resident(t2), resident(b2),
            resident(t3), resident(b3),
            resident(t4), resident(b4),
        ],
        out_specs=(tile_spec(f2), tile_spec(f4)),
        compiler_params=pltpu.CompilerParams(
            # Parallel batch axis -> shards grid steps over v7x's 2 TensorCores.
            dimension_semantics=("parallel",),
            # bf16 weights + small activation tiles: working set ~15 MiB;
            # 48 MiB stays safely inside v7x's 64 MiB physical VMEM.
            vmem_limit_bytes=48 * 1024 * 1024),
    )(x_flat, t1, b1, t2, b2, t3, b3, t4, b4)


# ------------------- Hoisted weight prep (runs once, not per forward) -------

_DN = ("NCHW", "OIHW", "NCHW")


def _conv_operator(w, stride, padding, cin, h, wsp):
    """Dense (Cin*H*W, Cout*Ho*Wo) operator for Conv2d, NCHW-flat ordering."""
    k = cin * h * wsp
    eye = jnp.eye(k, dtype=jnp.float32).reshape(k, cin, h, wsp)
    y = jax.lax.conv_general_dilated(
        eye, w.astype(jnp.float32), (stride, stride),
        ((padding, padding), (padding, padding)), dimension_numbers=_DN)
    _, cout, ho, wo = y.shape
    return y.reshape(k, cout * ho * wo), (cout, ho, wo)


def _conv_transpose_operator(w, stride, padding, output_padding, cin, h, wsp):
    """Dense operator for PyTorch ConvTranspose2d (weight layout (Cin,Cout,KH,KW))."""
    _, _, KH, KW = w.shape
    # exact equivalence: flip spatially, swap channel axes, dilate lhs by stride
    w_eq = jnp.flip(w, axis=(2, 3)).transpose(1, 0, 2, 3).astype(jnp.float32)
    pad_h = (KH - 1 - padding, KH - 1 - padding + output_padding)
    pad_w = (KW - 1 - padding, KW - 1 - padding + output_padding)
    k = cin * h * wsp
    eye = jnp.eye(k, dtype=jnp.float32).reshape(k, cin, h, wsp)
    y = jax.lax.conv_general_dilated(
        eye, w_eq, (1, 1), (pad_h, pad_w), lhs_dilation=(stride, stride),
        dimension_numbers=_DN)
    _, cout_, ho, wo = y.shape
    return y.reshape(k, cout_ * ho * wo), (cout_, ho, wo)


def prepare_gemm_params(params, img_hw=16):
    """Expand conv weights into ready GEMM operators (bf16) + f32 bias rows (once)."""
    H = W = img_hw
    t1, (c1, h1, w1) = _conv_operator(params["enc1_w"], 2, 1, 3, H, W)
    t2, (c2, h2, w2) = _conv_operator(params["enc2_w"], 2, 1, c1, h1, w1)
    t3, (c3, h3, w3) = _conv_transpose_operator(params["dec1_w"], 2, 1, 1, c2, h2, w2)
    t4, (c4, h4, w4) = _conv_transpose_operator(params["dec2_w"], 2, 1, 1, c3, h3, w3)

    def bias_row(b, spatial):
        return jnp.repeat(b.astype(jnp.float32), spatial).reshape(1, -1)

    return {
        "t1": t1.astype(jnp.bfloat16), "b1": bias_row(params["enc1_b"], h1 * w1),
        "t2": t2.astype(jnp.bfloat16), "b2": bias_row(params["enc2_b"], h2 * w2),
        "t3": t3.astype(jnp.bfloat16), "b3": bias_row(params["dec1_b"], h3 * w3),
        "t4": t4.astype(jnp.bfloat16), "b4": bias_row(params["dec2_b"], h4 * w4),
    }


# ----------------------------- Model ---------------------------------------

def init_params(key):
    def uconv(key, shape, fan_in):
        bound = 1.0 / math.sqrt(fan_in)
        return jax.random.uniform(key, shape, jnp.float32, -bound, bound)

    ks = jax.random.split(key, 8)
    return {
        # encoder
        "enc1_w": uconv(ks[0], (16, 3, 3, 3), 3 * 9),
        "enc1_b": uconv(ks[1], (16,), 3 * 9),
        "enc2_w": uconv(ks[2], (32, 16, 3, 3), 16 * 9),
        "enc2_b": uconv(ks[3], (32,), 16 * 9),
        # decoder (ConvTranspose2d weights are (Cin, Cout, KH, KW))
        "dec1_w": uconv(ks[4], (32, 16, 3, 3), 16 * 9),
        "dec1_b": uconv(ks[5], (16,), 16 * 9),
        "dec2_w": uconv(ks[6], (16, 3, 3, 3), 3 * 9),
        "dec2_b": uconv(ks[7], (3,), 3 * 9),
    }


def _round_up(n, m):
    return ((n + m - 1) // m) * m


@jax.jit
def autoencoder_forward(gemm_params, x):
    """x: (N, 3, H, W) NCHW.  Returns (latent (N,32,H/4,W/4), rec (N,3,H,W))."""
    N, C, H, W = x.shape
    x_flat = x.reshape(N, C * H * W).astype(jnp.float32)    # NCHW flatten (no transpose)
    # TILE_N: multiple of 8 (f32 sublanes), >=128 rows per GEMM once N allows,
    # capped at 256 to bound per-step VMEM and keep the pipeline deep.
    tile_n = min(256, _round_up(N, 8))
    n_pad = _round_up(N, tile_n)
    if n_pad != N:
        x_flat = jnp.pad(x_flat, ((0, n_pad - N), (0, 0)))
    latent_flat, rec_flat = _fused_forward(x_flat, gemm_params, tile_n)
    latent = latent_flat[:N].reshape(N, 32, H // 4, W // 4)
    reconstruction = rec_flat[:N].reshape(N, 3, H, W)
    return latent, reconstruction


# ----------------------------- Reference (pure JAX, f32) ---------------------

def ref_forward(params, x):
    dn = ("NCHW", "OIHW", "NCHW")

    def conv(x, w, b):
        y = jax.lax.conv_general_dilated(x, w, (2, 2), ((1, 1), (1, 1)),
                                         dimension_numbers=dn)
        return y + b[None, :, None, None]

    def convT(x, w, b):
        w_eq = jnp.flip(w, (2, 3)).transpose(1, 0, 2, 3)
        y = jax.lax.conv_general_dilated(x, w_eq, (1, 1), ((1, 2), (1, 2)),
                                         lhs_dilation=(2, 2),
                                         dimension_numbers=dn)
        return y + b[None, :, None, None]

    h = jax.nn.relu(conv(x, params["enc1_w"], params["enc1_b"]))
    latent = jax.nn.relu(conv(h, params["enc2_w"], params["enc2_b"]))
    d = jax.nn.relu(convT(latent, params["dec1_w"], params["dec1_b"]))
    rec = jax.nn.sigmoid(convT(d, params["dec2_w"], params["dec2_b"]))
    return latent, rec


# ----------------------------- Main -----------------------------------------

if __name__ == "__main__":
    key = jax.random.PRNGKey(0)
    kp, kx, kx2 = jax.random.split(key, 3)
    params = init_params(kp)

    # Hoisted once: conv weights -> dense bf16 GEMM operators (not in hot path).
    gemm_params = prepare_gemm_params(params, img_hw=16)

    # Small demo batch (NCHW RGB images), like the PyTorch module.
    x = jax.random.uniform(kx, (2, 3, 16, 16), jnp.float32)
    latent, rec = jax.block_until_ready(autoencoder_forward(gemm_params, x))
    assert latent.shape == (2, 32, 4, 4), latent.shape
    assert rec.shape == (2, 3, 16, 16), rec.shape

    latent_ref, rec_ref = ref_forward(params, x)
    # Tolerance relaxed vs v1: GEMM operands are bf16 (f32 accumulation),
    # compared against the pure-f32 reference.
    assert jnp.allclose(latent, latent_ref, atol=5e-2, rtol=5e-2)
    assert jnp.allclose(rec, rec_ref, atol=5e-2, rtol=5e-2)

    # Also exercise the multi-tile (pipelined, padded) grid path.
    xb = jax.random.uniform(kx2, (600, 3, 16, 16), jnp.float32)
    latent_b, rec_b = jax.block_until_ready(autoencoder_forward(gemm_params, xb))
    latent_b_ref, rec_b_ref = ref_forward(params, xb)
    assert latent_b.shape == (600, 32, 4, 4), latent_b.shape
    assert rec_b.shape == (600, 3, 16, 16), rec_b.shape
    assert jnp.allclose(latent_b, latent_b_ref, atol=5e-2, rtol=5e-2)
    assert jnp.allclose(rec_b, rec_b_ref, atol=5e-2, rtol=5e-2)

    print("KERNEL_OK")
</pallas_src>

<mosaic_0001>
module attributes {stable_mosaic.version = 11 : i64} {
  func.func @_fused_ae_kernel(%arg0: i32, %arg1: memref<8x768xf32, #tpu.memory_space<vmem>>, %arg2: memref<768x1024xbf16, #tpu.memory_space<vmem>>, %arg3: memref<1x1024xf32, #tpu.memory_space<vmem>>, %arg4: memref<1024x512xbf16, #tpu.memory_space<vmem>>, %arg5: memref<1x512xf32, #tpu.memory_space<vmem>>, %arg6: memref<512x1024xbf16, #tpu.memory_space<vmem>>, %arg7: memref<1x1024xf32, #tpu.memory_space<vmem>>, %arg8: memref<1024x768xbf16, #tpu.memory_space<vmem>>, %arg9: memref<1x768xf32, #tpu.memory_space<vmem>>, %arg10: memref<8x512xf32, #tpu.memory_space<vmem>>, %arg11: memref<8x768xf32, #tpu.memory_space<vmem>>) attributes {dimension_semantics = [#tpu.dimension_semantics<parallel>], iteration_bounds = array<i64: 1>, scalar_prefetch = 0 : i64, scratch_operands = 0 : i64, tpu.core_type = #tpu.core_type<tc>, window_params = [{transform_indices = @transform_0, window_bounds = array<i64: 8, 768>}, {pipeline_mode = #tpu.pipeline_mode<synchronous>, transform_indices = @transform_1, window_bounds = array<i64: 768, 1024>}, {pipeline_mode = #tpu.pipeline_mode<synchronous>, transform_indices = @transform_2, window_bounds = array<i64: 1, 1024>}, {pipeline_mode = #tpu.pipeline_mode<synchronous>, transform_indices = @transform_3, window_bounds = array<i64: 1024, 512>}, {pipeline_mode = #tpu.pipeline_mode<synchronous>, transform_indices = @transform_4, window_bounds = array<i64: 1, 512>}, {pipeline_mode = #tpu.pipeline_mode<synchronous>, transform_indices = @transform_5, window_bounds = array<i64: 512, 1024>}, {pipeline_mode = #tpu.pipeline_mode<synchronous>, transform_indices = @transform_6, window_bounds = array<i64: 1, 1024>}, {pipeline_mode = #tpu.pipeline_mode<synchronous>, transform_indices = @transform_7, window_bounds = array<i64: 1024, 768>}, {pipeline_mode = #tpu.pipeline_mode<synchronous>, transform_indices = @transform_8, window_bounds = array<i64: 1, 768>}, {transform_indices = @transform_9, window_bounds = array<i64: 8, 512>}, {transform_indices = @transform_10, window_bounds = array<i64: 8, 768>}]} {
    %c0 = arith.constant 0 : index
    %c0_0 = arith.constant 0 : index
    %0 = vector.load %arg1[%c0, %c0_0] : memref<8x768xf32, #tpu.memory_space<vmem>>, vector<8x768xf32>
    %1 = arith.truncf %0 : vector<8x768xf32> to vector<8x768xbf16>
    %c0_1 = arith.constant 0 : index
    %c0_2 = arith.constant 0 : index
    %2 = vector.load %arg2[%c0_1, %c0_2] : memref<768x1024xbf16, #tpu.memory_space<vmem>>, vector<768x1024xbf16>
    %cst = arith.constant dense<0.000000e+00> : vector<8x1024xf32>
    %3 = tpu.matmul %1, %2, %cst {dimension_numbers = #tpu.dot_dimension_numbers<[1], [0], [0], [1], [0, 0, 1, 1], [], []>} : vector<8x768xbf16>, vector<768x1024xbf16>, vector<8x1024xf32> -> vector<8x1024xf32>
    %c0_3 = arith.constant 0 : index
    %c0_4 = arith.constant 0 : index
    %4 = vector.load %arg3[%c0_3, %c0_4] : memref<1x1024xf32, #tpu.memory_space<vmem>>, vector<1x1024xf32>
    %5 = vector.broadcast %4 : vector<1x1024xf32> to vector<8x1024xf32>
    %6 = arith.addf %3, %5 : vector<8x1024xf32>
    %cst_5 = arith.constant 0.000000e+00 : f32
    %7 = vector.broadcast %cst_5 : f32 to vector<8x1024xf32>
    %8 = arith.maximumf %6, %7 : vector<8x1024xf32>
    %9 = arith.truncf %8 : vector<8x1024xf32> to vector<8x1024xbf16>
    %c0_6 = arith.constant 0 : index
    %c0_7 = arith.constant 0 : index
    %10 = vector.load %arg4[%c0_6, %c0_7] : memref<1024x512xbf16, #tpu.memory_space<vmem>>, vector<1024x512xbf16>
    %cst_8 = arith.constant dense<0.000000e+00> : vector<8x512xf32>
    %11 = tpu.matmul %9, %10, %cst_8 {dimension_numbers = #tpu.dot_dimension_numbers<[1], [0], [0], [1], [0, 0, 1, 1], [], []>} : vector<8x1024xbf16>, vector<1024x512xbf16>, vector<8x512xf32> -> vector<8x512xf32>
    %c0_9 = arith.constant 0 : index
    %c0_10 = arith.constant 0 : index
    %12 = vector.load %arg5[%c0_9, %c0_10] : memref<1x512xf32, #tpu.memory_space<vmem>>, vector<1x512xf32>
    %13 = vector.broadcast %12 : vector<1x512xf32> to vector<8x512xf32>
    %14 = arith.addf %11, %13 : vector<8x512xf32>
    %cst_11 = arith.constant 0.000000e+00 : f32
    %15 = vector.broadcast %cst_11 : f32 to vector<8x512xf32>
    %16 = arith.maximumf %14, %15 : vector<8x512xf32>
    %c0_12 = arith.constant 0 : index
    %c0_13 = arith.constant 0 : index
    %17 = vector.load %arg10[%c0_12, %c0_13] : memref<8x512xf32, #tpu.memory_space<vmem>>, vector<8x512xf32>
    tpu.vector_store %arg10[%c0_12, %c0_13], %16 {strides = array<i32>} : memref<8x512xf32, #tpu.memory_space<vmem>>, vector<8x512xf32>,
    %18 = arith.truncf %16 : vector<8x512xf32> to vector<8x512xbf16>
    %c0_14 = arith.constant 0 : index
    %c0_15 = arith.constant 0 : index
    %19 = vector.load %arg6[%c0_14, %c0_15] : memref<512x1024xbf16, #tpu.memory_space<vmem>>, vector<512x1024xbf16>
    %cst_16 = arith.constant dense<0.000000e+00> : vector<8x1024xf32>
    %20 = tpu.matmul %18, %19, %cst_16 {dimension_numbers = #tpu.dot_dimension_numbers<[1], [0], [0], [1], [0, 0, 1, 1], [], []>} : vector<8x512xbf16>, vector<512x1024xbf16>, vector<8x1024xf32> -> vector<8x1024xf32>
    %c0_17 = arith.constant 0 : index
    %c0_18 = arith.constant 0 : index
    %21 = vector.load %arg7[%c0_17, %c0_18] : memref<1x1024xf32, #tpu.memory_space<vmem>>, vector<1x1024xf32>
    %22 = vector.broadcast %21 : vector<1x1024xf32> to vector<8x1024xf32>
    %23 = arith.addf %20, %22 : vector<8x1024xf32>
    %cst_19 = arith.constant 0.000000e+00 : f32
    %24 = vector.broadcast %cst_19 : f32 to vector<8x1024xf32>
    %25 = arith.maximumf %23, %24 : vector<8x1024xf32>
    %26 = arith.truncf %25 : vector<8x1024xf32> to vector<8x1024xbf16>
    %c0_20 = arith.constant 0 : index
    %c0_21 = arith.constant 0 : index
    %27 = vector.load %arg8[%c0_20, %c0_21] : memref<1024x768xbf16, #tpu.memory_space<vmem>>, vector<1024x768xbf16>
    %cst_22 = arith.constant dense<0.000000e+00> : vector<8x768xf32>
    %28 = tpu.matmul %26, %27, %cst_22 {dimension_numbers = #tpu.dot_dimension_numbers<[1], [0], [0], [1], [0, 0, 1, 1], [], []>} : vector<8x1024xbf16>, vector<1024x768xbf16>, vector<8x768xf32> -> vector<8x768xf32>
    %c0_23 = arith.constant 0 : index
    %c0_24 = arith.constant 0 : index
    %29 = vector.load %arg9[%c0_23, %c0_24] : memref<1x768xf32, #tpu.memory_space<vmem>>, vector<1x768xf32>
    %30 = vector.broadcast %29 : vector<1x768xf32> to vector<8x768xf32>
    %31 = arith.addf %28, %30 : vector<8x768xf32>
    %cst_25 = arith.constant 0.000000e+00 : f32
    %32 = vector.broadcast %cst_25 : f32 to vector<8x768xf32>
    %33 = arith.subf %32, %31 : vector<8x768xf32>
    %34 = math.exp %33 : vector<8x768xf32>
    %cst_26 = arith.constant 1.000000e+00 : f32
    %35 = vector.broadcast %cst_26 : f32 to vector<8x768xf32>
    %36 = arith.addf %35, %34 : vector<8x768xf32>
    %37 = tpu.reciprocal %36 : vector<8x768xf32> -> vector<8x768xf32>
    %c0_27 = arith.constant 0 : index
    %c0_28 = arith.constant 0 : index
    %38 = vector.load %arg11[%c0_27, %c0_28] : memref<8x768xf32, #tpu.memory_space<vmem>>, vector<8x768xf32>
    tpu.vector_store %arg11[%c0_27, %c0_28], %37 {strides = array<i32>} : memref<8x768xf32, #tpu.memory_space<vmem>>, vector<8x768xf32>,
    return
  }
  func.func @transform_0(%arg0: i32) -> (i32, i32) {
    %c0_i32 = arith.constant 0 : i32
    %c0_i32_0 = arith.constant 0 : i32
    return %arg0, %c0_i32 : i32, i32
  }
  func.func @transform_1(%arg0: i32) -> (i32, i32) {
    %c0_i32 = arith.constant 0 : i32
    %c0_i32_0 = arith.constant 0 : i32
    %c0_i32_1 = arith.constant 0 : i32
    return %c0_i32, %c0_i32_0 : i32, i32
  }
  func.func @transform_2(%arg0: i32) -> (i32, i32) {
    %c0_i32 = arith.constant 0 : i32
    %c0_i32_0 = arith.constant 0 : i32
    %c0_i32_1 = arith.constant 0 : i32
    return %c0_i32, %c0_i32_0 : i32, i32
  }
  func.func @transform_3(%arg0: i32) -> (i32, i32) {
    %c0_i32 = arith.constant 0 : i32
    %c0_i32_0 = arith.constant 0 : i32
    %c0_i32_1 = arith.constant 0 : i32
    return %c0_i32, %c0_i32_0 : i32, i32
  }
  func.func @transform_4(%arg0: i32) -> (i32, i32) {
    %c0_i32 = arith.constant 0 : i32
    %c0_i32_0 = arith.constant 0 : i32
    %c0_i32_1 = arith.constant 0 : i32
    return %c0_i32, %c0_i32_0 : i32, i32
  }
  func.func @transform_5(%arg0: i32) -> (i32, i32) {
    %c0_i32 = arith.constant 0 : i32
    %c0_i32_0 = arith.constant 0 : i32
    %c0_i32_1 = arith.constant 0 : i32
    return %c0_i32, %c0_i32_0 : i32, i32
  }
  func.func @transform_6(%arg0: i32) -> (i32, i32) {
    %c0_i32 = arith.constant 0 : i32
    %c0_i32_0 = arith.constant 0 : i32
    %c0_i32_1 = arith.constant 0 : i32
    return %c0_i32, %c0_i32_0 : i32, i32
  }
  func.func @transform_7(%arg0: i32) -> (i32, i32) {
    %c0_i32 = arith.constant 0 : i32
    %c0_i32_0 = arith.constant 0 : i32
    %c0_i32_1 = arith.constant 0 : i32
    return %c0_i32, %c0_i32_0 : i32, i32
  }
  func.func @transform_8(%arg0: i32) -> (i32, i32) {
    %c0_i32 = arith.constant 0 : i32
    %c0_i32_0 = arith.constant 0 : i32
    %c0_i32_1 = arith.constant 0 : i32
    return %c0_i32, %c0_i32_0 : i32, i32
  }
  func.func @transform_9(%arg0: i32) -> (i32, i32) {
    %c0_i32 = arith.constant 0 : i32
    %c0_i32_0 = arith.constant 0 : i32
    return %arg0, %c0_i32 : i32, i32
  }
  func.func @transform_10(%arg0: i32) -> (i32, i32) {
    %c0_i32 = arith.constant 0 : i32
    %c0_i32_0 = arith.constant 0 : i32
    return %arg0, %c0_i32 : i32, i32
  }
}

</mosaic_0001>

<llo_original>
// kernel: autoencoder_forward.1
$region0: #{autoencoder_forward.1}
  #allocation0 [shape = 'u32[]', space=smem, size = 0x4, offset = 0x4, fixed_abs, tag = 'smem constant byte address 0x4 - core index']
  #allocation1 [shape = 'u32[144,128]{1,0:T(1,128)}', space=vmem, size = 0x12000, scoped, tag = 'internal scratch']
  %s0 = inlined_call_operand.vmem [shape: f32[8,768], index: 0, kind: input, shape index: {}]
  %s1 = inlined_call_operand.hbm [shape: bf16[768,1024], index: 1, kind: input, shape index: {}]
  %s2 = inlined_call_operand.hbm [shape: f32[1,1024], index: 2, kind: input, shape index: {}]
  %s3 = inlined_call_operand.hbm [shape: bf16[1024,512], index: 3, kind: input, shape index: {}]
  %s4 = inlined_call_operand.hbm [shape: f32[1,512], index: 4, kind: input, shape index: {}]
  %s5 = inlined_call_operand.hbm [shape: bf16[512,1024], index: 5, kind: input, shape index: {}]
  %s6 = inlined_call_operand.hbm [shape: f32[1,1024], index: 6, kind: input, shape index: {}]
  %s7 = inlined_call_operand.hbm [shape: bf16[1024,768], index: 7, kind: input, shape index: {}]
  %s8 = inlined_call_operand.hbm [shape: f32[1,768], index: 8, kind: input, shape index: {}]
  %s9 = inlined_call_operand.vmem [shape: f32[8,512], index: 9, kind: output, shape index: {0}]
  %s10 = inlined_call_operand.vmem [shape: f32[8,768], index: 10, kind: output, shape index: {1}]
  %11 = xla_tuple %s9, %s10
  %s12 = sld [smem:[#allocation0]]
  $region86: #{autoencoder_forward.1} parent=0
    _
  %s14 = ssub.s32 1, %s12
  %s15 = scalar_select 0, %s14, %s12
  $region1: #{autoencoder_forward.1} parent=0
    #allocation2 [shape = 'u8[1572864]{0}', space=vmem, size = 0x180000, scoped, tag = 'input window, operand 1, single buffered']
    #allocation3 [shape = 's32[1]{0}', space=sflag, size = 0x4, scoped, tag = 'scoped memory for autoencoder_forward.1']
    #allocation4 [shape = 'u8[4096]{0}', space=vmem, size = 0x1000, scoped, tag = 'input window, operand 2, single buffered']
    #allocation5 [shape = 's32[1]{0}', space=sflag, size = 0x4, scoped, tag = 'scoped memory for autoencoder_forward.1']
    #allocation6 [shape = 'u8[1048576]{0}', space=vmem, size = 0x100000, scoped, tag = 'input window, operand 3, single buffered']
    #allocation7 [shape = 'u8[2048]{0}', space=vmem, size = 0x800, scoped, tag = 'input window, operand 4, single buffered']
    #allocation8 [shape = 's32[1]{0}', space=sflag, size = 0x4, scoped, tag = 'scoped memory for autoencoder_forward.1']
    #allocation9 [shape = 'u8[1048576]{0}', space=vmem, size = 0x100000, scoped, tag = 'input window, operand 5, single buffered']
    #allocation10 [shape = 'u8[4096]{0}', space=vmem, size = 0x1000, scoped, tag = 'input window, operand 6, single buffered']
    #allocation11 [shape = 's32[1]{0}', space=sflag, size = 0x4, scoped, tag = 'scoped memory for autoencoder_forward.1']
    #allocation12 [shape = 'u8[1572864]{0}', space=vmem, size = 0x180000, scoped, tag = 'input window, operand 7, single buffered']
    #allocation13 [shape = 'u8[3072]{0}', space=vmem, size = 0xc00, scoped, tag = 'input window, operand 8, single buffered']
    #allocation14 [shape = 's32[1]{0}', space=sflag, size = 0x4, scoped, tag = 'scoped memory for autoencoder_forward.1']
    %16 = vsyncpa [#allocation3], 0
    %17 = vsyncpa [#allocation5], 0
    %18 = vsyncpa [#allocation8], 0
    %19 = vsyncpa [#allocation11], 0
    %20 = vsyncpa [#allocation14], 0
    // Predicated region
    $region2: #{autoencoder_forward.1} parent=1 // pred_check
      _
    $region3: #{autoencoder_forward.1} parent=1 // pred_check_branch
      %22 = sbr.rel (0) target = $region5
    $region4: #{autoencoder_forward.1} parent=1 // pred_region
      _
    $region5: #{autoencoder_forward.1} parent=1 // pred_fallthru
      _
    // Predicated region
    $region6: #{autoencoder_forward.1} parent=1 // pred_check
      _
    $region7: #{autoencoder_forward.1} parent=1 // pred_check_branch
      %24 = sbr.rel (0) target = $region9
    $region8: #{autoencoder_forward.1} parent=1 // pred_region
      %s26 = ssub.s32 49152, 49152
      %27 = vsyncadd [#allocation3], %s26
      %s28 = sshll.u32 [#allocation2], 4
      %s29 = int_to_ptr.vmem [resolvable:$true] %s28
      %34 = dma.hbm_to_vmem [thread:$0]  %s1, 49152, %s29, [#allocation3], 512, 512, 32
    $region9: #{autoencoder_forward.1} parent=1 // pred_fallthru
      _
    // Predicated region
    $region10: #{autoencoder_forward.1} parent=1 // pred_check
      _
    $region11: #{autoencoder_forward.1} parent=1 // pred_check_branch
      %36 = sbr.rel (0) target = $region13
    $region12: #{autoencoder_forward.1} parent=1 // pred_region
      %s38 = ssub.s32 128, 128
      %39 = vsyncadd [#allocation5], %s38
      %s41 = sshll.u32 [#allocation4], 4
      %s42 = int_to_ptr.vmem [resolvable:$true] %s41
      %44 = dma.hbm_to_vmem [thread:$0]  %s2, 128, %s42, [#allocation5]
    $region13: #{autoencoder_forward.1} parent=1 // pred_fallthru
      _
    // Predicated region
    $region14: #{autoencoder_forward.1} parent=1 // pred_check
      _
    $region15: #{autoencoder_forward.1} parent=1 // pred_check_branch
      %46 = sbr.rel (0) target = $region17
    $region16: #{autoencoder_forward.1} parent=1 // pred_region
      %s48 = ssub.s32 32768, 32768
      %49 = vsyncadd [#allocation5], %s48
      %s50 = sshll.u32 [#allocation6], 4
      %s51 = int_to_ptr.vmem [resolvable:$true] %s50
      %56 = dma.hbm_to_vmem [thread:$0]  %s3, 32768, %s51, [#allocation5], 256, 256, 16
    $region17: #{autoencoder_forward.1} parent=1 // pred_fallthru
      _
    // Predicated region
    $region18: #{autoencoder_forward.1} parent=1 // pred_check
      _
    $region19: #{autoencoder_forward.1} parent=1 // pred_check_branch
      %58 = sbr.rel (0) target = $region21
    $region20: #{autoencoder_forward.1} parent=1 // pred_region
      %s60 = ssub.s32 64, 64
      %61 = vsyncadd [#allocation8], %s60
      %s63 = sshll.u32 [#allocation7], 4
      %s64 = int_to_ptr.vmem [resolvable:$true] %s63
      %66 = dma.hbm_to_vmem [thread:$0]  %s4, 64, %s64, [#allocation8]
    $region21: #{autoencoder_forward.1} parent=1 // pred_fallthru
      _
    // Predicated region
    $region22: #{autoencoder_forward.1} parent=1 // pred_check
      _
    $region23: #{autoencoder_forward.1} parent=1 // pred_check_branch
      %68 = sbr.rel (0) target = $region25
    $region24: #{autoencoder_forward.1} parent=1 // pred_region
      %s70 = ssub.s32 32768, 32768
      %71 = vsyncadd [#allocation8], %s70
      %s72 = sshll.u32 [#allocation9], 4
      %s73 = int_to_ptr.vmem [resolvable:$true] %s72
      %78 = dma.hbm_to_vmem [thread:$0]  %s5, 32768, %s73, [#allocation8], 512, 512, 32
    $region25: #{autoencoder_forward.1} parent=1 // pred_fallthru
      _
    // Predicated region
    $region26: #{autoencoder_forward.1} parent=1 // pred_check
      _
    $region27: #{autoencoder_forward.1} parent=1 // pred_check_branch
      %80 = sbr.rel (0) target = $region29
    $region28: #{autoencoder_forward.1} parent=1 // pred_region
      %s82 = ssub.s32 128, 128
      %83 = vsyncadd [#allocation11], %s82
      %s85 = sshll.u32 [#allocation10], 4
      %s86 = int_to_ptr.vmem [resolvable:$true] %s85
      %88 = dma.hbm_to_vmem [thread:$0]  %s6, 128, %s86, [#allocation11]
    $region29: #{autoencoder_forward.1} parent=1 // pred_fallthru
      _
    // Predicated region
    $region30: #{autoencoder_forward.1} parent=1 // pred_check
      _
    $region31: #{autoencoder_forward.1} parent=1 // pred_check_branch
      %90 = sbr.rel (0) target = $region33
    $region32: #{autoencoder_forward.1} parent=1 // pred_region
      %s92 = ssub.s32 49152, 49152
      %93 = vsyncadd [#allocation11], %s92
      %s94 = sshll.u32 [#allocation12], 4
      %s95 = int_to_ptr.vmem [resolvable:$true] %s94
      %100 = dma.hbm_to_vmem [thread:$0]  %s7, 49152, %s95, [#allocation11], 384, 384, 24
    $region33: #{autoencoder_forward.1} parent=1 // pred_fallthru
      _
    // Predicated region
    $region34: #{autoencoder_forward.1} parent=1 // pred_check
      _
    $region35: #{autoencoder_forward.1} parent=1 // pred_check_branch
      %102 = sbr.rel (0) target = $region37
    $region36: #{autoencoder_forward.1} parent=1 // pred_region
      %s104 = ssub.s32 96, 96
      %105 = vsyncadd [#allocation14], %s104
      %s107 = sshll.u32 [#allocation13], 4
      %s108 = int_to_ptr.vmem [resolvable:$true] %s107
      %110 = dma.hbm_to_vmem [thread:$0]  %s8, 96, %s108, [#allocation14]
    $region37: #{autoencoder_forward.1} parent=1 // pred_fallthru
      _
    // Predicated region
    $region38: #{autoencoder_forward.1} parent=1 // pred_check
      _
    $region39: #{autoencoder_forward.1} parent=1 // pred_check_branch
      %112 = sbr.rel (0) target = $region41
    $region40: #{autoencoder_forward.1} parent=1 // pred_region
      %113 = dma.done [#allocation3], 49152
    $region41: #{autoencoder_forward.1} parent=1 // pred_fallthru
      _
    // Predicated region
    $region42: #{autoencoder_forward.1} parent=1 // pred_check
      _
    $region43: #{autoencoder_forward.1} parent=1 // pred_check_branch
      %115 = sbr.rel (0) target = $region45
    $region44: #{autoencoder_forward.1} parent=1 // pred_region
      %116 = dma.done [#allocation5], 128
    $region45: #{autoencoder_forward.1} parent=1 // pred_fallthru
      _
    // Predicated region
    $region46: #{autoencoder_forward.1} parent=1 // pred_check
      _
    $region47: #{autoencoder_forward.1} parent=1 // pred_check_branch
      %118 = sbr.rel (0) target = $region49
    $region48: #{autoencoder_forward.1} parent=1 // pred_region
      %119 = dma.done [#allocation5], 32768
    $region49: #{autoencoder_forward.1} parent=1 // pred_fallthru
      _
    // Predicated region
    $region50: #{autoencoder_forward.1} parent=1 // pred_check
      _
    $region51: #{autoencoder_forward.1} parent=1 // pred_check_branch
      %121 = sbr.rel (0) target = $region53
    $region52: #{autoencoder_forward.1} parent=1 // pred_region
      %122 = dma.done [#allocation8], 64
    $region53: #{autoencoder_forward.1} parent=1 // pred_fallthru
      _
    // Predicated region
    $region54: #{autoencoder_forward.1} parent=1 // pred_check
      _
    $region55: #{autoencoder_forward.1} parent=1 // pred_check_branch
      %124 = sbr.rel (0) target = $region57
    $region56: #{autoencoder_forward.1} parent=1 // pred_region
      %125 = dma.done [#allocation8], 32768
    $region57: #{autoencoder_forward.1} parent=1 // pred_fallthru
      _
    // Predicated region
    $region58: #{autoencoder_forward.1} parent=1 // pred_check
      _
    $region59: #{autoencoder_forward.1} parent=1 // pred_check_branch
      %127 = sbr.rel (0) target = $region61
    $region60: #{autoencoder_forward.1} parent=1 // pred_region
      %128 = dma.done [#allocation11], 128
    $region61: #{autoencoder_forward.1} parent=1 // pred_fallthru
      _
    // Predicated region
    $region62: #{autoencoder_forward.1} parent=1 // pred_check
      _
    $region63: #{autoencoder_forward.1} parent=1 // pred_check_branch
      %130 = sbr.rel (0) target = $region65
    $region64: #{autoencoder_forward.1} parent=1 // pred_region
      %131 = dma.done [#allocation11], 49152
    $region65: #{autoencoder_forward.1} parent=1 // pred_fallthru
      _
    // Predicated region
    $region66: #{autoencoder_forward.1} parent=1 // pred_check
      _
    $region67: #{autoencoder_forward.1} parent=1 // pred_check_branch
      %133 = sbr.rel (0) target = $region69
    $region68: #{autoencoder_forward.1} parent=1 // pred_region
      %134 = dma.done [#allocation14], 96
    $region69: #{autoencoder_forward.1} parent=1 // pred_fallthru
      _
    %v135 = vld [vmem:[%s0] sm:$0xff]
    %v136 = vld [vmem:[%s0 + $0x8] sm:$0xff]
    %v137 = vld [vmem:[%s0 + $0x10] sm:$0xff]
    %v138 = vld [vmem:[%s0 + $0x18] sm:$0xff]
    %v139 = vld [vmem:[%s0 + $0x20] sm:$0xff]
    %v140 = vld [vmem:[%s0 + $0x28] sm:$0xff]
    %v141 = vpack.c.bf16 %v135, %v135
    %v142 = vpack.c.bf16 %v136, %v136
    %v143 = vpack.c.bf16 %v137, %v137
    %v144 = vpack.c.bf16 %v138, %v138
    %v145 = vpack.c.bf16 %v139, %v139
    %v146 = vpack.c.bf16 %v140, %v140
    %v147 = vld [vmem:[#allocation2] sm:$0xff]
    %v148 = vld [vmem:[#allocation2 + $0x8] sm:$0xff]
    %v149 = vld [vmem:[#allocation2 + $0x10] sm:$0xff]
    %v150 = vld [vmem:[#allocation2 + $0x18] sm:$0xff]
    %v151 = vld [vmem:[#allocation2 + $0x20] sm:$0xff]
    %v152 = vld [vmem:[#allocation2 + $0x28] sm:$0xff]
    %v153 = vld [vmem:[#allocation2 + $0x30] sm:$0xff]
    %v154 = vld [vmem:[#allocation2 + $0x38] sm:$0xff]
    %v155 = vld [vmem:[#allocation2 + $0x40] sm:$0xff]
    %v156 = vld [vmem:[#allocation2 + $0x48] sm:$0xff]
    %v157 = vld [vmem:[#allocation2 + $0x50] sm:$0xff]
    %v158 = vld [vmem:[#allocation2 + $0x58] sm:$0xff]
    %v159 = vld [vmem:[#allocation2 + $0x60] sm:$0xff]
    %v160 = vld [vmem:[#allocation2 + $0x68] sm:$0xff]
    %v161 = vld [vmem:[#allocation2 + $0x70] sm:$0xff]
    %v162 = vld [vmem:[#allocation2 + $0x78] sm:$0xff]
    %v163 = vld [vmem:[#allocation2 + $0x80] sm:$0xff]
    %v164 = vld [vmem:[#allocation2 + $0x88] sm:$0xff]
    %v165 = vld [vmem:[#allocation2 + $0x90] sm:$0xff]
    %v166 = vld [vmem:[#allocation2 + $0x98] sm:$0xff]
    %v167 = vld [vmem:[#allocation2 + $0xa0] sm:$0xff]
    %v168 = vld [vmem:[#allocation2 + $0xa8] sm:$0xff]
    %v169 = vld [vmem:[#allocation2 + $0xb0] sm:$0xff]
    %v170 = vld [vmem:[#allocation2 + $0xb8] sm:$0xff]
    %v171 = vld [vmem:[#allocation2 + $0xc0] sm:$0xff]
    %v172 = vld [vmem:[#allocation2 + $0xc8] sm:$0xff]
    %v173 = vld [vmem:[#allocation2 + $0xd0] sm:$0xff]
    %v174 = vld [vmem:[#allocation2 + $0xd8] sm:$0xff]
    %v175 = vld [vmem:[#allocation2 + $0xe0] sm:$0xff]
    %v176 = vld [vmem:[#allocation2 + $0xe8] sm:$0xff]
    %v177 = vld [vmem:[#allocation2 + $0xf0] sm:$0xff]
    %v178 = vld [vmem:[#allocation2 + $0xf8] sm:$0xff]
    %v179 = vld [vmem:[#allocation2 + $0x100] sm:$0xff]
    %v180 = vld [vmem:[#allocation2 + $0x108] sm:$0xff]
    %v181 = vld [vmem:[#allocation2 + $0x110] sm:$0xff]
    %v182 = vld [vmem:[#allocation2 + $0x118] sm:$0xff]
    %v183 = vld [vmem:[#allocation2 + $0x120] sm:$0xff]
    %v184 = vld [vmem:[#allocation2 + $0x128] sm:$0xff]
    %v185 = vld [vmem:[#allocation2 + $0x130] sm:$0xff]
    %v186 = vld [vmem:[#allocation2 + $0x138] sm:$0xff]
    %v187 = vld [vmem:[#allocation2 + $0x140] sm:$0xff]
    %v188 = vld [vmem:[#allocation2 + $0x148] sm:$0xff]
    %v189 = vld [vmem:[#allocation2 + $0x150] sm:$0xff]
    %v190 = vld [vmem:[#allocation2 + $0x158] sm:$0xff]
    %v191 = vld [vmem:[#allocation2 + $0x160] sm:$0xff]
    %v192 = vld [vmem:[#allocation2 + $0x168] sm:$0xff]
    %v193 = vld [vmem:[#allocation2 + $0x170] sm:$0xff]
    %v194 = vld [vmem:[#allocation2 + $0x178] sm:$0xff]
    %v195 = vld [vmem:[#allocation2 + $0x180] sm:$0xff]
    %v196 = vld [vmem:[#allocation2 + $0x188] sm:$0xff]
    %v197 = vld [vmem:[#allocation2 + $0x190] sm:$0xff]
    %v198 = vld [vmem:[#allocation2 + $0x198] sm:$0xff]
    %v199 = vld [vmem:[#allocation2 + $0x1a0] sm:$0xff]
    %v200 = vld [vmem:[#allocation2 + $0x1a8] sm:$0xff]
    %v201 = vld [vmem:[#allocation2 + $0x1b0] sm:$0xff]
    %v202 = vld [vmem:[#allocation2 + $0x1b8] sm:$0xff]
    %v203 = vld [vmem:[#allocation2 + $0x1c0] sm:$0xff]
    %v204 = vld [vmem:[#allocation2 + $0x1c8] sm:$0xff]
    %v205 = vld [vmem:[#allocation2 + $0x1d0] sm:$0xff]
    %v206 = vld [vmem:[#allocation2 + $0x1d8] sm:$0xff]
    %v207 = vld [vmem:[#allocation2 + $0x1e0] sm:$0xff]
    %v208 = vld [vmem:[#allocation2 + $0x1e8] sm:$0xff]
    %v209 = vld [vmem:[#allocation2 + $0x1f0] sm:$0xff]
    %v210 = vld [vmem:[#allocation2 + $0x1f8] sm:$0xff]
    %v211 = vld [vmem:[#allocation2 + $0x200] sm:$0xff]
    %v212 = vld [vmem:[#allocation2 + $0x208] sm:$0xff]
    %v213 = vld [vmem:[#allocation2 + $0x210] sm:$0xff]
    %v214 = vld [vmem:[#allocation2 + $0x218] sm:$0xff]
    %v215 = vld [vmem:[#allocation2 + $0x220] sm:$0xff]
    %v216 = vld [vmem:[#allocation2 + $0x228] sm:$0xff]
    %v217 = vld [vmem:[#allocation2 + $0x230] sm:$0xff]
    %v218 = vld [vmem:[#allocation2 + $0x238] sm:$0xff]
    %v219 = vld [vmem:[#allocation2 + $0x240] sm:$0xff]
    %v220 = vld [vmem:[#allocation2 + $0x248] sm:$0xff]
    %v221 = vld [vmem:[#allocation2 + $0x250] sm:$0xff]
    %v222 = vld [vmem:[#allocation2 + $0x258] sm:$0xff]
    %v223 = vld [vmem:[#allocation2 + $0x260] sm:$0xff]
    %v224 = vld [vmem:[#allocation2 + $0x268] sm:$0xff]
    %v225 = vld [vmem:[#allocation2 + $0x270] sm:$0xff]
    %v226 = vld [vmem:[#allocation2 + $0x278] sm:$0xff]
    %v227 = vld [vmem:[#allocation2 + $0x280] sm:$0xff]
    %v228 = vld [vmem:[#allocation2 + $0x288] sm:$0xff]
    %v229 = vld [vmem:[#allocation2 + $0x290] sm:$0xff]
    %v230 = vld [vmem:[#allocation2 + $0x298] sm:$0xff]
    %v231 = vld [vmem:[#allocation2 + $0x2a0] sm:$0xff]
    %v232 = vld [vmem:[#allocation2 + $0x2a8] sm:$0xff]
    %v233 = vld [vmem:[#allocation2 + $0x2b0] sm:$0xff]
    %v234 = vld [vmem:[#allocation2 + $0x2b8] sm:$0xff]
    %v235 = vld [vmem:[#allocation2 + $0x2c0] sm:$0xff]
    %v236 = vld [vmem:[#allocation2 + $0x2c8] sm:$0xff]
    %v237 = vld [vmem:[#allocation2 + $0x2d0] sm:$0xff]
    %v238 = vld [vmem:[#allocation2 + $0x2d8] sm:$0xff]
    %v239 = vld [vmem:[#allocation2 + $0x2e0] sm:$0xff]
    %v240 = vld [vmem:[#allocation2 + $0x2e8] sm:$0xff]
    %v241 = vld [vmem:[#allocation2 + $0x2f0] sm:$0xff]
    %v242 = vld [vmem:[#allocation2 + $0x2f8] sm:$0xff]
    %v243 = vld [vmem:[#allocation2 + $0x300] sm:$0xff]
    %v244 = vld [vmem:[#allocation2 + $0x308] sm:$0xff]
    %v245 = vld [vmem:[#allocation2 + $0x310] sm:$0xff]
    %v246 = vld [vmem:[#allocation2 + $0x318] sm:$0xff]
    %v247 = vld [vmem:[#allocation2 + $0x320] sm:$0xff]
    %v248 = vld [vmem:[#allocation2 + $0x328] sm:$0xff]
    %v249 = vld [vmem:[#allocation2 + $0x330] sm:$0xff]
    %v250 = vld [vmem:[#allocation2 + $0x338] sm:$0xff]
    %v251 = vld [vmem:[#allocation2 + $0x340] sm:$0xff]
    %v252 = vld [vmem:[#allocation2 + $0x348] sm:$0xff]
    %v253 = vld [vmem:[#allocation2 + $0x350] sm:$0xff]
    %v254 = vld [vmem:[#allocation2 + $0x358] sm:$0xff]
    %v255 = vld [vmem:[#allocation2 + $0x360] sm:$0xff]
    %v256 = vld [vmem:[#allocation2 + $0x368] sm:$0xff]
    %v257 = vld [vmem:[#allocation2 + $0x370] sm:$0xff]
    %v258 = vld [vmem:[#allocation2 + $0x378] sm:$0xff]
    %v259 = vld [vmem:[#allocation2 + $0x380] sm:$0xff]
    %v260 = vld [vmem:[#allocation2 + $0x388] sm:$0xff]
    %v261 = vld [vmem:[#allocation2 + $0x390] sm:$0xff]
    %v262 = vld [vmem:[#allocation2 + $0x398] sm:$0xff]
    %v263 = vld [vmem:[#allocation2 + $0x3a0] sm:$0xff]
    %v264 = vld [vmem:[#allocation2 + $0x3a8] sm:$0xff]
    %v265 = vld [vmem:[#allocation2 + $0x3b0] sm:$0xff]
    %v266 = vld [vmem:[#allocation2 + $0x3b8] sm:$0xff]
    %v267 = vld [vmem:[#allocation2 + $0x3c0] sm:$0xff]
    %v268 = vld [vmem:[#allocation2 + $0x3c8] sm:$0xff]
    %v269 = vld [vmem:[#allocation2 + $0x3d0] sm:$0xff]
    %v270 = vld [vmem:[#allocation2 + $0x3d8] sm:$0xff]
    %v271 = vld [vmem:[#allocation2 + $0x3e0] sm:$0xff]
    %v272 = vld [vmem:[#allocation2 + $0x3e8] sm:$0xff]
    %v273 = vld [vmem:[#allocation2 + $0x3f0] sm:$0xff]
    %v274 = vld [vmem:[#allocation2 + $0x3f8] sm:$0xff]
    %v275 = vld [vmem:[#allocation2 + $0x400] sm:$0xff]
    %v276 = vld [vmem:[#allocation2 + $0x408] sm:$0xff]
    %v277 = vld [vmem:[#allocation2 + $0x410] sm:$0xff]
    %v278 = vld [vmem:[#allocation2 + $0x418] sm:$0xff]
    %v279 = vld [vmem:[#allocation2 + $0x420] sm:$0xff]
    %v280 = vld [vmem:[#allocation2 + $0x428] sm:$0xff]
    %v281 = vld [vmem:[#allocation2 + $0x430] sm:$0xff]
    %v282 = vld [vmem:[#allocation2 + $0x438] sm:$0xff]
    %v283 = vld [vmem:[#allocation2 + $0x440] sm:$0xff]
    %v284 = vld [vmem:[#allocation2 + $0x448] sm:$0xff]
    %v285 = vld [vmem:[#allocation2 + $0x450] sm:$0xff]
    %v286 = vld [vmem:[#allocation2 + $0x458] sm:$0xff]
    %v287 = vld [vmem:[#allocation2 + $0x460] sm:$0xff]
    %v288 = vld [vmem:[#allocation2 + $0x468] sm:$0xff]
    %v289 = vld [vmem:[#allocation2 + $0x470] sm:$0xff]
    %v290 = vld [vmem:[#allocation2 + $0x478] sm:$0xff]
    %v291 = vld [vmem:[#allocation2 + $0x480] sm:$0xff]
    %v292 = vld [vmem:[#allocation2 + $0x488] sm:$0xff]
    %v293 = vld [vmem:[#allocation2 + $0x490] sm:$0xff]
    %v294 = vld [vmem:[#allocation2 + $0x498] sm:$0xff]
    %v295 = vld [vmem:[#allocation2 + $0x4a0] sm:$0xff]
    %v296 = vld [vmem:[#allocation2 + $0x4a8] sm:$0xff]
    %v297 = vld [vmem:[#allocation2 + $0x4b0] sm:$0xff]
    %v298 = vld [vmem:[#allocation2 + $0x4b8] sm:$0xff]
    %v299 = vld [vmem:[#allocation2 + $0x4c0] sm:$0xff]
    %v300 = vld [vmem:[#allocation2 + $0x4c8] sm:$0xff]
    %v301 = vld [vmem:[#allocation2 + $0x4d0] sm:$0xff]
    %v302 = vld [vmem:[#allocation2 + $0x4d8] sm:$0xff]
    %v303 = vld [vmem:[#allocation2 + $0x4e0] sm:$0xff]
    %v304 = vld [vmem:[#allocation2 + $0x4e8] sm:$0xff]
    %v305 = vld [vmem:[#allocation2 + $0x4f0] sm:$0xff]
    %v306 = vld [vmem:[#allocation2 + $0x4f8] sm:$0xff]
    %v307 = vld [vmem:[#allocation2 + $0x500] sm:$0xff]
    %v308 = vld [vmem:[#allocation2 + $0x508] sm:$0xff]
    %v309 = vld [vmem:[#allocation2 + $0x510] sm:$0xff]
    %v310 = vld [vmem:[#allocation2 + $0x518] sm:$0xff]
    %v311 = vld [vmem:[#allocation2 + $0x520] sm:$0xff]
    %v312 = vld [vmem:[#allocation2 + $0x528] sm:$0xff]
    %v313 = vld [vmem:[#allocation2 + $0x530] sm:$0xff]
    %v314 = vld [vmem:[#allocation2 + $0x538] sm:$0xff]
    %v315 = vld [vmem:[#allocation2 + $0x540] sm:$0xff]
    %v316 = vld [vmem:[#allocation2 + $0x548] sm:$0xff]
    %v317 = vld [vmem:[#allocation2 + $0x550] sm:$0xff]
    %v318 = vld [vmem:[#allocation2 + $0x558] sm:$0xff]
    %v319 = vld [vmem:[#allocation2 + $0x560] sm:$0xff]
    %v320 = vld [vmem:[#allocation2 + $0x568] sm:$0xff]
    %v321 = vld [vmem:[#allocation2 + $0x570] sm:$0xff]
    %v322 = vld [vmem:[#allocation2 + $0x578] sm:$0xff]
    %v323 = vld [vmem:[#allocation2 + $0x580] sm:$0xff]
    %v324 = vld [vmem:[#allocation2 + $0x588] sm:$0xff]
    %v325 = vld [vmem:[#allocation2 + $0x590] sm:$0xff]
    %v326 = vld [vmem:[#allocation2 + $0x598] sm:$0xff]
    %v327 = vld [vmem:[#allocation2 + $0x5a0] sm:$0xff]
    %v328 = vld [vmem:[#allocation2 + $0x5a8] sm:$0xff]
    %v329 = vld [vmem:[#allocation2 + $0x5b0] sm:$0xff]
    %v330 = vld [vmem:[#allocation2 + $0x5b8] sm:$0xff]
    %v331 = vld [vmem:[#allocation2 + $0x5c0] sm:$0xff]
    %v332 = vld [vmem:[#allocation2 + $0x5c8] sm:$0xff]
    %v333 = vld [vmem:[#allocation2 + $0x5d0] sm:$0xff]
    %v334 = vld [vmem:[#allocation2 + $0x5d8] sm:$0xff]
    %v335 = vld [vmem:[#allocation2 + $0x5e0] sm:$0xff]
    %v336 = vld [vmem:[#allocation2 + $0x5e8] sm:$0xff]
    %v337 = vld [vmem:[#allocation2 + $0x5f0] sm:$0xff]
    %v338 = vld [vmem:[#allocation2 + $0x5f8] sm:$0xff]
    %v339 = vld [vmem:[#allocation2 + $0x600] sm:$0xff]
    %v340 = vld [vmem:[#allocation2 + $0x608] sm:$0xff]
    %v341 = vld [vmem:[#allocation2 + $0x610] sm:$0xff]
    %v342 = vld [vmem:[#allocation2 + $0x618] sm:$0xff]
    %v343 = vld [vmem:[#allocation2 + $0x620] sm:$0xff]
    %v344 = vld [vmem:[#allocation2 + $0x628] sm:$0xff]
    %v345 = vld [vmem:[#allocation2 + $0x630] sm:$0xff]
    %v346 = vld [vmem:[#allocation2 + $0x638] sm:$0xff]
    %v347 = vld [vmem:[#allocation2 + $0x640] sm:$0xff]
    %v348 = vld [vmem:[#allocation2 + $0x648] sm:$0xff]
    %v349 = vld [vmem:[#allocation2 + $0x650] sm:$0xff]
    %v350 = vld [vmem:[#allocation2 + $0x658] sm:$0xff]
    %v351 = vld [vmem:[#allocation2 + $0x660] sm:$0xff]
    %v352 = vld [vmem:[#allocation2 + $0x668] sm:$0xff]
    %v353 = vld [vmem:[#allocation2 + $0x670] sm:$0xff]
    %v354 = vld [vmem:[#allocation2 + $0x678] sm:$0xff]
    %v355 = vld [vmem:[#allocation2 + $0x680] sm:$0xff]
    %v356 = vld [vmem:[#allocation2 + $0x688] sm:$0xff]
    %v357 = vld [vmem:[#allocation2 + $0x690] sm:$0xff]
    %v358 = vld [vmem:[#allocation2 + $0x698] sm:$0xff]
    %v359 = vld [vmem:[#allocation2 + $0x6a0] sm:$0xff]
    %v360 = vld [vmem:[#allocation2 + $0x6a8] sm:$0xff]
    %v361 = vld [vmem:[#allocation2 + $0x6b0] sm:$0xff]
    %v362 = vld [vmem:[#allocation2 + $0x6b8] sm:$0xff]
    %v363 = vld [vmem:[#allocation2 + $0x6c0] sm:$0xff]
    %v364 = vld [vmem:[#allocation2 + $0x6c8] sm:$0xff]
    %v365 = vld [vmem:[#allocation2 + $0x6d0] sm:$0xff]
    %v366 = vld [vmem:[#allocation2 + $0x6d8] sm:$0xff]
    %v367 = vld [vmem:[#allocation2 + $0x6e0] sm:$0xff]
    %v368 = vld [vmem:[#allocation2 + $0x6e8] sm:$0xff]
    %v369 = vld [vmem:[#allocation2 + $0x6f0] sm:$0xff]
    %v370 = vld [vmem:[#allocation2 + $0x6f8] sm:$0xff]
    %v371 = vld [vmem:[#allocation2 + $0x700] sm:$0xff]
    %v372 = vld [vmem:[#allocation2 + $0x708] sm:$0xff]
    %v373 = vld [vmem:[#allocation2 + $0x710] sm:$0xff]
    %v374 = vld [vmem:[#allocation2 + $0x718] sm:$0xff]
    %v375 = vld [vmem:[#allocation2 + $0x720] sm:$0xff]
    %v376 = vld [vmem:[#allocation2 + $0x728] sm:$0xff]
    %v377 = vld [vmem:[#allocation2 + $0x730] sm:$0xff]
    %v378 = vld [vmem:[#allocation2 + $0x738] sm:$0xff]
    %v379 = vld [vmem:[#allocation2 + $0x740] sm:$0xff]
    %v380 = vld [vmem:[#allocation2 + $0x748] sm:$0xff]
    %v381 = vld [vmem:[#allocation2 + $0x750] sm:$0xff]
    %v382 = vld [vmem:[#allocation2 + $0x758] sm:$0xff]
    %v383 = vld [vmem:[#allocation2 + $0x760] sm:$0xff]
    %v384 = vld [vmem:[#allocation2 + $0x768] sm:$0xff]
    %v385 = vld [vmem:[#allocation2 + $0x770] sm:$0xff]
    %v386 = vld [vmem:[#allocation2 + $0x778] sm:$0xff]
    %v387 = vld [vmem:[#allocation2 + $0x780] sm:$0xff]
    %v388 = vld [vmem:[#allocation2 + $0x788] sm:$0xff]
    %v389 = vld [vmem:[#allocation2 + $0x790] sm:$0xff]
    %v390 = vld [vmem:[#allocation2 + $0x798] sm:$0xff]
    %v391 = vld [vmem:[#allocation2 + $0x7a0] sm:$0xff]
    %v392 = vld [vmem:[#allocation2 + $0x7a8] sm:$0xff]
    %v393 = vld [vmem:[#allocation2 + $0x7b0] sm:$0xff]
    %v394 = vld [vmem:[#allocation2 + $0x7b8] sm:$0xff]
    %v395 = vld [vmem:[#allocation2 + $0x7c0] sm:$0xff]
    %v396 = vld [vmem:[#allocation2 + $0x7c8] sm:$0xff]
    %v397 = vld [vmem:[#allocation2 + $0x7d0] sm:$0xff]
    %v398 = vld [vmem:[#allocation2 + $0x7d8] sm:$0xff]
    %v399 = vld [vmem:[#allocation2 + $0x7e0] sm:$0xff]
    %v400 = vld [vmem:[#allocation2 + $0x7e8] sm:$0xff]
    %v401 = vld [vmem:[#allocation2 + $0x7f0] sm:$0xff]
    %v402 = vld [vmem:[#allocation2 + $0x7f8] sm:$0xff]
    %v403 = vld [vmem:[#allocation2 + $0x800] sm:$0xff]
    %v404 = vld [vmem:[#allocation2 + $0x808] sm:$0xff]
    %v405 = vld [vmem:[#allocation2 + $0x810] sm:$0xff]
    %v406 = vld [vmem:[#allocation2 + $0x818] sm:$0xff]
    %v407 = vld [vmem:[#allocation2 + $0x820] sm:$0xff]
    %v408 = vld [vmem:[#allocation2 + $0x828] sm:$0xff]
    %v409 = vld [vmem:[#allocation2 + $0x830] sm:$0xff]
    %v410 = vld [vmem:[#allocation2 + $0x838] sm:$0xff]
    %v411 = vld [vmem:[#allocation2 + $0x840] sm:$0xff]
    %v412 = vld [vmem:[#allocation2 + $0x848] sm:$0xff]
    %v413 = vld [vmem:[#allocation2 + $0x850] sm:$0xff]
    %v414 = vld [vmem:[#allocation2 + $0x858] sm:$0xff]
    %v415 = vld [vmem:[#allocation2 + $0x860] sm:$0xff]
    %v416 = vld [vmem:[#allocation2 + $0x868] sm:$0xff]
    %v417 = vld [vmem:[#allocation2 + $0x870] sm:$0xff]
    %v418 = vld [vmem:[#allocation2 + $0x878] sm:$0xff]
    %v419 = vld [vmem:[#allocation2 + $0x880] sm:$0xff]
    %v420 = vld [vmem:[#allocation2 + $0x888] sm:$0xff]
    %v421 = vld [vmem:[#allocation2 + $0x890] sm:$0xff]
    %v422 = vld [vmem:[#allocation2 + $0x898] sm:$0xff]
    %v423 = vld [vmem:[#allocation2 + $0x8a0] sm:$0xff]
    %v424 = vld [vmem:[#allocation2 + $0x8a8] sm:$0xff]
    %v425 = vld [vmem:[#allocation2 + $0x8b0] sm:$0xff]
    %v426 = vld [vmem:[#allocation2 + $0x8b8] sm:$0xff]
    %v427 = vld [vmem:[#allocation2 + $0x8c0] sm:$0xff]
    %v428 = vld [vmem:[#allocation2 + $0x8c8] sm:$0xff]
    %v429 = vld [vmem:[#allocation2 + $0x8d0] sm:$0xff]
    %v430 = vld [vmem:[#allocation2 + $0x8d8] sm:$0xff]
    %v431 = vld [vmem:[#allocation2 + $0x8e0] sm:$0xff]
    %v432 = vld [vmem:[#allocation2 + $0x8e8] sm:$0xff]
    %v433 = vld [vmem:[#allocation2 + $0x8f0] sm:$0xff]
    %v434 = vld [vmem:[#allocation2 + $0x8f8] sm:$0xff]
    %v435 = vld [vmem:[#allocation2 + $0x900] sm:$0xff]
    %v436 = vld [vmem:[#allocation2 + $0x908] sm:$0xff]
    %v437 = vld [vmem:[#allocation2 + $0x910] sm:$0xff]
    %v438 = vld [vmem:[#allocation2 + $0x918] sm:$0xff]
    %v439 = vld [vmem:[#allocation2 + $0x920] sm:$0xff]
    %v440 = vld [vmem:[#allocation2 + $0x928] sm:$0xff]
    %v441 = vld [vmem:[#allocation2 + $0x930] sm:$0xff]
    %v442 = vld [vmem:[#allocation2 + $0x938] sm:$0xff]
    %v443 = vld [vmem:[#allocation2 + $0x940] sm:$0xff]
    %v444 = vld [vmem:[#allocation2 + $0x948] sm:$0xff]
    %v445 = vld [vmem:[#allocation2 + $0x950] sm:$0xff]
    %v446 = vld [vmem:[#allocation2 + $0x958] sm:$0xff]
    %v447 = vld [vmem:[#allocation2 + $0x960] sm:$0xff]
    %v448 = vld [vmem:[#allocation2 + $0x968] sm:$0xff]
    %v449 = vld [vmem:[#allocation2 + $0x970] sm:$0xff]
    %v450 = vld [vmem:[#allocation2 + $0x978] sm:$0xff]
    %v451 = vld [vmem:[#allocation2 + $0x980] sm:$0xff]
    %v452 = vld [vmem:[#allocation2 + $0x988] sm:$0xff]
    %v453 = vld [vmem:[#allocation2 + $0x990] sm:$0xff]
    %v454 = vld [vmem:[#allocation2 + $0x998] sm:$0xff]
    %v455 = vld [vmem:[#allocation2 + $0x9a0] sm:$0xff]
    %v456 = vld [vmem:[#allocation2 + $0x9a8] sm:$0xff]
    %v457 = vld [vmem:[#allocation2 + $0x9b0] sm:$0xff]
    %v458 = vld [vmem:[#allocation2 + $0x9b8] sm:$0xff]
    %v459 = vld [vmem:[#allocation2 + $0x9c0] sm:$0xff]
    %v460 = vld [vmem:[#allocation2 + $0x9c8] sm:$0xff]
    %v461 = vld [vmem:[#allocation2 + $0x9d0] sm:$0xff]
    %v462 = vld [vmem:[#allocation2 + $0x9d8] sm:$0xff]
    %v463 = vld [vmem:[#allocation2 + $0x9e0] sm:$0xff]
    %v464 = vld [vmem:[#allocation2 + $0x9e8] sm:$0xff]
    %v465 = vld [vmem:[#allocation2 + $0x9f0] sm:$0xff]
    %v466 = vld [vmem:[#allocation2 + $0x9f8] sm:$0xff]
    %v467 = vld [vmem:[#allocation2 + $0xa00] sm:$0xff]
    %v468 = vld [vmem:[#allocation2 + $0xa08] sm:$0xff]
    %v469 = vld [vmem:[#allocation2 + $0xa10] sm:$0xff]
    %v470 = vld [vmem:[#allocation2 + $0xa18] sm:$0xff]
    %v471 = vld [vmem:[#allocation2 + $0xa20] sm:$0xff]
    %v472 = vld [vmem:[#allocation2 + $0xa28] sm:$0xff]
    %v473 = vld [vmem:[#allocation2 + $0xa30] sm:$0xff]
    %v474 = vld [vmem:[#allocation2 + $0xa38] sm:$0xff]
    %v475 = vld [vmem:[#allocation2 + $0xa40] sm:$0xff]
    %v476 = vld [vmem:[#allocation2 + $0xa48] sm:$0xff]
    %v477 = vld [vmem:[#allocation2 + $0xa50] sm:$0xff]
    %v478 = vld [vmem:[#allocation2 + $0xa58] sm:$0xff]
    %v479 = vld [vmem:[#allocation2 + $0xa60] sm:$0xff]
    %v480 = vld [vmem:[#allocation2 + $0xa68] sm:$0xff]
    %v481 = vld [vmem:[#allocation2 + $0xa70] sm:$0xff]
    %v482 = vld [vmem:[#allocation2 + $0xa78] sm:$0xff]
    %v483 = vld [vmem:[#allocation2 + $0xa80] sm:$0xff]
    %v484 = vld [vmem:[#allocation2 + $0xa88] sm:$0xff]
    %v485 = vld [vmem:[#allocation2 + $0xa90] sm:$0xff]
    %v486 = vld [vmem:[#allocation2 + $0xa98] sm:$0xff]
    %v487 = vld [vmem:[#allocation2 + $0xaa0] sm:$0xff]
    %v488 = vld [vmem:[#allocation2 + $0xaa8] sm:$0xff]
    %v489 = vld [vmem:[#allocation2 + $0xab0] sm:$0xff]
    %v490 = vld [vmem:[#allocation2 + $0xab8] sm:$0xff]
    %v491 = vld [vmem:[#allocation2 + $0xac0] sm:$0xff]
    %v492 = vld [vmem:[#allocation2 + $0xac8] sm:$0xff]
    %v493 = vld [vmem:[#allocation2 + $0xad0] sm:$0xff]
    %v494 = vld [vmem:[#allocation2 + $0xad8] sm:$0xff]
    %v495 = vld [vmem:[#allocation2 + $0xae0] sm:$0xff]
    %v496 = vld [vmem:[#allocation2 + $0xae8] sm:$0xff]
    %v497 = vld [vmem:[#allocation2 + $0xaf0] sm:$0xff]
    %v498 = vld [vmem:[#allocation2 + $0xaf8] sm:$0xff]
    %v499 = vld [vmem:[#allocation2 + $0xb00] sm:$0xff]
    %v500 = vld [vmem:[#allocation2 + $0xb08] sm:$0xff]
    %v501 = vld [vmem:[#allocation2 + $0xb10] sm:$0xff]
    %v502 = vld [vmem:[#allocation2 + $0xb18] sm:$0xff]
    %v503 = vld [vmem:[#allocation2 + $0xb20] sm:$0xff]
    %v504 = vld [vmem:[#allocation2 + $0xb28] sm:$0xff]
    %v505 = vld [vmem:[#allocation2 + $0xb30] sm:$0xff]
    %v506 = vld [vmem:[#allocation2 + $0xb38] sm:$0xff]
    %v507 = vld [vmem:[#allocation2 + $0xb40] sm:$0xff]
    %v508 = vld [vmem:[#allocation2 + $0xb48] sm:$0xff]
    %v509 = vld [vmem:[#allocation2 + $0xb50] sm:$0xff]
    %v510 = vld [vmem:[#allocation2 + $0xb58] sm:$0xff]
    %v511 = vld [vmem:[#allocation2 + $0xb60] sm:$0xff]
    %v512 = vld [vmem:[#allocation2 + $0xb68] sm:$0xff]
    %v513 = vld [vmem:[#allocation2 + $0xb70] sm:$0xff]
    %v514 = vld [vmem:[#allocation2 + $0xb78] sm:$0xff]
    %v515 = vld [vmem:[#allocation2 + $0xb80] sm:$0xff]
    %v516 = vld [vmem:[#allocation2 + $0xb88] sm:$0xff]
    %v517 = vld [vmem:[#allocation2 + $0xb90] sm:$0xff]
    %v518 = vld [vmem:[#allocation2 + $0xb98] sm:$0xff]
    %v519 = vld [vmem:[#allocation2 + $0xba0] sm:$0xff]
    %v520 = vld [vmem:[#allocation2 + $0xba8] sm:$0xff]
    %v521 = vld [vmem:[#allocation2 + $0xbb0] sm:$0xff]
    %v522 = vld [vmem:[#allocation2 + $0xbb8] sm:$0xff]
    %v523 = vld [vmem:[#allocation2 + $0xbc0] sm:$0xff]
    %v524 = vld [vmem:[#allocation2 + $0xbc8] sm:$0xff]
    %v525 = vld [vmem:[#allocation2 + $0xbd0] sm:$0xff]
    %v526 = vld [vmem:[#allocation2 + $0xbd8] sm:$0xff]
    %v527 = vld [vmem:[#allocation2 + $0xbe0] sm:$0xff]
    %v528 = vld [vmem:[#allocation2 + $0xbe8] sm:$0xff]
    %v529 = vld [vmem:[#allocation2 + $0xbf0] sm:$0xff]
    %v530 = vld [vmem:[#allocation2 + $0xbf8] sm:$0xff]
    %v531 = vld [vmem:[#allocation4] sm:$0xff]
    %v533 = vlaneseq
    %v534 = vshrl.u32 %v533, 7
    %v535 = vsub.s32 0, %v534
    %v536 = vrot.slane %v531, %v535
    %v537 = vlaneseq
    %v538 = vshrl.u32 %v537, 7
    %v539 = vsub.s32 1, %v538
    %v540 = vrot.slane %v531, %v539
    %v541 = vlaneseq
    %v542 = vshrl.u32 %v541, 7
    %v543 = vsub.s32 2, %v542
    %v544 = vrot.slane %v531, %v543
    %v545 = vlaneseq
    %v546 = vshrl.u32 %v545, 7
    %v547 = vsub.s32 3, %v546
    %v548 = vrot.slane %v531, %v547
    %v549 = vlaneseq
    %v550 = vshrl.u32 %v549, 7
    %v551 = vsub.s32 4, %v550
    %v552 = vrot.slane %v531, %v551
    %v553 = vlaneseq
    %v554 = vshrl.u32 %v553, 7
    %v555 = vsub.s32 5, %v554
    %v556 = vrot.slane %v531, %v555
    %v557 = vlaneseq
    %v558 = vshrl.u32 %v557, 7
    %v559 = vsub.s32 6, %v558
    %v560 = vrot.slane %v531, %v559
    %v561 = vlaneseq
    %v562 = vshrl.u32 %v561, 7
    %v563 = vsub.s32 7, %v562
    %v564 = vrot.slane %v531, %v563
    %v957 = vunpack.c.l.b16 %v147
    %v958 = vunpack.c.h.b16 %v147
    %v959 = vunpack.c.l.b16 %v148
    %v960 = vunpack.c.h.b16 %v148
    %v961 = vunpack.c.l.b16 %v149
    %v962 = vunpack.c.h.b16 %v149
    %v963 = vunpack.c.l.b16 %v150
    %v964 = vunpack.c.h.b16 %v150
    %v965 = vunpack.c.l.b16 %v151
    %v966 = vunpack.c.h.b16 %v151
    %v967 = vunpack.c.l.b16 %v152
    %v968 = vunpack.c.h.b16 %v152
    %v969 = vunpack.c.l.b16 %v153
    %v970 = vunpack.c.h.b16 %v153
    %v971 = vunpack.c.l.b16 %v154
    %v972 = vunpack.c.h.b16 %v154
    %v973 = vunpack.c.l.b16 %v155
    %v974 = vunpack.c.h.b16 %v155
    %v975 = vunpack.c.l.b16 %v156
    %v976 = vunpack.c.h.b16 %v156
    %v977 = vunpack.c.l.b16 %v157
    %v978 = vunpack.c.h.b16 %v157
    %v979 = vunpack.c.l.b16 %v158
    %v980 = vunpack.c.h.b16 %v158
    %v981 = vunpack.c.l.b16 %v159
    %v982 = vunpack.c.h.b16 %v159
    %v983 = vunpack.c.l.b16 %v160
    %v984 = vunpack.c.h.b16 %v160
    %v985 = vunpack.c.l.b16 %v161
    %v986 = vunpack.c.h.b16 %v161
    %v987 = vunpack.c.l.b16 %v162
    %v988 = vunpack.c.h.b16 %v162
    %v989 = vunpack.c.l.b16 %v163
    %v990 = vunpack.c.h.b16 %v163
    %v991 = vunpack.c.l.b16 %v164
    %v992 = vunpack.c.h.b16 %v164
    %v993 = vunpack.c.l.b16 %v165
    %v994 = vunpack.c.h.b16 %v165
    %v995 = vunpack.c.l.b16 %v166
    %v996 = vunpack.c.h.b16 %v166
    %v997 = vunpack.c.l.b16 %v167
    %v998 = vunpack.c.h.b16 %v167
    %v999 = vunpack.c.l.b16 %v168
    %v1000 = vunpack.c.h.b16 %v168
    %v1001 = vunpack.c.l.b16 %v169
    %v1002 = vunpack.c.h.b16 %v169
    %v1003 = vunpack.c.l.b16 %v170
    %v1004 = vunpack.c.h.b16 %v170
    %v1005 = vunpack.c.l.b16 %v171
    %v1006 = vunpack.c.h.b16 %v171
    %v1007 = vunpack.c.l.b16 %v172
    %v1008 = vunpack.c.h.b16 %v172
    %v1009 = vunpack.c.l.b16 %v173
    %v1010 = vunpack.c.h.b16 %v173
    %v1011 = vunpack.c.l.b16 %v174
    %v1012 = vunpack.c.h.b16 %v174
    %v1013 = vunpack.c.l.b16 %v175
    %v1014 = vunpack.c.h.b16 %v175
    %v1015 = vunpack.c.l.b16 %v176
    %v1016 = vunpack.c.h.b16 %v176
    %v1017 = vunpack.c.l.b16 %v177
    %v1018 = vunpack.c.h.b16 %v177
    %v1019 = vunpack.c.l.b16 %v178
    %v1020 = vunpack.c.h.b16 %v178
    %v1021 = vunpack.c.l.b16 %v179
    %v1022 = vunpack.c.h.b16 %v179
    %v1023 = vunpack.c.l.b16 %v180
    %v1024 = vunpack.c.h.b16 %v180
    %v1025 = vunpack.c.l.b16 %v181
    %v1026 = vunpack.c.h.b16 %v181
    %v1027 = vunpack.c.l.b16 %v182
    %v1028 = vunpack.c.h.b16 %v182
    %v1029 = vunpack.c.l.b16 %v183
    %v1030 = vunpack.c.h.b16 %v183
    %v1031 = vunpack.c.l.b16 %v184
    %v1032 = vunpack.c.h.b16 %v184
    %v1033 = vunpack.c.l.b16 %v185
    %v1034 = vunpack.c.h.b16 %v185
    %v1035 = vunpack.c.l.b16 %v186
    %v1036 = vunpack.c.h.b16 %v186
    %v1037 = vunpack.c.l.b16 %v187
    %v1038 = vunpack.c.h.b16 %v187
    %v1039 = vunpack.c.l.b16 %v188
    %v1040 = vunpack.c.h.b16 %v188
    %v1041 = vunpack.c.l.b16 %v189
    %v1042 = vunpack.c.h.b16 %v189
    %v1043 = vunpack.c.l.b16 %v190
    %v1044 = vunpack.c.h.b16 %v190
    %v1045 = vunpack.c.l.b16 %v191
    %v1046 = vunpack.c.h.b16 %v191
    %v1047 = vunpack.c.l.b16 %v192
    %v1048 = vunpack.c.h.b16 %v192
    %v1049 = vunpack.c.l.b16 %v193
    %v1050 = vunpack.c.h.b16 %v193
    %v1051 = vunpack.c.l.b16 %v194
    %v1052 = vunpack.c.h.b16 %v194
    %v1053 = vunpack.c.l.b16 %v195
    %v1054 = vunpack.c.h.b16 %v195
    %v1055 = vunpack.c.l.b16 %v196
    %v1056 = vunpack.c.h.b16 %v196
    %v1057 = vunpack.c.l.b16 %v197
    %v1058 = vunpack.c.h.b16 %v197
    %v1059 = vunpack.c.l.b16 %v198
    %v1060 = vunpack.c.h.b16 %v198
    %v1061 = vunpack.c.l.b16 %v199
    %v1062 = vunpack.c.h.b16 %v199
    %v1063 = vunpack.c.l.b16 %v200
    %v1064 = vunpack.c.h.b16 %v200
    %v1065 = vunpack.c.l.b16 %v201
    %v1066 = vunpack.c.h.b16 %v201
    %v1067 = vunpack.c.l.b16 %v202
    %v1068 = vunpack.c.h.b16 %v202
    %v1069 = vunpack.c.l.b16 %v203
    %v1070 = vunpack.c.h.b16 %v203
    %v1071 = vunpack.c.l.b16 %v204
    %v1072 = vunpack.c.h.b16 %v204
    %v1073 = vunpack.c.l.b16 %v205
    %v1074 = vunpack.c.h.b16 %v205
    %v1075 = vunpack.c.l.b16 %v206
    %v1076 = vunpack.c.h.b16 %v206
    %v1077 = vunpack.c.l.b16 %v207
    %v1078 = vunpack.c.h.b16 %v207
    %v1079 = vunpack.c.l.b16 %v208
    %v1080 = vunpack.c.h.b16 %v208
    %v1081 = vunpack.c.l.b16 %v209
    %v1082 = vunpack.c.h.b16 %v209
    %v1083 = vunpack.c.l.b16 %v210
    %v1084 = vunpack.c.h.b16 %v210
    %v1085 = vunpack.c.l.b16 %v211
    %v1086 = vunpack.c.h.b16 %v211
    %v1087 = vunpack.c.l.b16 %v212
    %v1088 = vunpack.c.h.b16 %v212
    %v1089 = vunpack.c.l.b16 %v213
    %v1090 = vunpack.c.h.b16 %v213
    %v1091 = vunpack.c.l.b16 %v214
    %v1092 = vunpack.c.h.b16 %v214
    %v1093 = vunpack.c.l.b16 %v215
    %v1094 = vunpack.c.h.b16 %v215
    %v1095 = vunpack.c.l.b16 %v216
    %v1096 = vunpack.c.h.b16 %v216
    %v1097 = vunpack.c.l.b16 %v217
    %v1098 = vunpack.c.h.b16 %v217
    %v1099 = vunpack.c.l.b16 %v218
    %v1100 = vunpack.c.h.b16 %v218
    %v1101 = vunpack.c.l.b16 %v219
    %v1102 = vunpack.c.h.b16 %v219
    %v1103 = vunpack.c.l.b16 %v220
    %v1104 = vunpack.c.h.b16 %v220
    %v1105 = vunpack.c.l.b16 %v221
    %v1106 = vunpack.c.h.b16 %v221
    %v1107 = vunpack.c.l.b16 %v222
    %v1108 = vunpack.c.h.b16 %v222
    %v1109 = vunpack.c.l.b16 %v223
    %v1110 = vunpack.c.h.b16 %v223
    %v1111 = vunpack.c.l.b16 %v224
    %v1112 = vunpack.c.h.b16 %v224
    %v1113 = vunpack.c.l.b16 %v225
    %v1114 = vunpack.c.h.b16 %v225
    %v1115 = vunpack.c.l.b16 %v226
    %v1116 = vunpack.c.h.b16 %v226
    %v1117 = vunpack.c.l.b16 %v227
    %v1118 = vunpack.c.h.b16 %v227
    %v1119 = vunpack.c.l.b16 %v228
    %v1120 = vunpack.c.h.b16 %v228
    %v1121 = vunpack.c.l.b16 %v229
    %v1122 = vunpack.c.h.b16 %v229
    %v1123 = vunpack.c.l.b16 %v230
    %v1124 = vunpack.c.h.b16 %v230
    %v1125 = vunpack.c.l.b16 %v231
    %v1126 = vunpack.c.h.b16 %v231
    %v1127 = vunpack.c.l.b16 %v232
    %v1128 = vunpack.c.h.b16 %v232
    %v1129 = vunpack.c.l.b16 %v233
    %v1130 = vunpack.c.h.b16 %v233
    %v1131 = vunpack.c.l.b16 %v234
    %v1132 = vunpack.c.h.b16 %v234
    %v1133 = vunpack.c.l.b16 %v235
    %v1134 = vunpack.c.h.b16 %v235
    %v1135 = vunpack.c.l.b16 %v236
    %v1136 = vunpack.c.h.b16 %v236
    %v1137 = vunpack.c.l.b16 %v237
    %v1138 = vunpack.c.h.b16 %v237
    %v1139 = vunpack.c.l.b16 %v238
    %v1140 = vunpack.c.h.b16 %v238
    %v1141 = vunpack.c.l.b16 %v239
    %v1142 = vunpack.c.h.b16 %v239
    %v1143 = vunpack.c.l.b16 %v240
    %v1144 = vunpack.c.h.b16 %v240
    %v1145 = vunpack.c.l.b16 %v241
    %v1146 = vunpack.c.h.b16 %v241
    %v1147 = vunpack.c.l.b16 %v242
    %v1148 = vunpack.c.h.b16 %v242
    %v1149 = vunpack.c.l.b16 %v243
    %v1150 = vunpack.c.h.b16 %v243
    %v1151 = vunpack.c.l.b16 %v244
    %v1152 = vunpack.c.h.b16 %v244
    %v1153 = vunpack.c.l.b16 %v245
    %v1154 = vunpack.c.h.b16 %v245
    %v1155 = vunpack.c.l.b16 %v246
    %v1156 = vunpack.c.h.b16 %v246
    %v1157 = vunpack.c.l.b16 %v247
    %v1158 = vunpack.c.h.b16 %v247
    %v1159 = vunpack.c.l.b16 %v248
    %v1160 = vunpack.c.h.b16 %v248
    %v1161 = vunpack.c.l.b16 %v249
    %v1162 = vunpack.c.h.b16 %v249
    %v1163 = vunpack.c.l.b16 %v250
    %v1164 = vunpack.c.h.b16 %v250
    %v1165 = vunpack.c.l.b16 %v251
    %v1166 = vunpack.c.h.b16 %v251
    %v1167 = vunpack.c.l.b16 %v252
    %v1168 = vunpack.c.h.b16 %v252
    %v1169 = vunpack.c.l.b16 %v253
    %v1170 = vunpack.c.h.b16 %v253
    %v1171 = vunpack.c.l.b16 %v254
    %v1172 = vunpack.c.h.b16 %v254
    %v1173 = vunpack.c.l.b16 %v255
    %v1174 = vunpack.c.h.b16 %v255
    %v1175 = vunpack.c.l.b16 %v256
    %v1176 = vunpack.c.h.b16 %v256
    %v1177 = vunpack.c.l.b16 %v257
    %v1178 = vunpack.c.h.b16 %v257
    %v1179 = vunpack.c.l.b16 %v258
    %v1180 = vunpack.c.h.b16 %v258
    %v1181 = vunpack.c.l.b16 %v259
    %v1182 = vunpack.c.h.b16 %v259
    %v1183 = vunpack.c.l.b16 %v260
    %v1184 = vunpack.c.h.b16 %v260
    %v1185 = vunpack.c.l.b16 %v261
    %v1186 = vunpack.c.h.b16 %v261
    %v1187 = vunpack.c.l.b16 %v262
    %v1188 = vunpack.c.h.b16 %v262
    %v1189 = vunpack.c.l.b16 %v263
    %v1190 = vunpack.c.h.b16 %v263
    %v1191 = vunpack.c.l.b16 %v264
    %v1192 = vunpack.c.h.b16 %v264
    %v1193 = vunpack.c.l.b16 %v265
    %v1194 = vunpack.c.h.b16 %v265
    %v1195 = vunpack.c.l.b16 %v266
    %v1196 = vunpack.c.h.b16 %v266
    %v1197 = vunpack.c.l.b16 %v267
    %v1198 = vunpack.c.h.b16 %v267
    %v1199 = vunpack.c.l.b16 %v268
    %v1200 = vunpack.c.h.b16 %v268
    %v1201 = vunpack.c.l.b16 %v269
    %v1202 = vunpack.c.h.b16 %v269
    %v1203 = vunpack.c.l.b16 %v270
    %v1204 = vunpack.c.h.b16 %v270
    %v1205 = vunpack.c.l.b16 %v271
    %v1206 = vunpack.c.h.b16 %v271
    %v1207 = vunpack.c.l.b16 %v272
    %v1208 = vunpack.c.h.b16 %v272
    %v1209 = vunpack.c.l.b16 %v273
    %v1210 = vunpack.c.h.b16 %v273
    %v1211 = vunpack.c.l.b16 %v274
    %v1212 = vunpack.c.h.b16 %v274
    %v1213 = vunpack.c.l.b16 %v275
    %v1214 = vunpack.c.h.b16 %v275
    %v1215 = vunpack.c.l.b16 %v276
    %v1216 = vunpack.c.h.b16 %v276
    %v1217 = vunpack.c.l.b16 %v277
    %v1218 = vunpack.c.h.b16 %v277
    %v1219 = vunpack.c.l.b16 %v278
    %v1220 = vunpack.c.h.b16 %v278
    %v1221 = vunpack.c.l.b16 %v279
    %v1222 = vunpack.c.h.b16 %v279
    %v1223 = vunpack.c.l.b16 %v280
    %v1224 = vunpack.c.h.b16 %v280
    %v1225 = vunpack.c.l.b16 %v281
    %v1226 = vunpack.c.h.b16 %v281
    %v1227 = vunpack.c.l.b16 %v282
    %v1228 = vunpack.c.h.b16 %v282
    %v1229 = vunpack.c.l.b16 %v283
    %v1230 = vunpack.c.h.b16 %v283
    %v1231 = vunpack.c.l.b16 %v284
    %v1232 = vunpack.c.h.b16 %v284
    %v1233 = vunpack.c.l.b16 %v285
    %v1234 = vunpack.c.h.b16 %v285
    %v1235 = vunpack.c.l.b16 %v286
    %v1236 = vunpack.c.h.b16 %v286
    %v1237 = vunpack.c.l.b16 %v287
    %v1238 = vunpack.c.h.b16 %v287
    %v1239 = vunpack.c.l.b16 %v288
    %v1240 = vunpack.c.h.b16 %v288
    %v1241 = vunpack.c.l.b16 %v289
    %v1242 = vunpack.c.h.b16 %v289
    %v1243 = vunpack.c.l.b16 %v290
    %v1244 = vunpack.c.h.b16 %v290
    %v1245 = vunpack.c.l.b16 %v291
    %v1246 = vunpack.c.h.b16 %v291
    %v1247 = vunpack.c.l.b16 %v292
    %v1248 = vunpack.c.h.b16 %v292
    %v1249 = vunpack.c.l.b16 %v293
    %v1250 = vunpack.c.h.b16 %v293
    %v1251 = vunpack.c.l.b16 %v294
    %v1252 = vunpack.c.h.b16 %v294
    %v1253 = vunpack.c.l.b16 %v295
    %v1254 = vunpack.c.h.b16 %v295
    %v1255 = vunpack.c.l.b16 %v296
    %v1256 = vunpack.c.h.b16 %v296
    %v1257 = vunpack.c.l.b16 %v297
    %v1258 = vunpack.c.h.b16 %v297
    %v1259 = vunpack.c.l.b16 %v298
    %v1260 = vunpack.c.h.b16 %v298
    %v1261 = vunpack.c.l.b16 %v299
    %v1262 = vunpack.c.h.b16 %v299
    %v1263 = vunpack.c.l.b16 %v300
    %v1264 = vunpack.c.h.b16 %v300
    %v1265 = vunpack.c.l.b16 %v301
    %v1266 = vunpack.c.h.b16 %v301
    %v1267 = vunpack.c.l.b16 %v302
    %v1268 = vunpack.c.h.b16 %v302
    %v1269 = vunpack.c.l.b16 %v303
    %v1270 = vunpack.c.h.b16 %v303
    %v1271 = vunpack.c.l.b16 %v304
    %v1272 = vunpack.c.h.b16 %v304
    %v1273 = vunpack.c.l.b16 %v305
    %v1274 = vunpack.c.h.b16 %v305
    %v1275 = vunpack.c.l.b16 %v306
    %v1276 = vunpack.c.h.b16 %v306
    %v1277 = vunpack.c.l.b16 %v307
    %v1278 = vunpack.c.h.b16 %v307
    %v1279 = vunpack.c.l.b16 %v308
    %v1280 = vunpack.c.h.b16 %v308
    %v1281 = vunpack.c.l.b16 %v309
    %v1282 = vunpack.c.h.b16 %v309
    %v1283 = vunpack.c.l.b16 %v310
    %v1284 = vunpack.c.h.b16 %v310
    %v1285 = vunpack.c.l.b16 %v311
    %v1286 = vunpack.c.h.b16 %v311
    %v1287 = vunpack.c.l.b16 %v312
    %v1288 = vunpack.c.h.b16 %v312
    %v1289 = vunpack.c.l.b16 %v313
    %v1290 = vunpack.c.h.b16 %v313
    %v1291 = vunpack.c.l.b16 %v314
    %v1292 = vunpack.c.h.b16 %v314
    %v1293 = vunpack.c.l.b16 %v315
    %v1294 = vunpack.c.h.b16 %v315
    %v1295 = vunpack.c.l.b16 %v316
    %v1296 = vunpack.c.h.b16 %v316
    %v1297 = vunpack.c.l.b16 %v317
    %v1298 = vunpack.c.h.b16 %v317
    %v1299 = vunpack.c.l.b16 %v318
    %v1300 = vunpack.c.h.b16 %v318
    %v1301 = vunpack.c.l.b16 %v319
    %v1302 = vunpack.c.h.b16 %v319
    %v1303 = vunpack.c.l.b16 %v320
    %v1304 = vunpack.c.h.b16 %v320
    %v1305 = vunpack.c.l.b16 %v321
    %v1306 = vunpack.c.h.b16 %v321
    %v1307 = vunpack.c.l.b16 %v322
    %v1308 = vunpack.c.h.b16 %v322
    %v1309 = vunpack.c.l.b16 %v323
    %v1310 = vunpack.c.h.b16 %v323
    %v1311 = vunpack.c.l.b16 %v324
    %v1312 = vunpack.c.h.b16 %v324
    %v1313 = vunpack.c.l.b16 %v325
    %v1314 = vunpack.c.h.b16 %v325
    %v1315 = vunpack.c.l.b16 %v326
    %v1316 = vunpack.c.h.b16 %v326
    %v1317 = vunpack.c.l.b16 %v327
    %v1318 = vunpack.c.h.b16 %v327
    %v1319 = vunpack.c.l.b16 %v328
    %v1320 = vunpack.c.h.b16 %v328
    %v1321 = vunpack.c.l.b16 %v329
    %v1322 = vunpack.c.h.b16 %v329
    %v1323 = vunpack.c.l.b16 %v330
    %v1324 = vunpack.c.h.b16 %v330
    %v1325 = vunpack.c.l.b16 %v331
    %v1326 = vunpack.c.h.b16 %v331
    %v1327 = vunpack.c.l.b16 %v332
    %v1328 = vunpack.c.h.b16 %v332
    %v1329 = vunpack.c.l.b16 %v333
    %v1330 = vunpack.c.h.b16 %v333
    %v1331 = vunpack.c.l.b16 %v334
    %v1332 = vunpack.c.h.b16 %v334
    %v1333 = vunpack.c.l.b16 %v335
    %v1334 = vunpack.c.h.b16 %v335
    %v1335 = vunpack.c.l.b16 %v336
    %v1336 = vunpack.c.h.b16 %v336
    %v1337 = vunpack.c.l.b16 %v337
    %v1338 = vunpack.c.h.b16 %v337
    %v1339 = vunpack.c.l.b16 %v338
    %v1340 = vunpack.c.h.b16 %v338
    %v1341 = vunpack.c.l.b16 %v339
    %v1342 = vunpack.c.h.b16 %v339
    %v1343 = vunpack.c.l.b16 %v340
    %v1344 = vunpack.c.h.b16 %v340
    %v1345 = vunpack.c.l.b16 %v341
    %v1346 = vunpack.c.h.b16 %v341
    %v1347 = vunpack.c.l.b16 %v342
    %v1348 = vunpack.c.h.b16 %v342
    %v1349 = vunpack.c.l.b16 %v343
    %v1350 = vunpack.c.h.b16 %v343
    %v1351 = vunpack.c.l.b16 %v344
    %v1352 = vunpack.c.h.b16 %v344
    %v1353 = vunpack.c.l.b16 %v345
    %v1354 = vunpack.c.h.b16 %v345
    %v1355 = vunpack.c.l.b16 %v346
    %v1356 = vunpack.c.h.b16 %v346
    %v1357 = vunpack.c.l.b16 %v347
    %v1358 = vunpack.c.h.b16 %v347
    %v1359 = vunpack.c.l.b16 %v348
    %v1360 = vunpack.c.h.b16 %v348
    %v1361 = vunpack.c.l.b16 %v349
    %v1362 = vunpack.c.h.b16 %v349
    %v1363 = vunpack.c.l.b16 %v350
    %v1364 = vunpack.c.h.b16 %v350
    %v1365 = vunpack.c.l.b16 %v351
    %v1366 = vunpack.c.h.b16 %v351
    %v1367 = vunpack.c.l.b16 %v352
    %v1368 = vunpack.c.h.b16 %v352
    %v1369 = vunpack.c.l.b16 %v353
    %v1370 = vunpack.c.h.b16 %v353
    %v1371 = vunpack.c.l.b16 %v354
    %v1372 = vunpack.c.h.b16 %v354
    %v1373 = vunpack.c.l.b16 %v355
    %v1374 = vunpack.c.h.b16 %v355
    %v1375 = vunpack.c.l.b16 %v356
    %v1376 = vunpack.c.h.b16 %v356
    %v1377 = vunpack.c.l.b16 %v357
    %v1378 = vunpack.c.h.b16 %v357
    %v1379 = vunpack.c.l.b16 %v358
    %v1380 = vunpack.c.h.b16 %v358
    %v1381 = vunpack.c.l.b16 %v359
    %v1382 = vunpack.c.h.b16 %v359
    %v1383 = vunpack.c.l.b16 %v360
    %v1384 = vunpack.c.h.b16 %v360
    %v1385 = vunpack.c.l.b16 %v361
    %v1386 = vunpack.c.h.b16 %v361
    %v1387 = vunpack.c.l.b16 %v362
    %v1388 = vunpack.c.h.b16 %v362
    %v1389 = vunpack.c.l.b16 %v363
    %v1390 = vunpack.c.h.b16 %v363
    %v1391 = vunpack.c.l.b16 %v364
    %v1392 = vunpack.c.h.b16 %v364
    %v1393 = vunpack.c.l.b16 %v365
    %v1394 = vunpack.c.h.b16 %v365
    %v1395 = vunpack.c.l.b16 %v366
    %v1396 = vunpack.c.h.b16 %v366
    %v1397 = vunpack.c.l.b16 %v367
    %v1398 = vunpack.c.h.b16 %v367
    %v1399 = vunpack.c.l.b16 %v368
    %v1400 = vunpack.c.h.b16 %v368
    %v1401 = vunpack.c.l.b16 %v369
    %v1402 = vunpack.c.h.b16 %v369
    %v1403 = vunpack.c.l.b16 %v370
    %v1404 = vunpack.c.h.b16 %v370
    %v1405 = vunpack.c.l.b16 %v371
    %v1406 = vunpack.c.h.b16 %v371
    %v1407 = vunpack.c.l.b16 %v372
    %v1408 = vunpack.c.h.b16 %v372
    %v1409 = vunpack.c.l.b16 %v373
    %v1410 = vunpack.c.h.b16 %v373
    %v1411 = vunpack.c.l.b16 %v374
    %v1412 = vunpack.c.h.b16 %v374
    %v1413 = vunpack.c.l.b16 %v375
    %v1414 = vunpack.c.h.b16 %v375
    %v1415 = vunpack.c.l.b16 %v376
    %v1416 = vunpack.c.h.b16 %v376
    %v1417 = vunpack.c.l.b16 %v377
    %v1418 = vunpack.c.h.b16 %v377
    %v1419 = vunpack.c.l.b16 %v378
    %v1420 = vunpack.c.h.b16 %v378
    %v1421 = vunpack.c.l.b16 %v379
    %v1422 = vunpack.c.h.b16 %v379
    %v1423 = vunpack.c.l.b16 %v380
    %v1424 = vunpack.c.h.b16 %v380
    %v1425 = vunpack.c.l.b16 %v381
    %v1426 = vunpack.c.h.b16 %v381
    %v1427 = vunpack.c.l.b16 %v382
    %v1428 = vunpack.c.h.b16 %v382
    %v1429 = vunpack.c.l.b16 %v383
    %v1430 = vunpack.c.h.b16 %v383
    %v1431 = vunpack.c.l.b16 %v384
    %v1432 = vunpack.c.h.b16 %v384
    %v1433 = vunpack.c.l.b16 %v385
    %v1434 = vunpack.c.h.b16 %v385
    %v1435 = vunpack.c.l.b16 %v386
    %v1436 = vunpack.c.h.b16 %v386
    %v1437 = vunpack.c.l.b16 %v387
    %v1438 = vunpack.c.h.b16 %v387
    %v1439 = vunpack.c.l.b16 %v388
    %v1440 = vunpack.c.h.b16 %v388
    %v1441 = vunpack.c.l.b16 %v389
    %v1442 = vunpack.c.h.b16 %v389
    %v1443 = vunpack.c.l.b16 %v390
    %v1444 = vunpack.c.h.b16 %v390
    %v1445 = vunpack.c.l.b16 %v391
    %v1446 = vunpack.c.h.b16 %v391
    %v1447 = vunpack.c.l.b16 %v392
    %v1448 = vunpack.c.h.b16 %v392
    %v1449 = vunpack.c.l.b16 %v393
    %v1450 = vunpack.c.h.b16 %v393
    %v1451 = vunpack.c.l.b16 %v394
    %v1452 = vunpack.c.h.b16 %v394
    %v1453 = vunpack.c.l.b16 %v395
    %v1454 = vunpack.c.h.b16 %v395
    %v1455 = vunpack.c.l.b16 %v396
    %v1456 = vunpack.c.h.b16 %v396
    %v1457 = vunpack.c.l.b16 %v397
    %v1458 = vunpack.c.h.b16 %v397
    %v1459 = vunpack.c.l.b16 %v398
    %v1460 = vunpack.c.h.b16 %v398
    %v1461 = vunpack.c.l.b16 %v399
    %v1462 = vunpack.c.h.b16 %v399
    %v1463 = vunpack.c.l.b16 %v400
    %v1464 = vunpack.c.h.b16 %v400
    %v1465 = vunpack.c.l.b16 %v401
    %v1466 = vunpack.c.h.b16 %v401
    %v1467 = vunpack.c.l.b16 %v402
    %v1468 = vunpack.c.h.b16 %v402
    %v1469 = vunpack.c.l.b16 %v403
    %v1470 = vunpack.c.h.b16 %v403
    %v1471 = vunpack.c.l.b16 %v404
    %v1472 = vunpack.c.h.b16 %v404
    %v1473 = vunpack.c.l.b16 %v405
    %v1474 = vunpack.c.h.b16 %v405
    %v1475 = vunpack.c.l.b16 %v406
    %v1476 = vunpack.c.h.b16 %v406
    %v1477 = vunpack.c.l.b16 %v407
    %v1478 = vunpack.c.h.b16 %v407
    %v1479 = vunpack.c.l.b16 %v408
    %v1480 = vunpack.c.h.b16 %v408
    %v1481 = vunpack.c.l.b16 %v409
    %v1482 = vunpack.c.h.b16 %v409
    %v1483 = vunpack.c.l.b16 %v410
    %v1484 = vunpack.c.h.b16 %v410
    %v1485 = vunpack.c.l.b16 %v411
    %v1486 = vunpack.c.h.b16 %v411
    %v1487 = vunpack.c.l.b16 %v412
    %v1488 = vunpack.c.h.b16 %v412
    %v1489 = vunpack.c.l.b16 %v413
    %v1490 = vunpack.c.h.b16 %v413
    %v1491 = vunpack.c.l.b16 %v414
    %v1492 = vunpack.c.h.b16 %v414
    %v1493 = vunpack.c.l.b16 %v415
    %v1494 = vunpack.c.h.b16 %v415
    %v1495 = vunpack.c.l.b16 %v416
    %v1496 = vunpack.c.h.b16 %v416
    %v1497 = vunpack.c.l.b16 %v417
    %v1498 = vunpack.c.h.b16 %v417
    %v1499 = vunpack.c.l.b16 %v418
    %v1500 = vunpack.c.h.b16 %v418
    %v1501 = vunpack.c.l.b16 %v419
    %v1502 = vunpack.c.h.b16 %v419
    %v1503 = vunpack.c.l.b16 %v420
    %v1504 = vunpack.c.h.b16 %v420
    %v1505 = vunpack.c.l.b16 %v421
    %v1506 = vunpack.c.h.b16 %v421
    %v1507 = vunpack.c.l.b16 %v422
    %v1508 = vunpack.c.h.b16 %v422
    %v1509 = vunpack.c.l.b16 %v423
    %v1510 = vunpack.c.h.b16 %v423
    %v1511 = vunpack.c.l.b16 %v424
    %v1512 = vunpack.c.h.b16 %v424
    %v1513 = vunpack.c.l.b16 %v425
    %v1514 = vunpack.c.h.b16 %v425
    %v1515 = vunpack.c.l.b16 %v426
    %v1516 = vunpack.c.h.b16 %v426
    %v1517 = vunpack.c.l.b16 %v427
    %v1518 = vunpack.c.h.b16 %v427
    %v1519 = vunpack.c.l.b16 %v428
    %v1520 = vunpack.c.h.b16 %v428
    %v1521 = vunpack.c.l.b16 %v429
    %v1522 = vunpack.c.h.b16 %v429
    %v1523 = vunpack.c.l.b16 %v430
    %v1524 = vunpack.c.h.b16 %v430
    %v1525 = vunpack.c.l.b16 %v431
    %v1526 = vunpack.c.h.b16 %v431
    %v1527 = vunpack.c.l.b16 %v432
    %v1528 = vunpack.c.h.b16 %v432
    %v1529 = vunpack.c.l.b16 %v433
    %v1530 = vunpack.c.h.b16 %v433
    %v1531 = vunpack.c.l.b16 %v434
    %v1532 = vunpack.c.h.b16 %v434
    %v1533 = vunpack.c.l.b16 %v435
    %v1534 = vunpack.c.h.b16 %v435
    %v1535 = vunpack.c.l.b16 %v436
    %v1536 = vunpack.c.h.b16 %v436
    %v1537 = vunpack.c.l.b16 %v437
    %v1538 = vunpack.c.h.b16 %v437
    %v1539 = vunpack.c.l.b16 %v438
    %v1540 = vunpack.c.h.b16 %v438
    %v1541 = vunpack.c.l.b16 %v439
    %v1542 = vunpack.c.h.b16 %v439
    %v1543 = vunpack.c.l.b16 %v440
    %v1544 = vunpack.c.h.b16 %v440
    %v1545 = vunpack.c.l.b16 %v441
    %v1546 = vunpack.c.h.b16 %v441
    %v1547 = vunpack.c.l.b16 %v442
    %v1548 = vunpack.c.h.b16 %v442
    %v1549 = vunpack.c.l.b16 %v443
    %v1550 = vunpack.c.h.b16 %v443
    %v1551 = vunpack.c.l.b16 %v444
    %v1552 = vunpack.c.h.b16 %v444
    %v1553 = vunpack.c.l.b16 %v445
    %v1554 = vunpack.c.h.b16 %v445
    %v1555 = vunpack.c.l.b16 %v446
    %v1556 = vunpack.c.h.b16 %v446
    %v1557 = vunpack.c.l.b16 %v447
    %v1558 = vunpack.c.h.b16 %v447
    %v1559 = vunpack.c.l.b16 %v448
    %v1560 = vunpack.c.h.b16 %v448
    %v1561 = vunpack.c.l.b16 %v449
    %v1562 = vunpack.c.h.b16 %v449
    %v1563 = vunpack.c.l.b16 %v450
    %v1564 = vunpack.c.h.b16 %v450
    %v1565 = vunpack.c.l.b16 %v451
    %v1566 = vunpack.c.h.b16 %v451
    %v1567 = vunpack.c.l.b16 %v452
    %v1568 = vunpack.c.h.b16 %v452
    %v1569 = vunpack.c.l.b16 %v453
    %v1570 = vunpack.c.h.b16 %v453
    %v1571 = vunpack.c.l.b16 %v454
    %v1572 = vunpack.c.h.b16 %v454
    %v1573 = vunpack.c.l.b16 %v455
    %v1574 = vunpack.c.h.b16 %v455
    %v1575 = vunpack.c.l.b16 %v456
    %v1576 = vunpack.c.h.b16 %v456
    %v1577 = vunpack.c.l.b16 %v457
    %v1578 = vunpack.c.h.b16 %v457
    %v1579 = vunpack.c.l.b16 %v458
    %v1580 = vunpack.c.h.b16 %v458
    %v1581 = vunpack.c.l.b16 %v459
    %v1582 = vunpack.c.h.b16 %v459
    %v1583 = vunpack.c.l.b16 %v460
    %v1584 = vunpack.c.h.b16 %v460
    %v1585 = vunpack.c.l.b16 %v461
    %v1586 = vunpack.c.h.b16 %v461
    %v1587 = vunpack.c.l.b16 %v462
    %v1588 = vunpack.c.h.b16 %v462
    %v1589 = vunpack.c.l.b16 %v463
    %v1590 = vunpack.c.h.b16 %v463
    %v1591 = vunpack.c.l.b16 %v464
    %v1592 = vunpack.c.h.b16 %v464
    %v1593 = vunpack.c.l.b16 %v465
    %v1594 = vunpack.c.h.b16 %v465
    %v1595 = vunpack.c.l.b16 %v466
    %v1596 = vunpack.c.h.b16 %v466
    %v1597 = vunpack.c.l.b16 %v467
    %v1598 = vunpack.c.h.b16 %v467
    %v1599 = vunpack.c.l.b16 %v468
    %v1600 = vunpack.c.h.b16 %v468
    %v1601 = vunpack.c.l.b16 %v469
    %v1602 = vunpack.c.h.b16 %v469
    %v1603 = vunpack.c.l.b16 %v470
    %v1604 = vunpack.c.h.b16 %v470
    %v1605 = vunpack.c.l.b16 %v471
    %v1606 = vunpack.c.h.b16 %v471
    %v1607 = vunpack.c.l.b16 %v472
    %v1608 = vunpack.c.h.b16 %v472
    %v1609 = vunpack.c.l.b16 %v473
    %v1610 = vunpack.c.h.b16 %v473
    %v1611 = vunpack.c.l.b16 %v474
    %v1612 = vunpack.c.h.b16 %v474
    %v1613 = vunpack.c.l.b16 %v475
    %v1614 = vunpack.c.h.b16 %v475
    %v1615 = vunpack.c.l.b16 %v476
    %v1616 = vunpack.c.h.b16 %v476
    %v1617 = vunpack.c.l.b16 %v477
    %v1618 = vunpack.c.h.b16 %v477
    %v1619 = vunpack.c.l.b16 %v478
    %v1620 = vunpack.c.h.b16 %v478
    %v1621 = vunpack.c.l.b16 %v479
    %v1622 = vunpack.c.h.b16 %v479
    %v1623 = vunpack.c.l.b16 %v480
    %v1624 = vunpack.c.h.b16 %v480
    %v1625 = vunpack.c.l.b16 %v481
    %v1626 = vunpack.c.h.b16 %v481
    %v1627 = vunpack.c.l.b16 %v482
    %v1628 = vunpack.c.h.b16 %v482
    %v1629 = vunpack.c.l.b16 %v483
    %v1630 = vunpack.c.h.b16 %v483
    %v1631 = vunpack.c.l.b16 %v484
    %v1632 = vunpack.c.h.b16 %v484
    %v1633 = vunpack.c.l.b16 %v485
    %v1634 = vunpack.c.h.b16 %v485
    %v1635 = vunpack.c.l.b16 %v486
    %v1636 = vunpack.c.h.b16 %v486
    %v1637 = vunpack.c.l.b16 %v487
    %v1638 = vunpack.c.h.b16 %v487
    %v1639 = vunpack.c.l.b16 %v488
    %v1640 = vunpack.c.h.b16 %v488
    %v1641 = vunpack.c.l.b16 %v489
    %v1642 = vunpack.c.h.b16 %v489
    %v1643 = vunpack.c.l.b16 %v490
    %v1644 = vunpack.c.h.b16 %v490
    %v1645 = vunpack.c.l.b16 %v491
    %v1646 = vunpack.c.h.b16 %v491
    %v1647 = vunpack.c.l.b16 %v492
    %v1648 = vunpack.c.h.b16 %v492
    %v1649 = vunpack.c.l.b16 %v493
    %v1650 = vunpack.c.h.b16 %v493
    %v1651 = vunpack.c.l.b16 %v494
    %v1652 = vunpack.c.h.b16 %v494
    %v1653 = vunpack.c.l.b16 %v495
    %v1654 = vunpack.c.h.b16 %v495
    %v1655 = vunpack.c.l.b16 %v496
    %v1656 = vunpack.c.h.b16 %v496
    %v1657 = vunpack.c.l.b16 %v497
    %v1658 = vunpack.c.h.b16 %v497
    %v1659 = vunpack.c.l.b16 %v498
    %v1660 = vunpack.c.h.b16 %v498
    %v1661 = vunpack.c.l.b16 %v499
    %v1662 = vunpack.c.h.b16 %v499
    %v1663 = vunpack.c.l.b16 %v500
    %v1664 = vunpack.c.h.b16 %v500
    %v1665 = vunpack.c.l.b16 %v501
    %v1666 = vunpack.c.h.b16 %v501
    %v1667 = vunpack.c.l.b16 %v502
    %v1668 = vunpack.c.h.b16 %v502
    %v1669 = vunpack.c.l.b16 %v503
    %v1670 = vunpack.c.h.b16 %v503
    %v1671 = vunpack.c.l.b16 %v504
    %v1672 = vunpack.c.h.b16 %v504
    %v1673 = vunpack.c.l.b16 %v505
    %v1674 = vunpack.c.h.b16 %v505
    %v1675 = vunpack.c.l.b16 %v506
    %v1676 = vunpack.c.h.b16 %v506
    %v1677 = vunpack.c.l.b16 %v507
    %v1678 = vunpack.c.h.b16 %v507
    %v1679 = vunpack.c.l.b16 %v508
    %v1680 = vunpack.c.h.b16 %v508
    %v1681 = vunpack.c.l.b16 %v509
    %v1682 = vunpack.c.h.b16 %v509
    %v1683 = vunpack.c.l.b16 %v510
    %v1684 = vunpack.c.h.b16 %v510
    %v1685 = vunpack.c.l.b16 %v511
    %v1686 = vunpack.c.h.b16 %v511
    %v1687 = vunpack.c.l.b16 %v512
    %v1688 = vunpack.c.h.b16 %v512
    %v1689 = vunpack.c.l.b16 %v513
    %v1690 = vunpack.c.h.b16 %v513
    %v1691 = vunpack.c.l.b16 %v514
    %v1692 = vunpack.c.h.b16 %v514
    %v1693 = vunpack.c.l.b16 %v515
    %v1694 = vunpack.c.h.b16 %v515
    %v1695 = vunpack.c.l.b16 %v516
    %v1696 = vunpack.c.h.b16 %v516
    %v1697 = vunpack.c.l.b16 %v517
    %v1698 = vunpack.c.h.b16 %v517
    %v1699 = vunpack.c.l.b16 %v518
    %v1700 = vunpack.c.h.b16 %v518
    %v1701 = vunpack.c.l.b16 %v519
    %v1702 = vunpack.c.h.b16 %v519
    %v1703 = vunpack.c.l.b16 %v520
    %v1704 = vunpack.c.h.b16 %v520
    %v1705 = vunpack.c.l.b16 %v521
    %v1706 = vunpack.c.h.b16 %v521
    %v1707 = vunpack.c.l.b16 %v522
    %v1708 = vunpack.c.h.b16 %v522
    %v1709 = vunpack.c.l.b16 %v523
    %v1710 = vunpack.c.h.b16 %v523
    %v1711 = vunpack.c.l.b16 %v524
    %v1712 = vunpack.c.h.b16 %v524
    %v1713 = vunpack.c.l.b16 %v525
    %v1714 = vunpack.c.h.b16 %v525
    %v1715 = vunpack.c.l.b16 %v526
    %v1716 = vunpack.c.h.b16 %v526
    %v1717 = vunpack.c.l.b16 %v527
    %v1718 = vunpack.c.h.b16 %v527
    %v1719 = vunpack.c.l.b16 %v528
    %v1720 = vunpack.c.h.b16 %v528
    %v1721 = vunpack.c.l.b16 %v529
    %v1722 = vunpack.c.h.b16 %v529
    %v1723 = vunpack.c.l.b16 %v530
    %v1724 = vunpack.c.h.b16 %v530
    %v1725 = vpack.c.b16 %v965, %v957
    %v1726 = vpack.c.b16 %v966, %v958
    %v1727 = vpack.c.b16 %v967, %v959
    %v1728 = vpack.c.b16 %v968, %v960
    %v1729 = vpack.c.b16 %v969, %v961
    %v1730 = vpack.c.b16 %v970, %v962
    %v1731 = vpack.c.b16 %v971, %v963
    %v1732 = vpack.c.b16 %v972, %v964
    %v1733 = vpack.c.b16 %v981, %v973
    %v1734 = vpack.c.b16 %v982, %v974
    %v1735 = vpack.c.b16 %v983, %v975
    %v1736 = vpack.c.b16 %v984, %v976
    %v1737 = vpack.c.b16 %v985, %v977
    %v1738 = vpack.c.b16 %v986, %v978
    %v1739 = vpack.c.b16 %v987, %v979
    %v1740 = vpack.c.b16 %v988, %v980
    %v1741 = vpack.c.b16 %v997, %v989
    %v1742 = vpack.c.b16 %v998, %v990
    %v1743 = vpack.c.b16 %v999, %v991
    %v1744 = vpack.c.b16 %v1000, %v992
    %v1745 = vpack.c.b16 %v1001, %v993
    %v1746 = vpack.c.b16 %v1002, %v994
    %v1747 = vpack.c.b16 %v1003, %v995
    %v1748 = vpack.c.b16 %v1004, %v996
    %v1749 = vpack.c.b16 %v1013, %v1005
    %v1750 = vpack.c.b16 %v1014, %v1006
    %v1751 = vpack.c.b16 %v1015, %v1007
    %v1752 = vpack.c.b16 %v1016, %v1008
    %v1753 = vpack.c.b16 %v1017, %v1009
    %v1754 = vpack.c.b16 %v1018, %v1010
    %v1755 = vpack.c.b16 %v1019, %v1011
    %v1756 = vpack.c.b16 %v1020, %v1012
    %v1757 = vpack.c.b16 %v1029, %v1021
    %v1758 = vpack.c.b16 %v1030, %v1022
    %v1759 = vpack.c.b16 %v1031, %v1023
    %v1760 = vpack.c.b16 %v1032, %v1024
    %v1761 = vpack.c.b16 %v1033, %v1025
    %v1762 = vpack.c.b16 %v1034, %v1026
    %v1763 = vpack.c.b16 %v1035, %v1027
    %v1764 = vpack.c.b16 %v1036, %v1028
    %v1765 = vpack.c.b16 %v1045, %v1037
    %v1766 = vpack.c.b16 %v1046, %v1038
    %v1767 = vpack.c.b16 %v1047, %v1039
    %v1768 = vpack.c.b16 %v1048, %v1040
    %v1769 = vpack.c.b16 %v1049, %v1041
    %v1770 = vpack.c.b16 %v1050, %v1042
    %v1771 = vpack.c.b16 %v1051, %v1043
    %v1772 = vpack.c.b16 %v1052, %v1044
    %v1773 = vpack.c.b16 %v1061, %v1053
    %v1774 = vpack.c.b16 %v1062, %v1054
    %v1775 = vpack.c.b16 %v1063, %v1055
    %v1776 = vpack.c.b16 %v1064, %v1056
    %v1777 = vpack.c.b16 %v1065, %v1057
    %v1778 = vpack.c.b16 %v1066, %v1058
    %v1779 = vpack.c.b16 %v1067, %v1059
    %v1780 = vpack.c.b16 %v1068, %v1060
    %v1781 = vpack.c.b16 %v1077, %v1069
    %v1782 = vpack.c.b16 %v1078, %v1070
    %v1783 = vpack.c.b16 %v1079, %v1071
    %v1784 = vpack.c.b16 %v1080, %v1072
    %v1785 = vpack.c.b16 %v1081, %v1073
    %v1786 = vpack.c.b16 %v1082, %v1074
    %v1787 = vpack.c.b16 %v1083, %v1075
    %v1788 = vpack.c.b16 %v1084, %v1076
    %v1789 = vpack.c.b16 %v1093, %v1085
    %v1790 = vpack.c.b16 %v1094, %v1086
    %v1791 = vpack.c.b16 %v1095, %v1087
    %v1792 = vpack.c.b16 %v1096, %v1088
    %v1793 = vpack.c.b16 %v1097, %v1089
    %v1794 = vpack.c.b16 %v1098, %v1090
    %v1795 = vpack.c.b16 %v1099, %v1091
    %v1796 = vpack.c.b16 %v1100, %v1092
    %v1797 = vpack.c.b16 %v1109, %v1101
    %v1798 = vpack.c.b16 %v1110, %v1102
    %v1799 = vpack.c.b16 %v1111, %v1103
    %v1800 = vpack.c.b16 %v1112, %v1104
    %v1801 = vpack.c.b16 %v1113, %v1105
    %v1802 = vpack.c.b16 %v1114, %v1106
    %v1803 = vpack.c.b16 %v1115, %v1107
    %v1804 = vpack.c.b16 %v1116, %v1108
    %v1805 = vpack.c.b16 %v1125, %v1117
    %v1806 = vpack.c.b16 %v1126, %v1118
    %v1807 = vpack.c.b16 %v1127, %v1119
    %v1808 = vpack.c.b16 %v1128, %v1120
    %v1809 = vpack.c.b16 %v1129, %v1121
    %v1810 = vpack.c.b16 %v1130, %v1122
    %v1811 = vpack.c.b16 %v1131, %v1123
    %v1812 = vpack.c.b16 %v1132, %v1124
    %v1813 = vpack.c.b16 %v1141, %v1133
    %v1814 = vpack.c.b16 %v1142, %v1134
    %v1815 = vpack.c.b16 %v1143, %v1135
    %v1816 = vpack.c.b16 %v1144, %v1136
    %v1817 = vpack.c.b16 %v1145, %v1137
    %v1818 = vpack.c.b16 %v1146, %v1138
    %v1819 = vpack.c.b16 %v1147, %v1139
    %v1820 = vpack.c.b16 %v1148, %v1140
    %v1821 = vpack.c.b16 %v1157, %v1149
    %v1822 = vpack.c.b16 %v1158, %v1150
    %v1823 = vpack.c.b16 %v1159, %v1151
    %v1824 = vpack.c.b16 %v1160, %v1152
    %v1825 = vpack.c.b16 %v1161, %v1153
    %v1826 = vpack.c.b16 %v1162, %v1154
    %v1827 = vpack.c.b16 %v1163, %v1155
    %v1828 = vpack.c.b16 %v1164, %v1156
    %v1829 = vpack.c.b16 %v1173, %v1165
    %v1830 = vpack.c.b16 %v1174, %v1166
    %v1831 = vpack.c.b16 %v1175, %v1167
    %v1832 = vpack.c.b16 %v1176, %v1168
    %v1833 = vpack.c.b16 %v1177, %v1169
    %v1834 = vpack.c.b16 %v1178, %v1170
    %v1835 = vpack.c.b16 %v1179, %v1171
    %v1836 = vpack.c.b16 %v1180, %v1172
    %v1837 = vpack.c.b16 %v1189, %v1181
    %v1838 = vpack.c.b16 %v1190, %v1182
    %v1839 = vpack.c.b16 %v1191, %v1183
    %v1840 = vpack.c.b16 %v1192, %v1184
    %v1841 = vpack.c.b16 %v1193, %v1185
    %v1842 = vpack.c.b16 %v1194, %v1186
    %v1843 = vpack.c.b16 %v1195, %v1187
    %v1844 = vpack.c.b16 %v1196, %v1188
    %v1845 = vpack.c.b16 %v1205, %v1197
    %v1846 = vpack.c.b16 %v1206, %v1198
    %v1847 = vpack.c.b16 %v1207, %v1199
    %v1848 = vpack.c.b16 %v1208, %v1200
    %v1849 = vpack.c.b16 %v1209, %v1201
    %v1850 = vpack.c.b16 %v1210, %v1202
    %v1851 = vpack.c.b16 %v1211, %v1203
    %v1852 = vpack.c.b16 %v1212, %v1204
    %v1853 = vpack.c.b16 %v1221, %v1213
    %v1854 = vpack.c.b16 %v1222, %v1214
    %v1855 = vpack.c.b16 %v1223, %v1215
    %v1856 = vpack.c.b16 %v1224, %v1216
    %v1857 = vpack.c.b16 %v1225, %v1217
    %v1858 = vpack.c.b16 %v1226, %v1218
    %v1859 = vpack.c.b16 %v1227, %v1219
    %v1860 = vpack.c.b16 %v1228, %v1220
    %v1861 = vpack.c.b16 %v1237, %v1229
    %v1862 = vpack.c.b16 %v1238, %v1230
    %v1863 = vpack.c.b16 %v1239, %v1231
    %v1864 = vpack.c.b16 %v1240, %v1232
    %v1865 = vpack.c.b16 %v1241, %v1233
    %v1866 = vpack.c.b16 %v1242, %v1234
    %v1867 = vpack.c.b16 %v1243, %v1235
    %v1868 = vpack.c.b16 %v1244, %v1236
    %v1869 = vpack.c.b16 %v1253, %v1245
    %v1870 = vpack.c.b16 %v1254, %v1246
    %v1871 = vpack.c.b16 %v1255, %v1247
    %v1872 = vpack.c.b16 %v1256, %v1248
    %v1873 = vpack.c.b16 %v1257, %v1249
    %v1874 = vpack.c.b16 %v1258, %v1250
    %v1875 = vpack.c.b16 %v1259, %v1251
    %v1876 = vpack.c.b16 %v1260, %v1252
    %v1877 = vpack.c.b16 %v1269, %v1261
    %v1878 = vpack.c.b16 %v1270, %v1262
    %v1879 = vpack.c.b16 %v1271, %v1263
    %v1880 = vpack.c.b16 %v1272, %v1264
    %v1881 = vpack.c.b16 %v1273, %v1265
    %v1882 = vpack.c.b16 %v1274, %v1266
    %v1883 = vpack.c.b16 %v1275, %v1267
    %v1884 = vpack.c.b16 %v1276, %v1268
    %v1885 = vpack.c.b16 %v1285, %v1277
    %v1886 = vpack.c.b16 %v1286, %v1278
    %v1887 = vpack.c.b16 %v1287, %v1279
    %v1888 = vpack.c.b16 %v1288, %v1280
    %v1889 = vpack.c.b16 %v1289, %v1281
    %v1890 = vpack.c.b16 %v1290, %v1282
    %v1891 = vpack.c.b16 %v1291, %v1283
    %v1892 = vpack.c.b16 %v1292, %v1284
    %v1893 = vpack.c.b16 %v1301, %v1293
    %v1894 = vpack.c.b16 %v1302, %v1294
    %v1895 = vpack.c.b16 %v1303, %v1295
    %v1896 = vpack.c.b16 %v1304, %v1296
    %v1897 = vpack.c.b16 %v1305, %v1297
    %v1898 = vpack.c.b16 %v1306, %v1298
    %v1899 = vpack.c.b16 %v1307, %v1299
    %v1900 = vpack.c.b16 %v1308, %v1300
    %v1901 = vpack.c.b16 %v1317, %v1309
    %v1902 = vpack.c.b16 %v1318, %v1310
    %v1903 = vpack.c.b16 %v1319, %v1311
    %v1904 = vpack.c.b16 %v1320, %v1312
    %v1905 = vpack.c.b16 %v1321, %v1313
    %v1906 = vpack.c.b16 %v1322, %v1314
    %v1907 = vpack.c.b16 %v1323, %v1315
    %v1908 = vpack.c.b16 %v1324, %v1316
    %v1909 = vpack.c.b16 %v1333, %v1325
    %v1910 = vpack.c.b16 %v1334, %v1326
    %v1911 = vpack.c.b16 %v1335, %v1327
    %v1912 = vpack.c.b16 %v1336, %v1328
    %v1913 = vpack.c.b16 %v1337, %v1329
    %v1914 = vpack.c.b16 %v1338, %v1330
    %v1915 = vpack.c.b16 %v1339, %v1331
    %v1916 = vpack.c.b16 %v1340, %v1332
    %v1917 = vpack.c.b16 %v1349, %v1341
    %v1918 = vpack.c.b16 %v1350, %v1342
    %v1919 = vpack.c.b16 %v1351, %v1343
    %v1920 = vpack.c.b16 %v1352, %v1344
    %v1921 = vpack.c.b16 %v1353, %v1345
    %v1922 = vpack.c.b16 %v1354, %v1346
    %v1923 = vpack.c.b16 %v1355, %v1347
    %v1924 = vpack.c.b16 %v1356, %v1348
    %v1925 = vpack.c.b16 %v1365, %v1357
    %v1926 = vpack.c.b16 %v1366, %v1358
    %v1927 = vpack.c.b16 %v1367, %v1359
    %v1928 = vpack.c.b16 %v1368, %v1360
    %v1929 = vpack.c.b16 %v1369, %v1361
    %v1930 = vpack.c.b16 %v1370, %v1362
    %v1931 = vpack.c.b16 %v1371, %v1363
    %v1932 = vpack.c.b16 %v1372, %v1364
    %v1933 = vpack.c.b16 %v1381, %v1373
    %v1934 = vpack.c.b16 %v1382, %v1374
    %v1935 = vpack.c.b16 %v1383, %v1375
    %v1936 = vpack.c.b16 %v1384, %v1376
    %v1937 = vpack.c.b16 %v1385, %v1377
    %v1938 = vpack.c.b16 %v1386, %v1378
    %v1939 = vpack.c.b16 %v1387, %v1379
    %v1940 = vpack.c.b16 %v1388, %v1380
    %v1941 = vpack.c.b16 %v1397, %v1389
    %v1942 = vpack.c.b16 %v1398, %v1390
    %v1943 = vpack.c.b16 %v1399, %v1391
    %v1944 = vpack.c.b16 %v1400, %v1392
    %v1945 = vpack.c.b16 %v1401, %v1393
    %v1946 = vpack.c.b16 %v1402, %v1394
    %v1947 = vpack.c.b16 %v1403, %v1395
    %v1948 = vpack.c.b16 %v1404, %v1396
    %v1949 = vpack.c.b16 %v1413, %v1405
    %v1950 = vpack.c.b16 %v1414, %v1406
    %v1951 = vpack.c.b16 %v1415, %v1407
    %v1952 = vpack.c.b16 %v1416, %v1408
    %v1953 = vpack.c.b16 %v1417, %v1409
    %v1954 = vpack.c.b16 %v1418, %v1410
    %v1955 = vpack.c.b16 %v1419, %v1411
    %v1956 = vpack.c.b16 %v1420, %v1412
    %v1957 = vpack.c.b16 %v1429, %v1421
    %v1958 = vpack.c.b16 %v1430, %v1422
    %v1959 = vpack.c.b16 %v1431, %v1423
    %v1960 = vpack.c.b16 %v1432, %v1424
    %v1961 = vpack.c.b16 %v1433, %v1425
    %v1962 = vpack.c.b16 %v1434, %v1426
    %v1963 = vpack.c.b16 %v1435, %v1427
    %v1964 = vpack.c.b16 %v1436, %v1428
    %v1965 = vpack.c.b16 %v1445, %v1437
    %v1966 = vpack.c.b16 %v1446, %v1438
    %v1967 = vpack.c.b16 %v1447, %v1439
    %v1968 = vpack.c.b16 %v1448, %v1440
    %v1969 = vpack.c.b16 %v1449, %v1441
    %v1970 = vpack.c.b16 %v1450, %v1442
    %v1971 = vpack.c.b16 %v1451, %v1443
    %v1972 = vpack.c.b16 %v1452, %v1444
    %v1973 = vpack.c.b16 %v1461, %v1453
    %v1974 = vpack.c.b16 %v1462, %v1454
    %v1975 = vpack.c.b16 %v1463, %v1455
    %v1976 = vpack.c.b16 %v1464, %v1456
    %v1977 = vpack.c.b16 %v1465, %v1457
    %v1978 = vpack.c.b16 %v1466, %v1458
    %v1979 = vpack.c.b16 %v1467, %v1459
    %v1980 = vpack.c.b16 %v1468, %v1460
    %v1981 = vpack.c.b16 %v1477, %v1469
    %v1982 = vpack.c.b16 %v1478, %v1470
    %v1983 = vpack.c.b16 %v1479, %v1471
    %v1984 = vpack.c.b16 %v1480, %v1472
    %v1985 = vpack.c.b16 %v1481, %v1473
    %v1986 = vpack.c.b16 %v1482, %v1474
    %v1987 = vpack.c.b16 %v1483, %v1475
    %v1988 = vpack.c.b16 %v1484, %v1476
    %v1989 = vpack.c.b16 %v1493, %v1485
    %v1990 = vpack.c.b16 %v1494, %v1486
    %v1991 = vpack.c.b16 %v1495, %v1487
    %v1992 = vpack.c.b16 %v1496, %v1488
    %v1993 = vpack.c.b16 %v1497, %v1489
    %v1994 = vpack.c.b16 %v1498, %v1490
    %v1995 = vpack.c.b16 %v1499, %v1491
    %v1996 = vpack.c.b16 %v1500, %v1492
    %v1997 = vpack.c.b16 %v1509, %v1501
    %v1998 = vpack.c.b16 %v1510, %v1502
    %v1999 = vpack.c.b16 %v1511, %v1503
    %v2000 = vpack.c.b16 %v1512, %v1504
    %v2001 = vpack.c.b16 %v1513, %v1505
    %v2002 = vpack.c.b16 %v1514, %v1506
    %v2003 = vpack.c.b16 %v1515, %v1507
    %v2004 = vpack.c.b16 %v1516, %v1508
    %v2005 = vpack.c.b16 %v1525, %v1517
    %v2006 = vpack.c.b16 %v1526, %v1518
    %v2007 = vpack.c.b16 %v1527, %v1519
    %v2008 = vpack.c.b16 %v1528, %v1520
    %v2009 = vpack.c.b16 %v1529, %v1521
    %v2010 = vpack.c.b16 %v1530, %v1522
    %v2011 = vpack.c.b16 %v1531, %v1523
    %v2012 = vpack.c.b16 %v1532, %v1524
    %v2013 = vpack.c.b16 %v1541, %v1533
    %v2014 = vpack.c.b16 %v1542, %v1534
    %v2015 = vpack.c.b16 %v1543, %v1535
    %v2016 = vpack.c.b16 %v1544, %v1536
    %v2017 = vpack.c.b16 %v1545, %v1537
    %v2018 = vpack.c.b16 %v1546, %v1538
    %v2019 = vpack.c.b16 %v1547, %v1539
    %v2020 = vpack.c.b16 %v1548, %v1540
    %v2021 = vpack.c.b16 %v1557, %v1549
    %v2022 = vpack.c.b16 %v1558, %v1550
    %v2023 = vpack.c.b16 %v1559, %v1551
    %v2024 = vpack.c.b16 %v1560, %v1552
    %v2025 = vpack.c.b16 %v1561, %v1553
    %v2026 = vpack.c.b16 %v1562, %v1554
    %v2027 = vpack.c.b16 %v1563, %v1555
    %v2028 = vpack.c.b16 %v1564, %v1556
    %v2029 = vpack.c.b16 %v1573, %v1565
    %v2030 = vpack.c.b16 %v1574, %v1566
    %v2031 = vpack.c.b16 %v1575, %v1567
    %v2032 = vpack.c.b16 %v1576, %v1568
    %v2033 = vpack.c.b16 %v1577, %v1569
    %v2034 = vpack.c.b16 %v1578, %v1570
    %v2035 = vpack.c.b16 %v1579, %v1571
    %v2036 = vpack.c.b16 %v1580, %v1572
    %v2037 = vpack.c.b16 %v1589, %v1581
    %v2038 = vpack.c.b16 %v1590, %v1582
    %v2039 = vpack.c.b16 %v1591, %v1583
    %v2040 = vpack.c.b16 %v1592, %v1584
    %v2041 = vpack.c.b16 %v1593, %v1585
    %v2042 = vpack.c.b16 %v1594, %v1586
    %v2043 = vpack.c.b16 %v1595, %v1587
    %v2044 = vpack.c.b16 %v1596, %v1588
    %v2045 = vpack.c.b16 %v1605, %v1597
    %v2046 = vpack.c.b16 %v1606, %v1598
    %v2047 = vpack.c.b16 %v1607, %v1599
    %v2048 = vpack.c.b16 %v1608, %v1600
    %v2049 = vpack.c.b16 %v1609, %v1601
    %v2050 = vpack.c.b16 %v1610, %v1602
    %v2051 = vpack.c.b16 %v1611, %v1603
    %v2052 = vpack.c.b16 %v1612, %v1604
    %v2053 = vpack.c.b16 %v1621, %v1613
    %v2054 = vpack.c.b16 %v1622, %v1614
    %v2055 = vpack.c.b16 %v1623, %v1615
    %v2056 = vpack.c.b16 %v1624, %v1616
    %v2057 = vpack.c.b16 %v1625, %v1617
    %v2058 = vpack.c.b16 %v1626, %v1618
    %v2059 = vpack.c.b16 %v1627, %v1619
    %v2060 = vpack.c.b16 %v1628, %v1620
    %v2061 = vpack.c.b16 %v1637, %v1629
    %v2062 = vpack.c.b16 %v1638, %v1630
    %v2063 = vpack.c.b16 %v1639, %v1631
    %v2064 = vpack.c.b16 %v1640, %v1632
    %v2065 = vpack.c.b16 %v1641, %v1633
    %v2066 = vpack.c.b16 %v1642, %v1634
    %v2067 = vpack.c.b16 %v1643, %v1635
    %v2068 = vpack.c.b16 %v1644, %v1636
    %v2069 = vpack.c.b16 %v1653, %v1645
    %v2070 = vpack.c.b16 %v1654, %v1646
    %v2071 = vpack.c.b16 %v1655, %v1647
    %v2072 = vpack.c.b16 %v1656, %v1648
    %v2073 = vpack.c.b16 %v1657, %v1649
    %v2074 = vpack.c.b16 %v1658, %v1650
    %v2075 = vpack.c.b16 %v1659, %v1651
    %v2076 = vpack.c.b16 %v1660, %v1652
    %v2077 = vpack.c.b16 %v1669, %v1661
    %v2078 = vpack.c.b16 %v1670, %v1662
    %v2079 = vpack.c.b16 %v1671, %v1663
    %v2080 = vpack.c.b16 %v1672, %v1664
    %v2081 = vpack.c.b16 %v1673, %v1665
    %v2082 = vpack.c.b16 %v1674, %v1666
    %v2083 = vpack.c.b16 %v1675, %v1667
    %v2084 = vpack.c.b16 %v1676, %v1668
    %v2085 = vpack.c.b16 %v1685, %v1677
    %v2086 = vpack.c.b16 %v1686, %v1678
    %v2087 = vpack.c.b16 %v1687, %v1679
    %v2088 = vpack.c.b16 %v1688, %v1680
    %v2089 = vpack.c.b16 %v1689, %v1681
    %v2090 = vpack.c.b16 %v1690, %v1682
    %v2091 = vpack.c.b16 %v1691, %v1683
    %v2092 = vpack.c.b16 %v1692, %v1684
    %v2093 = vpack.c.b16 %v1701, %v1693
    %v2094 = vpack.c.b16 %v1702, %v1694
    %v2095 = vpack.c.b16 %v1703, %v1695
    %v2096 = vpack.c.b16 %v1704, %v1696
    %v2097 = vpack.c.b16 %v1705, %v1697
    %v2098 = vpack.c.b16 %v1706, %v1698
    %v2099 = vpack.c.b16 %v1707, %v1699
    %v2100 = vpack.c.b16 %v1708, %v1700
    %v2101 = vpack.c.b16 %v1717, %v1709
    %v2102 = vpack.c.b16 %v1718, %v1710
    %v2103 = vpack.c.b16 %v1719, %v1711
    %v2104 = vpack.c.b16 %v1720, %v1712
    %v2105 = vpack.c.b16 %v1721, %v1713
    %v2106 = vpack.c.b16 %v1722, %v1714
    %v2107 = vpack.c.b16 %v1723, %v1715
    %v2108 = vpack.c.b16 %v1724, %v1716
    %2493 = vmatprep.subr.bf16.mxu0 %v1726
    %2494 = vmatpush1.bf16.msra.mxu0 %v1725
    %2495 = vmatprep.subr.bf16.mxu0 %v1734
    %2496 = vmatpush1.bf16.msra.mxu0 %v1733
    %2497 = vmatprep.subr.bf16.mxu0 %v1742
    %2498 = vmatpush1.bf16.msra.mxu0 %v1741
    %2499 = vmatprep.subr.bf16.mxu0 %v1750
    %2500 = vmatpush1.bf16.msra.mxu0 %v1749
    %2501 = vmatprep.subr.bf16.mxu0 %v1758
    %2502 = vmatpush1.bf16.msra.mxu0 %v1757
    %2503 = vmatprep.subr.bf16.mxu0 %v1766
    %2504 = vmatpush1.bf16.msra.mxu0 %v1765
    %2505 = vmatprep.subr.bf16.mxu0 %v1774
    %2506 = vmatpush1.bf16.msra.mxu0 %v1773
    %2507 = vmatprep.subr.bf16.mxu0 %v1782
    %2508 = vmatpush1.bf16.msra.mxu0 %v1781
    %2509 = vmatprep.subr.bf16.mxu0 %v1790
    %2510 = vmatpush1.bf16.msra.mxu0 %v1789
    %2511 = vmatprep.subr.bf16.mxu0 %v1798
    %2512 = vmatpush1.bf16.msra.mxu0 %v1797
    %2513 = vmatprep.subr.bf16.mxu0 %v1806
    %2514 = vmatpush1.bf16.msra.mxu0 %v1805
    %2515 = vmatprep.subr.bf16.mxu0 %v1814
    %2516 = vmatpush1.bf16.msra.mxu0 %v1813
    %2517 = vmatprep.subr.bf16.mxu0 %v1822
    %2518 = vmatpush1.bf16.msra.mxu0 %v1821
    %2519 = vmatprep.subr.bf16.mxu0 %v1830
    %2520 = vmatpush1.bf16.msra.mxu0 %v1829
    %2521 = vmatprep.subr.bf16.mxu0 %v1838
    %2522 = vmatpush1.bf16.msra.mxu0 %v1837
    %2523 = vmatprep.subr.bf16.mxu0 %v1846
    %2524 = vmatpush1.bf16.msra.mxu0 %v1845
    %2525 = vmatprep.mubr.bf16.mxu0 %v142
    %2526 = vmatmul.mubr.bf16.gmra.mrb[0].mxu0 %v141
    %v2527 = vpop.f32.mrb[0].mxu0
    %v2528 = vadd.f32 %v536, %v2527
    %v2529 = vpop.f32.mrb[0].mxu0
    %v2530 = vadd.f32 %v540, %v2529
    %v2531 = vpop.f32.mrb[0].mxu0
    %v2532 = vpop.f32.mrb[0].mxu0
    %2533 = vdwg.mxu0
    %2534 = vmatprep.subr.bf16.mxu0 %v1854
    %2535 = vmatpush1.bf16.msra.mxu0 %v1853
    %2536 = vmatprep.subr.bf16.mxu0 %v1862
    %2537 = vmatpush1.bf16.msra.mxu0 %v1861
    %2538 = vmatprep.subr.bf16.mxu0 %v1870
    %2539 = vmatpush1.bf16.msra.mxu0 %v1869
    %2540 = vmatprep.subr.bf16.mxu0 %v1878
    %2541 = vmatpush1.bf16.msra.mxu0 %v1877
    %2542 = vmatprep.subr.bf16.mxu0 %v1886
    %2543 = vmatpush1.bf16.msra.mxu0 %v1885
    %2544 = vmatprep.subr.bf16.mxu0 %v1894
    %2545 = vmatpush1.bf16.msra.mxu0 %v1893
    %2546 = vmatprep.subr.bf16.mxu0 %v1902
    %2547 = vmatpush1.bf16.msra.mxu0 %v1901
    %2548 = vmatprep.subr.bf16.mxu0 %v1910
    %2549 = vmatpush1.bf16.msra.mxu0 %v1909
    %2550 = vmatprep.subr.bf16.mxu0 %v1918
    %2551 = vmatpush1.bf16.msra.mxu0 %v1917
    %2552 = vmatprep.subr.bf16.mxu0 %v1926
    %2553 = vmatpush1.bf16.msra.mxu0 %v1925
    %2554 = vmatprep.subr.bf16.mxu0 %v1934
    %2555 = vmatpush1.bf16.msra.mxu0 %v1933
    %2556 = vmatprep.subr.bf16.mxu0 %v1942
    %2557 = vmatpush1.bf16.msra.mxu0 %v1941
    %2558 = vmatprep.subr.bf16.mxu0 %v1950
    %2559 = vmatpush1.bf16.msra.mxu0 %v1949
    %2560 = vmatprep.subr.bf16.mxu0 %v1958
    %2561 = vmatpush1.bf16.msra.mxu0 %v1957
    %2562 = vmatprep.subr.bf16.mxu0 %v1966
    %2563 = vmatpush1.bf16.msra.mxu0 %v1965
    %2564 = vmatprep.subr.bf16.mxu0 %v1974
    %2565 = vmatpush1.bf16.msra.mxu0 %v1973
    %2566 = vmatprep.mubr.bf16.mxu0 %v144
    %2567 = vmatmul.mubr.bf16.gmra.mrb[0].mxu0 %v143
    %v2568 = vpop.f32.mrb[0].mxu0
    %v2569 = vadd.f32 %v2528, %v2568
    %v2570 = vpop.f32.mrb[0].mxu0
    %v2571 = vadd.f32 %v2530, %v2570
    %v2572 = vpop.f32.mrb[0].mxu0
    %v2573 = vpop.f32.mrb[0].mxu0
    %2574 = vdwg.mxu0
    %2575 = vmatprep.subr.bf16.mxu0 %v1982
    %2576 = vmatpush1.bf16.msra.mxu0 %v1981
    %2577 = vmatprep.subr.bf16.mxu0 %v1990
    %2578 = vmatpush1.bf16.msra.mxu0 %v1989
    %2579 = vmatprep.subr.bf16.mxu0 %v1998
    %2580 = vmatpush1.bf16.msra.mxu0 %v1997
    %2581 = vmatprep.subr.bf16.mxu0 %v2006
    %2582 = vmatpush1.bf16.msra.mxu0 %v2005
    %2583 = vmatprep.subr.bf16.mxu0 %v2014
    %2584 = vmatpush1.bf16.msra.mxu0 %v2013
    %2585 = vmatprep.subr.bf16.mxu0 %v2022
    %2586 = vmatpush1.bf16.msra.mxu0 %v2021
    %2587 = vmatprep.subr.bf16.mxu0 %v2030
    %2588 = vmatpush1.bf16.msra.mxu0 %v2029
    %2589 = vmatprep.subr.bf16.mxu0 %v2038
    %2590 = vmatpush1.bf16.msra.mxu0 %v2037
    %2591 = vmatprep.subr.bf16.mxu0 %v2046
    %2592 = vmatpush1.bf16.msra.mxu0 %v2045
    %2593 = vmatprep.subr.bf16.mxu0 %v2054
    %2594 = vmatpush1.bf16.msra.mxu0 %v2053
    %2595 = vmatprep.subr.bf16.mxu0 %v2062
    %2596 = vmatpush1.bf16.msra.mxu0 %v2061
    %2597 = vmatprep.subr.bf16.mxu0 %v2070
    %2598 = vmatpush1.bf16.msra.mxu0 %v2069
    %2599 = vmatprep.subr.bf16.mxu0 %v2078
    %2600 = vmatpush1.bf16.msra.mxu0 %v2077
    %2601 = vmatprep.subr.bf16.mxu0 %v2086
    %2602 = vmatpush1.bf16.msra.mxu0 %v2085
    %2603 = vmatprep.subr.bf16.mxu0 %v2094
    %2604 = vmatpush1.bf16.msra.mxu0 %v2093
    %2605 = vmatprep.subr.bf16.mxu0 %v2102
    %2606 = vmatpush1.bf16.msra.mxu0 %v2101
    %2607 = vmatprep.mubr.bf16.mxu0 %v146
    %2608 = vmatmul.mubr.bf16.gmra.mrb[0].mxu0 %v145
    %v2609 = vpop.f32.mrb[0].mxu0
    %v2610 = vadd.f32 %v2569, %v2609
    %v2611 = vpop.f32.mrb[0].mxu0
    %v2612 = vadd.f32 %v2571, %v2611
    %v2613 = vpop.f32.mrb[0].mxu0
    %v2614 = vpop.f32.mrb[0].mxu0
    %2615 = vdwg.mxu0
    %2616 = vmatprep.subr.bf16.mxu0 %v1728
    %2617 = vmatpush1.bf16.msra.mxu0 %v1727
    %2618 = vmatprep.subr.bf16.mxu0 %v1736
    %2619 = vmatpush1.bf16.msra.mxu0 %v1735
    %2620 = vmatprep.subr.bf16.mxu0 %v1744
    %2621 = vmatpush1.bf16.msra.mxu0 %v1743
    %2622 = vmatprep.subr.bf16.mxu0 %v1752
    %2623 = vmatpush1.bf16.msra.mxu0 %v1751
    %2624 = vmatprep.subr.bf16.mxu0 %v1760
    %2625 = vmatpush1.bf16.msra.mxu0 %v1759
    %2626 = vmatprep.subr.bf16.mxu0 %v1768
    %2627 = vmatpush1.bf16.msra.mxu0 %v1767
    %2628 = vmatprep.subr.bf16.mxu0 %v1776
    %2629 = vmatpush1.bf16.msra.mxu0 %v1775
    %2630 = vmatprep.subr.bf16.mxu0 %v1784
    %2631 = vmatpush1.bf16.msra.mxu0 %v1783
    %2632 = vmatprep.subr.bf16.mxu0 %v1792
    %2633 = vmatpush1.bf16.msra.mxu0 %v1791
    %2634 = vmatprep.subr.bf16.mxu0 %v1800
    %2635 = vmatpush1.bf16.msra.mxu0 %v1799
    %2636 = vmatprep.subr.bf16.mxu0 %v1808
    %2637 = vmatpush1.bf16.msra.mxu0 %v1807
    %2638 = vmatprep.subr.bf16.mxu0 %v1816
    %2639 = vmatpush1.bf16.msra.mxu0 %v1815
    %2640 = vmatprep.subr.bf16.mxu0 %v1824
    %2641 = vmatpush1.bf16.msra.mxu0 %v1823
    %2642 = vmatprep.subr.bf16.mxu0 %v1832
    %2643 = vmatpush1.bf16.msra.mxu0 %v1831
    %2644 = vmatprep.subr.bf16.mxu0 %v1840
    %2645 = vmatpush1.bf16.msra.mxu0 %v1839
    %2646 = vmatprep.subr.bf16.mxu0 %v1848
    %2647 = vmatpush1.bf16.msra.mxu0 %v1847
    %2648 = vmatprep.mubr.bf16.mxu0 %v142
    %2649 = vmatmul.mubr.bf16.gmra.mrb[0].mxu0 %v141
    %v2650 = vpop.f32.mrb[0].mxu0
    %v2651 = vadd.f32 %v544, %v2650
    %v2652 = vpop.f32.mrb[0].mxu0
    %v2653 = vadd.f32 %v548, %v2652
    %v2654 = vpop.f32.mrb[0].mxu0
    %v2655 = vpop.f32.mrb[0].mxu0
    %2656 = vdwg.mxu0
    %2657 = vmatprep.subr.bf16.mxu0 %v1856
    %2658 = vmatpush1.bf16.msra.mxu0 %v1855
    %2659 = vmatprep.subr.bf16.mxu0 %v1864
    %2660 = vmatpush1.bf16.msra.mxu0 %v1863
    %2661 = vmatprep.subr.bf16.mxu0 %v1872
    %2662 = vmatpush1.bf16.msra.mxu0 %v1871
    %2663 = vmatprep.subr.bf16.mxu0 %v1880
    %2664 = vmatpush1.bf16.msra.mxu0 %v1879
    %2665 = vmatprep.subr.bf16.mxu0 %v1888
    %2666 = vmatpush1.bf16.msra.mxu0 %v1887
    %2667 = vmatprep.subr.bf16.mxu0 %v1896
    %2668 = vmatpush1.bf16.msra.mxu0 %v1895
    %2669 = vmatprep.subr.bf16.mxu0 %v1904
    %2670 = vmatpush1.bf16.msra.mxu0 %v1903
    %2671 = vmatprep.subr.bf16.mxu0 %v1912
    %2672 = vmatpush1.bf16.msra.mxu0 %v1911
    %2673 = vmatprep.subr.bf16.mxu0 %v1920
    %2674 = vmatpush1.bf16.msra.mxu0 %v1919
    %2675 = vmatprep.subr.bf16.mxu0 %v1928
    %2676 = vmatpush1.bf16.msra.mxu0 %v1927
    %2677 = vmatprep.subr.bf16.mxu0 %v1936
    %2678 = vmatpush1.bf16.msra.mxu0 %v1935
    %2679 = vmatprep.subr.bf16.mxu0 %v1944
    %2680 = vmatpush1.bf16.msra.mxu0 %v1943
    %2681 = vmatprep.subr.bf16.mxu0 %v1952
    %2682 = vmatpush1.bf16.msra.mxu0 %v1951
    %2683 = vmatprep.subr.bf16.mxu0 %v1960
    %2684 = vmatpush1.bf16.msra.mxu0 %v1959
    %2685 = vmatprep.subr.bf16.mxu0 %v1968
    %2686 = vmatpush1.bf16.msra.mxu0 %v1967
    %2687 = vmatprep.subr.bf16.mxu0 %v1976
    %2688 = vmatpush1.bf16.msra.mxu0 %v1975
    %2689 = vmatprep.mubr.bf16.mxu0 %v144
    %2690 = vmatmul.mubr.bf16.gmra.mrb[0].mxu0 %v143
    %v2691 = vpop.f32.mrb[0].mxu0
    %v2692 = vadd.f32 %v2651, %v2691
    %v2693 = vpop.f32.mrb[0].mxu0
    %v2694 = vadd.f32 %v2653, %v2693
    %v2695 = vpop.f32.mrb[0].mxu0
    %v2696 = vpop.f32.mrb[0].mxu0
    %2697 = vdwg.mxu0
    %2698 = vmatprep.subr.bf16.mxu0 %v1984
    %2699 = vmatpush1.bf16.msra.mxu0 %v1983
    %2700 = vmatprep.subr.bf16.mxu0 %v1992
    %2701 = vmatpush1.bf16.msra.mxu0 %v1991
    %2702 = vmatprep.subr.bf16.mxu0 %v2000
    %2703 = vmatpush1.bf16.msra.mxu0 %v1999
    %2704 = vmatprep.subr.bf16.mxu0 %v2008
    %2705 = vmatpush1.bf16.msra.mxu0 %v2007
    %2706 = vmatprep.subr.bf16.mxu0 %v2016
    %2707 = vmatpush1.bf16.msra.mxu0 %v2015
    %2708 = vmatprep.subr.bf16.mxu0 %v2024
    %2709 = vmatpush1.bf16.msra.mxu0 %v2023
    %2710 = vmatprep.subr.bf16.mxu0 %v2032
    %2711 = vmatpush1.bf16.msra.mxu0 %v2031
    %2712 = vmatprep.subr.bf16.mxu0 %v2040
    %2713 = vmatpush1.bf16.msra.mxu0 %v2039
    %2714 = vmatprep.subr.bf16.mxu0 %v2048
    %2715 = vmatpush1.bf16.msra.mxu0 %v2047
    %2716 = vmatprep.subr.bf16.mxu0 %v2056
    %2717 = vmatpush1.bf16.msra.mxu0 %v2055
    %2718 = vmatprep.subr.bf16.mxu0 %v2064
    %2719 = vmatpush1.bf16.msra.mxu0 %v2063
    %2720 = vmatprep.subr.bf16.mxu0 %v2072
    %2721 = vmatpush1.bf16.msra.mxu0 %v2071
    %2722 = vmatprep.subr.bf16.mxu0 %v2080
    %2723 = vmatpush1.bf16.msra.mxu0 %v2079
    %2724 = vmatprep.subr.bf16.mxu0 %v2088
    %2725 = vmatpush1.bf16.msra.mxu0 %v2087
    %2726 = vmatprep.subr.bf16.mxu0 %v2096
    %2727 = vmatpush1.bf16.msra.mxu0 %v2095
    %2728 = vmatprep.subr.bf16.mxu0 %v2104
    %2729 = vmatpush1.bf16.msra.mxu0 %v2103
    %2730 = vmatprep.mubr.bf16.mxu0 %v146
    %2731 = vmatmul.mubr.bf16.gmra.mrb[0].mxu0 %v145
    %v2732 = vpop.f32.mrb[0].mxu0
    %v2733 = vadd.f32 %v2692, %v2732
    %v2734 = vpop.f32.mrb[0].mxu0
    %v2735 = vadd.f32 %v2694, %v2734
    %v2736 = vpop.f32.mrb[0].mxu0
    %v2737 = vpop.f32.mrb[0].mxu0
    %2738 = vdwg.mxu0
    %2739 = vmatprep.subr.bf16.mxu0 %v1730
    %2740 = vmatpush1.bf16.msra.mxu0 %v1729
    %2741 = vmatprep.subr.bf16.mxu0 %v1738
    %2742 = vmatpush1.bf16.msra.mxu0 %v1737
    %2743 = vmatprep.subr.bf16.mxu0 %v1746
    %2744 = vmatpush1.bf16.msra.mxu0 %v1745
    %2745 = vmatprep.subr.bf16.mxu0 %v1754
    %2746 = vmatpush1.bf16.msra.mxu0 %v1753
    %2747 = vmatprep.subr.bf16.mxu0 %v1762
    %2748 = vmatpush1.bf16.msra.mxu0 %v1761
    %2749 = vmatprep.subr.bf16.mxu0 %v1770
    %2750 = vmatpush1.bf16.msra.mxu0 %v1769
    %2751 = vmatprep.subr.bf16.mxu0 %v1778
    %2752 = vmatpush1.bf16.msra.mxu0 %v1777
    %2753 = vmatprep.subr.bf16.mxu0 %v1786
    %2754 = vmatpush1.bf16.msra.mxu0 %v1785
    %2755 = vmatprep.subr.bf16.mxu0 %v1794
    %2756 = vmatpush1.bf16.msra.mxu0 %v1793
    %2757 = vmatprep.subr.bf16.mxu0 %v1802
    %2758 = vmatpush1.bf16.msra.mxu0 %v1801
    %2759 = vmatprep.subr.bf16.mxu0 %v1810
    %2760 = vmatpush1.bf16.msra.mxu0 %v1809
    %2761 = vmatprep.subr.bf16.mxu0 %v1818
    %2762 = vmatpush1.bf16.msra.mxu0 %v1817
    %2763 = vmatprep.subr.bf16.mxu0 %v1826
    %2764 = vmatpush1.bf16.msra.mxu0 %v1825
    %2765 = vmatprep.subr.bf16.mxu0 %v1834
    %2766 = vmatpush1.bf16.msra.mxu0 %v1833
    %2767 = vmatprep.subr.bf16.mxu0 %v1842
    %2768 = vmatpush1.bf16.msra.mxu0 %v1841
    %2769 = vmatprep.subr.bf16.mxu0 %v1850
    %2770 = vmatpush1.bf16.msra.mxu0 %v1849
    %2771 = vmatprep.mubr.bf16.mxu0 %v142
    %2772 = vmatmul.mubr.bf16.gmra.mrb[0].mxu0 %v141
    %v2773 = vpop.f32.mrb[0].mxu0
    %v2774 = vadd.f32 %v552, %v2773
    %v2775 = vpop.f32.mrb[0].mxu0
    %v2776 = vadd.f32 %v556, %v2775
    %v2777 = vpop.f32.mrb[0].mxu0
    %v2778 = vpop.f32.mrb[0].mxu0
    %2779 = vdwg.mxu0
    %2780 = vmatprep.subr.bf16.mxu0 %v1858
    %2781 = vmatpush1.bf16.msra.mxu0 %v1857
    %2782 = vmatprep.subr.bf16.mxu0 %v1866
    %2783 = vmatpush1.bf16.msra.mxu0 %v1865
    %2784 = vmatprep.subr.bf16.mxu0 %v1874
    %2785 = vmatpush1.bf16.msra.mxu0 %v1873
    %2786 = vmatprep.subr.bf16.mxu0 %v1882
    %2787 = vmatpush1.bf16.msra.mxu0 %v1881
    %2788 = vmatprep.subr.bf16.mxu0 %v1890
    %2789 = vmatpush1.bf16.msra.mxu0 %v1889
    %2790 = vmatprep.subr.bf16.mxu0 %v1898
    %2791 = vmatpush1.bf16.msra.mxu0 %v1897
    %2792 = vmatprep.subr.bf16.mxu0 %v1906
    %2793 = vmatpush1.bf16.msra.mxu0 %v1905
    %2794 = vmatprep.subr.bf16.mxu0 %v1914
    %2795 = vmatpush1.bf16.msra.mxu0 %v1913
    %2796 = vmatprep.subr.bf16.mxu0 %v1922
    %2797 = vmatpush1.bf16.msra.mxu0 %v1921
    %2798 = vmatprep.subr.bf16.mxu0 %v1930
    %2799 = vmatpush1.bf16.msra.mxu0 %v1929
    %2800 = vmatprep.subr.bf16.mxu0 %v1938
    %2801 = vmatpush1.bf16.msra.mxu0 %v1937
    %2802 = vmatprep.subr.bf16.mxu0 %v1946
    %2803 = vmatpush1.bf16.msra.mxu0 %v1945
    %2804 = vmatprep.subr.bf16.mxu0 %v1954
    %2805 = vmatpush1.bf16.msra.mxu0 %v1953
    %2806 = vmatprep.subr.bf16.mxu0 %v1962
    %2807 = vmatpush1.bf16.msra.mxu0 %v1961
    %2808 = vmatprep.subr.bf16.mxu0 %v1970
    %2809 = vmatpush1.bf16.msra.mxu0 %v1969
    %2810 = vmatprep.subr.bf16.mxu0 %v1978
    %2811 = vmatpush1.bf16.msra.mxu0 %v1977
    %2812 = vmatprep.mubr.bf16.mxu0 %v144
    %2813 = vmatmul.mubr.bf16.gmra.mrb[0].mxu0 %v143
    %v2814 = vpop.f32.mrb[0].mxu0
    %v2815 = vadd.f32 %v2774, %v2814
    %v2816 = vpop.f32.mrb[0].mxu0
    %v2817 = vadd.f32 %v2776, %v2816
    %v2818 = vpop.f32.mrb[0].mxu0
    %v2819 = vpop.f32.mrb[0].mxu0
    %2820 = vdwg.mxu0
    %2821 = vmatprep.subr.bf16.mxu0 %v1986
    %2822 = vmatpush1.bf16.msra.mxu0 %v1985
    %2823 = vmatprep.subr.bf16.mxu0 %v1994
    %2824 = vmatpush1.bf16.msra.mxu0 %v1993
    %2825 = vmatprep.subr.bf16.mxu0 %v2002
    %2826 = vmatpush1.bf16.msra.mxu0 %v2001
    %2827 = vmatprep.subr.bf16.mxu0 %v2010
    %2828 = vmatpush1.bf16.msra.mxu0 %v2009
    %2829 = vmatprep.subr.bf16.mxu0 %v2018
    %2830 = vmatpush1.bf16.msra.mxu0 %v2017
    %2831 = vmatprep.subr.bf16.mxu0 %v2026
    %2832 = vmatpush1.bf16.msra.mxu0 %v2025
    %2833 = vmatprep.subr.bf16.mxu0 %v2034
    %2834 = vmatpush1.bf16.msra.mxu0 %v2033
    %2835 = vmatprep.subr.bf16.mxu0 %v2042
    %2836 = vmatpush1.bf16.msra.mxu0 %v2041
    %2837 = vmatprep.subr.bf16.mxu0 %v2050
    %2838 = vmatpush1.bf16.msra.mxu0 %v2049
    %2839 = vmatprep.subr.bf16.mxu0 %v2058
    %2840 = vmatpush1.bf16.msra.mxu0 %v2057
    %2841 = vmatprep.subr.bf16.mxu0 %v2066
    %2842 = vmatpush1.bf16.msra.mxu0 %v2065
    %2843 = vmatprep.subr.bf16.mxu0 %v2074
    %2844 = vmatpush1.bf16.msra.mxu0 %v2073
    %2845 = vmatprep.subr.bf16.mxu0 %v2082
    %2846 = vmatpush1.bf16.msra.mxu0 %v2081
    %2847 = vmatprep.subr.bf16.mxu0 %v2090
    %2848 = vmatpush1.bf16.msra.mxu0 %v2089
    %2849 = vmatprep.subr.bf16.mxu0 %v2098
    %2850 = vmatpush1.bf16.msra.mxu0 %v2097
    %2851 = vmatprep.subr.bf16.mxu0 %v2106
    %2852 = vmatpush1.bf16.msra.mxu0 %v2105
    %2853 = vmatprep.mubr.bf16.mxu0 %v146
    %2854 = vmatmul.mubr.bf16.gmra.mrb[0].mxu0 %v145
    %v2855 = vpop.f32.mrb[0].mxu0
    %v2856 = vadd.f32 %v2815, %v2855
    %v2857 = vpop.f32.mrb[0].mxu0
    %v2858 = vadd.f32 %v2817, %v2857
    %v2859 = vpop.f32.mrb[0].mxu0
    %v2860 = vpop.f32.mrb[0].mxu0
    %2861 = vdwg.mxu0
    %2862 = vmatprep.subr.bf16.mxu0 %v1732
    %2863 = vmatpush1.bf16.msra.mxu0 %v1731
    %2864 = vmatprep.subr.bf16.mxu0 %v1740
    %2865 = vmatpush1.bf16.msra.mxu0 %v1739
    %2866 = vmatprep.subr.bf16.mxu0 %v1748
    %2867 = vmatpush1.bf16.msra.mxu0 %v1747
    %2868 = vmatprep.subr.bf16.mxu0 %v1756
    %2869 = vmatpush1.bf16.msra.mxu0 %v1755
    %2870 = vmatprep.subr.bf16.mxu0 %v1764
    %2871 = vmatpush1.bf16.msra.mxu0 %v1763
    %2872 = vmatprep.subr.bf16.mxu0 %v1772
    %2873 = vmatpush1.bf16.msra.mxu0 %v1771
    %2874 = vmatprep.subr.bf16.mxu0 %v1780
    %2875 = vmatpush1.bf16.msra.mxu0 %v1779
    %2876 = vmatprep.subr.bf16.mxu0 %v1788
    %2877 = vmatpush1.bf16.msra.mxu0 %v1787
    %2878 = vmatprep.subr.bf16.mxu0 %v1796
    %2879 = vmatpush1.bf16.msra.mxu0 %v1795
    %2880 = vmatprep.subr.bf16.mxu0 %v1804
    %2881 = vmatpush1.bf16.msra.mxu0 %v1803
    %2882 = vmatprep.subr.bf16.mxu0 %v1812
    %2883 = vmatpush1.bf16.msra.mxu0 %v1811
    %2884 = vmatprep.subr.bf16.mxu0 %v1820
    %2885 = vmatpush1.bf16.msra.mxu0 %v1819
    %2886 = vmatprep.subr.bf16.mxu0 %v1828
    %2887 = vmatpush1.bf16.msra.mxu0 %v1827
    %2888 = vmatprep.subr.bf16.mxu0 %v1836
    %2889 = vmatpush1.bf16.msra.mxu0 %v1835
    %2890 = vmatprep.subr.bf16.mxu0 %v1844
    %2891 = vmatpush1.bf16.msra.mxu0 %v1843
    %2892 = vmatprep.subr.bf16.mxu0 %v1852
    %2893 = vmatpush1.bf16.msra.mxu0 %v1851
    %2894 = vmatprep.mubr.bf16.mxu0 %v142
    %2895 = vmatmul.mubr.bf16.gmra.mrb[0].mxu0 %v141
    %v2896 = vpop.f32.mrb[0].mxu0
    %v2897 = vadd.f32 %v560, %v2896
    %v2898 = vpop.f32.mrb[0].mxu0
    %v2899 = vadd.f32 %v564, %v2898
    %v2900 = vpop.f32.mrb[0].mxu0
    %v2901 = vpop.f32.mrb[0].mxu0
    %2902 = vdwg.mxu0
    %2903 = vmatprep.subr.bf16.mxu0 %v1860
    %2904 = vmatpush1.bf16.msra.mxu0 %v1859
    %2905 = vmatprep.subr.bf16.mxu0 %v1868
    %2906 = vmatpush1.bf16.msra.mxu0 %v1867
    %2907 = vmatprep.subr.bf16.mxu0 %v1876
    %2908 = vmatpush1.bf16.msra.mxu0 %v1875
    %2909 = vmatprep.subr.bf16.mxu0 %v1884
    %2910 = vmatpush1.bf16.msra.mxu0 %v1883
    %2911 = vmatprep.subr.bf16.mxu0 %v1892
    %2912 = vmatpush1.bf16.msra.mxu0 %v1891
    %2913 = vmatprep.subr.bf16.mxu0 %v1900
    %2914 = vmatpush1.bf16.msra.mxu0 %v1899
    %2915 = vmatprep.subr.bf16.mxu0 %v1908
    %2916 = vmatpush1.bf16.msra.mxu0 %v1907
    %2917 = vmatprep.subr.bf16.mxu0 %v1916
    %2918 = vmatpush1.bf16.msra.mxu0 %v1915
    %2919 = vmatprep.subr.bf16.mxu0 %v1924
    %2920 = vmatpush1.bf16.msra.mxu0 %v1923
    %2921 = vmatprep.subr.bf16.mxu0 %v1932
    %2922 = vmatpush1.bf16.msra.mxu0 %v1931
    %2923 = vmatprep.subr.bf16.mxu0 %v1940
    %2924 = vmatpush1.bf16.msra.mxu0 %v1939
    %2925 = vmatprep.subr.bf16.mxu0 %v1948
    %2926 = vmatpush1.bf16.msra.mxu0 %v1947
    %2927 = vmatprep.subr.bf16.mxu0 %v1956
    %2928 = vmatpush1.bf16.msra.mxu0 %v1955
    %2929 = vmatprep.subr.bf16.mxu0 %v1964
    %2930 = vmatpush1.bf16.msra.mxu0 %v1963
    %2931 = vmatprep.subr.bf16.mxu0 %v1972
    %2932 = vmatpush1.bf16.msra.mxu0 %v1971
    %2933 = vmatprep.subr.bf16.mxu0 %v1980
    %2934 = vmatpush1.bf16.msra.mxu0 %v1979
    %2935 = vmatprep.mubr.bf16.mxu0 %v144
    %2936 = vmatmul.mubr.bf16.gmra.mrb[0].mxu0 %v143
    %v2937 = vpop.f32.mrb[0].mxu0
    %v2938 = vadd.f32 %v2897, %v2937
    %v2939 = vpop.f32.mrb[0].mxu0
    %v2940 = vadd.f32 %v2899, %v2939
    %v2941 = vpop.f32.mrb[0].mxu0
    %v2942 = vpop.f32.mrb[0].mxu0
    %2943 = vdwg.mxu0
    %2944 = vmatprep.subr.bf16.mxu0 %v1988
    %2945 = vmatpush1.bf16.msra.mxu0 %v1987
    %2946 = vmatprep.subr.bf16.mxu0 %v1996
    %2947 = vmatpush1.bf16.msra.mxu0 %v1995
    %2948 = vmatprep.subr.bf16.mxu0 %v2004
    %2949 = vmatpush1.bf16.msra.mxu0 %v2003
    %2950 = vmatprep.subr.bf16.mxu0 %v2012
    %2951 = vmatpush1.bf16.msra.mxu0 %v2011
    %2952 = vmatprep.subr.bf16.mxu0 %v2020
    %2953 = vmatpush1.bf16.msra.mxu0 %v2019
    %2954 = vmatprep.subr.bf16.mxu0 %v2028
    %2955 = vmatpush1.bf16.msra.mxu0 %v2027
    %2956 = vmatprep.subr.bf16.mxu0 %v2036
    %2957 = vmatpush1.bf16.msra.mxu0 %v2035
    %2958 = vmatprep.subr.bf16.mxu0 %v2044
    %2959 = vmatpush1.bf16.msra.mxu0 %v2043
    %2960 = vmatprep.subr.bf16.mxu0 %v2052
    %2961 = vmatpush1.bf16.msra.mxu0 %v2051
    %2962 = vmatprep.subr.bf16.mxu0 %v2060
    %2963 = vmatpush1.bf16.msra.mxu0 %v2059
    %2964 = vmatprep.subr.bf16.mxu0 %v2068
    %2965 = vmatpush1.bf16.msra.mxu0 %v2067
    %2966 = vmatprep.subr.bf16.mxu0 %v2076
    %2967 = vmatpush1.bf16.msra.mxu0 %v2075
    %2968 = vmatprep.subr.bf16.mxu0 %v2084
    %2969 = vmatpush1.bf16.msra.mxu0 %v2083
    %2970 = vmatprep.subr.bf16.mxu0 %v2092
    %2971 = vmatpush1.bf16.msra.mxu0 %v2091
    %2972 = vmatprep.subr.bf16.mxu0 %v2100
    %2973 = vmatpush1.bf16.msra.mxu0 %v2099
    %2974 = vmatprep.subr.bf16.mxu0 %v2108
    %2975 = vmatpush1.bf16.msra.mxu0 %v2107
    %2976 = vmatprep.mubr.bf16.mxu0 %v146
    %2977 = vmatmul.mubr.bf16.gmra.mrb[0].mxu0 %v145
    %v2978 = vpop.f32.mrb[0].mxu0
    %v2979 = vadd.f32 %v2938, %v2978
    %v2980 = vpop.f32.mrb[0].mxu0
    %v2981 = vadd.f32 %v2940, %v2980
    %v2982 = vpop.f32.mrb[0].mxu0
    %v2983 = vpop.f32.mrb[0].mxu0
    %2984 = vdwg.mxu0
    %v2985 = vmax.f32 %v2610, 0.0
    %v2986 = vmax.f32 %v2612, 0.0
    %v2987 = vmax.f32 %v2733, 0.0
    %v2988 = vmax.f32 %v2735, 0.0
    %v2989 = vmax.f32 %v2856, 0.0
    %v2990 = vmax.f32 %v2858, 0.0
    %v2991 = vmax.f32 %v2979, 0.0
    %v2992 = vmax.f32 %v2981, 0.0
    %v2993 = vpack.c.bf16 %v2985, %v2985
    %v2994 = vpack.c.bf16 %v2986, %v2986
    %v2995 = vpack.c.bf16 %v2987, %v2987
    %v2996 = vpack.c.bf16 %v2988, %v2988
    %v2997 = vpack.c.bf16 %v2989, %v2989
    %v2998 = vpack.c.bf16 %v2990, %v2990
    %v2999 = vpack.c.bf16 %v2991, %v2991
    %v3000 = vpack.c.bf16 %v2992, %v2992
    %v3001 = vld [vmem:[#allocation6] sm:$0xff]
    %v3002 = vld [vmem:[#allocation6 + $0x8] sm:$0xff]
    %v3003 = vld [vmem:[#allocation6 + $0x10] sm:$0xff]
    %v3004 = vld [vmem:[#allocation6 + $0x18] sm:$0xff]
    %v3005 = vld [vmem:[#allocation6 + $0x20] sm:$0xff]
    %v3006 = vld [vmem:[#allocation6 + $0x28] sm:$0xff]
    %v3007 = vld [vmem:[#allocation6 + $0x30] sm:$0xff]
    %v3008 = vld [vmem:[#allocation6 + $0x38] sm:$0xff]
    %v3009 = vld [vmem:[#allocation6 + $0x40] sm:$0xff]
    %v3010 = vld [vmem:[#allocation6 + $0x48] sm:$0xff]
    %v3011 = vld [vmem:[#allocation6 + $0x50] sm:$0xff]
    %v3012 = vld [vmem:[#allocation6 + $0x58] sm:$0xff]
    %v3013 = vld [vmem:[#allocation6 + $0x60] sm:$0xff]
    %v3014 = vld [vmem:[#allocation6 + $0x68] sm:$0xff]
    %v3015 = vld [vmem:[#allocation6 + $0x70] sm:$0xff]
    %v3016 = vld [vmem:[#allocation6 + $0x78] sm:$0xff]
    %v3017 = vld [vmem:[#allocation6 + $0x80] sm:$0xff]
    %v3018 = vld [vmem:[#allocation6 + $0x88] sm:$0xff]
    %v3019 = vld [vmem:[#allocation6 + $0x90] sm:$0xff]
    %v3020 = vld [vmem:[#allocation6 + $0x98] sm:$0xff]
    %v3021 = vld [vmem:[#allocation6 + $0xa0] sm:$0xff]
    %v3022 = vld [vmem:[#allocation6 + $0xa8] sm:$0xff]
    %v3023 = vld [vmem:[#allocation6 + $0xb0] sm:$0xff]
    %v3024 = vld [vmem:[#allocation6 + $0xb8] sm:$0xff]
    %v3025 = vld [vmem:[#allocation6 + $0xc0] sm:$0xff]
    %v3026 = vld [vmem:[#allocation6 + $0xc8] sm:$0xff]
    %v3027 = vld [vmem:[#allocation6 + $0xd0] sm:$0xff]
    %v3028 = vld [vmem:[#allocation6 + $0xd8] sm:$0xff]
    %v3029 = vld [vmem:[#allocation6 + $0xe0] sm:$0xff]
    %v3030 = vld [vmem:[#allocation6 + $0xe8] sm:$0xff]
    %v3031 = vld [vmem:[#allocation6 + $0xf0] sm:$0xff]
    %v3032 = vld [vmem:[#allocation6 + $0xf8] sm:$0xff]
    %v3033 = vld [vmem:[#allocation6 + $0x100] sm:$0xff]
    %v3034 = vld [vmem:[#allocation6 + $0x108] sm:$0xff]
    %v3035 = vld [vmem:[#allocation6 + $0x110] sm:$0xff]
    %v3036 = vld [vmem:[#allocation6 + $0x118] sm:$0xff]
    %v3037 = vld [vmem:[#allocation6 + $0x120] sm:$0xff]
    %v3038 = vld [vmem:[#allocation6 + $0x128] sm:$0xff]
    %v3039 = vld [vmem:[#allocation6 + $0x130] sm:$0xff]
    %v3040 = vld [vmem:[#allocation6 + $0x138] sm:$0xff]
    %v3041 = vld [vmem:[#allocation6 + $0x140] sm:$0xff]
    %v3042 = vld [vmem:[#allocation6 + $0x148] sm:$0xff]
    %v3043 = vld [vmem:[#allocation6 + $0x150] sm:$0xff]
    %v3044 = vld [vmem:[#allocation6 + $0x158] sm:$0xff]
    %v3045 = vld [vmem:[#allocation6 + $0x160] sm:$0xff]
    %v3046 = vld [vmem:[#allocation6 + $0x168] sm:$0xff]
    %v3047 = vld [vmem:[#allocation6 + $0x170] sm:$0xff]
    %v3048 = vld [vmem:[#allocation6 + $0x178] sm:$0xff]
    %v3049 = vld [vmem:[#allocation6 + $0x180] sm:$0xff]
    %v3050 = vld [vmem:[#allocation6 + $0x188] sm:$0xff]
    %v3051 = vld [vmem:[#allocation6 + $0x190] sm:$0xff]
    %v3052 = vld [vmem:[#allocation6 + $0x198] sm:$0xff]
    %v3053 = vld [vmem:[#allocation6 + $0x1a0] sm:$0xff]
    %v3054 = vld [vmem:[#allocation6 + $0x1a8] sm:$0xff]
    %v3055 = vld [vmem:[#allocation6 + $0x1b0] sm:$0xff]
    %v3056 = vld [vmem:[#allocation6 + $0x1b8] sm:$0xff]
    %v3057 = vld [vmem:[#allocation6 + $0x1c0] sm:$0xff]
    %v3058 = vld [vmem:[#allocation6 + $0x1c8] sm:$0xff]
    %v3059 = vld [vmem:[#allocation6 + $0x1d0] sm:$0xff]
    %v3060 = vld [vmem:[#allocation6 + $0x1d8] sm:$0xff]
    %v3061 = vld [vmem:[#allocation6 + $0x1e0] sm:$0xff]
    %v3062 = vld [vmem:[#allocation6 + $0x1e8] sm:$0xff]
    %v3063 = vld [vmem:[#allocation6 + $0x1f0] sm:$0xff]
    %v3064 = vld [vmem:[#allocation6 + $0x1f8] sm:$0xff]
    %v3065 = vld [vmem:[#allocation6 + $0x200] sm:$0xff]
    %v3066 = vld [vmem:[#allocation6 + $0x208] sm:$0xff]
    %v3067 = vld [vmem:[#allocation6 + $0x210] sm:$0xff]
    %v3068 = vld [vmem:[#allocation6 + $0x218] sm:$0xff]
    %v3069 = vld [vmem:[#allocation6 + $0x220] sm:$0xff]
    %v3070 = vld [vmem:[#allocation6 + $0x228] sm:$0xff]
    %v3071 = vld [vmem:[#allocation6 + $0x230] sm:$0xff]
    %v3072 = vld [vmem:[#allocation6 + $0x238] sm:$0xff]
    %v3073 = vld [vmem:[#allocation6 + $0x240] sm:$0xff]
    %v3074 = vld [vmem:[#allocation6 + $0x248] sm:$0xff]
    %v3075 = vld [vmem:[#allocation6 + $0x250] sm:$0xff]
    %v3076 = vld [vmem:[#allocation6 + $0x258] sm:$0xff]
    %v3077 = vld [vmem:[#allocation6 + $0x260] sm:$0xff]
    %v3078 = vld [vmem:[#allocation6 + $0x268] sm:$0xff]
    %v3079 = vld [vmem:[#allocation6 + $0x270] sm:$0xff]
    %v3080 = vld [vmem:[#allocation6 + $0x278] sm:$0xff]
    %v3081 = vld [vmem:[#allocation6 + $0x280] sm:$0xff]
    %v3082 = vld [vmem:[#allocation6 + $0x288] sm:$0xff]
    %v3083 = vld [vmem:[#allocation6 + $0x290] sm:$0xff]
    %v3084 = vld [vmem:[#allocation6 + $0x298] sm:$0xff]
    %v3085 = vld [vmem:[#allocation6 + $0x2a0] sm:$0xff]
    %v3086 = vld [vmem:[#allocation6 + $0x2a8] sm:$0xff]
    %v3087 = vld [vmem:[#allocation6 + $0x2b0] sm:$0xff]
    %v3088 = vld [vmem:[#allocation6 + $0x2b8] sm:$0xff]
    %v3089 = vld [vmem:[#allocation6 + $0x2c0] sm:$0xff]
    %v3090 = vld [vmem:[#allocation6 + $0x2c8] sm:$0xff]
    %v3091 = vld [vmem:[#allocation6 + $0x2d0] sm:$0xff]
    %v3092 = vld [vmem:[#allocation6 + $0x2d8] sm:$0xff]
    %v3093 = vld [vmem:[#allocation6 + $0x2e0] sm:$0xff]
    %v3094 = vld [vmem:[#allocation6 + $0x2e8] sm:$0xff]
    %v3095 = vld [vmem:[#allocation6 + $0x2f0] sm:$0xff]
    %v3096 = vld [vmem:[#allocation6 + $0x2f8] sm:$0xff]
    %v3097 = vld [vmem:[#allocation6 + $0x300] sm:$0xff]
    %v3098 = vld [vmem:[#allocation6 + $0x308] sm:$0xff]
    %v3099 = vld [vmem:[#allocation6 + $0x310] sm:$0xff]
    %v3100 = vld [vmem:[#allocation6 + $0x318] sm:$0xff]
    %v3101 = vld [vmem:[#allocation6 + $0x320] sm:$0xff]
    %v3102 = vld [vmem:[#allocation6 + $0x328] sm:$0xff]
    %v3103 = vld [vmem:[#allocation6 + $0x330] sm:$0xff]
    %v3104 = vld [vmem:[#allocation6 + $0x338] sm:$0xff]
    %v3105 = vld [vmem:[#allocation6 + $0x340] sm:$0xff]
    %v3106 = vld [vmem:[#allocation6 + $0x348] sm:$0xff]
    %v3107 = vld [vmem:[#allocation6 + $0x350] sm:$0xff]
    %v3108 = vld [vmem:[#allocation6 + $0x358] sm:$0xff]
    %v3109 = vld [vmem:[#allocation6 + $0x360] sm:$0xff]
    %v3110 = vld [vmem:[#allocation6 + $0x368] sm:$0xff]
    %v3111 = vld [vmem:[#allocation6 + $0x370] sm:$0xff]
    %v3112 = vld [vmem:[#allocation6 + $0x378] sm:$0xff]
    %v3113 = vld [vmem:[#allocation6 + $0x380] sm:$0xff]
    %v3114 = vld [vmem:[#allocation6 + $0x388] sm:$0xff]
    %v3115 = vld [vmem:[#allocation6 + $0x390] sm:$0xff]
    %v3116 = vld [vmem:[#allocation6 + $0x398] sm:$0xff]
    %v3117 = vld [vmem:[#allocation6 + $0x3a0] sm:$0xff]
    %v3118 = vld [vmem:[#allocation6 + $0x3a8] sm:$0xff]
    %v3119 = vld [vmem:[#allocation6 + $0x3b0] sm:$0xff]
    %v3120 = vld [vmem:[#allocation6 + $0x3b8] sm:$0xff]
    %v3121 = vld [vmem:[#allocation6 + $0x3c0] sm:$0xff]
    %v3122 = vld [vmem:[#allocation6 + $0x3c8] sm:$0xff]
    %v3123 = vld [vmem:[#allocation6 + $0x3d0] sm:$0xff]
    %v3124 = vld [vmem:[#allocation6 + $0x3d8] sm:$0xff]
    %v3125 = vld [vmem:[#allocation6 + $0x3e0] sm:$0xff]
    %v3126 = vld [vmem:[#allocation6 + $0x3e8] sm:$0xff]
    %v3127 = vld [vmem:[#allocation6 + $0x3f0] sm:$0xff]
    %v3128 = vld [vmem:[#allocation6 + $0x3f8] sm:$0xff]
    %v3129 = vld [vmem:[#allocation6 + $0x400] sm:$0xff]
    %v3130 = vld [vmem:[#allocation6 + $0x408] sm:$0xff]
    %v3131 = vld [vmem:[#allocation6 + $0x410] sm:$0xff]
    %v3132 = vld [vmem:[#allocation6 + $0x418] sm:$0xff]
    %v3133 = vld [vmem:[#allocation6 + $0x420] sm:$0xff]
    %v3134 = vld [vmem:[#allocation6 + $0x428] sm:$0xff]
    %v3135 = vld [vmem:[#allocation6 + $0x430] sm:$0xff]
    %v3136 = vld [vmem:[#allocation6 + $0x438] sm:$0xff]
    %v3137 = vld [vmem:[#allocation6 + $0x440] sm:$0xff]
    %v3138 = vld [vmem:[#allocation6 + $0x448] sm:$0xff]
    %v3139 = vld [vmem:[#allocation6 + $0x450] sm:$0xff]
    %v3140 = vld [vmem:[#allocation6 + $0x458] sm:$0xff]
    %v3141 = vld [vmem:[#allocation6 + $0x460] sm:$0xff]
    %v3142 = vld [vmem:[#allocation6 + $0x468] sm:$0xff]
    %v3143 = vld [vmem:[#allocation6 + $0x470] sm:$0xff]
    %v3144 = vld [vmem:[#allocation6 + $0x478] sm:$0xff]
    %v3145 = vld [vmem:[#allocation6 + $0x480] sm:$0xff]
    %v3146 = vld [vmem:[#allocation6 + $0x488] sm:$0xff]
    %v3147 = vld [vmem:[#allocation6 + $0x490] sm:$0xff]
    %v3148 = vld [vmem:[#allocation6 + $0x498] sm:$0xff]
    %v3149 = vld [vmem:[#allocation6 + $0x4a0] sm:$0xff]
    %v3150 = vld [vmem:[#allocation6 + $0x4a8] sm:$0xff]
    %v3151 = vld [vmem:[#allocation6 + $0x4b0] sm:$0xff]
    %v3152 = vld [vmem:[#allocation6 + $0x4b8] sm:$0xff]
    %v3153 = vld [vmem:[#allocation6 + $0x4c0] sm:$0xff]
    %v3154 = vld [vmem:[#allocation6 + $0x4c8] sm:$0xff]
    %v3155 = vld [vmem:[#allocation6 + $0x4d0] sm:$0xff]
    %v3156 = vld [vmem:[#allocation6 + $0x4d8] sm:$0xff]
    %v3157 = vld [vmem:[#allocation6 + $0x4e0] sm:$0xff]
    %v3158 = vld [vmem:[#allocation6 + $0x4e8] sm:$0xff]
    %v3159 = vld [vmem:[#allocation6 + $0x4f0] sm:$0xff]
    %v3160 = vld [vmem:[#allocation6 + $0x4f8] sm:$0xff]
    %v3161 = vld [vmem:[#allocation6 + $0x500] sm:$0xff]
    %v3162 = vld [vmem:[#allocation6 + $0x508] sm:$0xff]
    %v3163 = vld [vmem:[#allocation6 + $0x510] sm:$0xff]
    %v3164 = vld [vmem:[#allocation6 + $0x518] sm:$0xff]
    %v3165 = vld [vmem:[#allocation6 + $0x520] sm:$0xff]
    %v3166 = vld [vmem:[#allocation6 + $0x528] sm:$0xff]
    %v3167 = vld [vmem:[#allocation6 + $0x530] sm:$0xff]
    %v3168 = vld [vmem:[#allocation6 + $0x538] sm:$0xff]
    %v3169 = vld [vmem:[#allocation6 + $0x540] sm:$0xff]
    %v3170 = vld [vmem:[#allocation6 + $0x548] sm:$0xff]
    %v3171 = vld [vmem:[#allocation6 + $0x550] sm:$0xff]
    %v3172 = vld [vmem:[#allocation6 + $0x558] sm:$0xff]
    %v3173 = vld [vmem:[#allocation6 + $0x560] sm:$0xff]
    %v3174 = vld [vmem:[#allocation6 + $0x568] sm:$0xff]
    %v3175 = vld [vmem:[#allocation6 + $0x570] sm:$0xff]
    %v3176 = vld [vmem:[#allocation6 + $0x578] sm:$0xff]
    %v3177 = vld [vmem:[#allocation6 + $0x580] sm:$0xff]
    %v3178 = vld [vmem:[#allocation6 + $0x588] sm:$0xff]
    %v3179 = vld [vmem:[#allocation6 + $0x590] sm:$0xff]
    %v3180 = vld [vmem:[#allocation6 + $0x598] sm:$0xff]
    %v3181 = vld [vmem:[#allocation6 + $0x5a0] sm:$0xff]
    %v3182 = vld [vmem:[#allocation6 + $0x5a8] sm:$0xff]
    %v3183 = vld [vmem:[#allocation6 + $0x5b0] sm:$0xff]
    %v3184 = vld [vmem:[#allocation6 + $0x5b8] sm:$0xff]
    %v3185 = vld [vmem:[#allocation6 + $0x5c0] sm:$0xff]
    %v3186 = vld [vmem:[#allocation6 + $0x5c8] sm:$0xff]
    %v3187 = vld [vmem:[#allocation6 + $0x5d0] sm:$0xff]
    %v3188 = vld [vmem:[#allocation6 + $0x5d8] sm:$0xff]
    %v3189 = vld [vmem:[#allocation6 + $0x5e0] sm:$0xff]
    %v3190 = vld [vmem:[#allocation6 + $0x5e8] sm:$0xff]
    %v3191 = vld [vmem:[#allocation6 + $0x5f0] sm:$0xff]
    %v3192 = vld [vmem:[#allocation6 + $0x5f8] sm:$0xff]
    %v3193 = vld [vmem:[#allocation6 + $0x600] sm:$0xff]
    %v3194 = vld [vmem:[#allocation6 + $0x608] sm:$0xff]
    %v3195 = vld [vmem:[#allocation6 + $0x610] sm:$0xff]
    %v3196 = vld [vmem:[#allocation6 + $0x618] sm:$0xff]
    %v3197 = vld [vmem:[#allocation6 + $0x620] sm:$0xff]
    %v3198 = vld [vmem:[#allocation6 + $0x628] sm:$0xff]
    %v3199 = vld [vmem:[#allocation6 + $0x630] sm:$0xff]
    %v3200 = vld [vmem:[#allocation6 + $0x638] sm:$0xff]
    %v3201 = vld [vmem:[#allocation6 + $0x640] sm:$0xff]
    %v3202 = vld [vmem:[#allocation6 + $0x648] sm:$0xff]
    %v3203 = vld [vmem:[#allocation6 + $0x650] sm:$0xff]
    %v3204 = vld [vmem:[#allocation6 + $0x658] sm:$0xff]
    %v3205 = vld [vmem:[#allocation6 + $0x660] sm:$0xff]
    %v3206 = vld [vmem:[#allocation6 + $0x668] sm:$0xff]
    %v3207 = vld [vmem:[#allocation6 + $0x670] sm:$0xff]
    %v3208 = vld [vmem:[#allocation6 + $0x678] sm:$0xff]
    %v3209 = vld [vmem:[#allocation6 + $0x680] sm:$0xff]
    %v3210 = vld [vmem:[#allocation6 + $0x688] sm:$0xff]
    %v3211 = vld [vmem:[#allocation6 + $0x690] sm:$0xff]
    %v3212 = vld [vmem:[#allocation6 + $0x698] sm:$0xff]
    %v3213 = vld [vmem:[#allocation6 + $0x6a0] sm:$0xff]
    %v3214 = vld [vmem:[#allocation6 + $0x6a8] sm:$0xff]
    %v3215 = vld [vmem:[#allocation6 + $0x6b0] sm:$0xff]
    %v3216 = vld [vmem:[#allocation6 + $0x6b8] sm:$0xff]
    %v3217 = vld [vmem:[#allocation6 + $0x6c0] sm:$0xff]
    %v3218 = vld [vmem:[#allocation6 + $0x6c8] sm:$0xff]
    %v3219 = vld [vmem:[#allocation6 + $0x6d0] sm:$0xff]
    %v3220 = vld [vmem:[#allocation6 + $0x6d8] sm:$0xff]
    %v3221 = vld [vmem:[#allocation6 + $0x6e0] sm:$0xff]
    %v3222 = vld [vmem:[#allocation6 + $0x6e8] sm:$0xff]
    %v3223 = vld [vmem:[#allocation6 + $0x6f0] sm:$0xff]
    %v3224 = vld [vmem:[#allocation6 + $0x6f8] sm:$0xff]
    %v3225 = vld [vmem:[#allocation6 + $0x700] sm:$0xff]
    %v3226 = vld [vmem:[#allocation6 + $0x708] sm:$0xff]
    %v3227 = vld [vmem:[#allocation6 + $0x710] sm:$0xff]
    %v3228 = vld [vmem:[#allocation6 + $0x718] sm:$0xff]
    %v3229 = vld [vmem:[#allocation6 + $0x720] sm:$0xff]
    %v3230 = vld [vmem:[#allocation6 + $0x728] sm:$0xff]
    %v3231 = vld [vmem:[#allocation6 + $0x730] sm:$0xff]
    %v3232 = vld [vmem:[#allocation6 + $0x738] sm:$0xff]
    %v3233 = vld [vmem:[#allocation6 + $0x740] sm:$0xff]
    %v3234 = vld [vmem:[#allocation6 + $0x748] sm:$0xff]
    %v3235 = vld [vmem:[#allocation6 + $0x750] sm:$0xff]
    %v3236 = vld [vmem:[#allocation6 + $0x758] sm:$0xff]
    %v3237 = vld [vmem:[#allocation6 + $0x760] sm:$0xff]
    %v3238 = vld [vmem:[#allocation6 + $0x768] sm:$0xff]
    %v3239 = vld [vmem:[#allocation6 + $0x770] sm:$0xff]
    %v3240 = vld [vmem:[#allocation6 + $0x778] sm:$0xff]
    %v3241 = vld [vmem:[#allocation6 + $0x780] sm:$0xff]
    %v3242 = vld [vmem:[#allocation6 + $0x788] sm:$0xff]
    %v3243 = vld [vmem:[#allocation6 + $0x790] sm:$0xff]
    %v3244 = vld [vmem:[#allocation6 + $0x798] sm:$0xff]
    %v3245 = vld [vmem:[#allocation6 + $0x7a0] sm:$0xff]
    %v3246 = vld [vmem:[#allocation6 + $0x7a8] sm:$0xff]
    %v3247 = vld [vmem:[#allocation6 + $0x7b0] sm:$0xff]
    %v3248 = vld [vmem:[#allocation6 + $0x7b8] sm:$0xff]
    %v3249 = vld [vmem:[#allocation6 + $0x7c0] sm:$0xff]
    %v3250 = vld [vmem:[#allocation6 + $0x7c8] sm:$0xff]
    %v3251 = vld [vmem:[#allocation6 + $0x7d0] sm:$0xff]
    %v3252 = vld [vmem:[#allocation6 + $0x7d8] sm:$0xff]
    %v3253 = vld [vmem:[#allocation6 + $0x7e0] sm:$0xff]
    %v3254 = vld [vmem:[#allocation6 + $0x7e8] sm:$0xff]
    %v3255 = vld [vmem:[#allocation6 + $0x7f0] sm:$0xff]
    %v3256 = vld [vmem:[#allocation6 + $0x7f8] sm:$0xff]
    %v3257 = vld [vmem:[#allocation7] sm:$0xf]
    %v3259 = vlaneseq
    %v3260 = vshrl.u32 %v3259, 7
    %v3261 = vsub.s32 0, %v3260
    %v3262 = vrot.slane %v3257, %v3261
    %v3263 = vlaneseq
    %v3264 = vshrl.u32 %v3263, 7
    %v3265 = vsub.s32 1, %v3264
    %v3266 = vrot.slane %v3257, %v3265
    %v3267 = vlaneseq
    %v3268 = vshrl.u32 %v3267, 7
    %v3269 = vsub.s32 2, %v3268
    %v3270 = vrot.slane %v3257, %v3269
    %v3271 = vlaneseq
    %v3272 = vshrl.u32 %v3271, 7
    %v3273 = vsub.s32 3, %v3272
    %v3274 = vrot.slane %v3257, %v3273
    %v3535 = vunpack.c.l.b16 %v3001
    %v3536 = vunpack.c.h.b16 %v3001
    %v3537 = vunpack.c.l.b16 %v3002
    %v3538 = vunpack.c.h.b16 %v3002
    %v3539 = vunpack.c.l.b16 %v3003
    %v3540 = vunpack.c.h.b16 %v3003
    %v3541 = vunpack.c.l.b16 %v3004
    %v3542 = vunpack.c.h.b16 %v3004
    %v3543 = vunpack.c.l.b16 %v3005
    %v3544 = vunpack.c.h.b16 %v3005
    %v3545 = vunpack.c.l.b16 %v3006
    %v3546 = vunpack.c.h.b16 %v3006
    %v3547 = vunpack.c.l.b16 %v3007
    %v3548 = vunpack.c.h.b16 %v3007
    %v3549 = vunpack.c.l.b16 %v3008
    %v3550 = vunpack.c.h.b16 %v3008
    %v3551 = vunpack.c.l.b16 %v3009
    %v3552 = vunpack.c.h.b16 %v3009
    %v3553 = vunpack.c.l.b16 %v3010
    %v3554 = vunpack.c.h.b16 %v3010
    %v3555 = vunpack.c.l.b16 %v3011
    %v3556 = vunpack.c.h.b16 %v3011
    %v3557 = vunpack.c.l.b16 %v3012
    %v3558 = vunpack.c.h.b16 %v3012
    %v3559 = vunpack.c.l.b16 %v3013
    %v3560 = vunpack.c.h.b16 %v3013
    %v3561 = vunpack.c.l.b16 %v3014
    %v3562 = vunpack.c.h.b16 %v3014
    %v3563 = vunpack.c.l.b16 %v3015
    %v3564 = vunpack.c.h.b16 %v3015
    %v3565 = vunpack.c.l.b16 %v3016
    %v3566 = vunpack.c.h.b16 %v3016
    %v3567 = vunpack.c.l.b16 %v3017
    %v3568 = vunpack.c.h.b16 %v3017
    %v3569 = vunpack.c.l.b16 %v3018
    %v3570 = vunpack.c.h.b16 %v3018
    %v3571 = vunpack.c.l.b16 %v3019
    %v3572 = vunpack.c.h.b16 %v3019
    %v3573 = vunpack.c.l.b16 %v3020
    %v3574 = vunpack.c.h.b16 %v3020
    %v3575 = vunpack.c.l.b16 %v3021
    %v3576 = vunpack.c.h.b16 %v3021
    %v3577 = vunpack.c.l.b16 %v3022
    %v3578 = vunpack.c.h.b16 %v3022
    %v3579 = vunpack.c.l.b16 %v3023
    %v3580 = vunpack.c.h.b16 %v3023
    %v3581 = vunpack.c.l.b16 %v3024
    %v3582 = vunpack.c.h.b16 %v3024
    %v3583 = vunpack.c.l.b16 %v3025
    %v3584 = vunpack.c.h.b16 %v3025
    %v3585 = vunpack.c.l.b16 %v3026
    %v3586 = vunpack.c.h.b16 %v3026
    %v3587 = vunpack.c.l.b16 %v3027
    %v3588 = vunpack.c.h.b16 %v3027
    %v3589 = vunpack.c.l.b16 %v3028
    %v3590 = vunpack.c.h.b16 %v3028
    %v3591 = vunpack.c.l.b16 %v3029
    %v3592 = vunpack.c.h.b16 %v3029
    %v3593 = vunpack.c.l.b16 %v3030
    %v3594 = vunpack.c.h.b16 %v3030
    %v3595 = vunpack.c.l.b16 %v3031
    %v3596 = vunpack.c.h.b16 %v3031
    %v3597 = vunpack.c.l.b16 %v3032
    %v3598 = vunpack.c.h.b16 %v3032
    %v3599 = vunpack.c.l.b16 %v3033
    %v3600 = vunpack.c.h.b16 %v3033
    %v3601 = vunpack.c.l.b16 %v3034
    %v3602 = vunpack.c.h.b16 %v3034
    %v3603 = vunpack.c.l.b16 %v3035
    %v3604 = vunpack.c.h.b16 %v3035
    %v3605 = vunpack.c.l.b16 %v3036
    %v3606 = vunpack.c.h.b16 %v3036
    %v3607 = vunpack.c.l.b16 %v3037
    %v3608 = vunpack.c.h.b16 %v3037
    %v3609 = vunpack.c.l.b16 %v3038
    %v3610 = vunpack.c.h.b16 %v3038
    %v3611 = vunpack.c.l.b16 %v3039
    %v3612 = vunpack.c.h.b16 %v3039
    %v3613 = vunpack.c.l.b16 %v3040
    %v3614 = vunpack.c.h.b16 %v3040
    %v3615 = vunpack.c.l.b16 %v3041
    %v3616 = vunpack.c.h.b16 %v3041
    %v3617 = vunpack.c.l.b16 %v3042
    %v3618 = vunpack.c.h.b16 %v3042
    %v3619 = vunpack.c.l.b16 %v3043
    %v3620 = vunpack.c.h.b16 %v3043
    %v3621 = vunpack.c.l.b16 %v3044
    %v3622 = vunpack.c.h.b16 %v3044
    %v3623 = vunpack.c.l.b16 %v3045
    %v3624 = vunpack.c.h.b16 %v3045
    %v3625 = vunpack.c.l.b16 %v3046
    %v3626 = vunpack.c.h.b16 %v3046
    %v3627 = vunpack.c.l.b16 %v3047
    %v3628 = vunpack.c.h.b16 %v3047
    %v3629 = vunpack.c.l.b16 %v3048
    %v3630 = vunpack.c.h.b16 %v3048
    %v3631 = vunpack.c.l.b16 %v3049
    %v3632 = vunpack.c.h.b16 %v3049
    %v3633 = vunpack.c.l.b16 %v3050
    %v3634 = vunpack.c.h.b16 %v3050
    %v3635 = vunpack.c.l.b16 %v3051
    %v3636 = vunpack.c.h.b16 %v3051
    %v3637 = vunpack.c.l.b16 %v3052
    %v3638 = vunpack.c.h.b16 %v3052
    %v3639 = vunpack.c.l.b16 %v3053
    %v3640 = vunpack.c.h.b16 %v3053
    %v3641 = vunpack.c.l.b16 %v3054
    %v3642 = vunpack.c.h.b16 %v3054
    %v3643 = vunpack.c.l.b16 %v3055
    %v3644 = vunpack.c.h.b16 %v3055
    %v3645 = vunpack.c.l.b16 %v3056
    %v3646 = vunpack.c.h.b16 %v3056
    %v3647 = vunpack.c.l.b16 %v3057
    %v3648 = vunpack.c.h.b16 %v3057
    %v3649 = vunpack.c.l.b16 %v3058
    %v3650 = vunpack.c.h.b16 %v3058
    %v3651 = vunpack.c.l.b16 %v3059
    %v3652 = vunpack.c.h.b16 %v3059
    %v3653 = vunpack.c.l.b16 %v3060
    %v3654 = vunpack.c.h.b16 %v3060
    %v3655 = vunpack.c.l.b16 %v3061
    %v3656 = vunpack.c.h.b16 %v3061
    %v3657 = vunpack.c.l.b16 %v3062
    %v3658 = vunpack.c.h.b16 %v3062
    %v3659 = vunpack.c.l.b16 %v3063
    %v3660 = vunpack.c.h.b16 %v3063
    %v3661 = vunpack.c.l.b16 %v3064
    %v3662 = vunpack.c.h.b16 %v3064
    %v3663 = vunpack.c.l.b16 %v3065
    %v3664 = vunpack.c.h.b16 %v3065
    %v3665 = vunpack.c.l.b16 %v3066
    %v3666 = vunpack.c.h.b16 %v3066
    %v3667 = vunpack.c.l.b16 %v3067
    %v3668 = vunpack.c.h.b16 %v3067
    %v3669 = vunpack.c.l.b16 %v3068
    %v3670 = vunpack.c.h.b16 %v3068
    %v3671 = vunpack.c.l.b16 %v3069
    %v3672 = vunpack.c.h.b16 %v3069
    %v3673 = vunpack.c.l.b16 %v3070
    %v3674 = vunpack.c.h.b16 %v3070
    %v3675 = vunpack.c.l.b16 %v3071
    %v3676 = vunpack.c.h.b16 %v3071
    %v3677 = vunpack.c.l.b16 %v3072
    %v3678 = vunpack.c.h.b16 %v3072
    %v3679 = vunpack.c.l.b16 %v3073
    %v3680 = vunpack.c.h.b16 %v3073
    %v3681 = vunpack.c.l.b16 %v3074
    %v3682 = vunpack.c.h.b16 %v3074
    %v3683 = vunpack.c.l.b16 %v3075
    %v3684 = vunpack.c.h.b16 %v3075
    %v3685 = vunpack.c.l.b16 %v3076
    %v3686 = vunpack.c.h.b16 %v3076
    %v3687 = vunpack.c.l.b16 %v3077
    %v3688 = vunpack.c.h.b16 %v3077
    %v3689 = vunpack.c.l.b16 %v3078
    %v3690 = vunpack.c.h.b16 %v3078
    %v3691 = vunpack.c.l.b16 %v3079
    %v3692 = vunpack.c.h.b16 %v3079
    %v3693 = vunpack.c.l.b16 %v3080
    %v3694 = vunpack.c.h.b16 %v3080
    %v3695 = vunpack.c.l.b16 %v3081
    %v3696 = vunpack.c.h.b16 %v3081
    %v3697 = vunpack.c.l.b16 %v3082
    %v3698 = vunpack.c.h.b16 %v3082
    %v3699 = vunpack.c.l.b16 %v3083
    %v3700 = vunpack.c.h.b16 %v3083
    %v3701 = vunpack.c.l.b16 %v3084
    %v3702 = vunpack.c.h.b16 %v3084
    %v3703 = vunpack.c.l.b16 %v3085
    %v3704 = vunpack.c.h.b16 %v3085
    %v3705 = vunpack.c.l.b16 %v3086
    %v3706 = vunpack.c.h.b16 %v3086
    %v3707 = vunpack.c.l.b16 %v3087
    %v3708 = vunpack.c.h.b16 %v3087
    %v3709 = vunpack.c.l.b16 %v3088
    %v3710 = vunpack.c.h.b16 %v3088
    %v3711 = vunpack.c.l.b16 %v3089
    %v3712 = vunpack.c.h.b16 %v3089
    %v3713 = vunpack.c.l.b16 %v3090
    %v3714 = vunpack.c.h.b16 %v3090
    %v3715 = vunpack.c.l.b16 %v3091
    %v3716 = vunpack.c.h.b16 %v3091
    %v3717 = vunpack.c.l.b16 %v3092
    %v3718 = vunpack.c.h.b16 %v3092
    %v3719 = vunpack.c.l.b16 %v3093
    %v3720 = vunpack.c.h.b16 %v3093
    %v3721 = vunpack.c.l.b16 %v3094
    %v3722 = vunpack.c.h.b16 %v3094
    %v3723 = vunpack.c.l.b16 %v3095
    %v3724 = vunpack.c.h.b16 %v3095
    %v3725 = vunpack.c.l.b16 %v3096
    %v3726 = vunpack.c.h.b16 %v3096
    %v3727 = vunpack.c.l.b16 %v3097
    %v3728 = vunpack.c.h.b16 %v3097
    %v3729 = vunpack.c.l.b16 %v3098
    %v3730 = vunpack.c.h.b16 %v3098
    %v3731 = vunpack.c.l.b16 %v3099
    %v3732 = vunpack.c.h.b16 %v3099
    %v3733 = vunpack.c.l.b16 %v3100
    %v3734 = vunpack.c.h.b16 %v3100
    %v3735 = vunpack.c.l.b16 %v3101
    %v3736 = vunpack.c.h.b16 %v3101
    %v3737 = vunpack.c.l.b16 %v3102
    %v3738 = vunpack.c.h.b16 %v3102
    %v3739 = vunpack.c.l.b16 %v3103
    %v3740 = vunpack.c.h.b16 %v3103
    %v3741 = vunpack.c.l.b16 %v3104
    %v3742 = vunpack.c.h.b16 %v3104
    %v3743 = vunpack.c.l.b16 %v3105
    %v3744 = vunpack.c.h.b16 %v3105
    %v3745 = vunpack.c.l.b16 %v3106
    %v3746 = vunpack.c.h.b16 %v3106
    %v3747 = vunpack.c.l.b16 %v3107
    %v3748 = vunpack.c.h.b16 %v3107
    %v3749 = vunpack.c.l.b16 %v3108
    %v3750 = vunpack.c.h.b16 %v3108
    %v3751 = vunpack.c.l.b16 %v3109
    %v3752 = vunpack.c.h.b16 %v3109
    %v3753 = vunpack.c.l.b16 %v3110
    %v3754 = vunpack.c.h.b16 %v3110
    %v3755 = vunpack.c.l.b16 %v3111
    %v3756 = vunpack.c.h.b16 %v3111
    %v3757 = vunpack.c.l.b16 %v3112
    %v3758 = vunpack.c.h.b16 %v3112
    %v3759 = vunpack.c.l.b16 %v3113
    %v3760 = vunpack.c.h.b16 %v3113
    %v3761 = vunpack.c.l.b16 %v3114
    %v3762 = vunpack.c.h.b16 %v3114
    %v3763 = vunpack.c.l.b16 %v3115
    %v3764 = vunpack.c.h.b16 %v3115
    %v3765 = vunpack.c.l.b16 %v3116
    %v3766 = vunpack.c.h.b16 %v3116
    %v3767 = vunpack.c.l.b16 %v3117
    %v3768 = vunpack.c.h.b16 %v3117
    %v3769 = vunpack.c.l.b16 %v3118
    %v3770 = vunpack.c.h.b16 %v3118
    %v3771 = vunpack.c.l.b16 %v3119
    %v3772 = vunpack.c.h.b16 %v3119
    %v3773 = vunpack.c.l.b16 %v3120
    %v3774 = vunpack.c.h.b16 %v3120
    %v3775 = vunpack.c.l.b16 %v3121
    %v3776 = vunpack.c.h.b16 %v3121
    %v3777 = vunpack.c.l.b16 %v3122
    %v3778 = vunpack.c.h.b16 %v3122
    %v3779 = vunpack.c.l.b16 %v3123
    %v3780 = vunpack.c.h.b16 %v3123
    %v3781 = vunpack.c.l.b16 %v3124
    %v3782 = vunpack.c.h.b16 %v3124
    %v3783 = vunpack.c.l.b16 %v3125
    %v3784 = vunpack.c.h.b16 %v3125
    %v3785 = vunpack.c.l.b16 %v3126
    %v3786 = vunpack.c.h.b16 %v3126
    %v3787 = vunpack.c.l.b16 %v3127
    %v3788 = vunpack.c.h.b16 %v3127
    %v3789 = vunpack.c.l.b16 %v3128
    %v3790 = vunpack.c.h.b16 %v3128
    %v3791 = vunpack.c.l.b16 %v3129
    %v3792 = vunpack.c.h.b16 %v3129
    %v3793 = vunpack.c.l.b16 %v3130
    %v3794 = vunpack.c.h.b16 %v3130
    %v3795 = vunpack.c.l.b16 %v3131
    %v3796 = vunpack.c.h.b16 %v3131
    %v3797 = vunpack.c.l.b16 %v3132
    %v3798 = vunpack.c.h.b16 %v3132
    %v3799 = vunpack.c.l.b16 %v3133
    %v3800 = vunpack.c.h.b16 %v3133
    %v3801 = vunpack.c.l.b16 %v3134
    %v3802 = vunpack.c.h.b16 %v3134
    %v3803 = vunpack.c.l.b16 %v3135
    %v3804 = vunpack.c.h.b16 %v3135
    %v3805 = vunpack.c.l.b16 %v3136
    %v3806 = vunpack.c.h.b16 %v3136
    %v3807 = vunpack.c.l.b16 %v3137
    %v3808 = vunpack.c.h.b16 %v3137
    %v3809 = vunpack.c.l.b16 %v3138
    %v3810 = vunpack.c.h.b16 %v3138
    %v3811 = vunpack.c.l.b16 %v3139
    %v3812 = vunpack.c.h.b16 %v3139
    %v3813 = vunpack.c.l.b16 %v3140
    %v3814 = vunpack.c.h.b16 %v3140
    %v3815 = vunpack.c.l.b16 %v3141
    %v3816 = vunpack.c.h.b16 %v3141
    %v3817 = vunpack.c.l.b16 %v3142
    %v3818 = vunpack.c.h.b16 %v3142
    %v3819 = vunpack.c.l.b16 %v3143
    %v3820 = vunpack.c.h.b16 %v3143
    %v3821 = vunpack.c.l.b16 %v3144
    %v3822 = vunpack.c.h.b16 %v3144
    %v3823 = vunpack.c.l.b16 %v3145
    %v3824 = vunpack.c.h.b16 %v3145
    %v3825 = vunpack.c.l.b16 %v3146
    %v3826 = vunpack.c.h.b16 %v3146
    %v3827 = vunpack.c.l.b16 %v3147
    %v3828 = vunpack.c.h.b16 %v3147
    %v3829 = vunpack.c.l.b16 %v3148
    %v3830 = vunpack.c.h.b16 %v3148
    %v3831 = vunpack.c.l.b16 %v3149
    %v3832 = vunpack.c.h.b16 %v3149
    %v3833 = vunpack.c.l.b16 %v3150
    %v3834 = vunpack.c.h.b16 %v3150
    %v3835 = vunpack.c.l.b16 %v3151
    %v3836 = vunpack.c.h.b16 %v3151
    %v3837 = vunpack.c.l.b16 %v3152
    %v3838 = vunpack.c.h.b16 %v3152
    %v3839 = vunpack.c.l.b16 %v3153
    %v3840 = vunpack.c.h.b16 %v3153
    %v3841 = vunpack.c.l.b16 %v3154
    %v3842 = vunpack.c.h.b16 %v3154
    %v3843 = vunpack.c.l.b16 %v3155
    %v3844 = vunpack.c.h.b16 %v3155
    %v3845 = vunpack.c.l.b16 %v3156
    %v3846 = vunpack.c.h.b16 %v3156
    %v3847 = vunpack.c.l.b16 %v3157
    %v3848 = vunpack.c.h.b16 %v3157
    %v3849 = vunpack.c.l.b16 %v3158
    %v3850 = vunpack.c.h.b16 %v3158
    %v3851 = vunpack.c.l.b16 %v3159
    %v3852 = vunpack.c.h.b16 %v3159
    %v3853 = vunpack.c.l.b16 %v3160
    %v3854 = vunpack.c.h.b16 %v3160
    %v3855 = vunpack.c.l.b16 %v3161
    %v3856 = vunpack.c.h.b16 %v3161
    %v3857 = vunpack.c.l.b16 %v3162
    %v3858 = vunpack.c.h.b16 %v3162
    %v3859 = vunpack.c.l.b16 %v3163
    %v3860 = vunpack.c.h.b16 %v3163
    %v3861 = vunpack.c.l.b16 %v3164
    %v3862 = vunpack.c.h.b16 %v3164
    %v3863 = vunpack.c.l.b16 %v3165
    %v3864 = vunpack.c.h.b16 %v3165
    %v3865 = vunpack.c.l.b16 %v3166
    %v3866 = vunpack.c.h.b16 %v3166
    %v3867 = vunpack.c.l.b16 %v3167
    %v3868 = vunpack.c.h.b16 %v3167
    %v3869 = vunpack.c.l.b16 %v3168
    %v3870 = vunpack.c.h.b16 %v3168
    %v3871 = vunpack.c.l.b16 %v3169
    %v3872 = vunpack.c.h.b16 %v3169
    %v3873 = vunpack.c.l.b16 %v3170
    %v3874 = vunpack.c.h.b16 %v3170
    %v3875 = vunpack.c.l.b16 %v3171
    %v3876 = vunpack.c.h.b16 %v3171
    %v3877 = vunpack.c.l.b16 %v3172
    %v3878 = vunpack.c.h.b16 %v3172
    %v3879 = vunpack.c.l.b16 %v3173
    %v3880 = vunpack.c.h.b16 %v3173
    %v3881 = vunpack.c.l.b16 %v3174
    %v3882 = vunpack.c.h.b16 %v3174
    %v3883 = vunpack.c.l.b16 %v3175
    %v3884 = vunpack.c.h.b16 %v3175
    %v3885 = vunpack.c.l.b16 %v3176
    %v3886 = vunpack.c.h.b16 %v3176
    %v3887 = vunpack.c.l.b16 %v3177
    %v3888 = vunpack.c.h.b16 %v3177
    %v3889 = vunpack.c.l.b16 %v3178
    %v3890 = vunpack.c.h.b16 %v3178
    %v3891 = vunpack.c.l.b16 %v3179
    %v3892 = vunpack.c.h.b16 %v3179
    %v3893 = vunpack.c.l.b16 %v3180
    %v3894 = vunpack.c.h.b16 %v3180
    %v3895 = vunpack.c.l.b16 %v3181
    %v3896 = vunpack.c.h.b16 %v3181
    %v3897 = vunpack.c.l.b16 %v3182
    %v3898 = vunpack.c.h.b16 %v3182
    %v3899 = vunpack.c.l.b16 %v3183
    %v3900 = vunpack.c.h.b16 %v3183
    %v3901 = vunpack.c.l.b16 %v3184
    %v3902 = vunpack.c.h.b16 %v3184
    %v3903 = vunpack.c.l.b16 %v3185
    %v3904 = vunpack.c.h.b16 %v3185
    %v3905 = vunpack.c.l.b16 %v3186
    %v3906 = vunpack.c.h.b16 %v3186
    %v3907 = vunpack.c.l.b16 %v3187
    %v3908 = vunpack.c.h.b16 %v3187
    %v3909 = vunpack.c.l.b16 %v3188
    %v3910 = vunpack.c.h.b16 %v3188
    %v3911 = vunpack.c.l.b16 %v3189
    %v3912 = vunpack.c.h.b16 %v3189
    %v3913 = vunpack.c.l.b16 %v3190
    %v3914 = vunpack.c.h.b16 %v3190
    %v3915 = vunpack.c.l.b16 %v3191
    %v3916 = vunpack.c.h.b16 %v3191
    %v3917 = vunpack.c.l.b16 %v3192
    %v3918 = vunpack.c.h.b16 %v3192
    %v3919 = vunpack.c.l.b16 %v3193
    %v3920 = vunpack.c.h.b16 %v3193
    %v3921 = vunpack.c.l.b16 %v3194
    %v3922 = vunpack.c.h.b16 %v3194
    %v3923 = vunpack.c.l.b16 %v3195
    %v3924 = vunpack.c.h.b16 %v3195
    %v3925 = vunpack.c.l.b16 %v3196
    %v3926 = vunpack.c.h.b16 %v3196
    %v3927 = vunpack.c.l.b16 %v3197
    %v3928 = vunpack.c.h.b16 %v3197
    %v3929 = vunpack.c.l.b16 %v3198
    %v3930 = vunpack.c.h.b16 %v3198
    %v3931 = vunpack.c.l.b16 %v3199
    %v3932 = vunpack.c.h.b16 %v3199
    %v3933 = vunpack.c.l.b16 %v3200
    %v3934 = vunpack.c.h.b16 %v3200
    %v3935 = vunpack.c.l.b16 %v3201
    %v3936 = vunpack.c.h.b16 %v3201
    %v3937 = vunpack.c.l.b16 %v3202
    %v3938 = vunpack.c.h.b16 %v3202
    %v3939 = vunpack.c.l.b16 %v3203
    %v3940 = vunpack.c.h.b16 %v3203
    %v3941 = vunpack.c.l.b16 %v3204
    %v3942 = vunpack.c.h.b16 %v3204
    %v3943 = vunpack.c.l.b16 %v3205
    %v3944 = vunpack.c.h.b16 %v3205
    %v3945 = vunpack.c.l.b16 %v3206
    %v3946 = vunpack.c.h.b16 %v3206
    %v3947 = vunpack.c.l.b16 %v3207
    %v3948 = vunpack.c.h.b16 %v3207
    %v3949 = vunpack.c.l.b16 %v3208
    %v3950 = vunpack.c.h.b16 %v3208
    %v3951 = vunpack.c.l.b16 %v3209
    %v3952 = vunpack.c.h.b16 %v3209
    %v3953 = vunpack.c.l.b16 %v3210
    %v3954 = vunpack.c.h.b16 %v3210
    %v3955 = vunpack.c.l.b16 %v3211
    %v3956 = vunpack.c.h.b16 %v3211
    %v3957 = vunpack.c.l.b16 %v3212
    %v3958 = vunpack.c.h.b16 %v3212
    %v3959 = vunpack.c.l.b16 %v3213
    %v3960 = vunpack.c.h.b16 %v3213
    %v3961 = vunpack.c.l.b16 %v3214
    %v3962 = vunpack.c.h.b16 %v3214
    %v3963 = vunpack.c.l.b16 %v3215
    %v3964 = vunpack.c.h.b16 %v3215
    %v3965 = vunpack.c.l.b16 %v3216
    %v3966 = vunpack.c.h.b16 %v3216
    %v3967 = vunpack.c.l.b16 %v3217
    %v3968 = vunpack.c.h.b16 %v3217
    %v3969 = vunpack.c.l.b16 %v3218
    %v3970 = vunpack.c.h.b16 %v3218
    %v3971 = vunpack.c.l.b16 %v3219
    %v3972 = vunpack.c.h.b16 %v3219
    %v3973 = vunpack.c.l.b16 %v3220
    %v3974 = vunpack.c.h.b16 %v3220
    %v3975 = vunpack.c.l.b16 %v3221
    %v3976 = vunpack.c.h.b16 %v3221
    %v3977 = vunpack.c.l.b16 %v3222
    %v3978 = vunpack.c.h.b16 %v3222
    %v3979 = vunpack.c.l.b16 %v3223
    %v3980 = vunpack.c.h.b16 %v3223
    %v3981 = vunpack.c.l.b16 %v3224
    %v3982 = vunpack.c.h.b16 %v3224
    %v3983 = vunpack.c.l.b16 %v3225
    %v3984 = vunpack.c.h.b16 %v3225
    %v3985 = vunpack.c.l.b16 %v3226
    %v3986 = vunpack.c.h.b16 %v3226
    %v3987 = vunpack.c.l.b16 %v3227
    %v3988 = vunpack.c.h.b16 %v3227
    %v3989 = vunpack.c.l.b16 %v3228
    %v3990 = vunpack.c.h.b16 %v3228
    %v3991 = vunpack.c.l.b16 %v3229
    %v3992 = vunpack.c.h.b16 %v3229
    %v3993 = vunpack.c.l.b16 %v3230
    %v3994 = vunpack.c.h.b16 %v3230
    %v3995 = vunpack.c.l.b16 %v3231
    %v3996 = vunpack.c.h.b16 %v3231
    %v3997 = vunpack.c.l.b16 %v3232
    %v3998 = vunpack.c.h.b16 %v3232
    %v3999 = vunpack.c.l.b16 %v3233
    %v4000 = vunpack.c.h.b16 %v3233
    %v4001 = vunpack.c.l.b16 %v3234
    %v4002 = vunpack.c.h.b16 %v3234
    %v4003 = vunpack.c.l.b16 %v3235
    %v4004 = vunpack.c.h.b16 %v3235
    %v4005 = vunpack.c.l.b16 %v3236
    %v4006 = vunpack.c.h.b16 %v3236
    %v4007 = vunpack.c.l.b16 %v3237
    %v4008 = vunpack.c.h.b16 %v3237
    %v4009 = vunpack.c.l.b16 %v3238
    %v4010 = vunpack.c.h.b16 %v3238
    %v4011 = vunpack.c.l.b16 %v3239
    %v4012 = vunpack.c.h.b16 %v3239
    %v4013 = vunpack.c.l.b16 %v3240
    %v4014 = vunpack.c.h.b16 %v3240
    %v4015 = vunpack.c.l.b16 %v3241
    %v4016 = vunpack.c.h.b16 %v3241
    %v4017 = vunpack.c.l.b16 %v3242
    %v4018 = vunpack.c.h.b16 %v3242
    %v4019 = vunpack.c.l.b16 %v3243
    %v4020 = vunpack.c.h.b16 %v3243
    %v4021 = vunpack.c.l.b16 %v3244
    %v4022 = vunpack.c.h.b16 %v3244
    %v4023 = vunpack.c.l.b16 %v3245
    %v4024 = vunpack.c.h.b16 %v3245
    %v4025 = vunpack.c.l.b16 %v3246
    %v4026 = vunpack.c.h.b16 %v3246
    %v4027 = vunpack.c.l.b16 %v3247
    %v4028 = vunpack.c.h.b16 %v3247
    %v4029 = vunpack.c.l.b16 %v3248
    %v4030 = vunpack.c.h.b16 %v3248
    %v4031 = vunpack.c.l.b16 %v3249
    %v4032 = vunpack.c.h.b16 %v3249
    %v4033 = vunpack.c.l.b16 %v3250
    %v4034 = vunpack.c.h.b16 %v3250
    %v4035 = vunpack.c.l.b16 %v3251
    %v4036 = vunpack.c.h.b16 %v3251
    %v4037 = vunpack.c.l.b16 %v3252
    %v4038 = vunpack.c.h.b16 %v3252
    %v4039 = vunpack.c.l.b16 %v3253
    %v4040 = vunpack.c.h.b16 %v3253
    %v4041 = vunpack.c.l.b16 %v3254
    %v4042 = vunpack.c.h.b16 %v3254
    %v4043 = vunpack.c.l.b16 %v3255
    %v4044 = vunpack.c.h.b16 %v3255
    %v4045 = vunpack.c.l.b16 %v3256
    %v4046 = vunpack.c.h.b16 %v3256
    %v4047 = vpack.c.b16 %v3539, %v3535
    %v4048 = vpack.c.b16 %v3540, %v3536
    %v4049 = vpack.c.b16 %v3541, %v3537
    %v4050 = vpack.c.b16 %v3542, %v3538
    %v4051 = vpack.c.b16 %v3547, %v3543
    %v4052 = vpack.c.b16 %v3548, %v3544
    %v4053 = vpack.c.b16 %v3549, %v3545
    %v4054 = vpack.c.b16 %v3550, %v3546
    %v4055 = vpack.c.b16 %v3555, %v3551
    %v4056 = vpack.c.b16 %v3556, %v3552
    %v4057 = vpack.c.b16 %v3557, %v3553
    %v4058 = vpack.c.b16 %v3558, %v3554
    %v4059 = vpack.c.b16 %v3563, %v3559
    %v4060 = vpack.c.b16 %v3564, %v3560
    %v4061 = vpack.c.b16 %v3565, %v3561
    %v4062 = vpack.c.b16 %v3566, %v3562
    %v4063 = vpack.c.b16 %v3571, %v3567
    %v4064 = vpack.c.b16 %v3572, %v3568
    %v4065 = vpack.c.b16 %v3573, %v3569
    %v4066 = vpack.c.b16 %v3574, %v3570
    %v4067 = vpack.c.b16 %v3579, %v3575
    %v4068 = vpack.c.b16 %v3580, %v3576
    %v4069 = vpack.c.b16 %v3581, %v3577
    %v4070 = vpack.c.b16 %v3582, %v3578
    %v4071 = vpack.c.b16 %v3587, %v3583
    %v4072 = vpack.c.b16 %v3588, %v3584
    %v4073 = vpack.c.b16 %v3589, %v3585
    %v4074 = vpack.c.b16 %v3590, %v3586
    %v4075 = vpack.c.b16 %v3595, %v3591
    %v4076 = vpack.c.b16 %v3596, %v3592
    %v4077 = vpack.c.b16 %v3597, %v3593
    %v4078 = vpack.c.b16 %v3598, %v3594
    %v4079 = vpack.c.b16 %v3603, %v3599
    %v4080 = vpack.c.b16 %v3604, %v3600
    %v4081 = vpack.c.b16 %v3605, %v3601
    %v4082 = vpack.c.b16 %v3606, %v3602
    %v4083 = vpack.c.b16 %v3611, %v3607
    %v4084 = vpack.c.b16 %v3612, %v3608
    %v4085 = vpack.c.b16 %v3613, %v3609
    %v4086 = vpack.c.b16 %v3614, %v3610
    %v4087 = vpack.c.b16 %v3619, %v3615
    %v4088 = vpack.c.b16 %v3620, %v3616
    %v4089 = vpack.c.b16 %v3621, %v3617
    %v4090 = vpack.c.b16 %v3622, %v3618
    %v4091 = vpack.c.b16 %v3627, %v3623
    %v4092 = vpack.c.b16 %v3628, %v3624
    %v4093 = vpack.c.b16 %v3629, %v3625
    %v4094 = vpack.c.b16 %v3630, %v3626
    %v4095 = vpack.c.b16 %v3635, %v3631
    %v4096 = vpack.c.b16 %v3636, %v3632
    %v4097 = vpack.c.b16 %v3637, %v3633
    %v4098 = vpack.c.b16 %v3638, %v3634
    %v4099 = vpack.c.b16 %v3643, %v3639
    %v4100 = vpack.c.b16 %v3644, %v3640
    %v4101 = vpack.c.b16 %v3645, %v3641
    %v4102 = vpack.c.b16 %v3646, %v3642
    %v4103 = vpack.c.b16 %v3651, %v3647
    %v4104 = vpack.c.b16 %v3652, %v3648
    %v4105 = vpack.c.b16 %v3653, %v3649
    %v4106 = vpack.c.b16 %v3654, %v3650
    %v4107 = vpack.c.b16 %v3659, %v3655
    %v4108 = vpack.c.b16 %v3660, %v3656
    %v4109 = vpack.c.b16 %v3661, %v3657
    %v4110 = vpack.c.b16 %v3662, %v3658
    %v4111 = vpack.c.b16 %v3667, %v3663
    %v4112 = vpack.c.b16 %v3668, %v3664
    %v4113 = vpack.c.b16 %v3669, %v3665
    %v4114 = vpack.c.b16 %v3670, %v3666
    %v4115 = vpack.c.b16 %v3675, %v3671
    %v4116 = vpack.c.b16 %v3676, %v3672
    %v4117 = vpack.c.b16 %v3677, %v3673
    %v4118 = vpack.c.b16 %v3678, %v3674
    %v4119 = vpack.c.b16 %v3683, %v3679
    %v4120 = vpack.c.b16 %v3684, %v3680
    %v4121 = vpack.c.b16 %v3685, %v3681
    %v4122 = vpack.c.b16 %v3686, %v3682
    %v4123 = vpack.c.b16 %v3691, %v3687
    %v4124 = vpack.c.b16 %v3692, %v3688
    %v4125 = vpack.c.b16 %v3693, %v3689
    %v4126 = vpack.c.b16 %v3694, %v3690
    %v4127 = vpack.c.b16 %v3699, %v3695
    %v4128 = vpack.c.b16 %v3700, %v3696
    %v4129 = vpack.c.b16 %v3701, %v3697
    %v4130 = vpack.c.b16 %v3702, %v3698
    %v4131 = vpack.c.b16 %v3707, %v3703
    %v4132 = vpack.c.b16 %v3708, %v3704
    %v4133 = vpack.c.b16 %v3709, %v3705
    %v4134 = vpack.c.b16 %v3710, %v3706
    %v4135 = vpack.c.b16 %v3715, %v3711
    %v4136 = vpack.c.b16 %v3716, %v3712
    %v4137 = vpack.c.b16 %v3717, %v3713
    %v4138 = vpack.c.b16 %v3718, %v3714
    %v4139 = vpack.c.b16 %v3723, %v3719
    %v4140 = vpack.c.b16 %v3724, %v3720
    %v4141 = vpack.c.b16 %v3725, %v3721
    %v4142 = vpack.c.b16 %v3726, %v3722
    %v4143 = vpack.c.b16 %v3731, %v3727
    %v4144 = vpack.c.b16 %v3732, %v3728
    %v4145 = vpack.c.b16 %v3733, %v3729
    %v4146 = vpack.c.b16 %v3734, %v3730
    %v4147 = vpack.c.b16 %v3739, %v3735
    %v4148 = vpack.c.b16 %v3740, %v3736
    %v4149 = vpack.c.b16 %v3741, %v3737
    %v4150 = vpack.c.b16 %v3742, %v3738
    %v4151 = vpack.c.b16 %v3747, %v3743
    %v4152 = vpack.c.b16 %v3748, %v3744
    %v4153 = vpack.c.b16 %v3749, %v3745
    %v4154 = vpack.c.b16 %v3750, %v3746
    %v4155 = vpack.c.b16 %v3755, %v3751
    %v4156 = vpack.c.b16 %v3756, %v3752
    %v4157 = vpack.c.b16 %v3757, %v3753
    %v4158 = vpack.c.b16 %v3758, %v3754
    %v4159 = vpack.c.b16 %v3763, %v3759
    %v4160 = vpack.c.b16 %v3764, %v3760
    %v4161 = vpack.c.b16 %v3765, %v3761
    %v4162 = vpack.c.b16 %v3766, %v3762
    %v4163 = vpack.c.b16 %v3771, %v3767
    %v4164 = vpack.c.b16 %v3772, %v3768
    %v4165 = vpack.c.b16 %v3773, %v3769
    %v4166 = vpack.c.b16 %v3774, %v3770
    %v4167 = vpack.c.b16 %v3779, %v3775
    %v4168 = vpack.c.b16 %v3780, %v3776
    %v4169 = vpack.c.b16 %v3781, %v3777
    %v4170 = vpack.c.b16 %v3782, %v3778
    %v4171 = vpack.c.b16 %v3787, %v3783
    %v4172 = vpack.c.b16 %v3788, %v3784
    %v4173 = vpack.c.b16 %v3789, %v3785
    %v4174 = vpack.c.b16 %v3790, %v3786
    %v4175 = vpack.c.b16 %v3795, %v3791
    %v4176 = vpack.c.b16 %v3796, %v3792
    %v4177 = vpack.c.b16 %v3797, %v3793
    %v4178 = vpack.c.b16 %v3798, %v3794
    %v4179 = vpack.c.b16 %v3803, %v3799
    %v4180 = vpack.c.b16 %v3804, %v3800
    %v4181 = vpack.c.b16 %v3805, %v3801
    %v4182 = vpack.c.b16 %v3806, %v3802
    %v4183 = vpack.c.b16 %v3811, %v3807
    %v4184 = vpack.c.b16 %v3812, %v3808
    %v4185 = vpack.c.b16 %v3813, %v3809
    %v4186 = vpack.c.b16 %v3814, %v3810
    %v4187 = vpack.c.b16 %v3819, %v3815
    %v4188 = vpack.c.b16 %v3820, %v3816
    %v4189 = vpack.c.b16 %v3821, %v3817
    %v4190 = vpack.c.b16 %v3822, %v3818
    %v4191 = vpack.c.b16 %v3827, %v3823
    %v4192 = vpack.c.b16 %v3828, %v3824
    %v4193 = vpack.c.b16 %v3829, %v3825
    %v4194 = vpack.c.b16 %v3830, %v3826
    %v4195 = vpack.c.b16 %v3835, %v3831
    %v4196 = vpack.c.b16 %v3836, %v3832
    %v4197 = vpack.c.b16 %v3837, %v3833
    %v4198 = vpack.c.b16 %v3838, %v3834
    %v4199 = vpack.c.b16 %v3843, %v3839
    %v4200 = vpack.c.b16 %v3844, %v3840
    %v4201 = vpack.c.b16 %v3845, %v3841
    %v4202 = vpack.c.b16 %v3846, %v3842
    %v4203 = vpack.c.b16 %v3851, %v3847
    %v4204 = vpack.c.b16 %v3852, %v3848
    %v4205 = vpack.c.b16 %v3853, %v3849
    %v4206 = vpack.c.b16 %v3854, %v3850
    %v4207 = vpack.c.b16 %v3859, %v3855
    %v4208 = vpack.c.b16 %v3860, %v3856
    %v4209 = vpack.c.b16 %v3861, %v3857
    %v4210 = vpack.c.b16 %v3862, %v3858
    %v4211 = vpack.c.b16 %v3867, %v3863
    %v4212 = vpack.c.b16 %v3868, %v3864
    %v4213 = vpack.c.b16 %v3869, %v3865
    %v4214 = vpack.c.b16 %v3870, %v3866
    %v4215 = vpack.c.b16 %v3875, %v3871
    %v4216 = vpack.c.b16 %v3876, %v3872
    %v4217 = vpack.c.b16 %v3877, %v3873
    %v4218 = vpack.c.b16 %v3878, %v3874
    %v4219 = vpack.c.b16 %v3883, %v3879
    %v4220 = vpack.c.b16 %v3884, %v3880
    %v4221 = vpack.c.b16 %v3885, %v3881
    %v4222 = vpack.c.b16 %v3886, %v3882
    %v4223 = vpack.c.b16 %v3891, %v3887
    %v4224 = vpack.c.b16 %v3892, %v3888
    %v4225 = vpack.c.b16 %v3893, %v3889
    %v4226 = vpack.c.b16 %v3894, %v3890
    %v4227 = vpack.c.b16 %v3899, %v3895
    %v4228 = vpack.c.b16 %v3900, %v3896
    %v4229 = vpack.c.b16 %v3901, %v3897
    %v4230 = vpack.c.b16 %v3902, %v3898
    %v4231 = vpack.c.b16 %v3907, %v3903
    %v4232 = vpack.c.b16 %v3908, %v3904
    %v4233 = vpack.c.b16 %v3909, %v3905
    %v4234 = vpack.c.b16 %v3910, %v3906
    %v4235 = vpack.c.b16 %v3915, %v3911
    %v4236 = vpack.c.b16 %v3916, %v3912
    %v4237 = vpack.c.b16 %v3917, %v3913
    %v4238 = vpack.c.b16 %v3918, %v3914
    %v4239 = vpack.c.b16 %v3923, %v3919
    %v4240 = vpack.c.b16 %v3924, %v3920
    %v4241 = vpack.c.b16 %v3925, %v3921
    %v4242 = vpack.c.b16 %v3926, %v3922
    %v4243 = vpack.c.b16 %v3931, %v3927
    %v4244 = vpack.c.b16 %v3932, %v3928
    %v4245 = vpack.c.b16 %v3933, %v3929
    %v4246 = vpack.c.b16 %v3934, %v3930
    %v4247 = vpack.c.b16 %v3939, %v3935
    %v4248 = vpack.c.b16 %v3940, %v3936
    %v4249 = vpack.c.b16 %v3941, %v3937
    %v4250 = vpack.c.b16 %v3942, %v3938
    %v4251 = vpack.c.b16 %v3947, %v3943
    %v4252 = vpack.c.b16 %v3948, %v3944
    %v4253 = vpack.c.b16 %v3949, %v3945
    %v4254 = vpack.c.b16 %v3950, %v3946
    %v4255 = vpack.c.b16 %v3955, %v3951
    %v4256 = vpack.c.b16 %v3956, %v3952
    %v4257 = vpack.c.b16 %v3957, %v3953
    %v4258 = vpack.c.b16 %v3958, %v3954
    %v4259 = vpack.c.b16 %v3963, %v3959
    %v4260 = vpack.c.b16 %v3964, %v3960
    %v4261 = vpack.c.b16 %v3965, %v3961
    %v4262 = vpack.c.b16 %v3966, %v3962
    %v4263 = vpack.c.b16 %v3971, %v3967
    %v4264 = vpack.c.b16 %v3972, %v3968
    %v4265 = vpack.c.b16 %v3973, %v3969
    %v4266 = vpack.c.b16 %v3974, %v3970
    %v4267 = vpack.c.b16 %v3979, %v3975
    %v4268 = vpack.c.b16 %v3980, %v3976
    %v4269 = vpack.c.b16 %v3981, %v3977
    %v4270 = vpack.c.b16 %v3982, %v3978
    %v4271 = vpack.c.b16 %v3987, %v3983
    %v4272 = vpack.c.b16 %v3988, %v3984
    %v4273 = vpack.c.b16 %v3989, %v3985
    %v4274 = vpack.c.b16 %v3990, %v3986
    %v4275 = vpack.c.b16 %v3995, %v3991
    %v4276 = vpack.c.b16 %v3996, %v3992
    %v4277 = vpack.c.b16 %v3997, %v3993
    %v4278 = vpack.c.b16 %v3998, %v3994
    %v4279 = vpack.c.b16 %v4003, %v3999
    %v4280 = vpack.c.b16 %v4004, %v4000
    %v4281 = vpack.c.b16 %v4005, %v4001
    %v4282 = vpack.c.b16 %v4006, %v4002
    %v4283 = vpack.c.b16 %v4011, %v4007
    %v4284 = vpack.c.b16 %v4012, %v4008
    %v4285 = vpack.c.b16 %v4013, %v4009
    %v4286 = vpack.c.b16 %v4014, %v4010
    %v4287 = vpack.c.b16 %v4019, %v4015
    %v4288 = vpack.c.b16 %v4020, %v4016
    %v4289 = vpack.c.b16 %v4021, %v4017
    %v4290 = vpack.c.b16 %v4022, %v4018
    %v4291 = vpack.c.b16 %v4027, %v4023
    %v4292 = vpack.c.b16 %v4028, %v4024
    %v4293 = vpack.c.b16 %v4029, %v4025
    %v4294 = vpack.c.b16 %v4030, %v4026
    %v4295 = vpack.c.b16 %v4035, %v4031
    %v4296 = vpack.c.b16 %v4036, %v4032
    %v4297 = vpack.c.b16 %v4037, %v4033
    %v4298 = vpack.c.b16 %v4038, %v4034
    %v4299 = vpack.c.b16 %v4043, %v4039
    %v4300 = vpack.c.b16 %v4044, %v4040
    %v4301 = vpack.c.b16 %v4045, %v4041
    %v4302 = vpack.c.b16 %v4046, %v4042
    %4559 = vmatprep.subr.bf16.mxu0 %v4048
    %4560 = vmatpush1.bf16.msra.mxu0 %v4047
    %4561 = vmatprep.subr.bf16.mxu0 %v4052
    %4562 = vmatpush1.bf16.msra.mxu0 %v4051
    %4563 = vmatprep.subr.bf16.mxu0 %v4056
    %4564 = vmatpush1.bf16.msra.mxu0 %v4055
    %4565 = vmatprep.subr.bf16.mxu0 %v4060
    %4566 = vmatpush1.bf16.msra.mxu0 %v4059
    %4567 = vmatprep.subr.bf16.mxu0 %v4064
    %4568 = vmatpush1.bf16.msra.mxu0 %v4063
    %4569 = vmatprep.subr.bf16.mxu0 %v4068
    %4570 = vmatpush1.bf16.msra.mxu0 %v4067
    %4571 = vmatprep.subr.bf16.mxu0 %v4072
    %4572 = vmatpush1.bf16.msra.mxu0 %v4071
    %4573 = vmatprep.subr.bf16.mxu0 %v4076
    %4574 = vmatpush1.bf16.msra.mxu0 %v4075
    %4575 = vmatprep.subr.bf16.mxu0 %v4080
    %4576 = vmatpush1.bf16.msra.mxu0 %v4079
    %4577 = vmatprep.subr.bf16.mxu0 %v4084
    %4578 = vmatpush1.bf16.msra.mxu0 %v4083
    %4579 = vmatprep.subr.bf16.mxu0 %v4088
    %4580 = vmatpush1.bf16.msra.mxu0 %v4087
    %4581 = vmatprep.subr.bf16.mxu0 %v4092
    %4582 = vmatpush1.bf16.msra.mxu0 %v4091
    %4583 = vmatprep.subr.bf16.mxu0 %v4096
    %4584 = vmatpush1.bf16.msra.mxu0 %v4095
    %4585 = vmatprep.subr.bf16.mxu0 %v4100
    %4586 = vmatpush1.bf16.msra.mxu0 %v4099
    %4587 = vmatprep.subr.bf16.mxu0 %v4104
    %4588 = vmatpush1.bf16.msra.mxu0 %v4103
    %4589 = vmatprep.subr.bf16.mxu0 %v4108
    %4590 = vmatpush1.bf16.msra.mxu0 %v4107
    %4591 = vmatprep.mubr.bf16.mxu0 %v2994
    %4592 = vmatmul.mubr.bf16.gmra.mrb[0].mxu0 %v2993
    %v4593 = vpop.f32.mrb[0].mxu0
    %v4594 = vadd.f32 %v3262, %v4593
    %v4595 = vpop.f32.mrb[0].mxu0
    %v4596 = vadd.f32 %v3266, %v4595
    %v4597 = vpop.f32.mrb[0].mxu0
    %v4598 = vpop.f32.mrb[0].mxu0
    %4599 = vdwg.mxu0
    %4600 = vmatprep.subr.bf16.mxu0 %v4112
    %4601 = vmatpush1.bf16.msra.mxu0 %v4111
    %4602 = vmatprep.subr.bf16.mxu0 %v4116
    %4603 = vmatpush1.bf16.msra.mxu0 %v4115
    %4604 = vmatprep.subr.bf16.mxu0 %v4120
    %4605 = vmatpush1.bf16.msra.mxu0 %v4119
    %4606 = vmatprep.subr.bf16.mxu0 %v4124
    %4607 = vmatpush1.bf16.msra.mxu0 %v4123
    %4608 = vmatprep.subr.bf16.mxu0 %v4128
    %4609 = vmatpush1.bf16.msra.mxu0 %v4127
    %4610 = vmatprep.subr.bf16.mxu0 %v4132
    %4611 = vmatpush1.bf16.msra.mxu0 %v4131
    %4612 = vmatprep.subr.bf16.mxu0 %v4136
    %4613 = vmatpush1.bf16.msra.mxu0 %v4135
    %4614 = vmatprep.subr.bf16.mxu0 %v4140
    %4615 = vmatpush1.bf16.msra.mxu0 %v4139
    %4616 = vmatprep.subr.bf16.mxu0 %v4144
    %4617 = vmatpush1.bf16.msra.mxu0 %v4143
    %4618 = vmatprep.subr.bf16.mxu0 %v4148
    %4619 = vmatpush1.bf16.msra.mxu0 %v4147
    %4620 = vmatprep.subr.bf16.mxu0 %v4152
    %4621 = vmatpush1.bf16.msra.mxu0 %v4151
    %4622 = vmatprep.subr.bf16.mxu0 %v4156
    %4623 = vmatpush1.bf16.msra.mxu0 %v4155
    %4624 = vmatprep.subr.bf16.mxu0 %v4160
    %4625 = vmatpush1.bf16.msra.mxu0 %v4159
    %4626 = vmatprep.subr.bf16.mxu0 %v4164
    %4627 = vmatpush1.bf16.msra.mxu0 %v4163
    %4628 = vmatprep.subr.bf16.mxu0 %v4168
    %4629 = vmatpush1.bf16.msra.mxu0 %v4167
    %4630 = vmatprep.subr.bf16.mxu0 %v4172
    %4631 = vmatpush1.bf16.msra.mxu0 %v4171
    %4632 = vmatprep.mubr.bf16.mxu0 %v2996
    %4633 = vmatmul.mubr.bf16.gmra.mrb[0].mxu0 %v2995
    %v4634 = vpop.f32.mrb[0].mxu0
    %v4635 = vadd.f32 %v4594, %v4634
    %v4636 = vpop.f32.mrb[0].mxu0
    %v4637 = vadd.f32 %v4596, %v4636
    %v4638 = vpop.f32.mrb[0].mxu0
    %v4639 = vpop.f32.mrb[0].mxu0
    %4640 = vdwg.mxu0
    %4641 = vmatprep.subr.bf16.mxu0 %v4176
    %4642 = vmatpush1.bf16.msra.mxu0 %v4175
    %4643 = vmatprep.subr.bf16.mxu0 %v4180
    %4644 = vmatpush1.bf16.msra.mxu0 %v4179
    %4645 = vmatprep.subr.bf16.mxu0 %v4184
    %4646 = vmatpush1.bf16.msra.mxu0 %v4183
    %4647 = vmatprep.subr.bf16.mxu0 %v4188
    %4648 = vmatpush1.bf16.msra.mxu0 %v4187
    %4649 = vmatprep.subr.bf16.mxu0 %v4192
    %4650 = vmatpush1.bf16.msra.mxu0 %v4191
    %4651 = vmatprep.subr.bf16.mxu0 %v4196
    %4652 = vmatpush1.bf16.msra.mxu0 %v4195
    %4653 = vmatprep.subr.bf16.mxu0 %v4200
    %4654 = vmatpush1.bf16.msra.mxu0 %v4199
    %4655 = vmatprep.subr.bf16.mxu0 %v4204
    %4656 = vmatpush1.bf16.msra.mxu0 %v4203
    %4657 = vmatprep.subr.bf16.mxu0 %v4208
    %4658 = vmatpush1.bf16.msra.mxu0 %v4207
    %4659 = vmatprep.subr.bf16.mxu0 %v4212
    %4660 = vmatpush1.bf16.msra.mxu0 %v4211
    %4661 = vmatprep.subr.bf16.mxu0 %v4216
    %4662 = vmatpush1.bf16.msra.mxu0 %v4215
    %4663 = vmatprep.subr.bf16.mxu0 %v4220
    %4664 = vmatpush1.bf16.msra.mxu0 %v4219
    %4665 = vmatprep.subr.bf16.mxu0 %v4224
    %4666 = vmatpush1.bf16.msra.mxu0 %v4223
    %4667 = vmatprep.subr.bf16.mxu0 %v4228
    %4668 = vmatpush1.bf16.msra.mxu0 %v4227
    %4669 = vmatprep.subr.bf16.mxu0 %v4232
    %4670 = vmatpush1.bf16.msra.mxu0 %v4231
    %4671 = vmatprep.subr.bf16.mxu0 %v4236
    %4672 = vmatpush1.bf16.msra.mxu0 %v4235
    %4673 = vmatprep.mubr.bf16.mxu0 %v2998
    %4674 = vmatmul.mubr.bf16.gmra.mrb[0].mxu0 %v2997
    %v4675 = vpop.f32.mrb[0].mxu0
    %v4676 = vadd.f32 %v4635, %v4675
    %v4677 = vpop.f32.mrb[0].mxu0
    %v4678 = vadd.f32 %v4637, %v4677
    %v4679 = vpop.f32.mrb[0].mxu0
    %v4680 = vpop.f32.mrb[0].mxu0
    %4681 = vdwg.mxu0
    %4682 = vmatprep.subr.bf16.mxu0 %v4240
    %4683 = vmatpush1.bf16.msra.mxu0 %v4239
    %4684 = vmatprep.subr.bf16.mxu0 %v4244
    %4685 = vmatpush1.bf16.msra.mxu0 %v4243
    %4686 = vmatprep.subr.bf16.mxu0 %v4248
    %4687 = vmatpush1.bf16.msra.mxu0 %v4247
    %4688 = vmatprep.subr.bf16.mxu0 %v4252
    %4689 = vmatpush1.bf16.msra.mxu0 %v4251
    %4690 = vmatprep.subr.bf16.mxu0 %v4256
    %4691 = vmatpush1.bf16.msra.mxu0 %v4255
    %4692 = vmatprep.subr.bf16.mxu0 %v4260
    %4693 = vmatpush1.bf16.msra.mxu0 %v4259
    %4694 = vmatprep.subr.bf16.mxu0 %v4264
    %4695 = vmatpush1.bf16.msra.mxu0 %v4263
    %4696 = vmatprep.subr.bf16.mxu0 %v4268
    %4697 = vmatpush1.bf16.msra.mxu0 %v4267
    %4698 = vmatprep.subr.bf16.mxu0 %v4272
    %4699 = vmatpush1.bf16.msra.mxu0 %v4271
    %4700 = vmatprep.subr.bf16.mxu0 %v4276
    %4701 = vmatpush1.bf16.msra.mxu0 %v4275
    %4702 = vmatprep.subr.bf16.mxu0 %v4280
    %4703 = vmatpush1.bf16.msra.mxu0 %v4279
    %4704 = vmatprep.subr.bf16.mxu0 %v4284
    %4705 = vmatpush1.bf16.msra.mxu0 %v4283
    %4706 = vmatprep.subr.bf16.mxu0 %v4288
    %4707 = vmatpush1.bf16.msra.mxu0 %v4287
    %4708 = vmatprep.subr.bf16.mxu0 %v4292
    %4709 = vmatpush1.bf16.msra.mxu0 %v4291
    %4710 = vmatprep.subr.bf16.mxu0 %v4296
    %4711 = vmatpush1.bf16.msra.mxu0 %v4295
    %4712 = vmatprep.subr.bf16.mxu0 %v4300
    %4713 = vmatpush1.bf16.msra.mxu0 %v4299
    %4714 = vmatprep.mubr.bf16.mxu0 %v3000
    %4715 = vmatmul.mubr.bf16.gmra.mrb[0].mxu0 %v2999
    %v4716 = vpop.f32.mrb[0].mxu0
    %v4717 = vadd.f32 %v4676, %v4716
    %v4718 = vpop.f32.mrb[0].mxu0
    %v4719 = vadd.f32 %v4678, %v4718
    %v4720 = vpop.f32.mrb[0].mxu0
    %v4721 = vpop.f32.mrb[0].mxu0
    %4722 = vdwg.mxu0
    %4723 = vmatprep.subr.bf16.mxu0 %v4050
    %4724 = vmatpush1.bf16.msra.mxu0 %v4049
    %4725 = vmatprep.subr.bf16.mxu0 %v4054
    %4726 = vmatpush1.bf16.msra.mxu0 %v4053
    %4727 = vmatprep.subr.bf16.mxu0 %v4058
    %4728 = vmatpush1.bf16.msra.mxu0 %v4057
    %4729 = vmatprep.subr.bf16.mxu0 %v4062
    %4730 = vmatpush1.bf16.msra.mxu0 %v4061
    %4731 = vmatprep.subr.bf16.mxu0 %v4066
    %4732 = vmatpush1.bf16.msra.mxu0 %v4065
    %4733 = vmatprep.subr.bf16.mxu0 %v4070
    %4734 = vmatpush1.bf16.msra.mxu0 %v4069
    %4735 = vmatprep.subr.bf16.mxu0 %v4074
    %4736 = vmatpush1.bf16.msra.mxu0 %v4073
    %4737 = vmatprep.subr.bf16.mxu0 %v4078
    %4738 = vmatpush1.bf16.msra.mxu0 %v4077
    %4739 = vmatprep.subr.bf16.mxu0 %v4082
    %4740 = vmatpush1.bf16.msra.mxu0 %v4081
    %4741 = vmatprep.subr.bf16.mxu0 %v4086
    %4742 = vmatpush1.bf16.msra.mxu0 %v4085
    %4743 = vmatprep.subr.bf16.mxu0 %v4090
    %4744 = vmatpush1.bf16.msra.mxu0 %v4089
    %4745 = vmatprep.subr.bf16.mxu0 %v4094
    %4746 = vmatpush1.bf16.msra.mxu0 %v4093
    %4747 = vmatprep.subr.bf16.mxu0 %v4098
    %4748 = vmatpush1.bf16.msra.mxu0 %v4097
    %4749 = vmatprep.subr.bf16.mxu0 %v4102
    %4750 = vmatpush1.bf16.msra.mxu0 %v4101
    %4751 = vmatprep.subr.bf16.mxu0 %v4106
    %4752 = vmatpush1.bf16.msra.mxu0 %v4105
    %4753 = vmatprep.subr.bf16.mxu0 %v4110
    %4754 = vmatpush1.bf16.msra.mxu0 %v4109
    %4755 = vmatprep.mubr.bf16.mxu0 %v2994
    %4756 = vmatmul.mubr.bf16.gmra.mrb[0].mxu0 %v2993
    %v4757 = vpop.f32.mrb[0].mxu0
    %v4758 = vadd.f32 %v3270, %v4757
    %v4759 = vpop.f32.mrb[0].mxu0
    %v4760 = vadd.f32 %v3274, %v4759
    %v4761 = vpop.f32.mrb[0].mxu0
    %v4762 = vpop.f32.mrb[0].mxu0
    %4763 = vdwg.mxu0
    %4764 = vmatprep.subr.bf16.mxu0 %v4114
    %4765 = vmatpush1.bf16.msra.mxu0 %v4113
    %4766 = vmatprep.subr.bf16.mxu0 %v4118
    %4767 = vmatpush1.bf16.msra.mxu0 %v4117
    %4768 = vmatprep.subr.bf16.mxu0 %v4122
    %4769 = vmatpush1.bf16.msra.mxu0 %v4121
    %4770 = vmatprep.subr.bf16.mxu0 %v4126
    %4771 = vmatpush1.bf16.msra.mxu0 %v4125
    %4772 = vmatprep.subr.bf16.mxu0 %v4130
    %4773 = vmatpush1.bf16.msra.mxu0 %v4129
    %4774 = vmatprep.subr.bf16.mxu0 %v4134
    %4775 = vmatpush1.bf16.msra.mxu0 %v4133
    %4776 = vmatprep.subr.bf16.mxu0 %v4138
    %4777 = vmatpush1.bf16.msra.mxu0 %v4137
    %4778 = vmatprep.subr.bf16.mxu0 %v4142
    %4779 = vmatpush1.bf16.msra.mxu0 %v4141
    %4780 = vmatprep.subr.bf16.mxu0 %v4146
    %4781 = vmatpush1.bf16.msra.mxu0 %v4145
    %4782 = vmatprep.subr.bf16.mxu0 %v4150
    %4783 = vmatpush1.bf16.msra.mxu0 %v4149
    %4784 = vmatprep.subr.bf16.mxu0 %v4154
    %4785 = vmatpush1.bf16.msra.mxu0 %v4153
    %4786 = vmatprep.subr.bf16.mxu0 %v4158
    %4787 = vmatpush1.bf16.msra.mxu0 %v4157
    %4788 = vmatprep.subr.bf16.mxu0 %v4162
    %4789 = vmatpush1.bf16.msra.mxu0 %v4161
    %4790 = vmatprep.subr.bf16.mxu0 %v4166
    %4791 = vmatpush1.bf16.msra.mxu0 %v4165
    %4792 = vmatprep.subr.bf16.mxu0 %v4170
    %4793 = vmatpush1.bf16.msra.mxu0 %v4169
    %4794 = vmatprep.subr.bf16.mxu0 %v4174
    %4795 = vmatpush1.bf16.msra.mxu0 %v4173
    %4796 = vmatprep.mubr.bf16.mxu0 %v2996
    %4797 = vmatmul.mubr.bf16.gmra.mrb[0].mxu0 %v2995
    %v4798 = vpop.f32.mrb[0].mxu0
    %v4799 = vadd.f32 %v4758, %v4798
    %v4800 = vpop.f32.mrb[0].mxu0
    %v4801 = vadd.f32 %v4760, %v4800
    %v4802 = vpop.f32.mrb[0].mxu0
    %v4803 = vpop.f32.mrb[0].mxu0
    %4804 = vdwg.mxu0
    %4805 = vmatprep.subr.bf16.mxu0 %v4178
    %4806 = vmatpush1.bf16.msra.mxu0 %v4177
    %4807 = vmatprep.subr.bf16.mxu0 %v4182
    %4808 = vmatpush1.bf16.msra.mxu0 %v4181
    %4809 = vmatprep.subr.bf16.mxu0 %v4186
    %4810 = vmatpush1.bf16.msra.mxu0 %v4185
    %4811 = vmatprep.subr.bf16.mxu0 %v4190
    %4812 = vmatpush1.bf16.msra.mxu0 %v4189
    %4813 = vmatprep.subr.bf16.mxu0 %v4194
    %4814 = vmatpush1.bf16.msra.mxu0 %v4193
    %4815 = vmatprep.subr.bf16.mxu0 %v4198
    %4816 = vmatpush1.bf16.msra.mxu0 %v4197
    %4817 = vmatprep.subr.bf16.mxu0 %v4202
    %4818 = vmatpush1.bf16.msra.mxu0 %v4201
    %4819 = vmatprep.subr.bf16.mxu0 %v4206
    %4820 = vmatpush1.bf16.msra.mxu0 %v4205
    %4821 = vmatprep.subr.bf16.mxu0 %v4210
    %4822 = vmatpush1.bf16.msra.mxu0 %v4209
    %4823 = vmatprep.subr.bf16.mxu0 %v4214
    %4824 = vmatpush1.bf16.msra.mxu0 %v4213
    %4825 = vmatprep.subr.bf16.mxu0 %v4218
    %4826 = vmatpush1.bf16.msra.mxu0 %v4217
    %4827 = vmatprep.subr.bf16.mxu0 %v4222
    %4828 = vmatpush1.bf16.msra.mxu0 %v4221
    %4829 = vmatprep.subr.bf16.mxu0 %v4226
    %4830 = vmatpush1.bf16.msra.mxu0 %v4225
    %4831 = vmatprep.subr.bf16.mxu0 %v4230
    %4832 = vmatpush1.bf16.msra.mxu0 %v4229
    %4833 = vmatprep.subr.bf16.mxu0 %v4234
    %4834 = vmatpush1.bf16.msra.mxu0 %v4233
    %4835 = vmatprep.subr.bf16.mxu0 %v4238
    %4836 = vmatpush1.bf16.msra.mxu0 %v4237
    %4837 = vmatprep.mubr.bf16.mxu0 %v2998
    %4838 = vmatmul.mubr.bf16.gmra.mrb[0].mxu0 %v2997
    %v4839 = vpop.f32.mrb[0].mxu0
    %v4840 = vadd.f32 %v4799, %v4839
    %v4841 = vpop.f32.mrb[0].mxu0
    %v4842 = vadd.f32 %v4801, %v4841
    %v4843 = vpop.f32.mrb[0].mxu0
    %v4844 = vpop.f32.mrb[0].mxu0
    %4845 = vdwg.mxu0
    %4846 = vmatprep.subr.bf16.mxu0 %v4242
    %4847 = vmatpush1.bf16.msra.mxu0 %v4241
    %4848 = vmatprep.subr.bf16.mxu0 %v4246
    %4849 = vmatpush1.bf16.msra.mxu0 %v4245
    %4850 = vmatprep.subr.bf16.mxu0 %v4250
    %4851 = vmatpush1.bf16.msra.mxu0 %v4249
    %4852 = vmatprep.subr.bf16.mxu0 %v4254
    %4853 = vmatpush1.bf16.msra.mxu0 %v4253
    %4854 = vmatprep.subr.bf16.mxu0 %v4258
    %4855 = vmatpush1.bf16.msra.mxu0 %v4257
    %4856 = vmatprep.subr.bf16.mxu0 %v4262
    %4857 = vmatpush1.bf16.msra.mxu0 %v4261
    %4858 = vmatprep.subr.bf16.mxu0 %v4266
    %4859 = vmatpush1.bf16.msra.mxu0 %v4265
    %4860 = vmatprep.subr.bf16.mxu0 %v4270
    %4861 = vmatpush1.bf16.msra.mxu0 %v4269
    %4862 = vmatprep.subr.bf16.mxu0 %v4274
    %4863 = vmatpush1.bf16.msra.mxu0 %v4273
    %4864 = vmatprep.subr.bf16.mxu0 %v4278
    %4865 = vmatpush1.bf16.msra.mxu0 %v4277
    %4866 = vmatprep.subr.bf16.mxu0 %v4282
    %4867 = vmatpush1.bf16.msra.mxu0 %v4281
    %4868 = vmatprep.subr.bf16.mxu0 %v4286
    %4869 = vmatpush1.bf16.msra.mxu0 %v4285
    %4870 = vmatprep.subr.bf16.mxu0 %v4290
    %4871 = vmatpush1.bf16.msra.mxu0 %v4289
    %4872 = vmatprep.subr.bf16.mxu0 %v4294
    %4873 = vmatpush1.bf16.msra.mxu0 %v4293
    %4874 = vmatprep.subr.bf16.mxu0 %v4298
    %4875 = vmatpush1.bf16.msra.mxu0 %v4297
    %4876 = vmatprep.subr.bf16.mxu0 %v4302
    %4877 = vmatpush1.bf16.msra.mxu0 %v4301
    %4878 = vmatprep.mubr.bf16.mxu0 %v3000
    %4879 = vmatmul.mubr.bf16.gmra.mrb[0].mxu0 %v2999
    %v4880 = vpop.f32.mrb[0].mxu0
    %v4881 = vadd.f32 %v4840, %v4880
    %v4882 = vpop.f32.mrb[0].mxu0
    %v4883 = vadd.f32 %v4842, %v4882
    %v4884 = vpop.f32.mrb[0].mxu0
    %v4885 = vpop.f32.mrb[0].mxu0
    %4886 = vdwg.mxu0
    %v4887 = vmax.f32 %v4717, 0.0
    %v4888 = vmax.f32 %v4719, 0.0
    %v4889 = vmax.f32 %v4881, 0.0
    %v4890 = vmax.f32 %v4883, 0.0
    %4891 = vst [vmem:[%s9] sm:$0xff] %v4887
    %4892 = vst [vmem:[%s9 + $0x8] sm:$0xff] %v4888
    %4893 = vst [vmem:[%s9 + $0x10] sm:$0xff] %v4889
    %4894 = vst [vmem:[%s9 + $0x18] sm:$0xff] %v4890
    %v4895 = vpack.c.bf16 %v4887, %v4887
    %v4896 = vpack.c.bf16 %v4888, %v4888
    %v4897 = vpack.c.bf16 %v4889, %v4889
    %v4898 = vpack.c.bf16 %v4890, %v4890
    %v4899 = vld [vmem:[#allocation9] sm:$0xff]
    %v4900 = vld [vmem:[#allocation9 + $0x8] sm:$0xff]
    %v4901 = vld [vmem:[#allocation9 + $0x10] sm:$0xff]
    %v4902 = vld [vmem:[#allocation9 + $0x18] sm:$0xff]
    %v4903 = vld [vmem:[#allocation9 + $0x20] sm:$0xff]
    %v4904 = vld [vmem:[#allocation9 + $0x28] sm:$0xff]
    %v4905 = vld [vmem:[#allocation9 + $0x30] sm:$0xff]
    %v4906 = vld [vmem:[#allocation9 + $0x38] sm:$0xff]
    %v4907 = vld [vmem:[#allocation9 + $0x40] sm:$0xff]
    %v4908 = vld [vmem:[#allocation9 + $0x48] sm:$0xff]
    %v4909 = vld [vmem:[#allocation9 + $0x50] sm:$0xff]
    %v4910 = vld [vmem:[#allocation9 + $0x58] sm:$0xff]
    %v4911 = vld [vmem:[#allocation9 + $0x60] sm:$0xff]
    %v4912 = vld [vmem:[#allocation9 + $0x68] sm:$0xff]
    %v4913 = vld [vmem:[#allocation9 + $0x70] sm:$0xff]
    %v4914 = vld [vmem:[#allocation9 + $0x78] sm:$0xff]
    %v4915 = vld [vmem:[#allocation9 + $0x80] sm:$0xff]
    %v4916 = vld [vmem:[#allocation9 + $0x88] sm:$0xff]
    %v4917 = vld [vmem:[#allocation9 + $0x90] sm:$0xff]
    %v4918 = vld [vmem:[#allocation9 + $0x98] sm:$0xff]
    %v4919 = vld [vmem:[#allocation9 + $0xa0] sm:$0xff]
    %v4920 = vld [vmem:[#allocation9 + $0xa8] sm:$0xff]
    %v4921 = vld [vmem:[#allocation9 + $0xb0] sm:$0xff]
    %v4922 = vld [vmem:[#allocation9 + $0xb8] sm:$0xff]
    %v4923 = vld [vmem:[#allocation9 + $0xc0] sm:$0xff]
    %v4924 = vld [vmem:[#allocation9 + $0xc8] sm:$0xff]
    %v4925 = vld [vmem:[#allocation9 + $0xd0] sm:$0xff]
    %v4926 = vld [vmem:[#allocation9 + $0xd8] sm:$0xff]
    %v4927 = vld [vmem:[#allocation9 + $0xe0] sm:$0xff]
    %v4928 = vld [vmem:[#allocation9 + $0xe8] sm:$0xff]
    %v4929 = vld [vmem:[#allocation9 + $0xf0] sm:$0xff]
    %v4930 = vld [vmem:[#allocation9 + $0xf8] sm:$0xff]
    %v4931 = vld [vmem:[#allocation9 + $0x100] sm:$0xff]
    %v4932 = vld [vmem:[#allocation9 + $0x108] sm:$0xff]
    %v4933 = vld [vmem:[#allocation9 + $0x110] sm:$0xff]
    %v4934 = vld [vmem:[#allocation9 + $0x118] sm:$0xff]
    %v4935 = vld [vmem:[#allocation9 + $0x120] sm:$0xff]
    %v4936 = vld [vmem:[#allocation9 + $0x128] sm:$0xff]
    %v4937 = vld [vmem:[#allocation9 + $0x130] sm:$0xff]
    %v4938 = vld [vmem:[#allocation9 + $0x138] sm:$0xff]
    %v4939 = vld [vmem:[#allocation9 + $0x140] sm:$0xff]
    %v4940 = vld [vmem:[#allocation9 + $0x148] sm:$0xff]
    %v4941 = vld [vmem:[#allocation9 + $0x150] sm:$0xff]
    %v4942 = vld [vmem:[#allocation9 + $0x158] sm:$0xff]
    %v4943 = vld [vmem:[#allocation9 + $0x160] sm:$0xff]
    %v4944 = vld [vmem:[#allocation9 + $0x168] sm:$0xff]
    %v4945 = vld [vmem:[#allocation9 + $0x170] sm:$0xff]
    %v4946 = vld [vmem:[#allocation9 + $0x178] sm:$0xff]
    %v4947 = vld [vmem:[#allocation9 + $0x180] sm:$0xff]
    %v4948 = vld [vmem:[#allocation9 + $0x188] sm:$0xff]
    %v4949 = vld [vmem:[#allocation9 + $0x190] sm:$0xff]
    %v4950 = vld [vmem:[#allocation9 + $0x198] sm:$0xff]
    %v4951 = vld [vmem:[#allocation9 + $0x1a0] sm:$0xff]
    %v4952 = vld [vmem:[#allocation9 + $0x1a8] sm:$0xff]
    %v4953 = vld [vmem:[#allocation9 + $0x1b0] sm:$0xff]
    %v4954 = vld [vmem:[#allocation9 + $0x1b8] sm:$0xff]
    %v4955 = vld [vmem:[#allocation9 + $0x1c0] sm:$0xff]
    %v4956 = vld [vmem:[#allocation9 + $0x1c8] sm:$0xff]
    %v4957 = vld [vmem:[#allocation9 + $0x1d0] sm:$0xff]
    %v4958 = vld [vmem:[#allocation9 + $0x1d8] sm:$0xff]
    %v4959 = vld [vmem:[#allocation9 + $0x1e0] sm:$0xff]
    %v4960 = vld [vmem:[#allocation9 + $0x1e8] sm:$0xff]
    %v4961 = vld [vmem:[#allocation9 + $0x1f0] sm:$0xff]
    %v4962 = vld [vmem:[#allocation9 + $0x1f8] sm:$0xff]
    %v4963 = vld [vmem:[#allocation9 + $0x200] sm:$0xff]
    %v4964 = vld [vmem:[#allocation9 + $0x208] sm:$0xff]
    %v4965 = vld [vmem:[#allocation9 + $0x210] sm:$0xff]
    %v4966 = vld [vmem:[#allocation9 + $0x218] sm:$0xff]
    %v4967 = vld [vmem:[#allocation9 + $0x220] sm:$0xff]
    %v4968 = vld [vmem:[#allocation9 + $0x228] sm:$0xff]
    %v4969 = vld [vmem:[#allocation9 + $0x230] sm:$0xff]
    %v4970 = vld [vmem:[#allocation9 + $0x238] sm:$0xff]
    %v4971 = vld [vmem:[#allocation9 + $0x240] sm:$0xff]
    %v4972 = vld [vmem:[#allocation9 + $0x248] sm:$0xff]
    %v4973 = vld [vmem:[#allocation9 + $0x250] sm:$0xff]
    %v4974 = vld [vmem:[#allocation9 + $0x258] sm:$0xff]
    %v4975 = vld [vmem:[#allocation9 + $0x260] sm:$0xff]
    %v4976 = vld [vmem:[#allocation9 + $0x268] sm:$0xff]
    %v4977 = vld [vmem:[#allocation9 + $0x270] sm:$0xff]
    %v4978 = vld [vmem:[#allocation9 + $0x278] sm:$0xff]
    %v4979 = vld [vmem:[#allocation9 + $0x280] sm:$0xff]
    %v4980 = vld [vmem:[#allocation9 + $0x288] sm:$0xff]
    %v4981 = vld [vmem:[#allocation9 + $0x290] sm:$0xff]
    %v4982 = vld [vmem:[#allocation9 + $0x298] sm:$0xff]
    %v4983 = vld [vmem:[#allocation9 + $0x2a0] sm:$0xff]
    %v4984 = vld [vmem:[#allocation9 + $0x2a8] sm:$0xff]
    %v4985 = vld [vmem:[#allocation9 + $0x2b0] sm:$0xff]
    %v4986 = vld [vmem:[#allocation9 + $0x2b8] sm:$0xff]
    %v4987 = vld [vmem:[#allocation9 + $0x2c0] sm:$0xff]
    %v4988 = vld [vmem:[#allocation9 + $0x2c8] sm:$0xff]
    %v4989 = vld [vmem:[#allocation9 + $0x2d0] sm:$0xff]
    %v4990 = vld [vmem:[#allocation9 + $0x2d8] sm:$0xff]
    %v4991 = vld [vmem:[#allocation9 + $0x2e0] sm:$0xff]
    %v4992 = vld [vmem:[#allocation9 + $0x2e8] sm:$0xff]
    %v4993 = vld [vmem:[#allocation9 + $0x2f0] sm:$0xff]
    %v4994 = vld [vmem:[#allocation9 + $0x2f8] sm:$0xff]
    %v4995 = vld [vmem:[#allocation9 + $0x300] sm:$0xff]
    %v4996 = vld [vmem:[#allocation9 + $0x308] sm:$0xff]
    %v4997 = vld [vmem:[#allocation9 + $0x310] sm:$0xff]
    %v4998 = vld [vmem:[#allocation9 + $0x318] sm:$0xff]
    %v4999 = vld [vmem:[#allocation9 + $0x320] sm:$0xff]
    %v5000 = vld [vmem:[#allocation9 + $0x328] sm:$0xff]
    %v5001 = vld [vmem:[#allocation9 + $0x330] sm:$0xff]
    %v5002 = vld [vmem:[#allocation9 + $0x338] sm:$0xff]
    %v5003 = vld [vmem:[#allocation9 + $0x340] sm:$0xff]
    %v5004 = vld [vmem:[#allocation9 + $0x348] sm:$0xff]
    %v5005 = vld [vmem:[#allocation9 + $0x350] sm:$0xff]
    %v5006 = vld [vmem:[#allocation9 + $0x358] sm:$0xff]
    %v5007 = vld [vmem:[#allocation9 + $0x360] sm:$0xff]
    %v5008 = vld [vmem:[#allocation9 + $0x368] sm:$0xff]
    %v5009 = vld [vmem:[#allocation9 + $0x370] sm:$0xff]
    %v5010 = vld [vmem:[#allocation9 + $0x378] sm:$0xff]
    %v5011 = vld [vmem:[#allocation9 + $0x380] sm:$0xff]
    %v5012 = vld [vmem:[#allocation9 + $0x388] sm:$0xff]
    %v5013 = vld [vmem:[#allocation9 + $0x390] sm:$0xff]
    %v5014 = vld [vmem:[#allocation9 + $0x398] sm:$0xff]
    %v5015 = vld [vmem:[#allocation9 + $0x3a0] sm:$0xff]
    %v5016 = vld [vmem:[#allocation9 + $0x3a8] sm:$0xff]
    %v5017 = vld [vmem:[#allocation9 + $0x3b0] sm:$0xff]
    %v5018 = vld [vmem:[#allocation9 + $0x3b8] sm:$0xff]
    %v5019 = vld [vmem:[#allocation9 + $0x3c0] sm:$0xff]
    %v5020 = vld [vmem:[#allocation9 + $0x3c8] sm:$0xff]
    %v5021 = vld [vmem:[#allocation9 + $0x3d0] sm:$0xff]
    %v5022 = vld [vmem:[#allocation9 + $0x3d8] sm:$0xff]
    %v5023 = vld [vmem:[#allocation9 + $0x3e0] sm:$0xff]
    %v5024 = vld [vmem:[#allocation9 + $0x3e8] sm:$0xff]
    %v5025 = vld [vmem:[#allocation9 + $0x3f0] sm:$0xff]
    %v5026 = vld [vmem:[#allocation9 + $0x3f8] sm:$0xff]
    %v5027 = vld [vmem:[#allocation9 + $0x400] sm:$0xff]
    %v5028 = vld [vmem:[#allocation9 + $0x408] sm:$0xff]
    %v5029 = vld [vmem:[#allocation9 + $0x410] sm:$0xff]
    %v5030 = vld [vmem:[#allocation9 + $0x418] sm:$0xff]
    %v5031 = vld [vmem:[#allocation9 + $0x420] sm:$0xff]
    %v5032 = vld [vmem:[#allocation9 + $0x428] sm:$0xff]
    %v5033 = vld [vmem:[#allocation9 + $0x430] sm:$0xff]
    %v5034 = vld [vmem:[#allocation9 + $0x438] sm:$0xff]
    %v5035 = vld [vmem:[#allocation9 + $0x440] sm:$0xff]
    %v5036 = vld [vmem:[#allocation9 + $0x448] sm:$0xff]
    %v5037 = vld [vmem:[#allocation9 + $0x450] sm:$0xff]
    %v5038 = vld [vmem:[#allocation9 + $0x458] sm:$0xff]
    %v5039 = vld [vmem:[#allocation9 + $0x460] sm:$0xff]
    %v5040 = vld [vmem:[#allocation9 + $0x468] sm:$0xff]
    %v5041 = vld [vmem:[#allocation9 + $0x470] sm:$0xff]
    %v5042 = vld [vmem:[#allocation9 + $0x478] sm:$0xff]
    %v5043 = vld [vmem:[#allocation9 + $0x480] sm:$0xff]
    %v5044 = vld [vmem:[#allocation9 + $0x488] sm:$0xff]
    %v5045 = vld [vmem:[#allocation9 + $0x490] sm:$0xff]
    %v5046 = vld [vmem:[#allocation9 + $0x498] sm:$0xff]
    %v5047 = vld [vmem:[#allocation9 + $0x4a0] sm:$0xff]
    %v5048 = vld [vmem:[#allocation9 + $0x4a8] sm:$0xff]
    %v5049 = vld [vmem:[#allocation9 + $0x4b0] sm:$0xff]
    %v5050 = vld [vmem:[#allocation9 + $0x4b8] sm:$0xff]
    %v5051 = vld [vmem:[#allocation9 + $0x4c0] sm:$0xff]
    %v5052 = vld [vmem:[#allocation9 + $0x4c8] sm:$0xff]
    %v5053 = vld [vmem:[#allocation9 + $0x4d0] sm:$0xff]
    %v5054 = vld [vmem:[#allocation9 + $0x4d8] sm:$0xff]
    %v5055 = vld [vmem:[#allocation9 + $0x4e0] sm:$0xff]
    %v5056 = vld [vmem:[#allocation9 + $0x4e8] sm:$0xff]
    %v5057 = vld [vmem:[#allocation9 + $0x4f0] sm:$0xff]
    %v5058 = vld [vmem:[#allocation9 + $0x4f8] sm:$0xff]
    %v5059 = vld [vmem:[#allocation9 + $0x500] sm:$0xff]
    %v5060 = vld [vmem:[#allocation9 + $0x508] sm:$0xff]
    %v5061 = vld [vmem:[#allocation9 + $0x510] sm:$0xff]
    %v5062 = vld [vmem:[#allocation9 + $0x518] sm:$0xff]
    %v5063 = vld [vmem:[#allocation9 + $0x520] sm:$0xff]
    %v5064 = vld [vmem:[#allocation9 + $0x528] sm:$0xff]
    %v5065 = vld [vmem:[#allocation9 + $0x530] sm:$0xff]
    %v5066 = vld [vmem:[#allocation9 + $0x538] sm:$0xff]
    %v5067 = vld [vmem:[#allocation9 + $0x540] sm:$0xff]
    %v5068 = vld [vmem:[#allocation9 + $0x548] sm:$0xff]
    %v5069 = vld [vmem:[#allocation9 + $0x550] sm:$0xff]
    %v5070 = vld [vmem:[#allocation9 + $0x558] sm:$0xff]
    %v5071 = vld [vmem:[#allocation9 + $0x560] sm:$0xff]
    %v5072 = vld [vmem:[#allocation9 + $0x568] sm:$0xff]
    %v5073 = vld [vmem:[#allocation9 + $0x570] sm:$0xff]
    %v5074 = vld [vmem:[#allocation9 + $0x578] sm:$0xff]
    %v5075 = vld [vmem:[#allocation9 + $0x580] sm:$0xff]
    %v5076 = vld [vmem:[#allocation9 + $0x588] sm:$0xff]
    %v5077 = vld [vmem:[#allocation9 + $0x590] sm:$0xff]
    %v5078 = vld [vmem:[#allocation9 + $0x598] sm:$0xff]
    %v5079 = vld [vmem:[#allocation9 + $0x5a0] sm:$0xff]
    %v5080 = vld [vmem:[#allocation9 + $0x5a8] sm:$0xff]
    %v5081 = vld [vmem:[#allocation9 + $0x5b0] sm:$0xff]
    %v5082 = vld [vmem:[#allocation9 + $0x5b8] sm:$0xff]
    %v5083 = vld [vmem:[#allocation9 + $0x5c0] sm:$0xff]
    %v5084 = vld [vmem:[#allocation9 + $0x5c8] sm:$0xff]
    %v5085 = vld [vmem:[#allocation9 + $0x5d0] sm:$0xff]
    %v5086 = vld [vmem:[#allocation9 + $0x5d8] sm:$0xff]
    %v5087 = vld [vmem:[#allocation9 + $0x5e0] sm:$0xff]
    %v5088 = vld [vmem:[#allocation9 + $0x5e8] sm:$0xff]
    %v5089 = vld [vmem:[#allocation9 + $0x5f0] sm:$0xff]
    %v5090 = vld [vmem:[#allocation9 + $0x5f8] sm:$0xff]
    %v5091 = vld [vmem:[#allocation9 + $0x600] sm:$0xff]
    %v5092 = vld [vmem:[#allocation9 + $0x608] sm:$0xff]
    %v5093 = vld [vmem:[#allocation9 + $0x610] sm:$0xff]
    %v5094 = vld [vmem:[#allocation9 + $0x618] sm:$0xff]
    %v5095 = vld [vmem:[#allocation9 + $0x620] sm:$0xff]
    %v5096 = vld [vmem:[#allocation9 + $0x628] sm:$0xff]
    %v5097 = vld [vmem:[#allocation9 + $0x630] sm:$0xff]
    %v5098 = vld [vmem:[#allocation9 + $0x638] sm:$0xff]
    %v5099 = vld [vmem:[#allocation9 + $0x640] sm:$0xff]
    %v5100 = vld [vmem:[#allocation9 + $0x648] sm:$0xff]
    %v5101 = vld [vmem:[#allocation9 + $0x650] sm:$0xff]
    %v5102 = vld [vmem:[#allocation9 + $0x658] sm:$0xff]
    %v5103 = vld [vmem:[#allocation9 + $0x660] sm:$0xff]
    %v5104 = vld [vmem:[#allocation9 + $0x668] sm:$0xff]
    %v5105 = vld [vmem:[#allocation9 + $0x670] sm:$0xff]
    %v5106 = vld [vmem:[#allocation9 + $0x678] sm:$0xff]
    %v5107 = vld [vmem:[#allocation9 + $0x680] sm:$0xff]
    %v5108 = vld [vmem:[#allocation9 + $0x688] sm:$0xff]
    %v5109 = vld [vmem:[#allocation9 + $0x690] sm:$0xff]
    %v5110 = vld [vmem:[#allocation9 + $0x698] sm:$0xff]
    %v5111 = vld [vmem:[#allocation9 + $0x6a0] sm:$0xff]
    %v5112 = vld [vmem:[#allocation9 + $0x6a8] sm:$0xff]
    %v5113 = vld [vmem:[#allocation9 + $0x6b0] sm:$0xff]
    %v5114 = vld [vmem:[#allocation9 + $0x6b8] sm:$0xff]
    %v5115 = vld [vmem:[#allocation9 + $0x6c0] sm:$0xff]
    %v5116 = vld [vmem:[#allocation9 + $0x6c8] sm:$0xff]
    %v5117 = vld [vmem:[#allocation9 + $0x6d0] sm:$0xff]
    %v5118 = vld [vmem:[#allocation9 + $0x6d8] sm:$0xff]
    %v5119 = vld [vmem:[#allocation9 + $0x6e0] sm:$0xff]
    %v5120 = vld [vmem:[#allocation9 + $0x6e8] sm:$0xff]
    %v5121 = vld [vmem:[#allocation9 + $0x6f0] sm:$0xff]
    %v5122 = vld [vmem:[#allocation9 + $0x6f8] sm:$0xff]
    %v5123 = vld [vmem:[#allocation9 + $0x700] sm:$0xff]
    %v5124 = vld [vmem:[#allocation9 + $0x708] sm:$0xff]
    %v5125 = vld [vmem:[#allocation9 + $0x710] sm:$0xff]
    %v5126 = vld [vmem:[#allocation9 + $0x718] sm:$0xff]
    %v5127 = vld [vmem:[#allocation9 + $0x720] sm:$0xff]
    %v5128 = vld [vmem:[#allocation9 + $0x728] sm:$0xff]
    %v5129 = vld [vmem:[#allocation9 + $0x730] sm:$0xff]
    %v5130 = vld [vmem:[#allocation9 + $0x738] sm:$0xff]
    %v5131 = vld [vmem:[#allocation9 + $0x740] sm:$0xff]
    %v5132 = vld [vmem:[#allocation9 + $0x748] sm:$0xff]
    %v5133 = vld [vmem:[#allocation9 + $0x750] sm:$0xff]
    %v5134 = vld [vmem:[#allocation9 + $0x758] sm:$0xff]
    %v5135 = vld [vmem:[#allocation9 + $0x760] sm:$0xff]
    %v5136 = vld [vmem:[#allocation9 + $0x768] sm:$0xff]
    %v5137 = vld [vmem:[#allocation9 + $0x770] sm:$0xff]
    %v5138 = vld [vmem:[#allocation9 + $0x778] sm:$0xff]
    %v5139 = vld [vmem:[#allocation9 + $0x780] sm:$0xff]
    %v5140 = vld [vmem:[#allocation9 + $0x788] sm:$0xff]
    %v5141 = vld [vmem:[#allocation9 + $0x790] sm:$0xff]
    %v5142 = vld [vmem:[#allocation9 + $0x798] sm:$0xff]
    %v5143 = vld [vmem:[#allocation9 + $0x7a0] sm:$0xff]
    %v5144 = vld [vmem:[#allocation9 + $0x7a8] sm:$0xff]
    %v5145 = vld [vmem:[#allocation9 + $0x7b0] sm:$0xff]
    %v5146 = vld [vmem:[#allocation9 + $0x7b8] sm:$0xff]
    %v5147 = vld [vmem:[#allocation9 + $0x7c0] sm:$0xff]
    %v5148 = vld [vmem:[#allocation9 + $0x7c8] sm:$0xff]
    %v5149 = vld [vmem:[#allocation9 + $0x7d0] sm:$0xff]
    %v5150 = vld [vmem:[#allocation9 + $0x7d8] sm:$0xff]
    %v5151 = vld [vmem:[#allocation9 + $0x7e0] sm:$0xff]
    %v5152 = vld [vmem:[#allocation9 + $0x7e8] sm:$0xff]
    %v5153 = vld [vmem:[#allocation9 + $0x7f0] sm:$0xff]
    %v5154 = vld [vmem:[#allocation9 + $0x7f8] sm:$0xff]
    %v5155 = vld [vmem:[#allocation10] sm:$0xff]
    %v5157 = vlaneseq
    %v5158 = vshrl.u32 %v5157, 7
    %v5159 = vsub.s32 0, %v5158
    %v5160 = vrot.slane %v5155, %v5159
    %v5161 = vlaneseq
    %v5162 = vshrl.u32 %v5161, 7
    %v5163 = vsub.s32 1, %v5162
    %v5164 = vrot.slane %v5155, %v5163
    %v5165 = vlaneseq
    %v5166 = vshrl.u32 %v5165, 7
    %v5167 = vsub.s32 2, %v5166
    %v5168 = vrot.slane %v5155, %v5167
    %v5169 = vlaneseq
    %v5170 = vshrl.u32 %v5169, 7
    %v5171 = vsub.s32 3, %v5170
    %v5172 = vrot.slane %v5155, %v5171
    %v5173 = vlaneseq
    %v5174 = vshrl.u32 %v5173, 7
    %v5175 = vsub.s32 4, %v5174
    %v5176 = vrot.slane %v5155, %v5175
    %v5177 = vlaneseq
    %v5178 = vshrl.u32 %v5177, 7
    %v5179 = vsub.s32 5, %v5178
    %v5180 = vrot.slane %v5155, %v5179
    %v5181 = vlaneseq
    %v5182 = vshrl.u32 %v5181, 7
    %v5183 = vsub.s32 6, %v5182
    %v5184 = vrot.slane %v5155, %v5183
    %v5185 = vlaneseq
    %v5186 = vshrl.u32 %v5185, 7
    %v5187 = vsub.s32 7, %v5186
    %v5188 = vrot.slane %v5155, %v5187
    %v5453 = vunpack.c.l.b16 %v4899
    %v5454 = vunpack.c.h.b16 %v4899
    %v5455 = vunpack.c.l.b16 %v4900
    %v5456 = vunpack.c.h.b16 %v4900
    %v5457 = vunpack.c.l.b16 %v4901
    %v5458 = vunpack.c.h.b16 %v4901
    %v5459 = vunpack.c.l.b16 %v4902
    %v5460 = vunpack.c.h.b16 %v4902
    %v5461 = vunpack.c.l.b16 %v4903
    %v5462 = vunpack.c.h.b16 %v4903
    %v5463 = vunpack.c.l.b16 %v4904
    %v5464 = vunpack.c.h.b16 %v4904
    %v5465 = vunpack.c.l.b16 %v4905
    %v5466 = vunpack.c.h.b16 %v4905
    %v5467 = vunpack.c.l.b16 %v4906
    %v5468 = vunpack.c.h.b16 %v4906
    %v5469 = vunpack.c.l.b16 %v4907
    %v5470 = vunpack.c.h.b16 %v4907
    %v5471 = vunpack.c.l.b16 %v4908
    %v5472 = vunpack.c.h.b16 %v4908
    %v5473 = vunpack.c.l.b16 %v4909
    %v5474 = vunpack.c.h.b16 %v4909
    %v5475 = vunpack.c.l.b16 %v4910
    %v5476 = vunpack.c.h.b16 %v4910
    %v5477 = vunpack.c.l.b16 %v4911
    %v5478 = vunpack.c.h.b16 %v4911
    %v5479 = vunpack.c.l.b16 %v4912
    %v5480 = vunpack.c.h.b16 %v4912
    %v5481 = vunpack.c.l.b16 %v4913
    %v5482 = vunpack.c.h.b16 %v4913
    %v5483 = vunpack.c.l.b16 %v4914
    %v5484 = vunpack.c.h.b16 %v4914
    %v5485 = vunpack.c.l.b16 %v4915
    %v5486 = vunpack.c.h.b16 %v4915
    %v5487 = vunpack.c.l.b16 %v4916
    %v5488 = vunpack.c.h.b16 %v4916
    %v5489 = vunpack.c.l.b16 %v4917
    %v5490 = vunpack.c.h.b16 %v4917
    %v5491 = vunpack.c.l.b16 %v4918
    %v5492 = vunpack.c.h.b16 %v4918
    %v5493 = vunpack.c.l.b16 %v4919
    %v5494 = vunpack.c.h.b16 %v4919
    %v5495 = vunpack.c.l.b16 %v4920
    %v5496 = vunpack.c.h.b16 %v4920
    %v5497 = vunpack.c.l.b16 %v4921
    %v5498 = vunpack.c.h.b16 %v4921
    %v5499 = vunpack.c.l.b16 %v4922
    %v5500 = vunpack.c.h.b16 %v4922
    %v5501 = vunpack.c.l.b16 %v4923
    %v5502 = vunpack.c.h.b16 %v4923
    %v5503 = vunpack.c.l.b16 %v4924
    %v5504 = vunpack.c.h.b16 %v4924
    %v5505 = vunpack.c.l.b16 %v4925
    %v5506 = vunpack.c.h.b16 %v4925
    %v5507 = vunpack.c.l.b16 %v4926
    %v5508 = vunpack.c.h.b16 %v4926
    %v5509 = vunpack.c.l.b16 %v4927
    %v5510 = vunpack.c.h.b16 %v4927
    %v5511 = vunpack.c.l.b16 %v4928
    %v5512 = vunpack.c.h.b16 %v4928
    %v5513 = vunpack.c.l.b16 %v4929
    %v5514 = vunpack.c.h.b16 %v4929
    %v5515 = vunpack.c.l.b16 %v4930
    %v5516 = vunpack.c.h.b16 %v4930
    %v5517 = vunpack.c.l.b16 %v4931
    %v5518 = vunpack.c.h.b16 %v4931
    %v5519 = vunpack.c.l.b16 %v4932
    %v5520 = vunpack.c.h.b16 %v4932
    %v5521 = vunpack.c.l.b16 %v4933
    %v5522 = vunpack.c.h.b16 %v4933
    %v5523 = vunpack.c.l.b16 %v4934
    %v5524 = vunpack.c.h.b16 %v4934
    %v5525 = vunpack.c.l.b16 %v4935
    %v5526 = vunpack.c.h.b16 %v4935
    %v5527 = vunpack.c.l.b16 %v4936
    %v5528 = vunpack.c.h.b16 %v4936
    %v5529 = vunpack.c.l.b16 %v4937
    %v5530 = vunpack.c.h.b16 %v4937
    %v5531 = vunpack.c.l.b16 %v4938
    %v5532 = vunpack.c.h.b16 %v4938
    %v5533 = vunpack.c.l.b16 %v4939
    %v5534 = vunpack.c.h.b16 %v4939
    %v5535 = vunpack.c.l.b16 %v4940
    %v5536 = vunpack.c.h.b16 %v4940
    %v5537 = vunpack.c.l.b16 %v4941
    %v5538 = vunpack.c.h.b16 %v4941
    %v5539 = vunpack.c.l.b16 %v4942
    %v5540 = vunpack.c.h.b16 %v4942
    %v5541 = vunpack.c.l.b16 %v4943
    %v5542 = vunpack.c.h.b16 %v4943
    %v5543 = vunpack.c.l.b16 %v4944
    %v5544 = vunpack.c.h.b16 %v4944
    %v5545 = vunpack.c.l.b16 %v4945
    %v5546 = vunpack.c.h.b16 %v4945
    %v5547 = vunpack.c.l.b16 %v4946
    %v5548 = vunpack.c.h.b16 %v4946
    %v5549 = vunpack.c.l.b16 %v4947
    %v5550 = vunpack.c.h.b16 %v4947
    %v5551 = vunpack.c.l.b16 %v4948
    %v5552 = vunpack.c.h.b16 %v4948
    %v5553 = vunpack.c.l.b16 %v4949
    %v5554 = vunpack.c.h.b16 %v4949
    %v5555 = vunpack.c.l.b16 %v4950
    %v5556 = vunpack.c.h.b16 %v4950
    %v5557 = vunpack.c.l.b16 %v4951
    %v5558 = vunpack.c.h.b16 %v4951
    %v5559 = vunpack.c.l.b16 %v4952
    %v5560 = vunpack.c.h.b16 %v4952
    %v5561 = vunpack.c.l.b16 %v4953
    %v5562 = vunpack.c.h.b16 %v4953
    %v5563 = vunpack.c.l.b16 %v4954
    %v5564 = vunpack.c.h.b16 %v4954
    %v5565 = vunpack.c.l.b16 %v4955
    %v5566 = vunpack.c.h.b16 %v4955
    %v5567 = vunpack.c.l.b16 %v4956
    %v5568 = vunpack.c.h.b16 %v4956
    %v5569 = vunpack.c.l.b16 %v4957
    %v5570 = vunpack.c.h.b16 %v4957
    %v5571 = vunpack.c.l.b16 %v4958
    %v5572 = vunpack.c.h.b16 %v4958
    %v5573 = vunpack.c.l.b16 %v4959
    %v5574 = vunpack.c.h.b16 %v4959
    %v5575 = vunpack.c.l.b16 %v4960
    %v5576 = vunpack.c.h.b16 %v4960
    %v5577 = vunpack.c.l.b16 %v4961
    %v5578 = vunpack.c.h.b16 %v4961
    %v5579 = vunpack.c.l.b16 %v4962
    %v5580 = vunpack.c.h.b16 %v4962
    %v5581 = vunpack.c.l.b16 %v4963
    %v5582 = vunpack.c.h.b16 %v4963
    %v5583 = vunpack.c.l.b16 %v4964
    %v5584 = vunpack.c.h.b16 %v4964
    %v5585 = vunpack.c.l.b16 %v4965
    %v5586 = vunpack.c.h.b16 %v4965
    %v5587 = vunpack.c.l.b16 %v4966
    %v5588 = vunpack.c.h.b16 %v4966
    %v5589 = vunpack.c.l.b16 %v4967
    %v5590 = vunpack.c.h.b16 %v4967
    %v5591 = vunpack.c.l.b16 %v4968
    %v5592 = vunpack.c.h.b16 %v4968
    %v5593 = vunpack.c.l.b16 %v4969
    %v5594 = vunpack.c.h.b16 %v4969
    %v5595 = vunpack.c.l.b16 %v4970
    %v5596 = vunpack.c.h.b16 %v4970
    %v5597 = vunpack.c.l.b16 %v4971
    %v5598 = vunpack.c.h.b16 %v4971
    %v5599 = vunpack.c.l.b16 %v4972
    %v5600 = vunpack.c.h.b16 %v4972
    %v5601 = vunpack.c.l.b16 %v4973
    %v5602 = vunpack.c.h.b16 %v4973
    %v5603 = vunpack.c.l.b16 %v4974
    %v5604 = vunpack.c.h.b16 %v4974
    %v5605 = vunpack.c.l.b16 %v4975
    %v5606 = vunpack.c.h.b16 %v4975
    %v5607 = vunpack.c.l.b16 %v4976
    %v5608 = vunpack.c.h.b16 %v4976
    %v5609 = vunpack.c.l.b16 %v4977
    %v5610 = vunpack.c.h.b16 %v4977
    %v5611 = vunpack.c.l.b16 %v4978
    %v5612 = vunpack.c.h.b16 %v4978
    %v5613 = vunpack.c.l.b16 %v4979
    %v5614 = vunpack.c.h.b16 %v4979
    %v5615 = vunpack.c.l.b16 %v4980
    %v5616 = vunpack.c.h.b16 %v4980
    %v5617 = vunpack.c.l.b16 %v4981
    %v5618 = vunpack.c.h.b16 %v4981
    %v5619 = vunpack.c.l.b16 %v4982
    %v5620 = vunpack.c.h.b16 %v4982
    %v5621 = vunpack.c.l.b16 %v4983
    %v5622 = vunpack.c.h.b16 %v4983
    %v5623 = vunpack.c.l.b16 %v4984
    %v5624 = vunpack.c.h.b16 %v4984
    %v5625 = vunpack.c.l.b16 %v4985
    %v5626 = vunpack.c.h.b16 %v4985
    %v5627 = vunpack.c.l.b16 %v4986
    %v5628 = vunpack.c.h.b16 %v4986
    %v5629 = vunpack.c.l.b16 %v4987
    %v5630 = vunpack.c.h.b16 %v4987
    %v5631 = vunpack.c.l.b16 %v4988
    %v5632 = vunpack.c.h.b16 %v4988
    %v5633 = vunpack.c.l.b16 %v4989
    %v5634 = vunpack.c.h.b16 %v4989
    %v5635 = vunpack.c.l.b16 %v4990
    %v5636 = vunpack.c.h.b16 %v4990
    %v5637 = vunpack.c.l.b16 %v4991
    %v5638 = vunpack.c.h.b16 %v4991
    %v5639 = vunpack.c.l.b16 %v4992
    %v5640 = vunpack.c.h.b16 %v4992
    %v5641 = vunpack.c.l.b16 %v4993
    %v5642 = vunpack.c.h.b16 %v4993
    %v5643 = vunpack.c.l.b16 %v4994
    %v5644 = vunpack.c.h.b16 %v4994
    %v5645 = vunpack.c.l.b16 %v4995
    %v5646 = vunpack.c.h.b16 %v4995
    %v5647 = vunpack.c.l.b16 %v4996
    %v5648 = vunpack.c.h.b16 %v4996
    %v5649 = vunpack.c.l.b16 %v4997
    %v5650 = vunpack.c.h.b16 %v4997
    %v5651 = vunpack.c.l.b16 %v4998
    %v5652 = vunpack.c.h.b16 %v4998
    %v5653 = vunpack.c.l.b16 %v4999
    %v5654 = vunpack.c.h.b16 %v4999
    %v5655 = vunpack.c.l.b16 %v5000
    %v5656 = vunpack.c.h.b16 %v5000
    %v5657 = vunpack.c.l.b16 %v5001
    %v5658 = vunpack.c.h.b16 %v5001
    %v5659 = vunpack.c.l.b16 %v5002
    %v5660 = vunpack.c.h.b16 %v5002
    %v5661 = vunpack.c.l.b16 %v5003
    %v5662 = vunpack.c.h.b16 %v5003
    %v5663 = vunpack.c.l.b16 %v5004
    %v5664 = vunpack.c.h.b16 %v5004
    %v5665 = vunpack.c.l.b16 %v5005
    %v5666 = vunpack.c.h.b16 %v5005
    %v5667 = vunpack.c.l.b16 %v5006
    %v5668 = vunpack.c.h.b16 %v5006
    %v5669 = vunpack.c.l.b16 %v5007
    %v5670 = vunpack.c.h.b16 %v5007
    %v5671 = vunpack.c.l.b16 %v5008
    %v5672 = vunpack.c.h.b16 %v5008
    %v5673 = vunpack.c.l.b16 %v5009
    %v5674 = vunpack.c.h.b16 %v5009
    %v5675 = vunpack.c.l.b16 %v5010
    %v5676 = vunpack.c.h.b16 %v5010
    %v5677 = vunpack.c.l.b16 %v5011
    %v5678 = vunpack.c.h.b16 %v5011
    %v5679 = vunpack.c.l.b16 %v5012
    %v5680 = vunpack.c.h.b16 %v5012
    %v5681 = vunpack.c.l.b16 %v5013
    %v5682 = vunpack.c.h.b16 %v5013
    %v5683 = vunpack.c.l.b16 %v5014
    %v5684 = vunpack.c.h.b16 %v5014
    %v5685 = vunpack.c.l.b16 %v5015
    %v5686 = vunpack.c.h.b16 %v5015
    %v5687 = vunpack.c.l.b16 %v5016
    %v5688 = vunpack.c.h.b16 %v5016
    %v5689 = vunpack.c.l.b16 %v5017
    %v5690 = vunpack.c.h.b16 %v5017
    %v5691 = vunpack.c.l.b16 %v5018
    %v5692 = vunpack.c.h.b16 %v5018
    %v5693 = vunpack.c.l.b16 %v5019
    %v5694 = vunpack.c.h.b16 %v5019
    %v5695 = vunpack.c.l.b16 %v5020
    %v5696 = vunpack.c.h.b16 %v5020
    %v5697 = vunpack.c.l.b16 %v5021
    %v5698 = vunpack.c.h.b16 %v5021
    %v5699 = vunpack.c.l.b16 %v5022
    %v5700 = vunpack.c.h.b16 %v5022
    %v5701 = vunpack.c.l.b16 %v5023
    %v5702 = vunpack.c.h.b16 %v5023
    %v5703 = vunpack.c.l.b16 %v5024
    %v5704 = vunpack.c.h.b16 %v5024
    %v5705 = vunpack.c.l.b16 %v5025
    %v5706 = vunpack.c.h.b16 %v5025
    %v5707 = vunpack.c.l.b16 %v5026
    %v5708 = vunpack.c.h.b16 %v5026
    %v5709 = vunpack.c.l.b16 %v5027
    %v5710 = vunpack.c.h.b16 %v5027
    %v5711 = vunpack.c.l.b16 %v5028
    %v5712 = vunpack.c.h.b16 %v5028
    %v5713 = vunpack.c.l.b16 %v5029
    %v5714 = vunpack.c.h.b16 %v5029
    %v5715 = vunpack.c.l.b16 %v5030
    %v5716 = vunpack.c.h.b16 %v5030
    %v5717 = vunpack.c.l.b16 %v5031
    %v5718 = vunpack.c.h.b16 %v5031
    %v5719 = vunpack.c.l.b16 %v5032
    %v5720 = vunpack.c.h.b16 %v5032
    %v5721 = vunpack.c.l.b16 %v5033
    %v5722 = vunpack.c.h.b16 %v5033
    %v5723 = vunpack.c.l.b16 %v5034
    %v5724 = vunpack.c.h.b16 %v5034
    %v5725 = vunpack.c.l.b16 %v5035
    %v5726 = vunpack.c.h.b16 %v5035
    %v5727 = vunpack.c.l.b16 %v5036
    %v5728 = vunpack.c.h.b16 %v5036
    %v5729 = vunpack.c.l.b16 %v5037
    %v5730 = vunpack.c.h.b16 %v5037
    %v5731 = vunpack.c.l.b16 %v5038
    %v5732 = vunpack.c.h.b16 %v5038
    %v5733 = vunpack.c.l.b16 %v5039
    %v5734 = vunpack.c.h.b16 %v5039
    %v5735 = vunpack.c.l.b16 %v5040
    %v5736 = vunpack.c.h.b16 %v5040
    %v5737 = vunpack.c.l.b16 %v5041
    %v5738 = vunpack.c.h.b16 %v5041
    %v5739 = vunpack.c.l.b16 %v5042
    %v5740 = vunpack.c.h.b16 %v5042
    %v5741 = vunpack.c.l.b16 %v5043
    %v5742 = vunpack.c.h.b16 %v5043
    %v5743 = vunpack.c.l.b16 %v5044
    %v5744 = vunpack.c.h.b16 %v5044
    %v5745 = vunpack.c.l.b16 %v5045
    %v5746 = vunpack.c.h.b16 %v5045
    %v5747 = vunpack.c.l.b16 %v5046
    %v5748 = vunpack.c.h.b16 %v5046
    %v5749 = vunpack.c.l.b16 %v5047
    %v5750 = vunpack.c.h.b16 %v5047
    %v5751 = vunpack.c.l.b16 %v5048
    %v5752 = vunpack.c.h.b16 %v5048
    %v5753 = vunpack.c.l.b16 %v5049
    %v5754 = vunpack.c.h.b16 %v5049
    %v5755 = vunpack.c.l.b16 %v5050
    %v5756 = vunpack.c.h.b16 %v5050
    %v5757 = vunpack.c.l.b16 %v5051
    %v5758 = vunpack.c.h.b16 %v5051
    %v5759 = vunpack.c.l.b16 %v5052
    %v5760 = vunpack.c.h.b16 %v5052
    %v5761 = vunpack.c.l.b16 %v5053
    %v5762 = vunpack.c.h.b16 %v5053
    %v5763 = vunpack.c.l.b16 %v5054
    %v5764 = vunpack.c.h.b16 %v5054
    %v5765 = vunpack.c.l.b16 %v5055
    %v5766 = vunpack.c.h.b16 %v5055
    %v5767 = vunpack.c.l.b16 %v5056
    %v5768 = vunpack.c.h.b16 %v5056
    %v5769 = vunpack.c.l.b16 %v5057
    %v5770 = vunpack.c.h.b16 %v5057
    %v5771 = vunpack.c.l.b16 %v5058
    %v5772 = vunpack.c.h.b16 %v5058
    %v5773 = vunpack.c.l.b16 %v5059
    %v5774 = vunpack.c.h.b16 %v5059
    %v5775 = vunpack.c.l.b16 %v5060
    %v5776 = vunpack.c.h.b16 %v5060
    %v5777 = vunpack.c.l.b16 %v5061
    %v5778 = vunpack.c.h.b16 %v5061
    %v5779 = vunpack.c.l.b16 %v5062
    %v5780 = vunpack.c.h.b16 %v5062
    %v5781 = vunpack.c.l.b16 %v5063
    %v5782 = vunpack.c.h.b16 %v5063
    %v5783 = vunpack.c.l.b16 %v5064
    %v5784 = vunpack.c.h.b16 %v5064
    %v5785 = vunpack.c.l.b16 %v5065
    %v5786 = vunpack.c.h.b16 %v5065
    %v5787 = vunpack.c.l.b16 %v5066
    %v5788 = vunpack.c.h.b16 %v5066
    %v5789 = vunpack.c.l.b16 %v5067
    %v5790 = vunpack.c.h.b16 %v5067
    %v5791 = vunpack.c.l.b16 %v5068
    %v5792 = vunpack.c.h.b16 %v5068
    %v5793 = vunpack.c.l.b16 %v5069
    %v5794 = vunpack.c.h.b16 %v5069
    %v5795 = vunpack.c.l.b16 %v5070
    %v5796 = vunpack.c.h.b16 %v5070
    %v5797 = vunpack.c.l.b16 %v5071
    %v5798 = vunpack.c.h.b16 %v5071
    %v5799 = vunpack.c.l.b16 %v5072
    %v5800 = vunpack.c.h.b16 %v5072
    %v5801 = vunpack.c.l.b16 %v5073
    %v5802 = vunpack.c.h.b16 %v5073
    %v5803 = vunpack.c.l.b16 %v5074
    %v5804 = vunpack.c.h.b16 %v5074
    %v5805 = vunpack.c.l.b16 %v5075
    %v5806 = vunpack.c.h.b16 %v5075
    %v5807 = vunpack.c.l.b16 %v5076
    %v5808 = vunpack.c.h.b16 %v5076
    %v5809 = vunpack.c.l.b16 %v5077
    %v5810 = vunpack.c.h.b16 %v5077
    %v5811 = vunpack.c.l.b16 %v5078
    %v5812 = vunpack.c.h.b16 %v5078
    %v5813 = vunpack.c.l.b16 %v5079
    %v5814 = vunpack.c.h.b16 %v5079
    %v5815 = vunpack.c.l.b16 %v5080
    %v5816 = vunpack.c.h.b16 %v5080
    %v5817 = vunpack.c.l.b16 %v5081
    %v5818 = vunpack.c.h.b16 %v5081
    %v5819 = vunpack.c.l.b16 %v5082
    %v5820 = vunpack.c.h.b16 %v5082
    %v5821 = vunpack.c.l.b16 %v5083
    %v5822 = vunpack.c.h.b16 %v5083
    %v5823 = vunpack.c.l.b16 %v5084
    %v5824 = vunpack.c.h.b16 %v5084
    %v5825 = vunpack.c.l.b16 %v5085
    %v5826 = vunpack.c.h.b16 %v5085
    %v5827 = vunpack.c.l.b16 %v5086
    %v5828 = vunpack.c.h.b16 %v5086
    %v5829 = vunpack.c.l.b16 %v5087
    %v5830 = vunpack.c.h.b16 %v5087
    %v5831 = vunpack.c.l.b16 %v5088
    %v5832 = vunpack.c.h.b16 %v5088
    %v5833 = vunpack.c.l.b16 %v5089
    %v5834 = vunpack.c.h.b16 %v5089
    %v5835 = vunpack.c.l.b16 %v5090
    %v5836 = vunpack.c.h.b16 %v5090
    %v5837 = vunpack.c.l.b16 %v5091
    %v5838 = vunpack.c.h.b16 %v5091
    %v5839 = vunpack.c.l.b16 %v5092
    %v5840 = vunpack.c.h.b16 %v5092
    %v5841 = vunpack.c.l.b16 %v5093
    %v5842 = vunpack.c.h.b16 %v5093
    %v5843 = vunpack.c.l.b16 %v5094
    %v5844 = vunpack.c.h.b16 %v5094
    %v5845 = vunpack.c.l.b16 %v5095
    %v5846 = vunpack.c.h.b16 %v5095
    %v5847 = vunpack.c.l.b16 %v5096
    %v5848 = vunpack.c.h.b16 %v5096
    %v5849 = vunpack.c.l.b16 %v5097
    %v5850 = vunpack.c.h.b16 %v5097
    %v5851 = vunpack.c.l.b16 %v5098
    %v5852 = vunpack.c.h.b16 %v5098
    %v5853 = vunpack.c.l.b16 %v5099
    %v5854 = vunpack.c.h.b16 %v5099
    %v5855 = vunpack.c.l.b16 %v5100
    %v5856 = vunpack.c.h.b16 %v5100
    %v5857 = vunpack.c.l.b16 %v5101
    %v5858 = vunpack.c.h.b16 %v5101
    %v5859 = vunpack.c.l.b16 %v5102
    %v5860 = vunpack.c.h.b16 %v5102
    %v5861 = vunpack.c.l.b16 %v5103
    %v5862 = vunpack.c.h.b16 %v5103
    %v5863 = vunpack.c.l.b16 %v5104
    %v5864 = vunpack.c.h.b16 %v5104
    %v5865 = vunpack.c.l.b16 %v5105
    %v5866 = vunpack.c.h.b16 %v5105
    %v5867 = vunpack.c.l.b16 %v5106
    %v5868 = vunpack.c.h.b16 %v5106
    %v5869 = vunpack.c.l.b16 %v5107
    %v5870 = vunpack.c.h.b16 %v5107
    %v5871 = vunpack.c.l.b16 %v5108
    %v5872 = vunpack.c.h.b16 %v5108
    %v5873 = vunpack.c.l.b16 %v5109
    %v5874 = vunpack.c.h.b16 %v5109
    %v5875 = vunpack.c.l.b16 %v5110
    %v5876 = vunpack.c.h.b16 %v5110
    %v5877 = vunpack.c.l.b16 %v5111
    %v5878 = vunpack.c.h.b16 %v5111
    %v5879 = vunpack.c.l.b16 %v5112
    %v5880 = vunpack.c.h.b16 %v5112
    %v5881 = vunpack.c.l.b16 %v5113
    %v5882 = vunpack.c.h.b16 %v5113
    %v5883 = vunpack.c.l.b16 %v5114
    %v5884 = vunpack.c.h.b16 %v5114
    %v5885 = vunpack.c.l.b16 %v5115
    %v5886 = vunpack.c.h.b16 %v5115
    %v5887 = vunpack.c.l.b16 %v5116
    %v5888 = vunpack.c.h.b16 %v5116
    %v5889 = vunpack.c.l.b16 %v5117
    %v5890 = vunpack.c.h.b16 %v5117
    %v5891 = vunpack.c.l.b16 %v5118
    %v5892 = vunpack.c.h.b16 %v5118
    %v5893 = vunpack.c.l.b16 %v5119
    %v5894 = vunpack.c.h.b16 %v5119
    %v5895 = vunpack.c.l.b16 %v5120
    %v5896 = vunpack.c.h.b16 %v5120
    %v5897 = vunpack.c.l.b16 %v5121
    %v5898 = vunpack.c.h.b16 %v5121
    %v5899 = vunpack.c.l.b16 %v5122
    %v5900 = vunpack.c.h.b16 %v5122
    %v5901 = vunpack.c.l.b16 %v5123
    %v5902 = vunpack.c.h.b16 %v5123
    %v5903 = vunpack.c.l.b16 %v5124
    %v5904 = vunpack.c.h.b16 %v5124
    %v5905 = vunpack.c.l.b16 %v5125
    %v5906 = vunpack.c.h.b16 %v5125
    %v5907 = vunpack.c.l.b16 %v5126
    %v5908 = vunpack.c.h.b16 %v5126
    %v5909 = vunpack.c.l.b16 %v5127
    %v5910 = vunpack.c.h.b16 %v5127
    %v5911 = vunpack.c.l.b16 %v5128
    %v5912 = vunpack.c.h.b16 %v5128
    %v5913 = vunpack.c.l.b16 %v5129
    %v5914 = vunpack.c.h.b16 %v5129
    %v5915 = vunpack.c.l.b16 %v5130
    %v5916 = vunpack.c.h.b16 %v5130
    %v5917 = vunpack.c.l.b16 %v5131
    %v5918 = vunpack.c.h.b16 %v5131
    %v5919 = vunpack.c.l.b16 %v5132
    %v5920 = vunpack.c.h.b16 %v5132
    %v5921 = vunpack.c.l.b16 %v5133
    %v5922 = vunpack.c.h.b16 %v5133
    %v5923 = vunpack.c.l.b16 %v5134
    %v5924 = vunpack.c.h.b16 %v5134
    %v5925 = vunpack.c.l.b16 %v5135
    %v5926 = vunpack.c.h.b16 %v5135
    %v5927 = vunpack.c.l.b16 %v5136
    %v5928 = vunpack.c.h.b16 %v5136
    %v5929 = vunpack.c.l.b16 %v5137
    %v5930 = vunpack.c.h.b16 %v5137
    %v5931 = vunpack.c.l.b16 %v5138
    %v5932 = vunpack.c.h.b16 %v5138
    %v5933 = vunpack.c.l.b16 %v5139
    %v5934 = vunpack.c.h.b16 %v5139
    %v5935 = vunpack.c.l.b16 %v5140
    %v5936 = vunpack.c.h.b16 %v5140
    %v5937 = vunpack.c.l.b16 %v5141
    %v5938 = vunpack.c.h.b16 %v5141
    %v5939 = vunpack.c.l.b16 %v5142
    %v5940 = vunpack.c.h.b16 %v5142
    %v5941 = vunpack.c.l.b16 %v5143
    %v5942 = vunpack.c.h.b16 %v5143
    %v5943 = vunpack.c.l.b16 %v5144
    %v5944 = vunpack.c.h.b16 %v5144
    %v5945 = vunpack.c.l.b16 %v5145
    %v5946 = vunpack.c.h.b16 %v5145
    %v5947 = vunpack.c.l.b16 %v5146
    %v5948 = vunpack.c.h.b16 %v5146
    %v5949 = vunpack.c.l.b16 %v5147
    %v5950 = vunpack.c.h.b16 %v5147
    %v5951 = vunpack.c.l.b16 %v5148
    %v5952 = vunpack.c.h.b16 %v5148
    %v5953 = vunpack.c.l.b16 %v5149
    %v5954 = vunpack.c.h.b16 %v5149
    %v5955 = vunpack.c.l.b16 %v5150
    %v5956 = vunpack.c.h.b16 %v5150
    %v5957 = vunpack.c.l.b16 %v5151
    %v5958 = vunpack.c.h.b16 %v5151
    %v5959 = vunpack.c.l.b16 %v5152
    %v5960 = vunpack.c.h.b16 %v5152
    %v5961 = vunpack.c.l.b16 %v5153
    %v5962 = vunpack.c.h.b16 %v5153
    %v5963 = vunpack.c.l.b16 %v5154
    %v5964 = vunpack.c.h.b16 %v5154
    %v5965 = vpack.c.b16 %v5461, %v5453
    %v5966 = vpack.c.b16 %v5462, %v5454
    %v5967 = vpack.c.b16 %v5463, %v5455
    %v5968 = vpack.c.b16 %v5464, %v5456
    %v5969 = vpack.c.b16 %v5465, %v5457
    %v5970 = vpack.c.b16 %v5466, %v5458
    %v5971 = vpack.c.b16 %v5467, %v5459
    %v5972 = vpack.c.b16 %v5468, %v5460
    %v5973 = vpack.c.b16 %v5477, %v5469
    %v5974 = vpack.c.b16 %v5478, %v5470
    %v5975 = vpack.c.b16 %v5479, %v5471
    %v5976 = vpack.c.b16 %v5480, %v5472
    %v5977 = vpack.c.b16 %v5481, %v5473
    %v5978 = vpack.c.b16 %v5482, %v5474
    %v5979 = vpack.c.b16 %v5483, %v5475
    %v5980 = vpack.c.b16 %v5484, %v5476
    %v5981 = vpack.c.b16 %v5493, %v5485
    %v5982 = vpack.c.b16 %v5494, %v5486
    %v5983 = vpack.c.b16 %v5495, %v5487
    %v5984 = vpack.c.b16 %v5496, %v5488
    %v5985 = vpack.c.b16 %v5497, %v5489
    %v5986 = vpack.c.b16 %v5498, %v5490
    %v5987 = vpack.c.b16 %v5499, %v5491
    %v5988 = vpack.c.b16 %v5500, %v5492
    %v5989 = vpack.c.b16 %v5509, %v5501
    %v5990 = vpack.c.b16 %v5510, %v5502
    %v5991 = vpack.c.b16 %v5511, %v5503
    %v5992 = vpack.c.b16 %v5512, %v5504
    %v5993 = vpack.c.b16 %v5513, %v5505
    %v5994 = vpack.c.b16 %v5514, %v5506
    %v5995 = vpack.c.b16 %v5515, %v5507
    %v5996 = vpack.c.b16 %v5516, %v5508
    %v5997 = vpack.c.b16 %v5525, %v5517
    %v5998 = vpack.c.b16 %v5526, %v5518
    %v5999 = vpack.c.b16 %v5527, %v5519
    %v6000 = vpack.c.b16 %v5528, %v5520
    %v6001 = vpack.c.b16 %v5529, %v5521
    %v6002 = vpack.c.b16 %v5530, %v5522
    %v6003 = vpack.c.b16 %v5531, %v5523
    %v6004 = vpack.c.b16 %v5532, %v5524
    %v6005 = vpack.c.b16 %v5541, %v5533
    %v6006 = vpack.c.b16 %v5542, %v5534
    %v6007 = vpack.c.b16 %v5543, %v5535
    %v6008 = vpack.c.b16 %v5544, %v5536
    %v6009 = vpack.c.b16 %v5545, %v5537
    %v6010 = vpack.c.b16 %v5546, %v5538
    %v6011 = vpack.c.b16 %v5547, %v5539
    %v6012 = vpack.c.b16 %v5548, %v5540
    %v6013 = vpack.c.b16 %v5557, %v5549
    %v6014 = vpack.c.b16 %v5558, %v5550
    %v6015 = vpack.c.b16 %v5559, %v5551
    %v6016 = vpack.c.b16 %v5560, %v5552
    %v6017 = vpack.c.b16 %v5561, %v5553
    %v6018 = vpack.c.b16 %v5562, %v5554
    %v6019 = vpack.c.b16 %v5563, %v5555
    %v6020 = vpack.c.b16 %v5564, %v5556
    %v6021 = vpack.c.b16 %v5573, %v5565
    %v6022 = vpack.c.b16 %v5574, %v5566
    %v6023 = vpack.c.b16 %v5575, %v5567
    %v6024 = vpack.c.b16 %v5576, %v5568
    %v6025 = vpack.c.b16 %v5577, %v5569
    %v6026 = vpack.c.b16 %v5578, %v5570
    %v6027 = vpack.c.b16 %v5579, %v5571
    %v6028 = vpack.c.b16 %v5580, %v5572
    %v6029 = vpack.c.b16 %v5589, %v5581
    %v6030 = vpack.c.b16 %v5590, %v5582
    %v6031 = vpack.c.b16 %v5591, %v5583
    %v6032 = vpack.c.b16 %v5592, %v5584
    %v6033 = vpack.c.b16 %v5593, %v5585
    %v6034 = vpack.c.b16 %v5594, %v5586
    %v6035 = vpack.c.b16 %v5595, %v5587
    %v6036 = vpack.c.b16 %v5596, %v5588
    %v6037 = vpack.c.b16 %v5605, %v5597
    %v6038 = vpack.c.b16 %v5606, %v5598
    %v6039 = vpack.c.b16 %v5607, %v5599
    %v6040 = vpack.c.b16 %v5608, %v5600
    %v6041 = vpack.c.b16 %v5609, %v5601
    %v6042 = vpack.c.b16 %v5610, %v5602
    %v6043 = vpack.c.b16 %v5611, %v5603
    %v6044 = vpack.c.b16 %v5612, %v5604
    %v6045 = vpack.c.b16 %v5621, %v5613
    %v6046 = vpack.c.b16 %v5622, %v5614
    %v6047 = vpack.c.b16 %v5623, %v5615
    %v6048 = vpack.c.b16 %v5624, %v5616
    %v6049 = vpack.c.b16 %v5625, %v5617
    %v6050 = vpack.c.b16 %v5626, %v5618
    %v6051 = vpack.c.b16 %v5627, %v5619
    %v6052 = vpack.c.b16 %v5628, %v5620
    %v6053 = vpack.c.b16 %v5637, %v5629
    %v6054 = vpack.c.b16 %v5638, %v5630
    %v6055 = vpack.c.b16 %v5639, %v5631
    %v6056 = vpack.c.b16 %v5640, %v5632
    %v6057 = vpack.c.b16 %v5641, %v5633
    %v6058 = vpack.c.b16 %v5642, %v5634
    %v6059 = vpack.c.b16 %v5643, %v5635
    %v6060 = vpack.c.b16 %v5644, %v5636
    %v6061 = vpack.c.b16 %v5653, %v5645
    %v6062 = vpack.c.b16 %v5654, %v5646
    %v6063 = vpack.c.b16 %v5655, %v5647
    %v6064 = vpack.c.b16 %v5656, %v5648
    %v6065 = vpack.c.b16 %v5657, %v5649
    %v6066 = vpack.c.b16 %v5658, %v5650
    %v6067 = vpack.c.b16 %v5659, %v5651
    %v6068 = vpack.c.b16 %v5660, %v5652
    %v6069 = vpack.c.b16 %v5669, %v5661
    %v6070 = vpack.c.b16 %v5670, %v5662
    %v6071 = vpack.c.b16 %v5671, %v5663
    %v6072 = vpack.c.b16 %v5672, %v5664
    %v6073 = vpack.c.b16 %v5673, %v5665
    %v6074 = vpack.c.b16 %v5674, %v5666
    %v6075 = vpack.c.b16 %v5675, %v5667
    %v6076 = vpack.c.b16 %v5676, %v5668
    %v6077 = vpack.c.b16 %v5685, %v5677
    %v6078 = vpack.c.b16 %v5686, %v5678
    %v6079 = vpack.c.b16 %v5687, %v5679
    %v6080 = vpack.c.b16 %v5688, %v5680
    %v6081 = vpack.c.b16 %v5689, %v5681
    %v6082 = vpack.c.b16 %v5690, %v5682
    %v6083 = vpack.c.b16 %v5691, %v5683
    %v6084 = vpack.c.b16 %v5692, %v5684
    %v6085 = vpack.c.b16 %v5701, %v5693
    %v6086 = vpack.c.b16 %v5702, %v5694
    %v6087 = vpack.c.b16 %v5703, %v5695
    %v6088 = vpack.c.b16 %v5704, %v5696
    %v6089 = vpack.c.b16 %v5705, %v5697
    %v6090 = vpack.c.b16 %v5706, %v5698
    %v6091 = vpack.c.b16 %v5707, %v5699
    %v6092 = vpack.c.b16 %v5708, %v5700
    %v6093 = vpack.c.b16 %v5717, %v5709
    %v6094 = vpack.c.b16 %v5718, %v5710
    %v6095 = vpack.c.b16 %v5719, %v5711
    %v6096 = vpack.c.b16 %v5720, %v5712
    %v6097 = vpack.c.b16 %v5721, %v5713
    %v6098 = vpack.c.b16 %v5722, %v5714
    %v6099 = vpack.c.b16 %v5723, %v5715
    %v6100 = vpack.c.b16 %v5724, %v5716
    %v6101 = vpack.c.b16 %v5733, %v5725
    %v6102 = vpack.c.b16 %v5734, %v5726
    %v6103 = vpack.c.b16 %v5735, %v5727
    %v6104 = vpack.c.b16 %v5736, %v5728
    %v6105 = vpack.c.b16 %v5737, %v5729
    %v6106 = vpack.c.b16 %v5738, %v5730
    %v6107 = vpack.c.b16 %v5739, %v5731
    %v6108 = vpack.c.b16 %v5740, %v5732
    %v6109 = vpack.c.b16 %v5749, %v5741
    %v6110 = vpack.c.b16 %v5750, %v5742
    %v6111 = vpack.c.b16 %v5751, %v5743
    %v6112 = vpack.c.b16 %v5752, %v5744
    %v6113 = vpack.c.b16 %v5753, %v5745
    %v6114 = vpack.c.b16 %v5754, %v5746
    %v6115 = vpack.c.b16 %v5755, %v5747
    %v6116 = vpack.c.b16 %v5756, %v5748
    %v6117 = vpack.c.b16 %v5765, %v5757
    %v6118 = vpack.c.b16 %v5766, %v5758
    %v6119 = vpack.c.b16 %v5767, %v5759
    %v6120 = vpack.c.b16 %v5768, %v5760
    %v6121 = vpack.c.b16 %v5769, %v5761
    %v6122 = vpack.c.b16 %v5770, %v5762
    %v6123 = vpack.c.b16 %v5771, %v5763
    %v6124 = vpack.c.b16 %v5772, %v5764
    %v6125 = vpack.c.b16 %v5781, %v5773
    %v6126 = vpack.c.b16 %v5782, %v5774
    %v6127 = vpack.c.b16 %v5783, %v5775
    %v6128 = vpack.c.b16 %v5784, %v5776
    %v6129 = vpack.c.b16 %v5785, %v5777
    %v6130 = vpack.c.b16 %v5786, %v5778
    %v6131 = vpack.c.b16 %v5787, %v5779
    %v6132 = vpack.c.b16 %v5788, %v5780
    %v6133 = vpack.c.b16 %v5797, %v5789
    %v6134 = vpack.c.b16 %v5798, %v5790
    %v6135 = vpack.c.b16 %v5799, %v5791
    %v6136 = vpack.c.b16 %v5800, %v5792
    %v6137 = vpack.c.b16 %v5801, %v5793
    %v6138 = vpack.c.b16 %v5802, %v5794
    %v6139 = vpack.c.b16 %v5803, %v5795
    %v6140 = vpack.c.b16 %v5804, %v5796
    %v6141 = vpack.c.b16 %v5813, %v5805
    %v6142 = vpack.c.b16 %v5814, %v5806
    %v6143 = vpack.c.b16 %v5815, %v5807
    %v6144 = vpack.c.b16 %v5816, %v5808
    %v6145 = vpack.c.b16 %v5817, %v5809
    %v6146 = vpack.c.b16 %v5818, %v5810
    %v6147 = vpack.c.b16 %v5819, %v5811
    %v6148 = vpack.c.b16 %v5820, %v5812
    %v6149 = vpack.c.b16 %v5829, %v5821
    %v6150 = vpack.c.b16 %v5830, %v5822
    %v6151 = vpack.c.b16 %v5831, %v5823
    %v6152 = vpack.c.b16 %v5832, %v5824
    %v6153 = vpack.c.b16 %v5833, %v5825
    %v6154 = vpack.c.b16 %v5834, %v5826
    %v6155 = vpack.c.b16 %v5835, %v5827
    %v6156 = vpack.c.b16 %v5836, %v5828
    %v6157 = vpack.c.b16 %v5845, %v5837
    %v6158 = vpack.c.b16 %v5846, %v5838
    %v6159 = vpack.c.b16 %v5847, %v5839
    %v6160 = vpack.c.b16 %v5848, %v5840
    %v6161 = vpack.c.b16 %v5849, %v5841
    %v6162 = vpack.c.b16 %v5850, %v5842
    %v6163 = vpack.c.b16 %v5851, %v5843
    %v6164 = vpack.c.b16 %v5852, %v5844
    %v6165 = vpack.c.b16 %v5861, %v5853
    %v6166 = vpack.c.b16 %v5862, %v5854
    %v6167 = vpack.c.b16 %v5863, %v5855
    %v6168 = vpack.c.b16 %v5864, %v5856
    %v6169 = vpack.c.b16 %v5865, %v5857
    %v6170 = vpack.c.b16 %v5866, %v5858
    %v6171 = vpack.c.b16 %v5867, %v5859
    %v6172 = vpack.c.b16 %v5868, %v5860
    %v6173 = vpack.c.b16 %v5877, %v5869
    %v6174 = vpack.c.b16 %v5878, %v5870
    %v6175 = vpack.c.b16 %v5879, %v5871
    %v6176 = vpack.c.b16 %v5880, %v5872
    %v6177 = vpack.c.b16 %v5881, %v5873
    %v6178 = vpack.c.b16 %v5882, %v5874
    %v6179 = vpack.c.b16 %v5883, %v5875
    %v6180 = vpack.c.b16 %v5884, %v5876
    %v6181 = vpack.c.b16 %v5893, %v5885
    %v6182 = vpack.c.b16 %v5894, %v5886
    %v6183 = vpack.c.b16 %v5895, %v5887
    %v6184 = vpack.c.b16 %v5896, %v5888
    %v6185 = vpack.c.b16 %v5897, %v5889
    %v6186 = vpack.c.b16 %v5898, %v5890
    %v6187 = vpack.c.b16 %v5899, %v5891
    %v6188 = vpack.c.b16 %v5900, %v5892
    %v6189 = vpack.c.b16 %v5909, %v5901
    %v6190 = vpack.c.b16 %v5910, %v5902
    %v6191 = vpack.c.b16 %v5911, %v5903
    %v6192 = vpack.c.b16 %v5912, %v5904
    %v6193 = vpack.c.b16 %v5913, %v5905
    %v6194 = vpack.c.b16 %v5914, %v5906
    %v6195 = vpack.c.b16 %v5915, %v5907
    %v6196 = vpack.c.b16 %v5916, %v5908
    %v6197 = vpack.c.b16 %v5925, %v5917
    %v6198 = vpack.c.b16 %v5926, %v5918
    %v6199 = vpack.c.b16 %v5927, %v5919
    %v6200 = vpack.c.b16 %v5928, %v5920
    %v6201 = vpack.c.b16 %v5929, %v5921
    %v6202 = vpack.c.b16 %v5930, %v5922
    %v6203 = vpack.c.b16 %v5931, %v5923
    %v6204 = vpack.c.b16 %v5932, %v5924
    %v6205 = vpack.c.b16 %v5941, %v5933
    %v6206 = vpack.c.b16 %v5942, %v5934
    %v6207 = vpack.c.b16 %v5943, %v5935
    %v6208 = vpack.c.b16 %v5944, %v5936
    %v6209 = vpack.c.b16 %v5945, %v5937
    %v6210 = vpack.c.b16 %v5946, %v5938
    %v6211 = vpack.c.b16 %v5947, %v5939
    %v6212 = vpack.c.b16 %v5948, %v5940
    %v6213 = vpack.c.b16 %v5957, %v5949
    %v6214 = vpack.c.b16 %v5958, %v5950
    %v6215 = vpack.c.b16 %v5959, %v5951
    %v6216 = vpack.c.b16 %v5960, %v5952
    %v6217 = vpack.c.b16 %v5961, %v5953
    %v6218 = vpack.c.b16 %v5962, %v5954
    %v6219 = vpack.c.b16 %v5963, %v5955
    %v6220 = vpack.c.b16 %v5964, %v5956
    %6477 = vmatprep.subr.bf16.mxu0 %v5966
    %6478 = vmatpush1.bf16.msra.mxu0 %v5965
    %6479 = vmatprep.subr.bf16.mxu0 %v5974
    %6480 = vmatpush1.bf16.msra.mxu0 %v5973
    %6481 = vmatprep.subr.bf16.mxu0 %v5982
    %6482 = vmatpush1.bf16.msra.mxu0 %v5981
    %6483 = vmatprep.subr.bf16.mxu0 %v5990
    %6484 = vmatpush1.bf16.msra.mxu0 %v5989
    %6485 = vmatprep.subr.bf16.mxu0 %v5998
    %6486 = vmatpush1.bf16.msra.mxu0 %v5997
    %6487 = vmatprep.subr.bf16.mxu0 %v6006
    %6488 = vmatpush1.bf16.msra.mxu0 %v6005
    %6489 = vmatprep.subr.bf16.mxu0 %v6014
    %6490 = vmatpush1.bf16.msra.mxu0 %v6013
    %6491 = vmatprep.subr.bf16.mxu0 %v6022
    %6492 = vmatpush1.bf16.msra.mxu0 %v6021
    %6493 = vmatprep.subr.bf16.mxu0 %v6030
    %6494 = vmatpush1.bf16.msra.mxu0 %v6029
    %6495 = vmatprep.subr.bf16.mxu0 %v6038
    %6496 = vmatpush1.bf16.msra.mxu0 %v6037
    %6497 = vmatprep.subr.bf16.mxu0 %v6046
    %6498 = vmatpush1.bf16.msra.mxu0 %v6045
    %6499 = vmatprep.subr.bf16.mxu0 %v6054
    %6500 = vmatpush1.bf16.msra.mxu0 %v6053
    %6501 = vmatprep.subr.bf16.mxu0 %v6062
    %6502 = vmatpush1.bf16.msra.mxu0 %v6061
    %6503 = vmatprep.subr.bf16.mxu0 %v6070
    %6504 = vmatpush1.bf16.msra.mxu0 %v6069
    %6505 = vmatprep.subr.bf16.mxu0 %v6078
    %6506 = vmatpush1.bf16.msra.mxu0 %v6077
    %6507 = vmatprep.subr.bf16.mxu0 %v6086
    %6508 = vmatpush1.bf16.msra.mxu0 %v6085
    %6509 = vmatprep.mubr.bf16.mxu0 %v4896
    %6510 = vmatmul.mubr.bf16.gmra.mrb[0].mxu0 %v4895
    %v6511 = vpop.f32.mrb[0].mxu0
    %v6512 = vadd.f32 %v5160, %v6511
    %v6513 = vpop.f32.mrb[0].mxu0
    %v6514 = vadd.f32 %v5164, %v6513
    %v6515 = vpop.f32.mrb[0].mxu0
    %v6516 = vpop.f32.mrb[0].mxu0
    %6517 = vdwg.mxu0
    %6518 = vmatprep.subr.bf16.mxu0 %v6094
    %6519 = vmatpush1.bf16.msra.mxu0 %v6093
    %6520 = vmatprep.subr.bf16.mxu0 %v6102
    %6521 = vmatpush1.bf16.msra.mxu0 %v6101
    %6522 = vmatprep.subr.bf16.mxu0 %v6110
    %6523 = vmatpush1.bf16.msra.mxu0 %v6109
    %6524 = vmatprep.subr.bf16.mxu0 %v6118
    %6525 = vmatpush1.bf16.msra.mxu0 %v6117
    %6526 = vmatprep.subr.bf16.mxu0 %v6126
    %6527 = vmatpush1.bf16.msra.mxu0 %v6125
    %6528 = vmatprep.subr.bf16.mxu0 %v6134
    %6529 = vmatpush1.bf16.msra.mxu0 %v6133
    %6530 = vmatprep.subr.bf16.mxu0 %v6142
    %6531 = vmatpush1.bf16.msra.mxu0 %v6141
    %6532 = vmatprep.subr.bf16.mxu0 %v6150
    %6533 = vmatpush1.bf16.msra.mxu0 %v6149
    %6534 = vmatprep.subr.bf16.mxu0 %v6158
    %6535 = vmatpush1.bf16.msra.mxu0 %v6157
    %6536 = vmatprep.subr.bf16.mxu0 %v6166
    %6537 = vmatpush1.bf16.msra.mxu0 %v6165
    %6538 = vmatprep.subr.bf16.mxu0 %v6174
    %6539 = vmatpush1.bf16.msra.mxu0 %v6173
    %6540 = vmatprep.subr.bf16.mxu0 %v6182
    %6541 = vmatpush1.bf16.msra.mxu0 %v6181
    %6542 = vmatprep.subr.bf16.mxu0 %v6190
    %6543 = vmatpush1.bf16.msra.mxu0 %v6189
    %6544 = vmatprep.subr.bf16.mxu0 %v6198
    %6545 = vmatpush1.bf16.msra.mxu0 %v6197
    %6546 = vmatprep.subr.bf16.mxu0 %v6206
    %6547 = vmatpush1.bf16.msra.mxu0 %v6205
    %6548 = vmatprep.subr.bf16.mxu0 %v6214
    %6549 = vmatpush1.bf16.msra.mxu0 %v6213
    %6550 = vmatprep.mubr.bf16.mxu0 %v4898
    %6551 = vmatmul.mubr.bf16.gmra.mrb[0].mxu0 %v4897
    %v6552 = vpop.f32.mrb[0].mxu0
    %v6553 = vadd.f32 %v6512, %v6552
    %v6554 = vpop.f32.mrb[0].mxu0
    %v6555 = vadd.f32 %v6514, %v6554
    %v6556 = vpop.f32.mrb[0].mxu0
    %v6557 = vpop.f32.mrb[0].mxu0
    %6558 = vdwg.mxu0
    %6559 = vmatprep.subr.bf16.mxu0 %v5968
    %6560 = vmatpush1.bf16.msra.mxu0 %v5967
    %6561 = vmatprep.subr.bf16.mxu0 %v5976
    %6562 = vmatpush1.bf16.msra.mxu0 %v5975
    %6563 = vmatprep.subr.bf16.mxu0 %v5984
    %6564 = vmatpush1.bf16.msra.mxu0 %v5983
    %6565 = vmatprep.subr.bf16.mxu0 %v5992
    %6566 = vmatpush1.bf16.msra.mxu0 %v5991
    %6567 = vmatprep.subr.bf16.mxu0 %v6000
    %6568 = vmatpush1.bf16.msra.mxu0 %v5999
    %6569 = vmatprep.subr.bf16.mxu0 %v6008
    %6570 = vmatpush1.bf16.msra.mxu0 %v6007
    %6571 = vmatprep.subr.bf16.mxu0 %v6016
    %6572 = vmatpush1.bf16.msra.mxu0 %v6015
    %6573 = vmatprep.subr.bf16.mxu0 %v6024
    %6574 = vmatpush1.bf16.msra.mxu0 %v6023
    %6575 = vmatprep.subr.bf16.mxu0 %v6032
    %6576 = vmatpush1.bf16.msra.mxu0 %v6031
    %6577 = vmatprep.subr.bf16.mxu0 %v6040
    %6578 = vmatpush1.bf16.msra.mxu0 %v6039
    %6579 = vmatprep.subr.bf16.mxu0 %v6048
    %6580 = vmatpush1.bf16.msra.mxu0 %v6047
    %6581 = vmatprep.subr.bf16.mxu0 %v6056
    %6582 = vmatpush1.bf16.msra.mxu0 %v6055
    %6583 = vmatprep.subr.bf16.mxu0 %v6064
    %6584 = vmatpush1.bf16.msra.mxu0 %v6063
    %6585 = vmatprep.subr.bf16.mxu0 %v6072
    %6586 = vmatpush1.bf16.msra.mxu0 %v6071
    %6587 = vmatprep.subr.bf16.mxu0 %v6080
    %6588 = vmatpush1.bf16.msra.mxu0 %v6079
    %6589 = vmatprep.subr.bf16.mxu0 %v6088
    %6590 = vmatpush1.bf16.msra.mxu0 %v6087
    %6591 = vmatprep.mubr.bf16.mxu0 %v4896
    %6592 = vmatmul.mubr.bf16.gmra.mrb[0].mxu0 %v4895
    %v6593 = vpop.f32.mrb[0].mxu0
    %v6594 = vadd.f32 %v5168, %v6593
    %v6595 = vpop.f32.mrb[0].mxu0
    %v6596 = vadd.f32 %v5172, %v6595
    %v6597 = vpop.f32.mrb[0].mxu0
    %v6598 = vpop.f32.mrb[0].mxu0
    %6599 = vdwg.mxu0
    %6600 = vmatprep.subr.bf16.mxu0 %v6096
    %6601 = vmatpush1.bf16.msra.mxu0 %v6095
    %6602 = vmatprep.subr.bf16.mxu0 %v6104
    %6603 = vmatpush1.bf16.msra.mxu0 %v6103
    %6604 = vmatprep.subr.bf16.mxu0 %v6112
    %6605 = vmatpush1.bf16.msra.mxu0 %v6111
    %6606 = vmatprep.subr.bf16.mxu0 %v6120
    %6607 = vmatpush1.bf16.msra.mxu0 %v6119
    %6608 = vmatprep.subr.bf16.mxu0 %v6128
    %6609 = vmatpush1.bf16.msra.mxu0 %v6127
    %6610 = vmatprep.subr.bf16.mxu0 %v6136
    %6611 = vmatpush1.bf16.msra.mxu0 %v6135
    %6612 = vmatprep.subr.bf16.mxu0 %v6144
    %6613 = vmatpush1.bf16.msra.mxu0 %v6143
    %6614 = vmatprep.subr.bf16.mxu0 %v6152
    %6615 = vmatpush1.bf16.msra.mxu0 %v6151
    %6616 = vmatprep.subr.bf16.mxu0 %v6160
    %6617 = vmatpush1.bf16.msra.mxu0 %v6159
    %6618 = vmatprep.subr.bf16.mxu0 %v6168
    %6619 = vmatpush1.bf16.msra.mxu0 %v6167
    %6620 = vmatprep.subr.bf16.mxu0 %v6176
    %6621 = vmatpush1.bf16.msra.mxu0 %v6175
    %6622 = vmatprep.subr.bf16.mxu0 %v6184
    %6623 = vmatpush1.bf16.msra.mxu0 %v6183
    %6624 = vmatprep.subr.bf16.mxu0 %v6192
    %6625 = vmatpush1.bf16.msra.mxu0 %v6191
    %6626 = vmatprep.subr.bf16.mxu0 %v6200
    %6627 = vmatpush1.bf16.msra.mxu0 %v6199
    %6628 = vmatprep.subr.bf16.mxu0 %v6208
    %6629 = vmatpush1.bf16.msra.mxu0 %v6207
    %6630 = vmatprep.subr.bf16.mxu0 %v6216
    %6631 = vmatpush1.bf16.msra.mxu0 %v6215
    %6632 = vmatprep.mubr.bf16.mxu0 %v4898
    %6633 = vmatmul.mubr.bf16.gmra.mrb[0].mxu0 %v4897
    %v6634 = vpop.f32.mrb[0].mxu0
    %v6635 = vadd.f32 %v6594, %v6634
    %v6636 = vpop.f32.mrb[0].mxu0
    %v6637 = vadd.f32 %v6596, %v6636
    %v6638 = vpop.f32.mrb[0].mxu0
    %v6639 = vpop.f32.mrb[0].mxu0
    %6640 = vdwg.mxu0
    %6641 = vmatprep.subr.bf16.mxu0 %v5970
    %6642 = vmatpush1.bf16.msra.mxu0 %v5969
    %6643 = vmatprep.subr.bf16.mxu0 %v5978
    %6644 = vmatpush1.bf16.msra.mxu0 %v5977
    %6645 = vmatprep.subr.bf16.mxu0 %v5986
    %6646 = vmatpush1.bf16.msra.mxu0 %v5985
    %6647 = vmatprep.subr.bf16.mxu0 %v5994
    %6648 = vmatpush1.bf16.msra.mxu0 %v5993
    %6649 = vmatprep.subr.bf16.mxu0 %v6002
    %6650 = vmatpush1.bf16.msra.mxu0 %v6001
    %6651 = vmatprep.subr.bf16.mxu0 %v6010
    %6652 = vmatpush1.bf16.msra.mxu0 %v6009
    %6653 = vmatprep.subr.bf16.mxu0 %v6018
    %6654 = vmatpush1.bf16.msra.mxu0 %v6017
    %6655 = vmatprep.subr.bf16.mxu0 %v6026
    %6656 = vmatpush1.bf16.msra.mxu0 %v6025
    %6657 = vmatprep.subr.bf16.mxu0 %v6034
    %6658 = vmatpush1.bf16.msra.mxu0 %v6033
    %6659 = vmatprep.subr.bf16.mxu0 %v6042
    %6660 = vmatpush1.bf16.msra.mxu0 %v6041
    %6661 = vmatprep.subr.bf16.mxu0 %v6050
    %6662 = vmatpush1.bf16.msra.mxu0 %v6049
    %6663 = vmatprep.subr.bf16.mxu0 %v6058
    %6664 = vmatpush1.bf16.msra.mxu0 %v6057
    %6665 = vmatprep.subr.bf16.mxu0 %v6066
    %6666 = vmatpush1.bf16.msra.mxu0 %v6065
    %6667 = vmatprep.subr.bf16.mxu0 %v6074
    %6668 = vmatpush1.bf16.msra.mxu0 %v6073
    %6669 = vmatprep.subr.bf16.mxu0 %v6082
    %6670 = vmatpush1.bf16.msra.mxu0 %v6081
    %6671 = vmatprep.subr.bf16.mxu0 %v6090
    %6672 = vmatpush1.bf16.msra.mxu0 %v6089
    %6673 = vmatprep.mubr.bf16.mxu0 %v4896
    %6674 = vmatmul.mubr.bf16.gmra.mrb[0].mxu0 %v4895
    %v6675 = vpop.f32.mrb[0].mxu0
    %v6676 = vadd.f32 %v5176, %v6675
    %v6677 = vpop.f32.mrb[0].mxu0
    %v6678 = vadd.f32 %v5180, %v6677
    %v6679 = vpop.f32.mrb[0].mxu0
    %v6680 = vpop.f32.mrb[0].mxu0
    %6681 = vdwg.mxu0
    %6682 = vmatprep.subr.bf16.mxu0 %v6098
    %6683 = vmatpush1.bf16.msra.mxu0 %v6097
    %6684 = vmatprep.subr.bf16.mxu0 %v6106
    %6685 = vmatpush1.bf16.msra.mxu0 %v6105
    %6686 = vmatprep.subr.bf16.mxu0 %v6114
    %6687 = vmatpush1.bf16.msra.mxu0 %v6113
    %6688 = vmatprep.subr.bf16.mxu0 %v6122
    %6689 = vmatpush1.bf16.msra.mxu0 %v6121
    %6690 = vmatprep.subr.bf16.mxu0 %v6130
    %6691 = vmatpush1.bf16.msra.mxu0 %v6129
    %6692 = vmatprep.subr.bf16.mxu0 %v6138
    %6693 = vmatpush1.bf16.msra.mxu0 %v6137
    %6694 = vmatprep.subr.bf16.mxu0 %v6146
    %6695 = vmatpush1.bf16.msra.mxu0 %v6145
    %6696 = vmatprep.subr.bf16.mxu0 %v6154
    %6697 = vmatpush1.bf16.msra.mxu0 %v6153
    %6698 = vmatprep.subr.bf16.mxu0 %v6162
    %6699 = vmatpush1.bf16.msra.mxu0 %v6161
    %6700 = vmatprep.subr.bf16.mxu0 %v6170
    %6701 = vmatpush1.bf16.msra.mxu0 %v6169
    %6702 = vmatprep.subr.bf16.mxu0 %v6178
    %6703 = vmatpush1.bf16.msra.mxu0 %v6177
    %6704 = vmatprep.subr.bf16.mxu0 %v6186
    %6705 = vmatpush1.bf16.msra.mxu0 %v6185
    %6706 = vmatprep.subr.bf16.mxu0 %v6194
    %6707 = vmatpush1.bf16.msra.mxu0 %v6193
    %6708 = vmatprep.subr.bf16.mxu0 %v6202
    %6709 = vmatpush1.bf16.msra.mxu0 %v6201
    %6710 = vmatprep.subr.bf16.mxu0 %v6210
    %6711 = vmatpush1.bf16.msra.mxu0 %v6209
    %6712 = vmatprep.subr.bf16.mxu0 %v6218
    %6713 = vmatpush1.bf16.msra.mxu0 %v6217
    %6714 = vmatprep.mubr.bf16.mxu0 %v4898
    %6715 = vmatmul.mubr.bf16.gmra.mrb[0].mxu0 %v4897
    %v6716 = vpop.f32.mrb[0].mxu0
    %v6717 = vadd.f32 %v6676, %v6716
    %v6718 = vpop.f32.mrb[0].mxu0
    %v6719 = vadd.f32 %v6678, %v6718
    %v6720 = vpop.f32.mrb[0].mxu0
    %v6721 = vpop.f32.mrb[0].mxu0
    %6722 = vdwg.mxu0
    %6723 = vmatprep.subr.bf16.mxu0 %v5972
    %6724 = vmatpush1.bf16.msra.mxu0 %v5971
    %6725 = vmatprep.subr.bf16.mxu0 %v5980
    %6726 = vmatpush1.bf16.msra.mxu0 %v5979
    %6727 = vmatprep.subr.bf16.mxu0 %v5988
    %6728 = vmatpush1.bf16.msra.mxu0 %v5987
    %6729 = vmatprep.subr.bf16.mxu0 %v5996
    %6730 = vmatpush1.bf16.msra.mxu0 %v5995
    %6731 = vmatprep.subr.bf16.mxu0 %v6004
    %6732 = vmatpush1.bf16.msra.mxu0 %v6003
    %6733 = vmatprep.subr.bf16.mxu0 %v6012
    %6734 = vmatpush1.bf16.msra.mxu0 %v6011
    %6735 = vmatprep.subr.bf16.mxu0 %v6020
    %6736 = vmatpush1.bf16.msra.mxu0 %v6019
    %6737 = vmatprep.subr.bf16.mxu0 %v6028
    %6738 = vmatpush1.bf16.msra.mxu0 %v6027
    %6739 = vmatprep.subr.bf16.mxu0 %v6036
    %6740 = vmatpush1.bf16.msra.mxu0 %v6035
    %6741 = vmatprep.subr.bf16.mxu0 %v6044
    %6742 = vmatpush1.bf16.msra.mxu0 %v6043
    %6743 = vmatprep.subr.bf16.mxu0 %v6052
    %6744 = vmatpush1.bf16.msra.mxu0 %v6051
    %6745 = vmatprep.subr.bf16.mxu0 %v6060
    %6746 = vmatpush1.bf16.msra.mxu0 %v6059
    %6747 = vmatprep.subr.bf16.mxu0 %v6068
    %6748 = vmatpush1.bf16.msra.mxu0 %v6067
    %6749 = vmatprep.subr.bf16.mxu0 %v6076
    %6750 = vmatpush1.bf16.msra.mxu0 %v6075
    %6751 = vmatprep.subr.bf16.mxu0 %v6084
    %6752 = vmatpush1.bf16.msra.mxu0 %v6083
    %6753 = vmatprep.subr.bf16.mxu0 %v6092
    %6754 = vmatpush1.bf16.msra.mxu0 %v6091
    %6755 = vmatprep.mubr.bf16.mxu0 %v4896
    %6756 = vmatmul.mubr.bf16.gmra.mrb[0].mxu0 %v4895
    %v6757 = vpop.f32.mrb[0].mxu0
    %v6758 = vadd.f32 %v5184, %v6757
    %v6759 = vpop.f32.mrb[0].mxu0
    %v6760 = vadd.f32 %v5188, %v6759
    %v6761 = vpop.f32.mrb[0].mxu0
    %v6762 = vpop.f32.mrb[0].mxu0
    %6763 = vdwg.mxu0
    %6764 = vmatprep.subr.bf16.mxu0 %v6100
    %6765 = vmatpush1.bf16.msra.mxu0 %v6099
    %6766 = vmatprep.subr.bf16.mxu0 %v6108
    %6767 = vmatpush1.bf16.msra.mxu0 %v6107
    %6768 = vmatprep.subr.bf16.mxu0 %v6116
    %6769 = vmatpush1.bf16.msra.mxu0 %v6115
    %6770 = vmatprep.subr.bf16.mxu0 %v6124
    %6771 = vmatpush1.bf16.msra.mxu0 %v6123
    %6772 = vmatprep.subr.bf16.mxu0 %v6132
    %6773 = vmatpush1.bf16.msra.mxu0 %v6131
    %6774 = vmatprep.subr.bf16.mxu0 %v6140
    %6775 = vmatpush1.bf16.msra.mxu0 %v6139
    %6776 = vmatprep.subr.bf16.mxu0 %v6148
    %6777 = vmatpush1.bf16.msra.mxu0 %v6147
    %6778 = vmatprep.subr.bf16.mxu0 %v6156
    %6779 = vmatpush1.bf16.msra.mxu0 %v6155
    %6780 = vmatprep.subr.bf16.mxu0 %v6164
    %6781 = vmatpush1.bf16.msra.mxu0 %v6163
    %6782 = vmatprep.subr.bf16.mxu0 %v6172
    %6783 = vmatpush1.bf16.msra.mxu0 %v6171
    %6784 = vmatprep.subr.bf16.mxu0 %v6180
    %6785 = vmatpush1.bf16.msra.mxu0 %v6179
    %6786 = vmatprep.subr.bf16.mxu0 %v6188
    %6787 = vmatpush1.bf16.msra.mxu0 %v6187
    %6788 = vmatprep.subr.bf16.mxu0 %v6196
    %6789 = vmatpush1.bf16.msra.mxu0 %v6195
    %6790 = vmatprep.subr.bf16.mxu0 %v6204
    %6791 = vmatpush1.bf16.msra.mxu0 %v6203
    %6792 = vmatprep.subr.bf16.mxu0 %v6212
    %6793 = vmatpush1.bf16.msra.mxu0 %v6211
    %6794 = vmatprep.subr.bf16.mxu0 %v6220
    %6795 = vmatpush1.bf16.msra.mxu0 %v6219
    %6796 = vmatprep.mubr.bf16.mxu0 %v4898
    %6797 = vmatmul.mubr.bf16.gmra.mrb[0].mxu0 %v4897
    %v6798 = vpop.f32.mrb[0].mxu0
    %v6799 = vadd.f32 %v6758, %v6798
    %v6800 = vpop.f32.mrb[0].mxu0
    %v6801 = vadd.f32 %v6760, %v6800
    %v6802 = vpop.f32.mrb[0].mxu0
    %v6803 = vpop.f32.mrb[0].mxu0
    %6804 = vdwg.mxu0
    %v6805 = vmax.f32 %v6553, 0.0
    %v6806 = vmax.f32 %v6555, 0.0
    %v6807 = vmax.f32 %v6635, 0.0
    %v6808 = vmax.f32 %v6637, 0.0
    %v6809 = vmax.f32 %v6717, 0.0
    %v6810 = vmax.f32 %v6719, 0.0
    %v6811 = vmax.f32 %v6799, 0.0
    %v6812 = vmax.f32 %v6801, 0.0
    %v6813 = vpack.c.bf16 %v6805, %v6805
    %v6814 = vpack.c.bf16 %v6806, %v6806
    %v6815 = vpack.c.bf16 %v6807, %v6807
    %v6816 = vpack.c.bf16 %v6808, %v6808
    %v6817 = vpack.c.bf16 %v6809, %v6809
    %v6818 = vpack.c.bf16 %v6810, %v6810
    %v6819 = vpack.c.bf16 %v6811, %v6811
    %v6820 = vpack.c.bf16 %v6812, %v6812
    %v6821 = vld [vmem:[#allocation12] sm:$0xff]
    %v6822 = vld [vmem:[#allocation12 + $0x8] sm:$0xff]
    %v6823 = vld [vmem:[#allocation12 + $0x10] sm:$0xff]
    %v6824 = vld [vmem:[#allocation12 + $0x18] sm:$0xff]
    %v6825 = vld [vmem:[#allocation12 + $0x20] sm:$0xff]
    %v6826 = vld [vmem:[#allocation12 + $0x28] sm:$0xff]
    %v6827 = vld [vmem:[#allocation12 + $0x30] sm:$0xff]
    %v6828 = vld [vmem:[#allocation12 + $0x38] sm:$0xff]
    %v6829 = vld [vmem:[#allocation12 + $0x40] sm:$0xff]
    %v6830 = vld [vmem:[#allocation12 + $0x48] sm:$0xff]
    %v6831 = vld [vmem:[#allocation12 + $0x50] sm:$0xff]
    %v6832 = vld [vmem:[#allocation12 + $0x58] sm:$0xff]
    %v6833 = vld [vmem:[#allocation12 + $0x60] sm:$0xff]
    %v6834 = vld [vmem:[#allocation12 + $0x68] sm:$0xff]
    %v6835 = vld [vmem:[#allocation12 + $0x70] sm:$0xff]
    %v6836 = vld [vmem:[#allocation12 + $0x78] sm:$0xff]
    %v6837 = vld [vmem:[#allocation12 + $0x80] sm:$0xff]
    %v6838 = vld [vmem:[#allocation12 + $0x88] sm:$0xff]
    %v6839 = vld [vmem:[#allocation12 + $0x90] sm:$0xff]
    %v6840 = vld [vmem:[#allocation12 + $0x98] sm:$0xff]
    %v6841 = vld [vmem:[#allocation12 + $0xa0] sm:$0xff]
    %v6842 = vld [vmem:[#allocation12 + $0xa8] sm:$0xff]
    %v6843 = vld [vmem:[#allocation12 + $0xb0] sm:$0xff]
    %v6844 = vld [vmem:[#allocation12 + $0xb8] sm:$0xff]
    %v6845 = vld [vmem:[#allocation12 + $0xc0] sm:$0xff]
    %v6846 = vld [vmem:[#allocation12 + $0xc8] sm:$0xff]
    %v6847 = vld [vmem:[#allocation12 + $0xd0] sm:$0xff]
    %v6848 = vld [vmem:[#allocation12 + $0xd8] sm:$0xff]
    %v6849 = vld [vmem:[#allocation12 + $0xe0] sm:$0xff]
    %v6850 = vld [vmem:[#allocation12 + $0xe8] sm:$0xff]
    %v6851 = vld [vmem:[#allocation12 + $0xf0] sm:$0xff]
    %v6852 = vld [vmem:[#allocation12 + $0xf8] sm:$0xff]
    %v6853 = vld [vmem:[#allocation12 + $0x100] sm:$0xff]
    %v6854 = vld [vmem:[#allocation12 + $0x108] sm:$0xff]
    %v6855 = vld [vmem:[#allocation12 + $0x110] sm:$0xff]
    %v6856 = vld [vmem:[#allocation12 + $0x118] sm:$0xff]
    %v6857 = vld [vmem:[#allocation12 + $0x120] sm:$0xff]
    %v6858 = vld [vmem:[#allocation12 + $0x128] sm:$0xff]
    %v6859 = vld [vmem:[#allocation12 + $0x130] sm:$0xff]
    %v6860 = vld [vmem:[#allocation12 + $0x138] sm:$0xff]
    %v6861 = vld [vmem:[#allocation12 + $0x140] sm:$0xff]
    %v6862 = vld [vmem:[#allocation12 + $0x148] sm:$0xff]
    %v6863 = vld [vmem:[#allocation12 + $0x150] sm:$0xff]
    %v6864 = vld [vmem:[#allocation12 + $0x158] sm:$0xff]
    %v6865 = vld [vmem:[#allocation12 + $0x160] sm:$0xff]
    %v6866 = vld [vmem:[#allocation12 + $0x168] sm:$0xff]
    %v6867 = vld [vmem:[#allocation12 + $0x170] sm:$0xff]
    %v6868 = vld [vmem:[#allocation12 + $0x178] sm:$0xff]
    %v6869 = vld [vmem:[#allocation12 + $0x180] sm:$0xff]
    %v6870 = vld [vmem:[#allocation12 + $0x188] sm:$0xff]
    %v6871 = vld [vmem:[#allocation12 + $0x190] sm:$0xff]
    %v6872 = vld [vmem:[#allocation12 + $0x198] sm:$0xff]
    %v6873 = vld [vmem:[#allocation12 + $0x1a0] sm:$0xff]
    %v6874 = vld [vmem:[#allocation12 + $0x1a8] sm:$0xff]
    %v6875 = vld [vmem:[#allocation12 + $0x1b0] sm:$0xff]
    %v6876 = vld [vmem:[#allocation12 + $0x1b8] sm:$0xff]
    %v6877 = vld [vmem:[#allocation12 + $0x1c0] sm:$0xff]
    %v6878 = vld [vmem:[#allocation12 + $0x1c8] sm:$0xff]
    %v6879 = vld [vmem:[#allocation12 + $0x1d0] sm:$0xff]
    %v6880 = vld [vmem:[#allocation12 + $0x1d8] sm:$0xff]
    %v6881 = vld [vmem:[#allocation12 + $0x1e0] sm:$0xff]
    %v6882 = vld [vmem:[#allocation12 + $0x1e8] sm:$0xff]
    %v6883 = vld [vmem:[#allocation12 + $0x1f0] sm:$0xff]
    %v6884 = vld [vmem:[#allocation12 + $0x1f8] sm:$0xff]
    %v6885 = vld [vmem:[#allocation12 + $0x200] sm:$0xff]
    %v6886 = vld [vmem:[#allocation12 + $0x208] sm:$0xff]
    %v6887 = vld [vmem:[#allocation12 + $0x210] sm:$0xff]
    %v6888 = vld [vmem:[#allocation12 + $0x218] sm:$0xff]
    %v6889 = vld [vmem:[#allocation12 + $0x220] sm:$0xff]
    %v6890 = vld [vmem:[#allocation12 + $0x228] sm:$0xff]
    %v6891 = vld [vmem:[#allocation12 + $0x230] sm:$0xff]
    %v6892 = vld [vmem:[#allocation12 + $0x238] sm:$0xff]
    %v6893 = vld [vmem:[#allocation12 + $0x240] sm:$0xff]
    %v6894 = vld [vmem:[#allocation12 + $0x248] sm:$0xff]
    %v6895 = vld [vmem:[#allocation12 + $0x250] sm:$0xff]
    %v6896 = vld [vmem:[#allocation12 + $0x258] sm:$0xff]
    %v6897 = vld [vmem:[#allocation12 + $0x260] sm:$0xff]
    %v6898 = vld [vmem:[#allocation12 + $0x268] sm:$0xff]
    %v6899 = vld [vmem:[#allocation12 + $0x270] sm:$0xff]
    %v6900 = vld [vmem:[#allocation12 + $0x278] sm:$0xff]
    %v6901 = vld [vmem:[#allocation12 + $0x280] sm:$0xff]
    %v6902 = vld [vmem:[#allocation12 + $0x288] sm:$0xff]
    %v6903 = vld [vmem:[#allocation12 + $0x290] sm:$0xff]
    %v6904 = vld [vmem:[#allocation12 + $0x298] sm:$0xff]
    %v6905 = vld [vmem:[#allocation12 + $0x2a0] sm:$0xff]
    %v6906 = vld [vmem:[#allocation12 + $0x2a8] sm:$0xff]
    %v6907 = vld [vmem:[#allocation12 + $0x2b0] sm:$0xff]
    %v6908 = vld [vmem:[#allocation12 + $0x2b8] sm:$0xff]
    %v6909 = vld [vmem:[#allocation12 + $0x2c0] sm:$0xff]
    %v6910 = vld [vmem:[#allocation12 + $0x2c8] sm:$0xff]
    %v6911 = vld [vmem:[#allocation12 + $0x2d0] sm:$0xff]
    %v6912 = vld [vmem:[#allocation12 + $0x2d8] sm:$0xff]
    %v6913 = vld [vmem:[#allocation12 + $0x2e0] sm:$0xff]
    %v6914 = vld [vmem:[#allocation12 + $0x2e8] sm:$0xff]
    %v6915 = vld [vmem:[#allocation12 + $0x2f0] sm:$0xff]
    %v6916 = vld [vmem:[#allocation12 + $0x2f8] sm:$0xff]
    %v6917 = vld [vmem:[#allocation12 + $0x300] sm:$0xff]
    %v6918 = vld [vmem:[#allocation12 + $0x308] sm:$0xff]
    %v6919 = vld [vmem:[#allocation12 + $0x310] sm:$0xff]
    %v6920 = vld [vmem:[#allocation12 + $0x318] sm:$0xff]
    %v6921 = vld [vmem:[#allocation12 + $0x320] sm:$0xff]
    %v6922 = vld [vmem:[#allocation12 + $0x328] sm:$0xff]
    %v6923 = vld [vmem:[#allocation12 + $0x330] sm:$0xff]
    %v6924 = vld [vmem:[#allocation12 + $0x338] sm:$0xff]
    %v6925 = vld [vmem:[#allocation12 + $0x340] sm:$0xff]
    %v6926 = vld [vmem:[#allocation12 + $0x348] sm:$0xff]
    %v6927 = vld [vmem:[#allocation12 + $0x350] sm:$0xff]
    %v6928 = vld [vmem:[#allocation12 + $0x358] sm:$0xff]
    %v6929 = vld [vmem:[#allocation12 + $0x360] sm:$0xff]
    %v6930 = vld [vmem:[#allocation12 + $0x368] sm:$0xff]
    %v6931 = vld [vmem:[#allocation12 + $0x370] sm:$0xff]
    %v6932 = vld [vmem:[#allocation12 + $0x378] sm:$0xff]
    %v6933 = vld [vmem:[#allocation12 + $0x380] sm:$0xff]
    %v6934 = vld [vmem:[#allocation12 + $0x388] sm:$0xff]
    %v6935 = vld [vmem:[#allocation12 + $0x390] sm:$0xff]
    %v6936 = vld [vmem:[#allocation12 + $0x398] sm:$0xff]
    %v6937 = vld [vmem:[#allocation12 + $0x3a0] sm:$0xff]
    %v6938 = vld [vmem:[#allocation12 + $0x3a8] sm:$0xff]
    %v6939 = vld [vmem:[#allocation12 + $0x3b0] sm:$0xff]
    %v6940 = vld [vmem:[#allocation12 + $0x3b8] sm:$0xff]
    %v6941 = vld [vmem:[#allocation12 + $0x3c0] sm:$0xff]
    %v6942 = vld [vmem:[#allocation12 + $0x3c8] sm:$0xff]
    %v6943 = vld [vmem:[#allocation12 + $0x3d0] sm:$0xff]
    %v6944 = vld [vmem:[#allocation12 + $0x3d8] sm:$0xff]
    %v6945 = vld [vmem:[#allocation12 + $0x3e0] sm:$0xff]
    %v6946 = vld [vmem:[#allocation12 + $0x3e8] sm:$0xff]
    %v6947 = vld [vmem:[#allocation12 + $0x3f0] sm:$0xff]
    %v6948 = vld [vmem:[#allocation12 + $0x3f8] sm:$0xff]
    %v6949 = vld [vmem:[#allocation12 + $0x400] sm:$0xff]
    %v6950 = vld [vmem:[#allocation12 + $0x408] sm:$0xff]
    %v6951 = vld [vmem:[#allocation12 + $0x410] sm:$0xff]
    %v6952 = vld [vmem:[#allocation12 + $0x418] sm:$0xff]
    %v6953 = vld [vmem:[#allocation12 + $0x420] sm:$0xff]
    %v6954 = vld [vmem:[#allocation12 + $0x428] sm:$0xff]
    %v6955 = vld [vmem:[#allocation12 + $0x430] sm:$0xff]
    %v6956 = vld [vmem:[#allocation12 + $0x438] sm:$0xff]
    %v6957 = vld [vmem:[#allocation12 + $0x440] sm:$0xff]
    %v6958 = vld [vmem:[#allocation12 + $0x448] sm:$0xff]
    %v6959 = vld [vmem:[#allocation12 + $0x450] sm:$0xff]
    %v6960 = vld [vmem:[#allocation12 + $0x458] sm:$0xff]
    %v6961 = vld [vmem:[#allocation12 + $0x460] sm:$0xff]
    %v6962 = vld [vmem:[#allocation12 + $0x468] sm:$0xff]
    %v6963 = vld [vmem:[#allocation12 + $0x470] sm:$0xff]
    %v6964 = vld [vmem:[#allocation12 + $0x478] sm:$0xff]
    %v6965 = vld [vmem:[#allocation12 + $0x480] sm:$0xff]
    %v6966 = vld [vmem:[#allocation12 + $0x488] sm:$0xff]
    %v6967 = vld [vmem:[#allocation12 + $0x490] sm:$0xff]
    %v6968 = vld [vmem:[#allocation12 + $0x498] sm:$0xff]
    %v6969 = vld [vmem:[#allocation12 + $0x4a0] sm:$0xff]
    %v6970 = vld [vmem:[#allocation12 + $0x4a8] sm:$0xff]
    %v6971 = vld [vmem:[#allocation12 + $0x4b0] sm:$0xff]
    %v6972 = vld [vmem:[#allocation12 + $0x4b8] sm:$0xff]
    %v6973 = vld [vmem:[#allocation12 + $0x4c0] sm:$0xff]
    %v6974 = vld [vmem:[#allocation12 + $0x4c8] sm:$0xff]
    %v6975 = vld [vmem:[#allocation12 + $0x4d0] sm:$0xff]
    %v6976 = vld [vmem:[#allocation12 + $0x4d8] sm:$0xff]
    %v6977 = vld [vmem:[#allocation12 + $0x4e0] sm:$0xff]
    %v6978 = vld [vmem:[#allocation12 + $0x4e8] sm:$0xff]
    %v6979 = vld [vmem:[#allocation12 + $0x4f0] sm:$0xff]
    %v6980 = vld [vmem:[#allocation12 + $0x4f8] sm:$0xff]
    %v6981 = vld [vmem:[#allocation12 + $0x500] sm:$0xff]
    %v6982 = vld [vmem:[#allocation12 + $0x508] sm:$0xff]
    %v6983 = vld [vmem:[#allocation12 + $0x510] sm:$0xff]
    %v6984 = vld [vmem:[#allocation12 + $0x518] sm:$0xff]
    %v6985 = vld [vmem:[#allocation12 + $0x520] sm:$0xff]
    %v6986 = vld [vmem:[#allocation12 + $0x528] sm:$0xff]
    %v6987 = vld [vmem:[#allocation12 + $0x530] sm:$0xff]
    %v6988 = vld [vmem:[#allocation12 + $0x538] sm:$0xff]
    %v6989 = vld [vmem:[#allocation12 + $0x540] sm:$0xff]
    %v6990 = vld [vmem:[#allocation12 + $0x548] sm:$0xff]
    %v6991 = vld [vmem:[#allocation12 + $0x550] sm:$0xff]
    %v6992 = vld [vmem:[#allocation12 + $0x558] sm:$0xff]
    %v6993 = vld [vmem:[#allocation12 + $0x560] sm:$0xff]
    %v6994 = vld [vmem:[#allocation12 + $0x568] sm:$0xff]
    %v6995 = vld [vmem:[#allocation12 + $0x570] sm:$0xff]
    %v6996 = vld [vmem:[#allocation12 + $0x578] sm:$0xff]
    %v6997 = vld [vmem:[#allocation12 + $0x580] sm:$0xff]
    %v6998 = vld [vmem:[#allocation12 + $0x588] sm:$0xff]
    %v6999 = vld [vmem:[#allocation12 + $0x590] sm:$0xff]
    %v7000 = vld [vmem:[#allocation12 + $0x598] sm:$0xff]
    %v7001 = vld [vmem:[#allocation12 + $0x5a0] sm:$0xff]
    %v7002 = vld [vmem:[#allocation12 + $0x5a8] sm:$0xff]
    %v7003 = vld [vmem:[#allocation12 + $0x5b0] sm:$0xff]
    %v7004 = vld [vmem:[#allocation12 + $0x5b8] sm:$0xff]
    %v7005 = vld [vmem:[#allocation12 + $0x5c0] sm:$0xff]
    %v7006 = vld [vmem:[#allocation12 + $0x5c8] sm:$0xff]
    %v7007 = vld [vmem:[#allocation12 + $0x5d0] sm:$0xff]
    %v7008 = vld [vmem:[#allocation12 + $0x5d8] sm:$0xff]
    %v7009 = vld [vmem:[#allocation12 + $0x5e0] sm:$0xff]
    %v7010 = vld [vmem:[#allocation12 + $0x5e8] sm:$0xff]
    %v7011 = vld [vmem:[#allocation12 + $0x5f0] sm:$0xff]
    %v7012 = vld [vmem:[#allocation12 + $0x5f8] sm:$0xff]
    %v7013 = vld [vmem:[#allocation12 + $0x600] sm:$0xff]
    %v7014 = vld [vmem:[#allocation12 + $0x608] sm:$0xff]
    %v7015 = vld [vmem:[#allocation12 + $0x610] sm:$0xff]
    %v7016 = vld [vmem:[#allocation12 + $0x618] sm:$0xff]
    %v7017 = vld [vmem:[#allocation12 + $0x620] sm:$0xff]
    %v7018 = vld [vmem:[#allocation12 + $0x628] sm:$0xff]
    %v7019 = vld [vmem:[#allocation12 + $0x630] sm:$0xff]
    %v7020 = vld [vmem:[#allocation12 + $0x638] sm:$0xff]
    %v7021 = vld [vmem:[#allocation12 + $0x640] sm:$0xff]
    %v7022 = vld [vmem:[#allocation12 + $0x648] sm:$0xff]
    %v7023 = vld [vmem:[#allocation12 + $0x650] sm:$0xff]
    %v7024 = vld [vmem:[#allocation12 + $0x658] sm:$0xff]
    %v7025 = vld [vmem:[#allocation12 + $0x660] sm:$0xff]
    %v7026 = vld [vmem:[#allocation12 + $0x668] sm:$0xff]
    %v7027 = vld [vmem:[#allocation12 + $0x670] sm:$0xff]
    %v7028 = vld [vmem:[#allocation12 + $0x678] sm:$0xff]
    %v7029 = vld [vmem:[#allocation12 + $0x680] sm:$0xff]
    %v7030 = vld [vmem:[#allocation12 + $0x688] sm:$0xff]
    %v7031 = vld [vmem:[#allocation12 + $0x690] sm:$0xff]
    %v7032 = vld [vmem:[#allocation12 + $0x698] sm:$0xff]
    %v7033 = vld [vmem:[#allocation12 + $0x6a0] sm:$0xff]
    %v7034 = vld [vmem:[#allocation12 + $0x6a8] sm:$0xff]
    %v7035 = vld [vmem:[#allocation12 + $0x6b0] sm:$0xff]
    %v7036 = vld [vmem:[#allocation12 + $0x6b8] sm:$0xff]
    %v7037 = vld [vmem:[#allocation12 + $0x6c0] sm:$0xff]
    %v7038 = vld [vmem:[#allocation12 + $0x6c8] sm:$0xff]
    %v7039 = vld [vmem:[#allocation12 + $0x6d0] sm:$0xff]
    %v7040 = vld [vmem:[#allocation12 + $0x6d8] sm:$0xff]
    %v7041 = vld [vmem:[#allocation12 + $0x6e0] sm:$0xff]
    %v7042 = vld [vmem:[#allocation12 + $0x6e8] sm:$0xff]
    %v7043 = vld [vmem:[#allocation12 + $0x6f0] sm:$0xff]
    %v7044 = vld [vmem:[#allocation12 + $0x6f8] sm:$0xff]
    %v7045 = vld [vmem:[#allocation12 + $0x700] sm:$0xff]
    %v7046 = vld [vmem:[#allocation12 + $0x708] sm:$0xff]
    %v7047 = vld [vmem:[#allocation12 + $0x710] sm:$0xff]
    %v7048 = vld [vmem:[#allocation12 + $0x718] sm:$0xff]
    %v7049 = vld [vmem:[#allocation12 + $0x720] sm:$0xff]
    %v7050 = vld [vmem:[#allocation12 + $0x728] sm:$0xff]
    %v7051 = vld [vmem:[#allocation12 + $0x730] sm:$0xff]
    %v7052 = vld [vmem:[#allocation12 + $0x738] sm:$0xff]
    %v7053 = vld [vmem:[#allocation12 + $0x740] sm:$0xff]
    %v7054 = vld [vmem:[#allocation12 + $0x748] sm:$0xff]
    %v7055 = vld [vmem:[#allocation12 + $0x750] sm:$0xff]
    %v7056 = vld [vmem:[#allocation12 + $0x758] sm:$0xff]
    %v7057 = vld [vmem:[#allocation12 + $0x760] sm:$0xff]
    %v7058 = vld [vmem:[#allocation12 + $0x768] sm:$0xff]
    %v7059 = vld [vmem:[#allocation12 + $0x770] sm:$0xff]
    %v7060 = vld [vmem:[#allocation12 + $0x778] sm:$0xff]
    %v7061 = vld [vmem:[#allocation12 + $0x780] sm:$0xff]
    %v7062 = vld [vmem:[#allocation12 + $0x788] sm:$0xff]
    %v7063 = vld [vmem:[#allocation12 + $0x790] sm:$0xff]
    %v7064 = vld [vmem:[#allocation12 + $0x798] sm:$0xff]
    %v7065 = vld [vmem:[#allocation12 + $0x7a0] sm:$0xff]
    %v7066 = vld [vmem:[#allocation12 + $0x7a8] sm:$0xff]
    %v7067 = vld [vmem:[#allocation12 + $0x7b0] sm:$0xff]
    %v7068 = vld [vmem:[#allocation12 + $0x7b8] sm:$0xff]
    %v7069 = vld [vmem:[#allocation12 + $0x7c0] sm:$0xff]
    %v7070 = vld [vmem:[#allocation12 + $0x7c8] sm:$0xff]
    %v7071 = vld [vmem:[#allocation12 + $0x7d0] sm:$0xff]
    %v7072 = vld [vmem:[#allocation12 + $0x7d8] sm:$0xff]
    %v7073 = vld [vmem:[#allocation12 + $0x7e0] sm:$0xff]
    %v7074 = vld [vmem:[#allocation12 + $0x7e8] sm:$0xff]
    %v7075 = vld [vmem:[#allocation12 + $0x7f0] sm:$0xff]
    %v7076 = vld [vmem:[#allocation12 + $0x7f8] sm:$0xff]
    %v7077 = vld [vmem:[#allocation12 + $0x800] sm:$0xff]
    %v7078 = vld [vmem:[#allocation12 + $0x808] sm:$0xff]
    %v7079 = vld [vmem:[#allocation12 + $0x810] sm:$0xff]
    %v7080 = vld [vmem:[#allocation12 + $0x818] sm:$0xff]
    %v7081 = vld [vmem:[#allocation12 + $0x820] sm:$0xff]
    %v7082 = vld [vmem:[#allocation12 + $0x828] sm:$0xff]
    %v7083 = vld [vmem:[#allocation12 + $0x830] sm:$0xff]
    %v7084 = vld [vmem:[#allocation12 + $0x838] sm:$0xff]
    %v7085 = vld [vmem:[#allocation12 + $0x840] sm:$0xff]
    %v7086 = vld [vmem:[#allocation12 + $0x848] sm:$0xff]
    %v7087 = vld [vmem:[#allocation12 + $0x850] sm:$0xff]
    %v7088 = vld [vmem:[#allocation12 + $0x858] sm:$0xff]
    %v7089 = vld [vmem:[#allocation12 + $0x860] sm:$0xff]
    %v7090 = vld [vmem:[#allocation12 + $0x868] sm:$0xff]
    %v7091 = vld [vmem:[#allocation12 + $0x870] sm:$0xff]
    %v7092 = vld [vmem:[#allocation12 + $0x878] sm:$0xff]
    %v7093 = vld [vmem:[#allocation12 + $0x880] sm:$0xff]
    %v7094 = vld [vmem:[#allocation12 + $0x888] sm:$0xff]
    %v7095 = vld [vmem:[#allocation12 + $0x890] sm:$0xff]
    %v7096 = vld [vmem:[#allocation12 + $0x898] sm:$0xff]
    %v7097 = vld [vmem:[#allocation12 + $0x8a0] sm:$0xff]
    %v7098 = vld [vmem:[#allocation12 + $0x8a8] sm:$0xff]
    %v7099 = vld [vmem:[#allocation12 + $0x8b0] sm:$0xff]
    %v7100 = vld [vmem:[#allocation12 + $0x8b8] sm:$0xff]
    %v7101 = vld [vmem:[#allocation12 + $0x8c0] sm:$0xff]
    %v7102 = vld [vmem:[#allocation12 + $0x8c8] sm:$0xff]
    %v7103 = vld [vmem:[#allocation12 + $0x8d0] sm:$0xff]
    %v7104 = vld [vmem:[#allocation12 + $0x8d8] sm:$0xff]
    %v7105 = vld [vmem:[#allocation12 + $0x8e0] sm:$0xff]
    %v7106 = vld [vmem:[#allocation12 + $0x8e8] sm:$0xff]
    %v7107 = vld [vmem:[#allocation12 + $0x8f0] sm:$0xff]
    %v7108 = vld [vmem:[#allocation12 + $0x8f8] sm:$0xff]
    %v7109 = vld [vmem:[#allocation12 + $0x900] sm:$0xff]
    %v7110 = vld [vmem:[#allocation12 + $0x908] sm:$0xff]
    %v7111 = vld [vmem:[#allocation12 + $0x910] sm:$0xff]
    %v7112 = vld [vmem:[#allocation12 + $0x918] sm:$0xff]
    %v7113 = vld [vmem:[#allocation12 + $0x920] sm:$0xff]
    %v7114 = vld [vmem:[#allocation12 + $0x928] sm:$0xff]
    %v7115 = vld [vmem:[#allocation12 + $0x930] sm:$0xff]
    %v7116 = vld [vmem:[#allocation12 + $0x938] sm:$0xff]
    %v7117 = vld [vmem:[#allocation12 + $0x940] sm:$0xff]
    %v7118 = vld [vmem:[#allocation12 + $0x948] sm:$0xff]
    %v7119 = vld [vmem:[#allocation12 + $0x950] sm:$0xff]
    %v7120 = vld [vmem:[#allocation12 + $0x958] sm:$0xff]
    %v7121 = vld [vmem:[#allocation12 + $0x960] sm:$0xff]
    %v7122 = vld [vmem:[#allocation12 + $0x968] sm:$0xff]
    %v7123 = vld [vmem:[#allocation12 + $0x970] sm:$0xff]
    %v7124 = vld [vmem:[#allocation12 + $0x978] sm:$0xff]
    %v7125 = vld [vmem:[#allocation12 + $0x980] sm:$0xff]
    %v7126 = vld [vmem:[#allocation12 + $0x988] sm:$0xff]
    %v7127 = vld [vmem:[#allocation12 + $0x990] sm:$0xff]
    %v7128 = vld [vmem:[#allocation12 + $0x998] sm:$0xff]
    %v7129 = vld [vmem:[#allocation12 + $0x9a0] sm:$0xff]
    %v7130 = vld [vmem:[#allocation12 + $0x9a8] sm:$0xff]
    %v7131 = vld [vmem:[#allocation12 + $0x9b0] sm:$0xff]
    %v7132 = vld [vmem:[#allocation12 + $0x9b8] sm:$0xff]
    %v7133 = vld [vmem:[#allocation12 + $0x9c0] sm:$0xff]
    %v7134 = vld [vmem:[#allocation12 + $0x9c8] sm:$0xff]
    %v7135 = vld [vmem:[#allocation12 + $0x9d0] sm:$0xff]
    %v7136 = vld [vmem:[#allocation12 + $0x9d8] sm:$0xff]
    %v7137 = vld [vmem:[#allocation12 + $0x9e0] sm:$0xff]
    %v7138 = vld [vmem:[#allocation12 + $0x9e8] sm:$0xff]
    %v7139 = vld [vmem:[#allocation12 + $0x9f0] sm:$0xff]
    %v7140 = vld [vmem:[#allocation12 + $0x9f8] sm:$0xff]
    %v7141 = vld [vmem:[#allocation12 + $0xa00] sm:$0xff]
    %v7142 = vld [vmem:[#allocation12 + $0xa08] sm:$0xff]
    %v7143 = vld [vmem:[#allocation12 + $0xa10] sm:$0xff]
    %v7144 = vld [vmem:[#allocation12 + $0xa18] sm:$0xff]
    %v7145 = vld [vmem:[#allocation12 + $0xa20] sm:$0xff]
    %v7146 = vld [vmem:[#allocation12 + $0xa28] sm:$0xff]
    %v7147 = vld [vmem:[#allocation12 + $0xa30] sm:$0xff]
    %v7148 = vld [vmem:[#allocation12 + $0xa38] sm:$0xff]
    %v7149 = vld [vmem:[#allocation12 + $0xa40] sm:$0xff]
    %v7150 = vld [vmem:[#allocation12 + $0xa48] sm:$0xff]
    %v7151 = vld [vmem:[#allocation12 + $0xa50] sm:$0xff]
    %v7152 = vld [vmem:[#allocation12 + $0xa58] sm:$0xff]
    %v7153 = vld [vmem:[#allocation12 + $0xa60] sm:$0xff]
    %v7154 = vld [vmem:[#allocation12 + $0xa68] sm:$0xff]
    %v7155 = vld [vmem:[#allocation12 + $0xa70] sm:$0xff]
    %v7156 = vld [vmem:[#allocation12 + $0xa78] sm:$0xff]
    %v7157 = vld [vmem:[#allocation12 + $0xa80] sm:$0xff]
    %v7158 = vld [vmem:[#allocation12 + $0xa88] sm:$0xff]
    %v7159 = vld [vmem:[#allocation12 + $0xa90] sm:$0xff]
    %v7160 = vld [vmem:[#allocation12 + $0xa98] sm:$0xff]
    %v7161 = vld [vmem:[#allocation12 + $0xaa0] sm:$0xff]
    %v7162 = vld [vmem:[#allocation12 + $0xaa8] sm:$0xff]
    %v7163 = vld [vmem:[#allocation12 + $0xab0] sm:$0xff]
    %v7164 = vld [vmem:[#allocation12 + $0xab8] sm:$0xff]
    %v7165 = vld [vmem:[#allocation12 + $0xac0] sm:$0xff]
    %v7166 = vld [vmem:[#allocation12 + $0xac8] sm:$0xff]
    %v7167 = vld [vmem:[#allocation12 + $0xad0] sm:$0xff]
    %v7168 = vld [vmem:[#allocation12 + $0xad8] sm:$0xff]
    %v7169 = vld [vmem:[#allocation12 + $0xae0] sm:$0xff]
    %v7170 = vld [vmem:[#allocation12 + $0xae8] sm:$0xff]
    %v7171 = vld [vmem:[#allocation12 + $0xaf0] sm:$0xff]
    %v7172 = vld [vmem:[#allocation12 + $0xaf8] sm:$0xff]
    %v7173 = vld [vmem:[#allocation12 + $0xb00] sm:$0xff]
    %v7174 = vld [vmem:[#allocation12 + $0xb08] sm:$0xff]
    %v7175 = vld [vmem:[#allocation12 + $0xb10] sm:$0xff]
    %v7176 = vld [vmem:[#allocation12 + $0xb18] sm:$0xff]
    %v7177 = vld [vmem:[#allocation12 + $0xb20] sm:$0xff]
    %v7178 = vld [vmem:[#allocation12 + $0xb28] sm:$0xff]
    %v7179 = vld [vmem:[#allocation12 + $0xb30] sm:$0xff]
    %v7180 = vld [vmem:[#allocation12 + $0xb38] sm:$0xff]
    %v7181 = vld [vmem:[#allocation12 + $0xb40] sm:$0xff]
    %v7182 = vld [vmem:[#allocation12 + $0xb48] sm:$0xff]
    %v7183 = vld [vmem:[#allocation12 + $0xb50] sm:$0xff]
    %v7184 = vld [vmem:[#allocation12 + $0xb58] sm:$0xff]
    %v7185 = vld [vmem:[#allocation12 + $0xb60] sm:$0xff]
    %v7186 = vld [vmem:[#allocation12 + $0xb68] sm:$0xff]
    %v7187 = vld [vmem:[#allocation12 + $0xb70] sm:$0xff]
    %v7188 = vld [vmem:[#allocation12 + $0xb78] sm:$0xff]
    %v7189 = vld [vmem:[#allocation12 + $0xb80] sm:$0xff]
    %v7190 = vld [vmem:[#allocation12 + $0xb88] sm:$0xff]
    %v7191 = vld [vmem:[#allocation12 + $0xb90] sm:$0xff]
    %v7192 = vld [vmem:[#allocation12 + $0xb98] sm:$0xff]
    %v7193 = vld [vmem:[#allocation12 + $0xba0] sm:$0xff]
    %v7194 = vld [vmem:[#allocation12 + $0xba8] sm:$0xff]
    %v7195 = vld [vmem:[#allocation12 + $0xbb0] sm:$0xff]
    %v7196 = vld [vmem:[#allocation12 + $0xbb8] sm:$0xff]
    %v7197 = vld [vmem:[#allocation12 + $0xbc0] sm:$0xff]
    %v7198 = vld [vmem:[#allocation12 + $0xbc8] sm:$0xff]
    %v7199 = vld [vmem:[#allocation12 + $0xbd0] sm:$0xff]
    %v7200 = vld [vmem:[#allocation12 + $0xbd8] sm:$0xff]
    %v7201 = vld [vmem:[#allocation12 + $0xbe0] sm:$0xff]
    %v7202 = vld [vmem:[#allocation12 + $0xbe8] sm:$0xff]
    %v7203 = vld [vmem:[#allocation12 + $0xbf0] sm:$0xff]
    %v7204 = vld [vmem:[#allocation12 + $0xbf8] sm:$0xff]
    %v7205 = vld [vmem:[#allocation13] sm:$0x3f]
    %v7207 = vlaneseq
    %v7208 = vshrl.u32 %v7207, 7
    %v7209 = vsub.s32 0, %v7208
    %v7210 = vrot.slane %v7205, %v7209
    %v7211 = vlaneseq
    %v7212 = vshrl.u32 %v7211, 7
    %v7213 = vsub.s32 1, %v7212
    %v7214 = vrot.slane %v7205, %v7213
    %v7215 = vlaneseq
    %v7216 = vshrl.u32 %v7215, 7
    %v7217 = vsub.s32 2, %v7216
    %v7218 = vrot.slane %v7205, %v7217
    %v7219 = vlaneseq
    %v7220 = vshrl.u32 %v7219, 7
    %v7221 = vsub.s32 3, %v7220
    %v7222 = vrot.slane %v7205, %v7221
    %v7223 = vlaneseq
    %v7224 = vshrl.u32 %v7223, 7
    %v7225 = vsub.s32 4, %v7224
    %v7226 = vrot.slane %v7205, %v7225
    %v7227 = vlaneseq
    %v7228 = vshrl.u32 %v7227, 7
    %v7229 = vsub.s32 5, %v7228
    %v7230 = vrot.slane %v7205, %v7229
    %v7621 = vunpack.c.l.b16 %v6821
    %v7622 = vunpack.c.h.b16 %v6821
    %v7623 = vunpack.c.l.b16 %v6822
    %v7624 = vunpack.c.h.b16 %v6822
    %v7625 = vunpack.c.l.b16 %v6823
    %v7626 = vunpack.c.h.b16 %v6823
    %v7627 = vunpack.c.l.b16 %v6824
    %v7628 = vunpack.c.h.b16 %v6824
    %v7629 = vunpack.c.l.b16 %v6825
    %v7630 = vunpack.c.h.b16 %v6825
    %v7631 = vunpack.c.l.b16 %v6826
    %v7632 = vunpack.c.h.b16 %v6826
    %v7633 = vunpack.c.l.b16 %v6827
    %v7634 = vunpack.c.h.b16 %v6827
    %v7635 = vunpack.c.l.b16 %v6828
    %v7636 = vunpack.c.h.b16 %v6828
    %v7637 = vunpack.c.l.b16 %v6829
    %v7638 = vunpack.c.h.b16 %v6829
    %v7639 = vunpack.c.l.b16 %v6830
    %v7640 = vunpack.c.h.b16 %v6830
    %v7641 = vunpack.c.l.b16 %v6831
    %v7642 = vunpack.c.h.b16 %v6831
    %v7643 = vunpack.c.l.b16 %v6832
    %v7644 = vunpack.c.h.b16 %v6832
    %v7645 = vunpack.c.l.b16 %v6833
    %v7646 = vunpack.c.h.b16 %v6833
    %v7647 = vunpack.c.l.b16 %v6834
    %v7648 = vunpack.c.h.b16 %v6834
    %v7649 = vunpack.c.l.b16 %v6835
    %v7650 = vunpack.c.h.b16 %v6835
    %v7651 = vunpack.c.l.b16 %v6836
    %v7652 = vunpack.c.h.b16 %v6836
    %v7653 = vunpack.c.l.b16 %v6837
    %v7654 = vunpack.c.h.b16 %v6837
    %v7655 = vunpack.c.l.b16 %v6838
    %v7656 = vunpack.c.h.b16 %v6838
    %v7657 = vunpack.c.l.b16 %v6839
    %v7658 = vunpack.c.h.b16 %v6839
    %v7659 = vunpack.c.l.b16 %v6840
    %v7660 = vunpack.c.h.b16 %v6840
    %v7661 = vunpack.c.l.b16 %v6841
    %v7662 = vunpack.c.h.b16 %v6841
    %v7663 = vunpack.c.l.b16 %v6842
    %v7664 = vunpack.c.h.b16 %v6842
    %v7665 = vunpack.c.l.b16 %v6843
    %v7666 = vunpack.c.h.b16 %v6843
    %v7667 = vunpack.c.l.b16 %v6844
    %v7668 = vunpack.c.h.b16 %v6844
    %v7669 = vunpack.c.l.b16 %v6845
    %v7670 = vunpack.c.h.b16 %v6845
    %v7671 = vunpack.c.l.b16 %v6846
    %v7672 = vunpack.c.h.b16 %v6846
    %v7673 = vunpack.c.l.b16 %v6847
    %v7674 = vunpack.c.h.b16 %v6847
    %v7675 = vunpack.c.l.b16 %v6848
    %v7676 = vunpack.c.h.b16 %v6848
    %v7677 = vunpack.c.l.b16 %v6849
    %v7678 = vunpack.c.h.b16 %v6849
    %v7679 = vunpack.c.l.b16 %v6850
    %v7680 = vunpack.c.h.b16 %v6850
    %v7681 = vunpack.c.l.b16 %v6851
    %v7682 = vunpack.c.h.b16 %v6851
    %v7683 = vunpack.c.l.b16 %v6852
    %v7684 = vunpack.c.h.b16 %v6852
    %v7685 = vunpack.c.l.b16 %v6853
    %v7686 = vunpack.c.h.b16 %v6853
    %v7687 = vunpack.c.l.b16 %v6854
    %v7688 = vunpack.c.h.b16 %v6854
    %v7689 = vunpack.c.l.b16 %v6855
    %v7690 = vunpack.c.h.b16 %v6855
    %v7691 = vunpack.c.l.b16 %v6856
    %v7692 = vunpack.c.h.b16 %v6856
    %v7693 = vunpack.c.l.b16 %v6857
    %v7694 = vunpack.c.h.b16 %v6857
    %v7695 = vunpack.c.l.b16 %v6858
    %v7696 = vunpack.c.h.b16 %v6858
    %v7697 = vunpack.c.l.b16 %v6859
    %v7698 = vunpack.c.h.b16 %v6859
    %v7699 = vunpack.c.l.b16 %v6860
    %v7700 = vunpack.c.h.b16 %v6860
    %v7701 = vunpack.c.l.b16 %v6861
    %v7702 = vunpack.c.h.b16 %v6861
    %v7703 = vunpack.c.l.b16 %v6862
    %v7704 = vunpack.c.h.b16 %v6862
    %v7705 = vunpack.c.l.b16 %v6863
    %v7706 = vunpack.c.h.b16 %v6863
    %v7707 = vunpack.c.l.b16 %v6864
    %v7708 = vunpack.c.h.b16 %v6864
    %v7709 = vunpack.c.l.b16 %v6865
    %v7710 = vunpack.c.h.b16 %v6865
    %v7711 = vunpack.c.l.b16 %v6866
    %v7712 = vunpack.c.h.b16 %v6866
    %v7713 = vunpack.c.l.b16 %v6867
    %v7714 = vunpack.c.h.b16 %v6867
    %v7715 = vunpack.c.l.b16 %v6868
    %v7716 = vunpack.c.h.b16 %v6868
    %v7717 = vunpack.c.l.b16 %v6869
    %v7718 = vunpack.c.h.b16 %v6869
    %v7719 = vunpack.c.l.b16 %v6870
    %v7720 = vunpack.c.h.b16 %v6870
    %v7721 = vunpack.c.l.b16 %v6871
    %v7722 = vunpack.c.h.b16 %v6871
    %v7723 = vunpack.c.l.b16 %v6872
    %v7724 = vunpack.c.h.b16 %v6872
    %v7725 = vunpack.c.l.b16 %v6873
    %v7726 = vunpack.c.h.b16 %v6873
    %v7727 = vunpack.c.l.b16 %v6874
    %v7728 = vunpack.c.h.b16 %v6874
    %v7729 = vunpack.c.l.b16 %v6875
    %v7730 = vunpack.c.h.b16 %v6875
    %v7731 = vunpack.c.l.b16 %v6876
    %v7732 = vunpack.c.h.b16 %v6876
    %v7733 = vunpack.c.l.b16 %v6877
    %v7734 = vunpack.c.h.b16 %v6877
    %v7735 = vunpack.c.l.b16 %v6878
    %v7736 = vunpack.c.h.b16 %v6878
    %v7737 = vunpack.c.l.b16 %v6879
    %v7738 = vunpack.c.h.b16 %v6879
    %v7739 = vunpack.c.l.b16 %v6880
    %v7740 = vunpack.c.h.b16 %v6880
    %v7741 = vunpack.c.l.b16 %v6881
    %v7742 = vunpack.c.h.b16 %v6881
    %v7743 = vunpack.c.l.b16 %v6882
    %v7744 = vunpack.c.h.b16 %v6882
    %v7745 = vunpack.c.l.b16 %v6883
    %v7746 = vunpack.c.h.b16 %v6883
    %v7747 = vunpack.c.l.b16 %v6884
    %v7748 = vunpack.c.h.b16 %v6884
    %v7749 = vunpack.c.l.b16 %v6885
    %v7750 = vunpack.c.h.b16 %v6885
    %v7751 = vunpack.c.l.b16 %v6886
    %v7752 = vunpack.c.h.b16 %v6886
    %v7753 = vunpack.c.l.b16 %v6887
    %v7754 = vunpack.c.h.b16 %v6887
    %v7755 = vunpack.c.l.b16 %v6888
    %v7756 = vunpack.c.h.b16 %v6888
    %v7757 = vunpack.c.l.b16 %v6889
    %v7758 = vunpack.c.h.b16 %v6889
    %v7759 = vunpack.c.l.b16 %v6890
    %v7760 = vunpack.c.h.b16 %v6890
    %v7761 = vunpack.c.l.b16 %v6891
    %v7762 = vunpack.c.h.b16 %v6891
    %v7763 = vunpack.c.l.b16 %v6892
    %v7764 = vunpack.c.h.b16 %v6892
    %v7765 = vunpack.c.l.b16 %v6893
    %v7766 = vunpack.c.h.b16 %v6893
    %v7767 = vunpack.c.l.b16 %v6894
    %v7768 = vunpack.c.h.b16 %v6894
    %v7769 = vunpack.c.l.b16 %v6895
    %v7770 = vunpack.c.h.b16 %v6895
    %v7771 = vunpack.c.l.b16 %v6896
    %v7772 = vunpack.c.h.b16 %v6896
    %v7773 = vunpack.c.l.b16 %v6897
    %v7774 = vunpack.c.h.b16 %v6897
    %v7775 = vunpack.c.l.b16 %v6898
    %v7776 = vunpack.c.h.b16 %v6898
    %v7777 = vunpack.c.l.b16 %v6899
    %v7778 = vunpack.c.h.b16 %v6899
    %v7779 = vunpack.c.l.b16 %v6900
    %v7780 = vunpack.c.h.b16 %v6900
    %v7781 = vunpack.c.l.b16 %v6901
    %v7782 = vunpack.c.h.b16 %v6901
    %v7783 = vunpack.c.l.b16 %v6902
    %v7784 = vunpack.c.h.b16 %v6902
    %v7785 = vunpack.c.l.b16 %v6903
    %v7786 = vunpack.c.h.b16 %v6903
    %v7787 = vunpack.c.l.b16 %v6904
    %v7788 = vunpack.c.h.b16 %v6904
    %v7789 = vunpack.c.l.b16 %v6905
    %v7790 = vunpack.c.h.b16 %v6905
    %v7791 = vunpack.c.l.b16 %v6906
    %v7792 = vunpack.c.h.b16 %v6906
    %v7793 = vunpack.c.l.b16 %v6907
    %v7794 = vunpack.c.h.b16 %v6907
    %v7795 = vunpack.c.l.b16 %v6908
    %v7796 = vunpack.c.h.b16 %v6908
    %v7797 = vunpack.c.l.b16 %v6909
    %v7798 = vunpack.c.h.b16 %v6909
    %v7799 = vunpack.c.l.b16 %v6910
    %v7800 = vunpack.c.h.b16 %v6910
    %v7801 = vunpack.c.l.b16 %v6911
    %v7802 = vunpack.c.h.b16 %v6911
    %v7803 = vunpack.c.l.b16 %v6912
    %v7804 = vunpack.c.h.b16 %v6912
    %v7805 = vunpack.c.l.b16 %v6913
    %v7806 = vunpack.c.h.b16 %v6913
    %v7807 = vunpack.c.l.b16 %v6914
    %v7808 = vunpack.c.h.b16 %v6914
    %v7809 = vunpack.c.l.b16 %v6915
    %v7810 = vunpack.c.h.b16 %v6915
    %v7811 = vunpack.c.l.b16 %v6916
    %v7812 = vunpack.c.h.b16 %v6916
    %v7813 = vunpack.c.l.b16 %v6917
    %v7814 = vunpack.c.h.b16 %v6917
    %v7815 = vunpack.c.l.b16 %v6918
    %v7816 = vunpack.c.h.b16 %v6918
    %v7817 = vunpack.c.l.b16 %v6919
    %v7818 = vunpack.c.h.b16 %v6919
    %v7819 = vunpack.c.l.b16 %v6920
    %v7820 = vunpack.c.h.b16 %v6920
    %v7821 = vunpack.c.l.b16 %v6921
    %v7822 = vunpack.c.h.b16 %v6921
    %v7823 = vunpack.c.l.b16 %v6922
    %v7824 = vunpack.c.h.b16 %v6922
    %v7825 = vunpack.c.l.b16 %v6923
    %v7826 = vunpack.c.h.b16 %v6923
    %v7827 = vunpack.c.l.b16 %v6924
    %v7828 = vunpack.c.h.b16 %v6924
    %v7829 = vunpack.c.l.b16 %v6925
    %v7830 = vunpack.c.h.b16 %v6925
    %v7831 = vunpack.c.l.b16 %v6926
    %v7832 = vunpack.c.h.b16 %v6926
    %v7833 = vunpack.c.l.b16 %v6927
    %v7834 = vunpack.c.h.b16 %v6927
    %v7835 = vunpack.c.l.b16 %v6928
    %v7836 = vunpack.c.h.b16 %v6928
    %v7837 = vunpack.c.l.b16 %v6929
    %v7838 = vunpack.c.h.b16 %v6929
    %v7839 = vunpack.c.l.b16 %v6930
    %v7840 = vunpack.c.h.b16 %v6930
    %v7841 = vunpack.c.l.b16 %v6931
    %v7842 = vunpack.c.h.b16 %v6931
    %v7843 = vunpack.c.l.b16 %v6932
    %v7844 = vunpack.c.h.b16 %v6932
    %v7845 = vunpack.c.l.b16 %v6933
    %v7846 = vunpack.c.h.b16 %v6933
    %v7847 = vunpack.c.l.b16 %v6934
    %v7848 = vunpack.c.h.b16 %v6934
    %v7849 = vunpack.c.l.b16 %v6935
    %v7850 = vunpack.c.h.b16 %v6935
    %v7851 = vunpack.c.l.b16 %v6936
    %v7852 = vunpack.c.h.b16 %v6936
    %v7853 = vunpack.c.l.b16 %v6937
    %v7854 = vunpack.c.h.b16 %v6937
    %v7855 = vunpack.c.l.b16 %v6938
    %v7856 = vunpack.c.h.b16 %v6938
    %v7857 = vunpack.c.l.b16 %v6939
    %v7858 = vunpack.c.h.b16 %v6939
    %v7859 = vunpack.c.l.b16 %v6940
    %v7860 = vunpack.c.h.b16 %v6940
    %v7861 = vunpack.c.l.b16 %v6941
    %v7862 = vunpack.c.h.b16 %v6941
    %v7863 = vunpack.c.l.b16 %v6942
    %v7864 = vunpack.c.h.b16 %v6942
    %v7865 = vunpack.c.l.b16 %v6943
    %v7866 = vunpack.c.h.b16 %v6943
    %v7867 = vunpack.c.l.b16 %v6944
    %v7868 = vunpack.c.h.b16 %v6944
    %v7869 = vunpack.c.l.b16 %v6945
    %v7870 = vunpack.c.h.b16 %v6945
    %v7871 = vunpack.c.l.b16 %v6946
    %v7872 = vunpack.c.h.b16 %v6946
    %v7873 = vunpack.c.l.b16 %v6947
    %v7874 = vunpack.c.h.b16 %v6947
    %v7875 = vunpack.c.l.b16 %v6948
    %v7876 = vunpack.c.h.b16 %v6948
    %v7877 = vunpack.c.l.b16 %v6949
    %v7878 = vunpack.c.h.b16 %v6949
    %v7879 = vunpack.c.l.b16 %v6950
    %v7880 = vunpack.c.h.b16 %v6950
    %v7881 = vunpack.c.l.b16 %v6951
    %v7882 = vunpack.c.h.b16 %v6951
    %v7883 = vunpack.c.l.b16 %v6952
    %v7884 = vunpack.c.h.b16 %v6952
    %v7885 = vunpack.c.l.b16 %v6953
    %v7886 = vunpack.c.h.b16 %v6953
    %v7887 = vunpack.c.l.b16 %v6954
    %v7888 = vunpack.c.h.b16 %v6954
    %v7889 = vunpack.c.l.b16 %v6955
    %v7890 = vunpack.c.h.b16 %v6955
    %v7891 = vunpack.c.l.b16 %v6956
    %v7892 = vunpack.c.h.b16 %v6956
    %v7893 = vunpack.c.l.b16 %v6957
    %v7894 = vunpack.c.h.b16 %v6957
    %v7895 = vunpack.c.l.b16 %v6958
    %v7896 = vunpack.c.h.b16 %v6958
    %v7897 = vunpack.c.l.b16 %v6959
    %v7898 = vunpack.c.h.b16 %v6959
    %v7899 = vunpack.c.l.b16 %v6960
    %v7900 = vunpack.c.h.b16 %v6960
    %v7901 = vunpack.c.l.b16 %v6961
    %v7902 = vunpack.c.h.b16 %v6961
    %v7903 = vunpack.c.l.b16 %v6962
    %v7904 = vunpack.c.h.b16 %v6962
    %v7905 = vunpack.c.l.b16 %v6963
    %v7906 = vunpack.c.h.b16 %v6963
    %v7907 = vunpack.c.l.b16 %v6964
    %v7908 = vunpack.c.h.b16 %v6964
    %v7909 = vunpack.c.l.b16 %v6965
    %v7910 = vunpack.c.h.b16 %v6965
    %v7911 = vunpack.c.l.b16 %v6966
    %v7912 = vunpack.c.h.b16 %v6966
    %v7913 = vunpack.c.l.b16 %v6967
    %v7914 = vunpack.c.h.b16 %v6967
    %v7915 = vunpack.c.l.b16 %v6968
    %v7916 = vunpack.c.h.b16 %v6968
    %v7917 = vunpack.c.l.b16 %v6969
    %v7918 = vunpack.c.h.b16 %v6969
    %v7919 = vunpack.c.l.b16 %v6970
    %v7920 = vunpack.c.h.b16 %v6970
    %v7921 = vunpack.c.l.b16 %v6971
    %v7922 = vunpack.c.h.b16 %v6971
    %v7923 = vunpack.c.l.b16 %v6972
    %v7924 = vunpack.c.h.b16 %v6972
    %v7925 = vunpack.c.l.b16 %v6973
    %v7926 = vunpack.c.h.b16 %v6973
    %v7927 = vunpack.c.l.b16 %v6974
    %v7928 = vunpack.c.h.b16 %v6974
    %v7929 = vunpack.c.l.b16 %v6975
    %v7930 = vunpack.c.h.b16 %v6975
    %v7931 = vunpack.c.l.b16 %v6976
    %v7932 = vunpack.c.h.b16 %v6976
    %v7933 = vunpack.c.l.b16 %v6977
    %v7934 = vunpack.c.h.b16 %v6977
    %v7935 = vunpack.c.l.b16 %v6978
    %v7936 = vunpack.c.h.b16 %v6978
    %v7937 = vunpack.c.l.b16 %v6979
    %v7938 = vunpack.c.h.b16 %v6979
    %v7939 = vunpack.c.l.b16 %v6980
    %v7940 = vunpack.c.h.b16 %v6980
    %v7941 = vunpack.c.l.b16 %v6981
    %v7942 = vunpack.c.h.b16 %v6981
    %v7943 = vunpack.c.l.b16 %v6982
    %v7944 = vunpack.c.h.b16 %v6982
    %v7945 = vunpack.c.l.b16 %v6983
    %v7946 = vunpack.c.h.b16 %v6983
    %v7947 = vunpack.c.l.b16 %v6984
    %v7948 = vunpack.c.h.b16 %v6984
    %v7949 = vunpack.c.l.b16 %v6985
    %v7950 = vunpack.c.h.b16 %v6985
    %v7951 = vunpack.c.l.b16 %v6986
    %v7952 = vunpack.c.h.b16 %v6986
    %v7953 = vunpack.c.l.b16 %v6987
    %v7954 = vunpack.c.h.b16 %v6987
    %v7955 = vunpack.c.l.b16 %v6988
    %v7956 = vunpack.c.h.b16 %v6988
    %v7957 = vunpack.c.l.b16 %v6989
    %v7958 = vunpack.c.h.b16 %v6989
    %v7959 = vunpack.c.l.b16 %v6990
    %v7960 = vunpack.c.h.b16 %v6990
    %v7961 = vunpack.c.l.b16 %v6991
    %v7962 = vunpack.c.h.b16 %v6991
    %v7963 = vunpack.c.l.b16 %v6992
    %v7964 = vunpack.c.h.b16 %v6992
    %v7965 = vunpack.c.l.b16 %v6993
    %v7966 = vunpack.c.h.b16 %v6993
    %v7967 = vunpack.c.l.b16 %v6994
    %v7968 = vunpack.c.h.b16 %v6994
    %v7969 = vunpack.c.l.b16 %v6995
    %v7970 = vunpack.c.h.b16 %v6995
    %v7971 = vunpack.c.l.b16 %v6996
    %v7972 = vunpack.c.h.b16 %v6996
    %v7973 = vunpack.c.l.b16 %v6997
    %v7974 = vunpack.c.h.b16 %v6997
    %v7975 = vunpack.c.l.b16 %v6998
    %v7976 = vunpack.c.h.b16 %v6998
    %v7977 = vunpack.c.l.b16 %v6999
    %v7978 = vunpack.c.h.b16 %v6999
    %v7979 = vunpack.c.l.b16 %v7000
    %v7980 = vunpack.c.h.b16 %v7000
    %v7981 = vunpack.c.l.b16 %v7001
    %v7982 = vunpack.c.h.b16 %v7001
    %v7983 = vunpack.c.l.b16 %v7002
    %v7984 = vunpack.c.h.b16 %v7002
    %v7985 = vunpack.c.l.b16 %v7003
    %v7986 = vunpack.c.h.b16 %v7003
    %v7987 = vunpack.c.l.b16 %v7004
    %v7988 = vunpack.c.h.b16 %v7004
    %v7989 = vunpack.c.l.b16 %v7005
    %v7990 = vunpack.c.h.b16 %v7005
    %v7991 = vunpack.c.l.b16 %v7006
    %v7992 = vunpack.c.h.b16 %v7006
    %v7993 = vunpack.c.l.b16 %v7007
    %v7994 = vunpack.c.h.b16 %v7007
    %v7995 = vunpack.c.l.b16 %v7008
    %v7996 = vunpack.c.h.b16 %v7008
    %v7997 = vunpack.c.l.b16 %v7009
    %v7998 = vunpack.c.h.b16 %v7009
    %v7999 = vunpack.c.l.b16 %v7010
    %v8000 = vunpack.c.h.b16 %v7010
    %v8001 = vunpack.c.l.b16 %v7011
    %v8002 = vunpack.c.h.b16 %v7011
    %v8003 = vunpack.c.l.b16 %v7012
    %v8004 = vunpack.c.h.b16 %v7012
    %v8005 = vunpack.c.l.b16 %v7013
    %v8006 = vunpack.c.h.b16 %v7013
    %v8007 = vunpack.c.l.b16 %v7014
    %v8008 = vunpack.c.h.b16 %v7014
    %v8009 = vunpack.c.l.b16 %v7015
    %v8010 = vunpack.c.h.b16 %v7015
    %v8011 = vunpack.c.l.b16 %v7016
    %v8012 = vunpack.c.h.b16 %v7016
    %v8013 = vunpack.c.l.b16 %v7017
    %v8014 = vunpack.c.h.b16 %v7017
    %v8015 = vunpack.c.l.b16 %v7018
    %v8016 = vunpack.c.h.b16 %v7018
    %v8017 = vunpack.c.l.b16 %v7019
    %v8018 = vunpack.c.h.b16 %v7019
    %v8019 = vunpack.c.l.b16 %v7020
    %v8020 = vunpack.c.h.b16 %v7020
    %v8021 = vunpack.c.l.b16 %v7021
    %v8022 = vunpack.c.h.b16 %v7021
    %v8023 = vunpack.c.l.b16 %v7022
    %v8024 = vunpack.c.h.b16 %v7022
    %v8025 = vunpack.c.l.b16 %v7023
    %v8026 = vunpack.c.h.b16 %v7023
    %v8027 = vunpack.c.l.b16 %v7024
    %v8028 = vunpack.c.h.b16 %v7024
    %v8029 = vunpack.c.l.b16 %v7025
    %v8030 = vunpack.c.h.b16 %v7025
    %v8031 = vunpack.c.l.b16 %v7026
    %v8032 = vunpack.c.h.b16 %v7026
    %v8033 = vunpack.c.l.b16 %v7027
    %v8034 = vunpack.c.h.b16 %v7027
    %v8035 = vunpack.c.l.b16 %v7028
    %v8036 = vunpack.c.h.b16 %v7028
    %v8037 = vunpack.c.l.b16 %v7029
    %v8038 = vunpack.c.h.b16 %v7029
    %v8039 = vunpack.c.l.b16 %v7030
    %v8040 = vunpack.c.h.b16 %v7030
    %v8041 = vunpack.c.l.b16 %v7031
    %v8042 = vunpack.c.h.b16 %v7031
    %v8043 = vunpack.c.l.b16 %v7032
    %v8044 = vunpack.c.h.b16 %v7032
    %v8045 = vunpack.c.l.b16 %v7033
    %v8046 = vunpack.c.h.b16 %v7033
    %v8047 = vunpack.c.l.b16 %v7034
    %v8048 = vunpack.c.h.b16 %v7034
    %v8049 = vunpack.c.l.b16 %v7035
    %v8050 = vunpack.c.h.b16 %v7035
    %v8051 = vunpack.c.l.b16 %v7036
    %v8052 = vunpack.c.h.b16 %v7036
    %v8053 = vunpack.c.l.b16 %v7037
    %v8054 = vunpack.c.h.b16 %v7037
    %v8055 = vunpack.c.l.b16 %v7038
    %v8056 = vunpack.c.h.b16 %v7038
    %v8057 = vunpack.c.l.b16 %v7039
    %v8058 = vunpack.c.h.b16 %v7039
    %v8059 = vunpack.c.l.b16 %v7040
    %v8060 = vunpack.c.h.b16 %v7040
    %v8061 = vunpack.c.l.b16 %v7041
    %v8062 = vunpack.c.h.b16 %v7041
    %v8063 = vunpack.c.l.b16 %v7042
    %v8064 = vunpack.c.h.b16 %v7042
    %v8065 = vunpack.c.l.b16 %v7043
    %v8066 = vunpack.c.h.b16 %v7043
    %v8067 = vunpack.c.l.b16 %v7044
    %v8068 = vunpack.c.h.b16 %v7044
    %v8069 = vunpack.c.l.b16 %v7045
    %v8070 = vunpack.c.h.b16 %v7045
    %v8071 = vunpack.c.l.b16 %v7046
    %v8072 = vunpack.c.h.b16 %v7046
    %v8073 = vunpack.c.l.b16 %v7047
    %v8074 = vunpack.c.h.b16 %v7047
    %v8075 = vunpack.c.l.b16 %v7048
    %v8076 = vunpack.c.h.b16 %v7048
    %v8077 = vunpack.c.l.b16 %v7049
    %v8078 = vunpack.c.h.b16 %v7049
    %v8079 = vunpack.c.l.b16 %v7050
    %v8080 = vunpack.c.h.b16 %v7050
    %v8081 = vunpack.c.l.b16 %v7051
    %v8082 = vunpack.c.h.b16 %v7051
    %v8083 = vunpack.c.l.b16 %v7052
    %v8084 = vunpack.c.h.b16 %v7052
    %v8085 = vunpack.c.l.b16 %v7053
    %v8086 = vunpack.c.h.b16 %v7053
    %v8087 = vunpack.c.l.b16 %v7054
    %v8088 = vunpack.c.h.b16 %v7054
    %v8089 = vunpack.c.l.b16 %v7055
    %v8090 = vunpack.c.h.b16 %v7055
    %v8091 = vunpack.c.l.b16 %v7056
    %v8092 = vunpack.c.h.b16 %v7056
    %v8093 = vunpack.c.l.b16 %v7057
    %v8094 = vunpack.c.h.b16 %v7057
    %v8095 = vunpack.c.l.b16 %v7058
    %v8096 = vunpack.c.h.b16 %v7058
    %v8097 = vunpack.c.l.b16 %v7059
    %v8098 = vunpack.c.h.b16 %v7059
    %v8099 = vunpack.c.l.b16 %v7060
    %v8100 = vunpack.c.h.b16 %v7060
    %v8101 = vunpack.c.l.b16 %v7061
    %v8102 = vunpack.c.h.b16 %v7061
    %v8103 = vunpack.c.l.b16 %v7062
    %v8104 = vunpack.c.h.b16 %v7062
    %v8105 = vunpack.c.l.b16 %v7063
    %v8106 = vunpack.c.h.b16 %v7063
    %v8107 = vunpack.c.l.b16 %v7064
    %v8108 = vunpack.c.h.b16 %v7064
    %v8109 = vunpack.c.l.b16 %v7065
    %v8110 = vunpack.c.h.b16 %v7065
    %v8111 = vunpack.c.l.b16 %v7066
    %v8112 = vunpack.c.h.b16 %v7066
    %v8113 = vunpack.c.l.b16 %v7067
    %v8114 = vunpack.c.h.b16 %v7067
    %v8115 = vunpack.c.l.b16 %v7068
    %v8116 = vunpack.c.h.b16 %v7068
    %v8117 = vunpack.c.l.b16 %v7069
    %v8118 = vunpack.c.h.b16 %v7069
    %v8119 = vunpack.c.l.b16 %v7070
    %v8120 = vunpack.c.h.b16 %v7070
    %v8121 = vunpack.c.l.b16 %v7071
    %v8122 = vunpack.c.h.b16 %v7071
    %v8123 = vunpack.c.l.b16 %v7072
    %v8124 = vunpack.c.h.b16 %v7072
    %v8125 = vunpack.c.l.b16 %v7073
    %v8126 = vunpack.c.h.b16 %v7073
    %v8127 = vunpack.c.l.b16 %v7074
    %v8128 = vunpack.c.h.b16 %v7074
    %v8129 = vunpack.c.l.b16 %v7075
    %v8130 = vunpack.c.h.b16 %v7075
    %v8131 = vunpack.c.l.b16 %v7076
    %v8132 = vunpack.c.h.b16 %v7076
    %v8133 = vunpack.c.l.b16 %v7077
    %v8134 = vunpack.c.h.b16 %v7077
    %v8135 = vunpack.c.l.b16 %v7078
    %v8136 = vunpack.c.h.b16 %v7078
    %v8137 = vunpack.c.l.b16 %v7079
    %v8138 = vunpack.c.h.b16 %v7079
    %v8139 = vunpack.c.l.b16 %v7080
    %v8140 = vunpack.c.h.b16 %v7080
    %v8141 = vunpack.c.l.b16 %v7081
    %v8142 = vunpack.c.h.b16 %v7081
    %v8143 = vunpack.c.l.b16 %v7082
    %v8144 = vunpack.c.h.b16 %v7082
    %v8145 = vunpack.c.l.b16 %v7083
    %v8146 = vunpack.c.h.b16 %v7083
    %v8147 = vunpack.c.l.b16 %v7084
    %v8148 = vunpack.c.h.b16 %v7084
    %v8149 = vunpack.c.l.b16 %v7085
    %v8150 = vunpack.c.h.b16 %v7085
    %v8151 = vunpack.c.l.b16 %v7086
    %v8152 = vunpack.c.h.b16 %v7086
    %v8153 = vunpack.c.l.b16 %v7087
    %v8154 = vunpack.c.h.b16 %v7087
    %v8155 = vunpack.c.l.b16 %v7088
    %v8156 = vunpack.c.h.b16 %v7088
    %v8157 = vunpack.c.l.b16 %v7089
    %v8158 = vunpack.c.h.b16 %v7089
    %v8159 = vunpack.c.l.b16 %v7090
    %v8160 = vunpack.c.h.b16 %v7090
    %v8161 = vunpack.c.l.b16 %v7091
    %v8162 = vunpack.c.h.b16 %v7091
    %v8163 = vunpack.c.l.b16 %v7092
    %v8164 = vunpack.c.h.b16 %v7092
    %v8165 = vunpack.c.l.b16 %v7093
    %v8166 = vunpack.c.h.b16 %v7093
    %v8167 = vunpack.c.l.b16 %v7094
    %v8168 = vunpack.c.h.b16 %v7094
    %v8169 = vunpack.c.l.b16 %v7095
    %v8170 = vunpack.c.h.b16 %v7095
    %v8171 = vunpack.c.l.b16 %v7096
    %v8172 = vunpack.c.h.b16 %v7096
    %v8173 = vunpack.c.l.b16 %v7097
    %v8174 = vunpack.c.h.b16 %v7097
    %v8175 = vunpack.c.l.b16 %v7098
    %v8176 = vunpack.c.h.b16 %v7098
    %v8177 = vunpack.c.l.b16 %v7099
    %v8178 = vunpack.c.h.b16 %v7099
    %v8179 = vunpack.c.l.b16 %v7100
    %v8180 = vunpack.c.h.b16 %v7100
    %v8181 = vunpack.c.l.b16 %v7101
    %v8182 = vunpack.c.h.b16 %v7101
    %v8183 = vunpack.c.l.b16 %v7102
    %v8184 = vunpack.c.h.b16 %v7102
    %v8185 = vunpack.c.l.b16 %v7103
    %v8186 = vunpack.c.h.b16 %v7103
    %v8187 = vunpack.c.l.b16 %v7104
    %v8188 = vunpack.c.h.b16 %v7104
    %v8189 = vunpack.c.l.b16 %v7105
    %v8190 = vunpack.c.h.b16 %v7105
    %v8191 = vunpack.c.l.b16 %v7106
    %v8192 = vunpack.c.h.b16 %v7106
    %v8193 = vunpack.c.l.b16 %v7107
    %v8194 = vunpack.c.h.b16 %v7107
    %v8195 = vunpack.c.l.b16 %v7108
    %v8196 = vunpack.c.h.b16 %v7108
    %v8197 = vunpack.c.l.b16 %v7109
    %v8198 = vunpack.c.h.b16 %v7109
    %v8199 = vunpack.c.l.b16 %v7110
    %v8200 = vunpack.c.h.b16 %v7110
    %v8201 = vunpack.c.l.b16 %v7111
    %v8202 = vunpack.c.h.b16 %v7111
    %v8203 = vunpack.c.l.b16 %v7112
    %v8204 = vunpack.c.h.b16 %v7112
    %v8205 = vunpack.c.l.b16 %v7113
    %v8206 = vunpack.c.h.b16 %v7113
    %v8207 = vunpack.c.l.b16 %v7114
    %v8208 = vunpack.c.h.b16 %v7114
    %v8209 = vunpack.c.l.b16 %v7115
    %v8210 = vunpack.c.h.b16 %v7115
    %v8211 = vunpack.c.l.b16 %v7116
    %v8212 = vunpack.c.h.b16 %v7116
    %v8213 = vunpack.c.l.b16 %v7117
    %v8214 = vunpack.c.h.b16 %v7117
    %v8215 = vunpack.c.l.b16 %v7118
    %v8216 = vunpack.c.h.b16 %v7118
    %v8217 = vunpack.c.l.b16 %v7119
    %v8218 = vunpack.c.h.b16 %v7119
    %v8219 = vunpack.c.l.b16 %v7120
    %v8220 = vunpack.c.h.b16 %v7120
    %v8221 = vunpack.c.l.b16 %v7121
    %v8222 = vunpack.c.h.b16 %v7121
    %v8223 = vunpack.c.l.b16 %v7122
    %v8224 = vunpack.c.h.b16 %v7122
    %v8225 = vunpack.c.l.b16 %v7123
    %v8226 = vunpack.c.h.b16 %v7123
    %v8227 = vunpack.c.l.b16 %v7124
    %v8228 = vunpack.c.h.b16 %v7124
    %v8229 = vunpack.c.l.b16 %v7125
    %v8230 = vunpack.c.h.b16 %v7125
    %v8231 = vunpack.c.l.b16 %v7126
    %v8232 = vunpack.c.h.b16 %v7126
    %v8233 = vunpack.c.l.b16 %v7127
    %v8234 = vunpack.c.h.b16 %v7127
    %v8235 = vunpack.c.l.b16 %v7128
    %v8236 = vunpack.c.h.b16 %v7128
    %v8237 = vunpack.c.l.b16 %v7129
    %v8238 = vunpack.c.h.b16 %v7129
    %v8239 = vunpack.c.l.b16 %v7130
    %v8240 = vunpack.c.h.b16 %v7130
    %v8241 = vunpack.c.l.b16 %v7131
    %v8242 = vunpack.c.h.b16 %v7131
    %v8243 = vunpack.c.l.b16 %v7132
    %v8244 = vunpack.c.h.b16 %v7132
    %v8245 = vunpack.c.l.b16 %v7133
    %v8246 = vunpack.c.h.b16 %v7133
    %v8247 = vunpack.c.l.b16 %v7134
    %v8248 = vunpack.c.h.b16 %v7134
    %v8249 = vunpack.c.l.b16 %v7135
    %v8250 = vunpack.c.h.b16 %v7135
    %v8251 = vunpack.c.l.b16 %v7136
    %v8252 = vunpack.c.h.b16 %v7136
    %v8253 = vunpack.c.l.b16 %v7137
    %v8254 = vunpack.c.h.b16 %v7137
    %v8255 = vunpack.c.l.b16 %v7138
    %v8256 = vunpack.c.h.b16 %v7138
    %v8257 = vunpack.c.l.b16 %v7139
    %v8258 = vunpack.c.h.b16 %v7139
    %v8259 = vunpack.c.l.b16 %v7140
    %v8260 = vunpack.c.h.b16 %v7140
    %v8261 = vunpack.c.l.b16 %v7141
    %v8262 = vunpack.c.h.b16 %v7141
    %v8263 = vunpack.c.l.b16 %v7142
    %v8264 = vunpack.c.h.b16 %v7142
    %v8265 = vunpack.c.l.b16 %v7143
    %v8266 = vunpack.c.h.b16 %v7143
    %v8267 = vunpack.c.l.b16 %v7144
    %v8268 = vunpack.c.h.b16 %v7144
    %v8269 = vunpack.c.l.b16 %v7145
    %v8270 = vunpack.c.h.b16 %v7145
    %v8271 = vunpack.c.l.b16 %v7146
    %v8272 = vunpack.c.h.b16 %v7146
    %v8273 = vunpack.c.l.b16 %v7147
    %v8274 = vunpack.c.h.b16 %v7147
    %v8275 = vunpack.c.l.b16 %v7148
    %v8276 = vunpack.c.h.b16 %v7148
    %v8277 = vunpack.c.l.b16 %v7149
    %v8278 = vunpack.c.h.b16 %v7149
    %v8279 = vunpack.c.l.b16 %v7150
    %v8280 = vunpack.c.h.b16 %v7150
    %v8281 = vunpack.c.l.b16 %v7151
    %v8282 = vunpack.c.h.b16 %v7151
    %v8283 = vunpack.c.l.b16 %v7152
    %v8284 = vunpack.c.h.b16 %v7152
    %v8285 = vunpack.c.l.b16 %v7153
    %v8286 = vunpack.c.h.b16 %v7153
    %v8287 = vunpack.c.l.b16 %v7154
    %v8288 = vunpack.c.h.b16 %v7154
    %v8289 = vunpack.c.l.b16 %v7155
    %v8290 = vunpack.c.h.b16 %v7155
    %v8291 = vunpack.c.l.b16 %v7156
    %v8292 = vunpack.c.h.b16 %v7156
    %v8293 = vunpack.c.l.b16 %v7157
    %v8294 = vunpack.c.h.b16 %v7157
    %v8295 = vunpack.c.l.b16 %v7158
    %v8296 = vunpack.c.h.b16 %v7158
    %v8297 = vunpack.c.l.b16 %v7159
    %v8298 = vunpack.c.h.b16 %v7159
    %v8299 = vunpack.c.l.b16 %v7160
    %v8300 = vunpack.c.h.b16 %v7160
    %v8301 = vunpack.c.l.b16 %v7161
    %v8302 = vunpack.c.h.b16 %v7161
    %v8303 = vunpack.c.l.b16 %v7162
    %v8304 = vunpack.c.h.b16 %v7162
    %v8305 = vunpack.c.l.b16 %v7163
    %v8306 = vunpack.c.h.b16 %v7163
    %v8307 = vunpack.c.l.b16 %v7164
    %v8308 = vunpack.c.h.b16 %v7164
    %v8309 = vunpack.c.l.b16 %v7165
    %v8310 = vunpack.c.h.b16 %v7165
    %v8311 = vunpack.c.l.b16 %v7166
    %v8312 = vunpack.c.h.b16 %v7166
    %v8313 = vunpack.c.l.b16 %v7167
    %v8314 = vunpack.c.h.b16 %v7167
    %v8315 = vunpack.c.l.b16 %v7168
    %v8316 = vunpack.c.h.b16 %v7168
    %v8317 = vunpack.c.l.b16 %v7169
    %v8318 = vunpack.c.h.b16 %v7169
    %v8319 = vunpack.c.l.b16 %v7170
    %v8320 = vunpack.c.h.b16 %v7170
    %v8321 = vunpack.c.l.b16 %v7171
    %v8322 = vunpack.c.h.b16 %v7171
    %v8323 = vunpack.c.l.b16 %v7172
    %v8324 = vunpack.c.h.b16 %v7172
    %v8325 = vunpack.c.l.b16 %v7173
    %v8326 = vunpack.c.h.b16 %v7173
    %v8327 = vunpack.c.l.b16 %v7174
    %v8328 = vunpack.c.h.b16 %v7174
    %v8329 = vunpack.c.l.b16 %v7175
    %v8330 = vunpack.c.h.b16 %v7175
    %v8331 = vunpack.c.l.b16 %v7176
    %v8332 = vunpack.c.h.b16 %v7176
    %v8333 = vunpack.c.l.b16 %v7177
    %v8334 = vunpack.c.h.b16 %v7177
    %v8335 = vunpack.c.l.b16 %v7178
    %v8336 = vunpack.c.h.b16 %v7178
    %v8337 = vunpack.c.l.b16 %v7179
    %v8338 = vunpack.c.h.b16 %v7179
    %v8339 = vunpack.c.l.b16 %v7180
    %v8340 = vunpack.c.h.b16 %v7180
    %v8341 = vunpack.c.l.b16 %v7181
    %v8342 = vunpack.c.h.b16 %v7181
    %v8343 = vunpack.c.l.b16 %v7182
    %v8344 = vunpack.c.h.b16 %v7182
    %v8345 = vunpack.c.l.b16 %v7183
    %v8346 = vunpack.c.h.b16 %v7183
    %v8347 = vunpack.c.l.b16 %v7184
    %v8348 = vunpack.c.h.b16 %v7184
    %v8349 = vunpack.c.l.b16 %v7185
    %v8350 = vunpack.c.h.b16 %v7185
    %v8351 = vunpack.c.l.b16 %v7186
    %v8352 = vunpack.c.h.b16 %v7186
    %v8353 = vunpack.c.l.b16 %v7187
    %v8354 = vunpack.c.h.b16 %v7187
    %v8355 = vunpack.c.l.b16 %v7188
    %v8356 = vunpack.c.h.b16 %v7188
    %v8357 = vunpack.c.l.b16 %v7189
    %v8358 = vunpack.c.h.b16 %v7189
    %v8359 = vunpack.c.l.b16 %v7190
    %v8360 = vunpack.c.h.b16 %v7190
    %v8361 = vunpack.c.l.b16 %v7191
    %v8362 = vunpack.c.h.b16 %v7191
    %v8363 = vunpack.c.l.b16 %v7192
    %v8364 = vunpack.c.h.b16 %v7192
    %v8365 = vunpack.c.l.b16 %v7193
    %v8366 = vunpack.c.h.b16 %v7193
    %v8367 = vunpack.c.l.b16 %v7194
    %v8368 = vunpack.c.h.b16 %v7194
    %v8369 = vunpack.c.l.b16 %v7195
    %v8370 = vunpack.c.h.b16 %v7195
    %v8371 = vunpack.c.l.b16 %v7196
    %v8372 = vunpack.c.h.b16 %v7196
    %v8373 = vunpack.c.l.b16 %v7197
    %v8374 = vunpack.c.h.b16 %v7197
    %v8375 = vunpack.c.l.b16 %v7198
    %v8376 = vunpack.c.h.b16 %v7198
    %v8377 = vunpack.c.l.b16 %v7199
    %v8378 = vunpack.c.h.b16 %v7199
    %v8379 = vunpack.c.l.b16 %v7200
    %v8380 = vunpack.c.h.b16 %v7200
    %v8381 = vunpack.c.l.b16 %v7201
    %v8382 = vunpack.c.h.b16 %v7201
    %v8383 = vunpack.c.l.b16 %v7202
    %v8384 = vunpack.c.h.b16 %v7202
    %v8385 = vunpack.c.l.b16 %v7203
    %v8386 = vunpack.c.h.b16 %v7203
    %v8387 = vunpack.c.l.b16 %v7204
    %v8388 = vunpack.c.h.b16 %v7204
    %v8389 = vpack.c.b16 %v7627, %v7621
    %v8390 = vpack.c.b16 %v7628, %v7622
    %v8391 = vpack.c.b16 %v7629, %v7623
    %v8392 = vpack.c.b16 %v7630, %v7624
    %v8393 = vpack.c.b16 %v7631, %v7625
    %v8394 = vpack.c.b16 %v7632, %v7626
    %v8395 = vpack.c.b16 %v7639, %v7633
    %v8396 = vpack.c.b16 %v7640, %v7634
    %v8397 = vpack.c.b16 %v7641, %v7635
    %v8398 = vpack.c.b16 %v7642, %v7636
    %v8399 = vpack.c.b16 %v7643, %v7637
    %v8400 = vpack.c.b16 %v7644, %v7638
    %v8401 = vpack.c.b16 %v7651, %v7645
    %v8402 = vpack.c.b16 %v7652, %v7646
    %v8403 = vpack.c.b16 %v7653, %v7647
    %v8404 = vpack.c.b16 %v7654, %v7648
    %v8405 = vpack.c.b16 %v7655, %v7649
    %v8406 = vpack.c.b16 %v7656, %v7650
    %v8407 = vpack.c.b16 %v7663, %v7657
    %v8408 = vpack.c.b16 %v7664, %v7658
    %v8409 = vpack.c.b16 %v7665, %v7659
    %v8410 = vpack.c.b16 %v7666, %v7660
    %v8411 = vpack.c.b16 %v7667, %v7661
    %v8412 = vpack.c.b16 %v7668, %v7662
    %v8413 = vpack.c.b16 %v7675, %v7669
    %v8414 = vpack.c.b16 %v7676, %v7670
    %v8415 = vpack.c.b16 %v7677, %v7671
    %v8416 = vpack.c.b16 %v7678, %v7672
    %v8417 = vpack.c.b16 %v7679, %v7673
    %v8418 = vpack.c.b16 %v7680, %v7674
    %v8419 = vpack.c.b16 %v7687, %v7681
    %v8420 = vpack.c.b16 %v7688, %v7682
    %v8421 = vpack.c.b16 %v7689, %v7683
    %v8422 = vpack.c.b16 %v7690, %v7684
    %v8423 = vpack.c.b16 %v7691, %v7685
    %v8424 = vpack.c.b16 %v7692, %v7686
    %v8425 = vpack.c.b16 %v7699, %v7693
    %v8426 = vpack.c.b16 %v7700, %v7694
    %v8427 = vpack.c.b16 %v7701, %v7695
    %v8428 = vpack.c.b16 %v7702, %v7696
    %v8429 = vpack.c.b16 %v7703, %v7697
    %v8430 = vpack.c.b16 %v7704, %v7698
    %v8431 = vpack.c.b16 %v7711, %v7705
    %v8432 = vpack.c.b16 %v7712, %v7706
    %v8433 = vpack.c.b16 %v7713, %v7707
    %v8434 = vpack.c.b16 %v7714, %v7708
    %v8435 = vpack.c.b16 %v7715, %v7709
    %v8436 = vpack.c.b16 %v7716, %v7710
    %v8437 = vpack.c.b16 %v7723, %v7717
    %v8438 = vpack.c.b16 %v7724, %v7718
    %v8439 = vpack.c.b16 %v7725, %v7719
    %v8440 = vpack.c.b16 %v7726, %v7720
    %v8441 = vpack.c.b16 %v7727, %v7721
    %v8442 = vpack.c.b16 %v7728, %v7722
    %v8443 = vpack.c.b16 %v7735, %v7729
    %v8444 = vpack.c.b16 %v7736, %v7730
    %v8445 = vpack.c.b16 %v7737, %v7731
    %v8446 = vpack.c.b16 %v7738, %v7732
    %v8447 = vpack.c.b16 %v7739, %v7733
    %v8448 = vpack.c.b16 %v7740, %v7734
    %v8449 = vpack.c.b16 %v7747, %v7741
    %v8450 = vpack.c.b16 %v7748, %v7742
    %v8451 = vpack.c.b16 %v7749, %v7743
    %v8452 = vpack.c.b16 %v7750, %v7744
    %v8453 = vpack.c.b16 %v7751, %v7745
    %v8454 = vpack.c.b16 %v7752, %v7746
    %v8455 = vpack.c.b16 %v7759, %v7753
    %v8456 = vpack.c.b16 %v7760, %v7754
    %v8457 = vpack.c.b16 %v7761, %v7755
    %v8458 = vpack.c.b16 %v7762, %v7756
    %v8459 = vpack.c.b16 %v7763, %v7757
    %v8460 = vpack.c.b16 %v7764, %v7758
    %v8461 = vpack.c.b16 %v7771, %v7765
    %v8462 = vpack.c.b16 %v7772, %v7766
    %v8463 = vpack.c.b16 %v7773, %v7767
    %v8464 = vpack.c.b16 %v7774, %v7768
    %v8465 = vpack.c.b16 %v7775, %v7769
    %v8466 = vpack.c.b16 %v7776, %v7770
    %v8467 = vpack.c.b16 %v7783, %v7777
    %v8468 = vpack.c.b16 %v7784, %v7778
    %v8469 = vpack.c.b16 %v7785, %v7779
    %v8470 = vpack.c.b16 %v7786, %v7780
    %v8471 = vpack.c.b16 %v7787, %v7781
    %v8472 = vpack.c.b16 %v7788, %v7782
    %v8473 = vpack.c.b16 %v7795, %v7789
    %v8474 = vpack.c.b16 %v7796, %v7790
    %v8475 = vpack.c.b16 %v7797, %v7791
    %v8476 = vpack.c.b16 %v7798, %v7792
    %v8477 = vpack.c.b16 %v7799, %v7793
    %v8478 = vpack.c.b16 %v7800, %v7794
    %v8479 = vpack.c.b16 %v7807, %v7801
    %v8480 = vpack.c.b16 %v7808, %v7802
    %v8481 = vpack.c.b16 %v7809, %v7803
    %v8482 = vpack.c.b16 %v7810, %v7804
    %v8483 = vpack.c.b16 %v7811, %v7805
    %v8484 = vpack.c.b16 %v7812, %v7806
    %v8485 = vpack.c.b16 %v7819, %v7813
    %v8486 = vpack.c.b16 %v7820, %v7814
    %v8487 = vpack.c.b16 %v7821, %v7815
    %v8488 = vpack.c.b16 %v7822, %v7816
    %v8489 = vpack.c.b16 %v7823, %v7817
    %v8490 = vpack.c.b16 %v7824, %v7818
    %v8491 = vpack.c.b16 %v7831, %v7825
    %v8492 = vpack.c.b16 %v7832, %v7826
    %v8493 = vpack.c.b16 %v7833, %v7827
    %v8494 = vpack.c.b16 %v7834, %v7828
    %v8495 = vpack.c.b16 %v7835, %v7829
    %v8496 = vpack.c.b16 %v7836, %v7830
    %v8497 = vpack.c.b16 %v7843, %v7837
    %v8498 = vpack.c.b16 %v7844, %v7838
    %v8499 = vpack.c.b16 %v7845, %v7839
    %v8500 = vpack.c.b16 %v7846, %v7840
    %v8501 = vpack.c.b16 %v7847, %v7841
    %v8502 = vpack.c.b16 %v7848, %v7842
    %v8503 = vpack.c.b16 %v7855, %v7849
    %v8504 = vpack.c.b16 %v7856, %v7850
    %v8505 = vpack.c.b16 %v7857, %v7851
    %v8506 = vpack.c.b16 %v7858, %v7852
    %v8507 = vpack.c.b16 %v7859, %v7853
    %v8508 = vpack.c.b16 %v7860, %v7854
    %v8509 = vpack.c.b16 %v7867, %v7861
    %v8510 = vpack.c.b16 %v7868, %v7862
    %v8511 = vpack.c.b16 %v7869, %v7863
    %v8512 = vpack.c.b16 %v7870, %v7864
    %v8513 = vpack.c.b16 %v7871, %v7865
    %v8514 = vpack.c.b16 %v7872, %v7866
    %v8515 = vpack.c.b16 %v7879, %v7873
    %v8516 = vpack.c.b16 %v7880, %v7874
    %v8517 = vpack.c.b16 %v7881, %v7875
    %v8518 = vpack.c.b16 %v7882, %v7876
    %v8519 = vpack.c.b16 %v7883, %v7877
    %v8520 = vpack.c.b16 %v7884, %v7878
    %v8521 = vpack.c.b16 %v7891, %v7885
    %v8522 = vpack.c.b16 %v7892, %v7886
    %v8523 = vpack.c.b16 %v7893, %v7887
    %v8524 = vpack.c.b16 %v7894, %v7888
    %v8525 = vpack.c.b16 %v7895, %v7889
    %v8526 = vpack.c.b16 %v7896, %v7890
    %v8527 = vpack.c.b16 %v7903, %v7897
    %v8528 = vpack.c.b16 %v7904, %v7898
    %v8529 = vpack.c.b16 %v7905, %v7899
    %v8530 = vpack.c.b16 %v7906, %v7900
    %v8531 = vpack.c.b16 %v7907, %v7901
    %v8532 = vpack.c.b16 %v7908, %v7902
    %v8533 = vpack.c.b16 %v7915, %v7909
    %v8534 = vpack.c.b16 %v7916, %v7910
    %v8535 = vpack.c.b16 %v7917, %v7911
    %v8536 = vpack.c.b16 %v7918, %v7912
    %v8537 = vpack.c.b16 %v7919, %v7913
    %v8538 = vpack.c.b16 %v7920, %v7914
    %v8539 = vpack.c.b16 %v7927, %v7921
    %v8540 = vpack.c.b16 %v7928, %v7922
    %v8541 = vpack.c.b16 %v7929, %v7923
    %v8542 = vpack.c.b16 %v7930, %v7924
    %v8543 = vpack.c.b16 %v7931, %v7925
    %v8544 = vpack.c.b16 %v7932, %v7926
    %v8545 = vpack.c.b16 %v7939, %v7933
    %v8546 = vpack.c.b16 %v7940, %v7934
    %v8547 = vpack.c.b16 %v7941, %v7935
    %v8548 = vpack.c.b16 %v7942, %v7936
    %v8549 = vpack.c.b16 %v7943, %v7937
    %v8550 = vpack.c.b16 %v7944, %v7938
    %v8551 = vpack.c.b16 %v7951, %v7945
    %v8552 = vpack.c.b16 %v7952, %v7946
    %v8553 = vpack.c.b16 %v7953, %v7947
    %v8554 = vpack.c.b16 %v7954, %v7948
    %v8555 = vpack.c.b16 %v7955, %v7949
    %v8556 = vpack.c.b16 %v7956, %v7950
    %v8557 = vpack.c.b16 %v7963, %v7957
    %v8558 = vpack.c.b16 %v7964, %v7958
    %v8559 = vpack.c.b16 %v7965, %v7959
    %v8560 = vpack.c.b16 %v7966, %v7960
    %v8561 = vpack.c.b16 %v7967, %v7961
    %v8562 = vpack.c.b16 %v7968, %v7962
    %v8563 = vpack.c.b16 %v7975, %v7969
    %v8564 = vpack.c.b16 %v7976, %v7970
    %v8565 = vpack.c.b16 %v7977, %v7971
    %v8566 = vpack.c.b16 %v7978, %v7972
    %v8567 = vpack.c.b16 %v7979, %v7973
    %v8568 = vpack.c.b16 %v7980, %v7974
    %v8569 = vpack.c.b16 %v7987, %v7981
    %v8570 = vpack.c.b16 %v7988, %v7982
    %v8571 = vpack.c.b16 %v7989, %v7983
    %v8572 = vpack.c.b16 %v7990, %v7984
    %v8573 = vpack.c.b16 %v7991, %v7985
    %v8574 = vpack.c.b16 %v7992, %v7986
    %v8575 = vpack.c.b16 %v7999, %v7993
    %v8576 = vpack.c.b16 %v8000, %v7994
    %v8577 = vpack.c.b16 %v8001, %v7995
    %v8578 = vpack.c.b16 %v8002, %v7996
    %v8579 = vpack.c.b16 %v8003, %v7997
    %v8580 = vpack.c.b16 %v8004, %v7998
    %v8581 = vpack.c.b16 %v8011, %v8005
    %v8582 = vpack.c.b16 %v8012, %v8006
    %v8583 = vpack.c.b16 %v8013, %v8007
    %v8584 = vpack.c.b16 %v8014, %v8008
    %v8585 = vpack.c.b16 %v8015, %v8009
    %v8586 = vpack.c.b16 %v8016, %v8010
    %v8587 = vpack.c.b16 %v8023, %v8017
    %v8588 = vpack.c.b16 %v8024, %v8018
    %v8589 = vpack.c.b16 %v8025, %v8019
    %v8590 = vpack.c.b16 %v8026, %v8020
    %v8591 = vpack.c.b16 %v8027, %v8021
    %v8592 = vpack.c.b16 %v8028, %v8022
    %v8593 = vpack.c.b16 %v8035, %v8029
    %v8594 = vpack.c.b16 %v8036, %v8030
    %v8595 = vpack.c.b16 %v8037, %v8031
    %v8596 = vpack.c.b16 %v8038, %v8032
    %v8597 = vpack.c.b16 %v8039, %v8033
    %v8598 = vpack.c.b16 %v8040, %v8034
    %v8599 = vpack.c.b16 %v8047, %v8041
    %v8600 = vpack.c.b16 %v8048, %v8042
    %v8601 = vpack.c.b16 %v8049, %v8043
    %v8602 = vpack.c.b16 %v8050, %v8044
    %v8603 = vpack.c.b16 %v8051, %v8045
    %v8604 = vpack.c.b16 %v8052, %v8046
    %v8605 = vpack.c.b16 %v8059, %v8053
    %v8606 = vpack.c.b16 %v8060, %v8054
    %v8607 = vpack.c.b16 %v8061, %v8055
    %v8608 = vpack.c.b16 %v8062, %v8056
    %v8609 = vpack.c.b16 %v8063, %v8057
    %v8610 = vpack.c.b16 %v8064, %v8058
    %v8611 = vpack.c.b16 %v8071, %v8065
    %v8612 = vpack.c.b16 %v8072, %v8066
    %v8613 = vpack.c.b16 %v8073, %v8067
    %v8614 = vpack.c.b16 %v8074, %v8068
    %v8615 = vpack.c.b16 %v8075, %v8069
    %v8616 = vpack.c.b16 %v8076, %v8070
    %v8617 = vpack.c.b16 %v8083, %v8077
    %v8618 = vpack.c.b16 %v8084, %v8078
    %v8619 = vpack.c.b16 %v8085, %v8079
    %v8620 = vpack.c.b16 %v8086, %v8080
    %v8621 = vpack.c.b16 %v8087, %v8081
    %v8622 = vpack.c.b16 %v8088, %v8082
    %v8623 = vpack.c.b16 %v8095, %v8089
    %v8624 = vpack.c.b16 %v8096, %v8090
    %v8625 = vpack.c.b16 %v8097, %v8091
    %v8626 = vpack.c.b16 %v8098, %v8092
    %v8627 = vpack.c.b16 %v8099, %v8093
    %v8628 = vpack.c.b16 %v8100, %v8094
    %v8629 = vpack.c.b16 %v8107, %v8101
    %v8630 = vpack.c.b16 %v8108, %v8102
    %v8631 = vpack.c.b16 %v8109, %v8103
    %v8632 = vpack.c.b16 %v8110, %v8104
    %v8633 = vpack.c.b16 %v8111, %v8105
    %v8634 = vpack.c.b16 %v8112, %v8106
    %v8635 = vpack.c.b16 %v8119, %v8113
    %v8636 = vpack.c.b16 %v8120, %v8114
    %v8637 = vpack.c.b16 %v8121, %v8115
    %v8638 = vpack.c.b16 %v8122, %v8116
    %v8639 = vpack.c.b16 %v8123, %v8117
    %v8640 = vpack.c.b16 %v8124, %v8118
    %v8641 = vpack.c.b16 %v8131, %v8125
    %v8642 = vpack.c.b16 %v8132, %v8126
    %v8643 = vpack.c.b16 %v8133, %v8127
    %v8644 = vpack.c.b16 %v8134, %v8128
    %v8645 = vpack.c.b16 %v8135, %v8129
    %v8646 = vpack.c.b16 %v8136, %v8130
    %v8647 = vpack.c.b16 %v8143, %v8137
    %v8648 = vpack.c.b16 %v8144, %v8138
    %v8649 = vpack.c.b16 %v8145, %v8139
    %v8650 = vpack.c.b16 %v8146, %v8140
    %v8651 = vpack.c.b16 %v8147, %v8141
    %v8652 = vpack.c.b16 %v8148, %v8142
    %v8653 = vpack.c.b16 %v8155, %v8149
    %v8654 = vpack.c.b16 %v8156, %v8150
    %v8655 = vpack.c.b16 %v8157, %v8151
    %v8656 = vpack.c.b16 %v8158, %v8152
    %v8657 = vpack.c.b16 %v8159, %v8153
    %v8658 = vpack.c.b16 %v8160, %v8154
    %v8659 = vpack.c.b16 %v8167, %v8161
    %v8660 = vpack.c.b16 %v8168, %v8162
    %v8661 = vpack.c.b16 %v8169, %v8163
    %v8662 = vpack.c.b16 %v8170, %v8164
    %v8663 = vpack.c.b16 %v8171, %v8165
    %v8664 = vpack.c.b16 %v8172, %v8166
    %v8665 = vpack.c.b16 %v8179, %v8173
    %v8666 = vpack.c.b16 %v8180, %v8174
    %v8667 = vpack.c.b16 %v8181, %v8175
    %v8668 = vpack.c.b16 %v8182, %v8176
    %v8669 = vpack.c.b16 %v8183, %v8177
    %v8670 = vpack.c.b16 %v8184, %v8178
    %v8671 = vpack.c.b16 %v8191, %v8185
    %v8672 = vpack.c.b16 %v8192, %v8186
    %v8673 = vpack.c.b16 %v8193, %v8187
    %v8674 = vpack.c.b16 %v8194, %v8188
    %v8675 = vpack.c.b16 %v8195, %v8189
    %v8676 = vpack.c.b16 %v8196, %v8190
    %v8677 = vpack.c.b16 %v8203, %v8197
    %v8678 = vpack.c.b16 %v8204, %v8198
    %v8679 = vpack.c.b16 %v8205, %v8199
    %v8680 = vpack.c.b16 %v8206, %v8200
    %v8681 = vpack.c.b16 %v8207, %v8201
    %v8682 = vpack.c.b16 %v8208, %v8202
    %v8683 = vpack.c.b16 %v8215, %v8209
    %v8684 = vpack.c.b16 %v8216, %v8210
    %v8685 = vpack.c.b16 %v8217, %v8211
    %v8686 = vpack.c.b16 %v8218, %v8212
    %v8687 = vpack.c.b16 %v8219, %v8213
    %v8688 = vpack.c.b16 %v8220, %v8214
    %v8689 = vpack.c.b16 %v8227, %v8221
    %v8690 = vpack.c.b16 %v8228, %v8222
    %v8691 = vpack.c.b16 %v8229, %v8223
    %v8692 = vpack.c.b16 %v8230, %v8224
    %v8693 = vpack.c.b16 %v8231, %v8225
    %v8694 = vpack.c.b16 %v8232, %v8226
    %v8695 = vpack.c.b16 %v8239, %v8233
    %v8696 = vpack.c.b16 %v8240, %v8234
    %v8697 = vpack.c.b16 %v8241, %v8235
    %v8698 = vpack.c.b16 %v8242, %v8236
    %v8699 = vpack.c.b16 %v8243, %v8237
    %v8700 = vpack.c.b16 %v8244, %v8238
    %v8701 = vpack.c.b16 %v8251, %v8245
    %v8702 = vpack.c.b16 %v8252, %v8246
    %v8703 = vpack.c.b16 %v8253, %v8247
    %v8704 = vpack.c.b16 %v8254, %v8248
    %v8705 = vpack.c.b16 %v8255, %v8249
    %v8706 = vpack.c.b16 %v8256, %v8250
    %v8707 = vpack.c.b16 %v8263, %v8257
    %v8708 = vpack.c.b16 %v8264, %v8258
    %v8709 = vpack.c.b16 %v8265, %v8259
    %v8710 = vpack.c.b16 %v8266, %v8260
    %v8711 = vpack.c.b16 %v8267, %v8261
    %v8712 = vpack.c.b16 %v8268, %v8262
    %v8713 = vpack.c.b16 %v8275, %v8269
    %v8714 = vpack.c.b16 %v8276, %v8270
    %v8715 = vpack.c.b16 %v8277, %v8271
    %v8716 = vpack.c.b16 %v8278, %v8272
    %v8717 = vpack.c.b16 %v8279, %v8273
    %v8718 = vpack.c.b16 %v8280, %v8274
    %v8719 = vpack.c.b16 %v8287, %v8281
    %v8720 = vpack.c.b16 %v8288, %v8282
    %v8721 = vpack.c.b16 %v8289, %v8283
    %v8722 = vpack.c.b16 %v8290, %v8284
    %v8723 = vpack.c.b16 %v8291, %v8285
    %v8724 = vpack.c.b16 %v8292, %v8286
    %v8725 = vpack.c.b16 %v8299, %v8293
    %v8726 = vpack.c.b16 %v8300, %v8294
    %v8727 = vpack.c.b16 %v8301, %v8295
    %v8728 = vpack.c.b16 %v8302, %v8296
    %v8729 = vpack.c.b16 %v8303, %v8297
    %v8730 = vpack.c.b16 %v8304, %v8298
    %v8731 = vpack.c.b16 %v8311, %v8305
    %v8732 = vpack.c.b16 %v8312, %v8306
    %v8733 = vpack.c.b16 %v8313, %v8307
    %v8734 = vpack.c.b16 %v8314, %v8308
    %v8735 = vpack.c.b16 %v8315, %v8309
    %v8736 = vpack.c.b16 %v8316, %v8310
    %v8737 = vpack.c.b16 %v8323, %v8317
    %v8738 = vpack.c.b16 %v8324, %v8318
    %v8739 = vpack.c.b16 %v8325, %v8319
    %v8740 = vpack.c.b16 %v8326, %v8320
    %v8741 = vpack.c.b16 %v8327, %v8321
    %v8742 = vpack.c.b16 %v8328, %v8322
    %v8743 = vpack.c.b16 %v8335, %v8329
    %v8744 = vpack.c.b16 %v8336, %v8330
    %v8745 = vpack.c.b16 %v8337, %v8331
    %v8746 = vpack.c.b16 %v8338, %v8332
    %v8747 = vpack.c.b16 %v8339, %v8333
    %v8748 = vpack.c.b16 %v8340, %v8334
    %v8749 = vpack.c.b16 %v8347, %v8341
    %v8750 = vpack.c.b16 %v8348, %v8342
    %v8751 = vpack.c.b16 %v8349, %v8343
    %v8752 = vpack.c.b16 %v8350, %v8344
    %v8753 = vpack.c.b16 %v8351, %v8345
    %v8754 = vpack.c.b16 %v8352, %v8346
    %v8755 = vpack.c.b16 %v8359, %v8353
    %v8756 = vpack.c.b16 %v8360, %v8354
    %v8757 = vpack.c.b16 %v8361, %v8355
    %v8758 = vpack.c.b16 %v8362, %v8356
    %v8759 = vpack.c.b16 %v8363, %v8357
    %v8760 = vpack.c.b16 %v8364, %v8358
    %v8761 = vpack.c.b16 %v8371, %v8365
    %v8762 = vpack.c.b16 %v8372, %v8366
    %v8763 = vpack.c.b16 %v8373, %v8367
    %v8764 = vpack.c.b16 %v8374, %v8368
    %v8765 = vpack.c.b16 %v8375, %v8369
    %v8766 = vpack.c.b16 %v8376, %v8370
    %v8767 = vpack.c.b16 %v8383, %v8377
    %v8768 = vpack.c.b16 %v8384, %v8378
    %v8769 = vpack.c.b16 %v8385, %v8379
    %v8770 = vpack.c.b16 %v8386, %v8380
    %v8771 = vpack.c.b16 %v8387, %v8381
    %v8772 = vpack.c.b16 %v8388, %v8382
    %9157 = vmatprep.subr.bf16.mxu0 %v8390
    %9158 = vmatpush1.bf16.msra.mxu0 %v8389
    %9159 = vmatprep.subr.bf16.mxu0 %v8396
    %9160 = vmatpush1.bf16.msra.mxu0 %v8395
    %9161 = vmatprep.subr.bf16.mxu0 %v8402
    %9162 = vmatpush1.bf16.msra.mxu0 %v8401
    %9163 = vmatprep.subr.bf16.mxu0 %v8408
    %9164 = vmatpush1.bf16.msra.mxu0 %v8407
    %9165 = vmatprep.subr.bf16.mxu0 %v8414
    %9166 = vmatpush1.bf16.msra.mxu0 %v8413
    %9167 = vmatprep.subr.bf16.mxu0 %v8420
    %9168 = vmatpush1.bf16.msra.mxu0 %v8419
    %9169 = vmatprep.subr.bf16.mxu0 %v8426
    %9170 = vmatpush1.bf16.msra.mxu0 %v8425
    %9171 = vmatprep.subr.bf16.mxu0 %v8432
    %9172 = vmatpush1.bf16.msra.mxu0 %v8431
    %9173 = vmatprep.subr.bf16.mxu0 %v8438
    %9174 = vmatpush1.bf16.msra.mxu0 %v8437
    %9175 = vmatprep.subr.bf16.mxu0 %v8444
    %9176 = vmatpush1.bf16.msra.mxu0 %v8443
    %9177 = vmatprep.subr.bf16.mxu0 %v8450
    %9178 = vmatpush1.bf16.msra.mxu0 %v8449
    %9179 = vmatprep.subr.bf16.mxu0 %v8456
    %9180 = vmatpush1.bf16.msra.mxu0 %v8455
    %9181 = vmatprep.subr.bf16.mxu0 %v8462
    %9182 = vmatpush1.bf16.msra.mxu0 %v8461
    %9183 = vmatprep.subr.bf16.mxu0 %v8468
    %9184 = vmatpush1.bf16.msra.mxu0 %v8467
    %9185 = vmatprep.subr.bf16.mxu0 %v8474
    %9186 = vmatpush1.bf16.msra.mxu0 %v8473
    %9187 = vmatprep.subr.bf16.mxu0 %v8480
    %9188 = vmatpush1.bf16.msra.mxu0 %v8479
    %9189 = vmatprep.mubr.bf16.mxu0 %v6814
    %9190 = vmatmul.mubr.bf16.gmra.mrb[0].mxu0 %v6813
    %v9191 = vpop.f32.mrb[0].mxu0
    %v9192 = vadd.f32 %v7210, %v9191
    %v9193 = vpop.f32.mrb[0].mxu0
    %v9194 = vadd.f32 %v7214, %v9193
    %v9195 = vpop.f32.mrb[0].mxu0
    %v9196 = vpop.f32.mrb[0].mxu0
    %9197 = vdwg.mxu0
    %9198 = vmatprep.subr.bf16.mxu0 %v8486
    %9199 = vmatpush1.bf16.msra.mxu0 %v8485
    %9200 = vmatprep.subr.bf16.mxu0 %v8492
    %9201 = vmatpush1.bf16.msra.mxu0 %v8491
    %9202 = vmatprep.subr.bf16.mxu0 %v8498
    %9203 = vmatpush1.bf16.msra.mxu0 %v8497
    %9204 = vmatprep.subr.bf16.mxu0 %v8504
    %9205 = vmatpush1.bf16.msra.mxu0 %v8503
    %9206 = vmatprep.subr.bf16.mxu0 %v8510
    %9207 = vmatpush1.bf16.msra.mxu0 %v8509
    %9208 = vmatprep.subr.bf16.mxu0 %v8516
    %9209 = vmatpush1.bf16.msra.mxu0 %v8515
    %9210 = vmatprep.subr.bf16.mxu0 %v8522
    %9211 = vmatpush1.bf16.msra.mxu0 %v8521
    %9212 = vmatprep.subr.bf16.mxu0 %v8528
    %9213 = vmatpush1.bf16.msra.mxu0 %v8527
    %9214 = vmatprep.subr.bf16.mxu0 %v8534
    %9215 = vmatpush1.bf16.msra.mxu0 %v8533
    %9216 = vmatprep.subr.bf16.mxu0 %v8540
    %9217 = vmatpush1.bf16.msra.mxu0 %v8539
    %9218 = vmatprep.subr.bf16.mxu0 %v8546
    %9219 = vmatpush1.bf16.msra.mxu0 %v8545
    %9220 = vmatprep.subr.bf16.mxu0 %v8552
    %9221 = vmatpush1.bf16.msra.mxu0 %v8551
    %9222 = vmatprep.subr.bf16.mxu0 %v8558
    %9223 = vmatpush1.bf16.msra.mxu0 %v8557
    %9224 = vmatprep.subr.bf16.mxu0 %v8564
    %9225 = vmatpush1.bf16.msra.mxu0 %v8563
    %9226 = vmatprep.subr.bf16.mxu0 %v8570
    %9227 = vmatpush1.bf16.msra.mxu0 %v8569
    %9228 = vmatprep.subr.bf16.mxu0 %v8576
    %9229 = vmatpush1.bf16.msra.mxu0 %v8575
    %9230 = vmatprep.mubr.bf16.mxu0 %v6816
    %9231 = vmatmul.mubr.bf16.gmra.mrb[0].mxu0 %v6815
    %v9232 = vpop.f32.mrb[0].mxu0
    %v9233 = vadd.f32 %v9192, %v9232
    %v9234 = vpop.f32.mrb[0].mxu0
    %v9235 = vadd.f32 %v9194, %v9234
    %v9236 = vpop.f32.mrb[0].mxu0
    %v9237 = vpop.f32.mrb[0].mxu0
    %9238 = vdwg.mxu0
    %9239 = vmatprep.subr.bf16.mxu0 %v8582
    %9240 = vmatpush1.bf16.msra.mxu0 %v8581
    %9241 = vmatprep.subr.bf16.mxu0 %v8588
    %9242 = vmatpush1.bf16.msra.mxu0 %v8587
    %9243 = vmatprep.subr.bf16.mxu0 %v8594
    %9244 = vmatpush1.bf16.msra.mxu0 %v8593
    %9245 = vmatprep.subr.bf16.mxu0 %v8600
    %9246 = vmatpush1.bf16.msra.mxu0 %v8599
    %9247 = vmatprep.subr.bf16.mxu0 %v8606
    %9248 = vmatpush1.bf16.msra.mxu0 %v8605
    %9249 = vmatprep.subr.bf16.mxu0 %v8612
    %9250 = vmatpush1.bf16.msra.mxu0 %v8611
    %9251 = vmatprep.subr.bf16.mxu0 %v8618
    %9252 = vmatpush1.bf16.msra.mxu0 %v8617
    %9253 = vmatprep.subr.bf16.mxu0 %v8624
    %9254 = vmatpush1.bf16.msra.mxu0 %v8623
    %9255 = vmatprep.subr.bf16.mxu0 %v8630
    %9256 = vmatpush1.bf16.msra.mxu0 %v8629
    %9257 = vmatprep.subr.bf16.mxu0 %v8636
    %9258 = vmatpush1.bf16.msra.mxu0 %v8635
    %9259 = vmatprep.subr.bf16.mxu0 %v8642
    %9260 = vmatpush1.bf16.msra.mxu0 %v8641
    %9261 = vmatprep.subr.bf16.mxu0 %v8648
    %9262 = vmatpush1.bf16.msra.mxu0 %v8647
    %9263 = vmatprep.subr.bf16.mxu0 %v8654
    %9264 = vmatpush1.bf16.msra.mxu0 %v8653
    %9265 = vmatprep.subr.bf16.mxu0 %v8660
    %9266 = vmatpush1.bf16.msra.mxu0 %v8659
    %9267 = vmatprep.subr.bf16.mxu0 %v8666
    %9268 = vmatpush1.bf16.msra.mxu0 %v8665
    %9269 = vmatprep.subr.bf16.mxu0 %v8672
    %9270 = vmatpush1.bf16.msra.mxu0 %v8671
    %9271 = vmatprep.mubr.bf16.mxu0 %v6818
    %9272 = vmatmul.mubr.bf16.gmra.mrb[0].mxu0 %v6817
    %v9273 = vpop.f32.mrb[0].mxu0
    %v9274 = vadd.f32 %v9233, %v9273
    %v9275 = vpop.f32.mrb[0].mxu0
    %v9276 = vadd.f32 %v9235, %v9275
    %v9277 = vpop.f32.mrb[0].mxu0
    %v9278 = vpop.f32.mrb[0].mxu0
    %9279 = vdwg.mxu0
    %9280 = vmatprep.subr.bf16.mxu0 %v8678
    %9281 = vmatpush1.bf16.msra.mxu0 %v8677
    %9282 = vmatprep.subr.bf16.mxu0 %v8684
    %9283 = vmatpush1.bf16.msra.mxu0 %v8683
    %9284 = vmatprep.subr.bf16.mxu0 %v8690
    %9285 = vmatpush1.bf16.msra.mxu0 %v8689
    %9286 = vmatprep.subr.bf16.mxu0 %v8696
    %9287 = vmatpush1.bf16.msra.mxu0 %v8695
    %9288 = vmatprep.subr.bf16.mxu0 %v8702
    %9289 = vmatpush1.bf16.msra.mxu0 %v8701
    %9290 = vmatprep.subr.bf16.mxu0 %v8708
    %9291 = vmatpush1.bf16.msra.mxu0 %v8707
    %9292 = vmatprep.subr.bf16.mxu0 %v8714
    %9293 = vmatpush1.bf16.msra.mxu0 %v8713
    %9294 = vmatprep.subr.bf16.mxu0 %v8720
    %9295 = vmatpush1.bf16.msra.mxu0 %v8719
    %9296 = vmatprep.subr.bf16.mxu0 %v8726
    %9297 = vmatpush1.bf16.msra.mxu0 %v8725
    %9298 = vmatprep.subr.bf16.mxu0 %v8732
    %9299 = vmatpush1.bf16.msra.mxu0 %v8731
    %9300 = vmatprep.subr.bf16.mxu0 %v8738
    %9301 = vmatpush1.bf16.msra.mxu0 %v8737
    %9302 = vmatprep.subr.bf16.mxu0 %v8744
    %9303 = vmatpush1.bf16.msra.mxu0 %v8743
    %9304 = vmatprep.subr.bf16.mxu0 %v8750
    %9305 = vmatpush1.bf16.msra.mxu0 %v8749
    %9306 = vmatprep.subr.bf16.mxu0 %v8756
    %9307 = vmatpush1.bf16.msra.mxu0 %v8755
    %9308 = vmatprep.subr.bf16.mxu0 %v8762
    %9309 = vmatpush1.bf16.msra.mxu0 %v8761
    %9310 = vmatprep.subr.bf16.mxu0 %v8768
    %9311 = vmatpush1.bf16.msra.mxu0 %v8767
    %9312 = vmatprep.mubr.bf16.mxu0 %v6820
    %9313 = vmatmul.mubr.bf16.gmra.mrb[0].mxu0 %v6819
    %v9314 = vpop.f32.mrb[0].mxu0
    %v9315 = vadd.f32 %v9274, %v9314
    %v9316 = vpop.f32.mrb[0].mxu0
    %v9317 = vadd.f32 %v9276, %v9316
    %v9318 = vpop.f32.mrb[0].mxu0
    %v9319 = vpop.f32.mrb[0].mxu0
    %9320 = vdwg.mxu0
    %9321 = vmatprep.subr.bf16.mxu0 %v8392
    %9322 = vmatpush1.bf16.msra.mxu0 %v8391
    %9323 = vmatprep.subr.bf16.mxu0 %v8398
    %9324 = vmatpush1.bf16.msra.mxu0 %v8397
    %9325 = vmatprep.subr.bf16.mxu0 %v8404
    %9326 = vmatpush1.bf16.msra.mxu0 %v8403
    %9327 = vmatprep.subr.bf16.mxu0 %v8410
    %9328 = vmatpush1.bf16.msra.mxu0 %v8409
    %9329 = vmatprep.subr.bf16.mxu0 %v8416
    %9330 = vmatpush1.bf16.msra.mxu0 %v8415
    %9331 = vmatprep.subr.bf16.mxu0 %v8422
    %9332 = vmatpush1.bf16.msra.mxu0 %v8421
    %9333 = vmatprep.subr.bf16.mxu0 %v8428
    %9334 = vmatpush1.bf16.msra.mxu0 %v8427
    %9335 = vmatprep.subr.bf16.mxu0 %v8434
    %9336 = vmatpush1.bf16.msra.mxu0 %v8433
    %9337 = vmatprep.subr.bf16.mxu0 %v8440
    %9338 = vmatpush1.bf16.msra.mxu0 %v8439
    %9339 = vmatprep.subr.bf16.mxu0 %v8446
    %9340 = vmatpush1.bf16.msra.mxu0 %v8445
    %9341 = vmatprep.subr.bf16.mxu0 %v8452
    %9342 = vmatpush1.bf16.msra.mxu0 %v8451
    %9343 = vmatprep.subr.bf16.mxu0 %v8458
    %9344 = vmatpush1.bf16.msra.mxu0 %v8457
    %9345 = vmatprep.subr.bf16.mxu0 %v8464
    %9346 = vmatpush1.bf16.msra.mxu0 %v8463
    %9347 = vmatprep.subr.bf16.mxu0 %v8470
    %9348 = vmatpush1.bf16.msra.mxu0 %v8469
    %9349 = vmatprep.subr.bf16.mxu0 %v8476
    %9350 = vmatpush1.bf16.msra.mxu0 %v8475
    %9351 = vmatprep.subr.bf16.mxu0 %v8482
    %9352 = vmatpush1.bf16.msra.mxu0 %v8481
    %9353 = vmatprep.mubr.bf16.mxu0 %v6814
    %9354 = vmatmul.mubr.bf16.gmra.mrb[0].mxu0 %v6813
    %v9355 = vpop.f32.mrb[0].mxu0
    %v9356 = vadd.f32 %v7218, %v9355
    %v9357 = vpop.f32.mrb[0].mxu0
    %v9358 = vadd.f32 %v7222, %v9357
    %v9359 = vpop.f32.mrb[0].mxu0
    %v9360 = vpop.f32.mrb[0].mxu0
    %9361 = vdwg.mxu0
    %9362 = vmatprep.subr.bf16.mxu0 %v8488
    %9363 = vmatpush1.bf16.msra.mxu0 %v8487
    %9364 = vmatprep.subr.bf16.mxu0 %v8494
    %9365 = vmatpush1.bf16.msra.mxu0 %v8493
    %9366 = vmatprep.subr.bf16.mxu0 %v8500
    %9367 = vmatpush1.bf16.msra.mxu0 %v8499
    %9368 = vmatprep.subr.bf16.mxu0 %v8506
    %9369 = vmatpush1.bf16.msra.mxu0 %v8505
    %9370 = vmatprep.subr.bf16.mxu0 %v8512
    %9371 = vmatpush1.bf16.msra.mxu0 %v8511
    %9372 = vmatprep.subr.bf16.mxu0 %v8518
    %9373 = vmatpush1.bf16.msra.mxu0 %v8517
    %9374 = vmatprep.subr.bf16.mxu0 %v8524
    %9375 = vmatpush1.bf16.msra.mxu0 %v8523
    %9376 = vmatprep.subr.bf16.mxu0 %v8530
    %9377 = vmatpush1.bf16.msra.mxu0 %v8529
    %9378 = vmatprep.subr.bf16.mxu0 %v8536
    %9379 = vmatpush1.bf16.msra.mxu0 %v8535
    %9380 = vmatprep.subr.bf16.mxu0 %v8542
    %9381 = vmatpush1.bf16.msra.mxu0 %v8541
    %9382 = vmatprep.subr.bf16.mxu0 %v8548
    %9383 = vmatpush1.bf16.msra.mxu0 %v8547
    %9384 = vmatprep.subr.bf16.mxu0 %v8554
    %9385 = vmatpush1.bf16.msra.mxu0 %v8553
    %9386 = vmatprep.subr.bf16.mxu0 %v8560
    %9387 = vmatpush1.bf16.msra.mxu0 %v8559
    %9388 = vmatprep.subr.bf16.mxu0 %v8566
    %9389 = vmatpush1.bf16.msra.mxu0 %v8565
    %9390 = vmatprep.subr.bf16.mxu0 %v8572
    %9391 = vmatpush1.bf16.msra.mxu0 %v8571
    %9392 = vmatprep.subr.bf16.mxu0 %v8578
    %9393 = vmatpush1.bf16.msra.mxu0 %v8577
    %9394 = vmatprep.mubr.bf16.mxu0 %v6816
    %9395 = vmatmul.mubr.bf16.gmra.mrb[0].mxu0 %v6815
    %v9396 = vpop.f32.mrb[0].mxu0
    %v9397 = vadd.f32 %v9356, %v9396
    %v9398 = vpop.f32.mrb[0].mxu0
    %v9399 = vadd.f32 %v9358, %v9398
    %v9400 = vpop.f32.mrb[0].mxu0
    %v9401 = vpop.f32.mrb[0].mxu0
    %9402 = vdwg.mxu0
    %9403 = vmatprep.subr.bf16.mxu0 %v8584
    %9404 = vmatpush1.bf16.msra.mxu0 %v8583
    %9405 = vmatprep.subr.bf16.mxu0 %v8590
    %9406 = vmatpush1.bf16.msra.mxu0 %v8589
    %9407 = vmatprep.subr.bf16.mxu0 %v8596
    %9408 = vmatpush1.bf16.msra.mxu0 %v8595
    %9409 = vmatprep.subr.bf16.mxu0 %v8602
    %9410 = vmatpush1.bf16.msra.mxu0 %v8601
    %9411 = vmatprep.subr.bf16.mxu0 %v8608
    %9412 = vmatpush1.bf16.msra.mxu0 %v8607
    %9413 = vmatprep.subr.bf16.mxu0 %v8614
    %9414 = vmatpush1.bf16.msra.mxu0 %v8613
    %9415 = vmatprep.subr.bf16.mxu0 %v8620
    %9416 = vmatpush1.bf16.msra.mxu0 %v8619
    %9417 = vmatprep.subr.bf16.mxu0 %v8626
    %9418 = vmatpush1.bf16.msra.mxu0 %v8625
    %9419 = vmatprep.subr.bf16.mxu0 %v8632
    %9420 = vmatpush1.bf16.msra.mxu0 %v8631
    %9421 = vmatprep.subr.bf16.mxu0 %v8638
    %9422 = vmatpush1.bf16.msra.mxu0 %v8637
    %9423 = vmatprep.subr.bf16.mxu0 %v8644
    %9424 = vmatpush1.bf16.msra.mxu0 %v8643
    %9425 = vmatprep.subr.bf16.mxu0 %v8650
    %9426 = vmatpush1.bf16.msra.mxu0 %v8649
    %9427 = vmatprep.subr.bf16.mxu0 %v8656
    %9428 = vmatpush1.bf16.msra.mxu0 %v8655
    %9429 = vmatprep.subr.bf16.mxu0 %v8662
    %9430 = vmatpush1.bf16.msra.mxu0 %v8661
    %9431 = vmatprep.subr.bf16.mxu0 %v8668
    %9432 = vmatpush1.bf16.msra.mxu0 %v8667
    %9433 = vmatprep.subr.bf16.mxu0 %v8674
    %9434 = vmatpush1.bf16.msra.mxu0 %v8673
    %9435 = vmatprep.mubr.bf16.mxu0 %v6818
    %9436 = vmatmul.mubr.bf16.gmra.mrb[0].mxu0 %v6817
    %v9437 = vpop.f32.mrb[0].mxu0
    %v9438 = vadd.f32 %v9397, %v9437
    %v9439 = vpop.f32.mrb[0].mxu0
    %v9440 = vadd.f32 %v9399, %v9439
    %v9441 = vpop.f32.mrb[0].mxu0
    %v9442 = vpop.f32.mrb[0].mxu0
    %9443 = vdwg.mxu0
    %9444 = vmatprep.subr.bf16.mxu0 %v8680
    %9445 = vmatpush1.bf16.msra.mxu0 %v8679
    %9446 = vmatprep.subr.bf16.mxu0 %v8686
    %9447 = vmatpush1.bf16.msra.mxu0 %v8685
    %9448 = vmatprep.subr.bf16.mxu0 %v8692
    %9449 = vmatpush1.bf16.msra.mxu0 %v8691
    %9450 = vmatprep.subr.bf16.mxu0 %v8698
    %9451 = vmatpush1.bf16.msra.mxu0 %v8697
    %9452 = vmatprep.subr.bf16.mxu0 %v8704
    %9453 = vmatpush1.bf16.msra.mxu0 %v8703
    %9454 = vmatprep.subr.bf16.mxu0 %v8710
    %9455 = vmatpush1.bf16.msra.mxu0 %v8709
    %9456 = vmatprep.subr.bf16.mxu0 %v8716
    %9457 = vmatpush1.bf16.msra.mxu0 %v8715
    %9458 = vmatprep.subr.bf16.mxu0 %v8722
    %9459 = vmatpush1.bf16.msra.mxu0 %v8721
    %9460 = vmatprep.subr.bf16.mxu0 %v8728
    %9461 = vmatpush1.bf16.msra.mxu0 %v8727
    %9462 = vmatprep.subr.bf16.mxu0 %v8734
    %9463 = vmatpush1.bf16.msra.mxu0 %v8733
    %9464 = vmatprep.subr.bf16.mxu0 %v8740
    %9465 = vmatpush1.bf16.msra.mxu0 %v8739
    %9466 = vmatprep.subr.bf16.mxu0 %v8746
    %9467 = vmatpush1.bf16.msra.mxu0 %v8745
    %9468 = vmatprep.subr.bf16.mxu0 %v8752
    %9469 = vmatpush1.bf16.msra.mxu0 %v8751
    %9470 = vmatprep.subr.bf16.mxu0 %v8758
    %9471 = vmatpush1.bf16.msra.mxu0 %v8757
    %9472 = vmatprep.subr.bf16.mxu0 %v8764
    %9473 = vmatpush1.bf16.msra.mxu0 %v8763
    %9474 = vmatprep.subr.bf16.mxu0 %v8770
    %9475 = vmatpush1.bf16.msra.mxu0 %v8769
    %9476 = vmatprep.mubr.bf16.mxu0 %v6820
    %9477 = vmatmul.mubr.bf16.gmra.mrb[0].mxu0 %v6819
    %v9478 = vpop.f32.mrb[0].mxu0
    %v9479 = vadd.f32 %v9438, %v9478
    %v9480 = vpop.f32.mrb[0].mxu0
    %v9481 = vadd.f32 %v9440, %v9480
    %v9482 = vpop.f32.mrb[0].mxu0
    %v9483 = vpop.f32.mrb[0].mxu0
    %9484 = vdwg.mxu0
    %9485 = vmatprep.subr.bf16.mxu0 %v8394
    %9486 = vmatpush1.bf16.msra.mxu0 %v8393
    %9487 = vmatprep.subr.bf16.mxu0 %v8400
    %9488 = vmatpush1.bf16.msra.mxu0 %v8399
    %9489 = vmatprep.subr.bf16.mxu0 %v8406
    %9490 = vmatpush1.bf16.msra.mxu0 %v8405
    %9491 = vmatprep.subr.bf16.mxu0 %v8412
    %9492 = vmatpush1.bf16.msra.mxu0 %v8411
    %9493 = vmatprep.subr.bf16.mxu0 %v8418
    %9494 = vmatpush1.bf16.msra.mxu0 %v8417
    %9495 = vmatprep.subr.bf16.mxu0 %v8424
    %9496 = vmatpush1.bf16.msra.mxu0 %v8423
    %9497 = vmatprep.subr.bf16.mxu0 %v8430
    %9498 = vmatpush1.bf16.msra.mxu0 %v8429
    %9499 = vmatprep.subr.bf16.mxu0 %v8436
    %9500 = vmatpush1.bf16.msra.mxu0 %v8435
    %9501 = vmatprep.subr.bf16.mxu0 %v8442
    %9502 = vmatpush1.bf16.msra.mxu0 %v8441
    %9503 = vmatprep.subr.bf16.mxu0 %v8448
    %9504 = vmatpush1.bf16.msra.mxu0 %v8447
    %9505 = vmatprep.subr.bf16.mxu0 %v8454
    %9506 = vmatpush1.bf16.msra.mxu0 %v8453
    %9507 = vmatprep.subr.bf16.mxu0 %v8460
    %9508 = vmatpush1.bf16.msra.mxu0 %v8459
    %9509 = vmatprep.subr.bf16.mxu0 %v8466
    %9510 = vmatpush1.bf16.msra.mxu0 %v8465
    %9511 = vmatprep.subr.bf16.mxu0 %v8472
    %9512 = vmatpush1.bf16.msra.mxu0 %v8471
    %9513 = vmatprep.subr.bf16.mxu0 %v8478
    %9514 = vmatpush1.bf16.msra.mxu0 %v8477
    %9515 = vmatprep.subr.bf16.mxu0 %v8484
    %9516 = vmatpush1.bf16.msra.mxu0 %v8483
    %9517 = vmatprep.mubr.bf16.mxu0 %v6814
    %9518 = vmatmul.mubr.bf16.gmra.mrb[0].mxu0 %v6813
    %v9519 = vpop.f32.mrb[0].mxu0
    %v9520 = vadd.f32 %v7226, %v9519
    %v9521 = vpop.f32.mrb[0].mxu0
    %v9522 = vadd.f32 %v7230, %v9521
    %v9523 = vpop.f32.mrb[0].mxu0
    %v9524 = vpop.f32.mrb[0].mxu0
    %9525 = vdwg.mxu0
    %9526 = vmatprep.subr.bf16.mxu0 %v8490
    %9527 = vmatpush1.bf16.msra.mxu0 %v8489
    %9528 = vmatprep.subr.bf16.mxu0 %v8496
    %9529 = vmatpush1.bf16.msra.mxu0 %v8495
    %9530 = vmatprep.subr.bf16.mxu0 %v8502
    %9531 = vmatpush1.bf16.msra.mxu0 %v8501
    %9532 = vmatprep.subr.bf16.mxu0 %v8508
    %9533 = vmatpush1.bf16.msra.mxu0 %v8507
    %9534 = vmatprep.subr.bf16.mxu0 %v8514
    %9535 = vmatpush1.bf16.msra.mxu0 %v8513
    %9536 = vmatprep.subr.bf16.mxu0 %v8520
    %9537 = vmatpush1.bf16.msra.mxu0 %v8519
    %9538 = vmatprep.subr.bf16.mxu0 %v8526
    %9539 = vmatpush1.bf16.msra.mxu0 %v8525
    %9540 = vmatprep.subr.bf16.mxu0 %v8532
    %9541 = vmatpush1.bf16.msra.mxu0 %v8531
    %9542 = vmatprep.subr.bf16.mxu0 %v8538
    %9543 = vmatpush1.bf16.msra.mxu0 %v8537
    %9544 = vmatprep.subr.bf16.mxu0 %v8544
    %9545 = vmatpush1.bf16.msra.mxu0 %v8543
    %9546 = vmatprep.subr.bf16.mxu0 %v8550
    %9547 = vmatpush1.bf16.msra.mxu0 %v8549
    %9548 = vmatprep.subr.bf16.mxu0 %v8556
    %9549 = vmatpush1.bf16.msra.mxu0 %v8555
    %9550 = vmatprep.subr.bf16.mxu0 %v8562
    %9551 = vmatpush1.bf16.msra.mxu0 %v8561
    %9552 = vmatprep.subr.bf16.mxu0 %v8568
    %9553 = vmatpush1.bf16.msra.mxu0 %v8567
    %9554 = vmatprep.subr.bf16.mxu0 %v8574
    %9555 = vmatpush1.bf16.msra.mxu0 %v8573
    %9556 = vmatprep.subr.bf16.mxu0 %v8580
    %9557 = vmatpush1.bf16.msra.mxu0 %v8579
    %9558 = vmatprep.mubr.bf16.mxu0 %v6816
    %9559 = vmatmul.mubr.bf16.gmra.mrb[0].mxu0 %v6815
    %v9560 = vpop.f32.mrb[0].mxu0
    %v9561 = vadd.f32 %v9520, %v9560
    %v9562 = vpop.f32.mrb[0].mxu0
    %v9563 = vadd.f32 %v9522, %v9562
    %v9564 = vpop.f32.mrb[0].mxu0
    %v9565 = vpop.f32.mrb[0].mxu0
    %9566 = vdwg.mxu0
    %9567 = vmatprep.subr.bf16.mxu0 %v8586
    %9568 = vmatpush1.bf16.msra.mxu0 %v8585
    %9569 = vmatprep.subr.bf16.mxu0 %v8592
    %9570 = vmatpush1.bf16.msra.mxu0 %v8591
    %9571 = vmatprep.subr.bf16.mxu0 %v8598
    %9572 = vmatpush1.bf16.msra.mxu0 %v8597
    %9573 = vmatprep.subr.bf16.mxu0 %v8604
    %9574 = vmatpush1.bf16.msra.mxu0 %v8603
    %9575 = vmatprep.subr.bf16.mxu0 %v8610
    %9576 = vmatpush1.bf16.msra.mxu0 %v8609
    %9577 = vmatprep.subr.bf16.mxu0 %v8616
    %9578 = vmatpush1.bf16.msra.mxu0 %v8615
    %9579 = vmatprep.subr.bf16.mxu0 %v8622
    %9580 = vmatpush1.bf16.msra.mxu0 %v8621
    %9581 = vmatprep.subr.bf16.mxu0 %v8628
    %9582 = vmatpush1.bf16.msra.mxu0 %v8627
    %9583 = vmatprep.subr.bf16.mxu0 %v8634
    %9584 = vmatpush1.bf16.msra.mxu0 %v8633
    %9585 = vmatprep.subr.bf16.mxu0 %v8640
    %9586 = vmatpush1.bf16.msra.mxu0 %v8639
    %9587 = vmatprep.subr.bf16.mxu0 %v8646
    %9588 = vmatpush1.bf16.msra.mxu0 %v8645
    %9589 = vmatprep.subr.bf16.mxu0 %v8652
    %9590 = vmatpush1.bf16.msra.mxu0 %v8651
    %9591 = vmatprep.subr.bf16.mxu0 %v8658
    %9592 = vmatpush1.bf16.msra.mxu0 %v8657
    %9593 = vmatprep.subr.bf16.mxu0 %v8664
    %9594 = vmatpush1.bf16.msra.mxu0 %v8663
    %9595 = vmatprep.subr.bf16.mxu0 %v8670
    %9596 = vmatpush1.bf16.msra.mxu0 %v8669
    %9597 = vmatprep.subr.bf16.mxu0 %v8676
    %9598 = vmatpush1.bf16.msra.mxu0 %v8675
    %9599 = vmatprep.mubr.bf16.mxu0 %v6818
    %9600 = vmatmul.mubr.bf16.gmra.mrb[0].mxu0 %v6817
    %v9601 = vpop.f32.mrb[0].mxu0
    %v9602 = vadd.f32 %v9561, %v9601
    %v9603 = vpop.f32.mrb[0].mxu0
    %v9604 = vadd.f32 %v9563, %v9603
    %v9605 = vpop.f32.mrb[0].mxu0
    %v9606 = vpop.f32.mrb[0].mxu0
    %9607 = vdwg.mxu0
    %9608 = vmatprep.subr.bf16.mxu0 %v8682
    %9609 = vmatpush1.bf16.msra.mxu0 %v8681
    %9610 = vmatprep.subr.bf16.mxu0 %v8688
    %9611 = vmatpush1.bf16.msra.mxu0 %v8687
    %9612 = vmatprep.subr.bf16.mxu0 %v8694
    %9613 = vmatpush1.bf16.msra.mxu0 %v8693
    %9614 = vmatprep.subr.bf16.mxu0 %v8700
    %9615 = vmatpush1.bf16.msra.mxu0 %v8699
    %9616 = vmatprep.subr.bf16.mxu0 %v8706
    %9617 = vmatpush1.bf16.msra.mxu0 %v8705
    %9618 = vmatprep.subr.bf16.mxu0 %v8712
    %9619 = vmatpush1.bf16.msra.mxu0 %v8711
    %9620 = vmatprep.subr.bf16.mxu0 %v8718
    %9621 = vmatpush1.bf16.msra.mxu0 %v8717
    %9622 = vmatprep.subr.bf16.mxu0 %v8724
    %9623 = vmatpush1.bf16.msra.mxu0 %v8723
    %9624 = vmatprep.subr.bf16.mxu0 %v8730
    %9625 = vmatpush1.bf16.msra.mxu0 %v8729
    %9626 = vmatprep.subr.bf16.mxu0 %v8736
    %9627 = vmatpush1.bf16.msra.mxu0 %v8735
    %9628 = vmatprep.subr.bf16.mxu0 %v8742
    %9629 = vmatpush1.bf16.msra.mxu0 %v8741
    %9630 = vmatprep.subr.bf16.mxu0 %v8748
    %9631 = vmatpush1.bf16.msra.mxu0 %v8747
    %9632 = vmatprep.subr.bf16.mxu0 %v8754
    %9633 = vmatpush1.bf16.msra.mxu0 %v8753
    %9634 = vmatprep.subr.bf16.mxu0 %v8760
    %9635 = vmatpush1.bf16.msra.mxu0 %v8759
    %9636 = vmatprep.subr.bf16.mxu0 %v8766
    %9637 = vmatpush1.bf16.msra.mxu0 %v8765
    %9638 = vmatprep.subr.bf16.mxu0 %v8772
    %9639 = vmatpush1.bf16.msra.mxu0 %v8771
    %9640 = vmatprep.mubr.bf16.mxu0 %v6820
    %9641 = vmatmul.mubr.bf16.gmra.mrb[0].mxu0 %v6819
    %v9642 = vpop.f32.mrb[0].mxu0
    %v9643 = vadd.f32 %v9602, %v9642
    %v9644 = vpop.f32.mrb[0].mxu0
    %v9645 = vadd.f32 %v9604, %v9644
    %v9646 = vpop.f32.mrb[0].mxu0
    %v9647 = vpop.f32.mrb[0].mxu0
    %9648 = vdwg.mxu0
    %v9649 = vsub.f32 0.0, %v9315
    %v9650 = vsub.f32 0.0, %v9317
    %v9651 = vsub.f32 0.0, %v9479
    %v9652 = vsub.f32 0.0, %v9481
    %v9653 = vsub.f32 0.0, %v9643
    %v9654 = vsub.f32 0.0, %v9645
    %v9655 = vmul.f32 %v9649, 1.442695
    %v9656 = vpow.pop %v9655
    %v9657 = vmul.f32 %v9650, 1.442695
    %v9658 = vpow.pop %v9657
    %v9659 = vmul.f32 %v9651, 1.442695
    %v9660 = vpow.pop %v9659
    %v9661 = vmul.f32 %v9652, 1.442695
    %v9662 = vpow.pop %v9661
    %v9663 = vmul.f32 %v9653, 1.442695
    %v9664 = vpow.pop %v9663
    %v9665 = vmul.f32 %v9654, 1.442695
    %v9666 = vpow.pop %v9665
    %v9667 = vadd.f32 %v9656, 1.0
    %v9668 = vadd.f32 %v9658, 1.0
    %v9669 = vadd.f32 %v9660, 1.0
    %v9670 = vadd.f32 %v9662, 1.0
    %v9671 = vadd.f32 %v9664, 1.0
    %v9672 = vadd.f32 %v9666, 1.0
    %v9673 = vrcp.pop %v9667
    %v9674 = vrcp.pop %v9668
    %v9675 = vrcp.pop %v9669
    %v9676 = vrcp.pop %v9670
    %v9677 = vrcp.pop %v9671
    %v9678 = vrcp.pop %v9672
    %9679 = vst [vmem:[%s10] sm:$0xff] %v9673
    %9680 = vst [vmem:[%s10 + $0x8] sm:$0xff] %v9674
    %9681 = vst [vmem:[%s10 + $0x10] sm:$0xff] %v9675
    %9682 = vst [vmem:[%s10 + $0x18] sm:$0xff] %v9676
    %9683 = vst [vmem:[%s10 + $0x20] sm:$0xff] %v9677
    %9684 = vst [vmem:[%s10 + $0x28] sm:$0xff] %v9678
    // Predicated region
    $region70: #{autoencoder_forward.1} parent=1 // pred_check
      _
    $region71: #{autoencoder_forward.1} parent=1 // pred_check_branch
      %9686 = sbr.rel (0) target = $region73
    $region72: #{autoencoder_forward.1} parent=1 // pred_region
      _
    $region73: #{autoencoder_forward.1} parent=1 // pred_fallthru
      _
    // Predicated region
    $region74: #{autoencoder_forward.1} parent=1 // pred_check
      _
    $region75: #{autoencoder_forward.1} parent=1 // pred_check_branch
      %9688 = sbr.rel (0) target = $region77
    $region76: #{autoencoder_forward.1} parent=1 // pred_region
      _
    $region77: #{autoencoder_forward.1} parent=1 // pred_fallthru
      _
    // Predicated region
    $region78: #{autoencoder_forward.1} parent=1 // pred_check
      _
    $region79: #{autoencoder_forward.1} parent=1 // pred_check_branch
      %9690 = sbr.rel (0) target = $region81
    $region80: #{autoencoder_forward.1} parent=1 // pred_region
      _
    $region81: #{autoencoder_forward.1} parent=1 // pred_fallthru
      _
    // Predicated region
    $region82: #{autoencoder_forward.1} parent=1 // pred_check
      _
    $region83: #{autoencoder_forward.1} parent=1 // pred_check_branch
      %9692 = sbr.rel (0) target = $region85
    $region84: #{autoencoder_forward.1} parent=1 // pred_region
      _
    $region85: #{autoencoder_forward.1} parent=1 // pred_fallthru
      _
    %9693 = vsyncpa [#allocation3], 1
    %9694 = vsyncpa [#allocation5], 1
    %9695 = vsyncpa [#allocation8], 1
    %9696 = vsyncpa [#allocation11], 1
    %9697 = vsyncpa [#allocation14], 1

</llo_original>
